<compile_context>
chip_gen: v5e
topology: v5e:2x2
jax: 0.10.0
libtpu: 0.0.40
codegen_flags: <defaults>
</compile_context>

<pallas_src>
import functools
import math

import jax
import jax.numpy as jnp
from jax.experimental import pallas as pl
from jax.experimental.pallas import tpu as pltpu


# ----------------------------------------------------------------------------
# Parameter-name tables (kernel ref ordering)
# ----------------------------------------------------------------------------
LAYER_PARAM_NAMES = (
    "ffn1_ln_g", "ffn1_ln_b", "ffn1_w1", "ffn1_b1", "ffn1_w2", "ffn1_b2",
    "attn_ln_g", "attn_ln_b", "wq", "bq", "wk", "bk", "wv", "bv", "wo", "bo",
    "conv_ln_g", "conv_ln_b", "pw_val_w", "pw_val_b", "pw_gate_w", "pw_gate_b",
    "dw_w", "dw_b", "bn_scale", "bn_shift", "pw2_w", "pw2_b",
    "ffn2_ln_g", "ffn2_ln_b", "ffn2_w1", "ffn2_b1", "ffn2_w2", "ffn2_b2",
    "final_ln_g", "final_ln_b",
)

NECK_PARAM_NAMES = (
    "neck_w1", "neck_b1", "neck_bn_scale", "neck_bn_shift", "neck_prelu_a",
    "neck_w2", "neck_b2", "machine_w", "machine_b", "section_w",
)


# ----------------------------------------------------------------------------
# Single fused kernel: mel frontend + all conformer layers + pool/neck/heads
# ----------------------------------------------------------------------------
def _asd_conformer_kernel(*refs, num_layers, num_heads, kernel_size, inv_e):
    n_lp = len(LAYER_PARAM_NAMES)
    n_np = len(NECK_PARAM_NAMES)

    fr_ref, cos_ref, sin_ref, fb_ref = refs[:4]
    LP = dict(zip(LAYER_PARAM_NAMES, refs[4:4 + n_lp]))          # stacked (L, ...)
    NP = dict(zip(NECK_PARAM_NAMES, refs[4 + n_lp:4 + n_lp + n_np]))
    emb_ref, mach_ref, sec_ref = refs[4 + n_lp + n_np:4 + n_lp + n_np + 3]
    pad_ref = refs[4 + n_lp + n_np + 3]                          # VMEM (Tp, D)

    H = num_heads
    K = kernel_size
    pad = (K - 1) // 2

    def sigmoid(v):
        return 1.0 / (1.0 + jnp.exp(-v))

    def silu(v):
        return v * sigmoid(v)

    # ---- Fused mel frontend: frames -> windowed DFT -> |X| -> mel-fb ----
    fr = fr_ref[0]                                               # (T, n_fft)
    re = jnp.dot(fr, cos_ref[...], preferred_element_type=jnp.float32)
    im = jnp.dot(fr, sin_ref[...], preferred_element_type=jnp.float32)
    mag = jnp.sqrt(re * re + im * im)                            # power = 1.0
    x = jnp.dot(mag, fb_ref[...], preferred_element_type=jnp.float32)  # (T, D)

    T, D = x.shape
    Dh = D // H

    # Zero the depthwise-conv pad scratch once; only [pad:pad+T] is rewritten
    # per layer, so the pad rows stay zero for every layer.
    pad_ref[...] = jnp.zeros_like(pad_ref)

    # ---- Conformer layers (static Python loop; weights indexed by layer) ----
    for l in range(num_layers):
        def p(name, _l=l):
            return LP[name][_l]                                  # drops layer axis

        def layernorm(v, gname, bname):
            mu = jnp.mean(v, axis=-1, keepdims=True)
            vc = v - mu
            var = jnp.mean(vc * vc, axis=-1, keepdims=True)
            return vc * jax.lax.rsqrt(var + 1e-5) * p(gname) + p(bname)

        def dense(v, wname, bname):
            return (jnp.dot(v, p(wname), preferred_element_type=jnp.float32)
                    + p(bname))

        # FFN module 1 (half-step residual)
        h = layernorm(x, "ffn1_ln_g", "ffn1_ln_b")
        h = silu(dense(h, "ffn1_w1", "ffn1_b1"))
        h = dense(h, "ffn1_w2", "ffn1_b2")
        x = x + 0.5 * h

        # Multi-head self-attention (full lengths -> no padding mask)
        hn = layernorm(x, "attn_ln_g", "attn_ln_b")
        q = dense(hn, "wq", "bq")        # 1/sqrt(Dh) already folded into wq/bq
        k = dense(hn, "wk", "bk")
        v = dense(hn, "wv", "bv")
        wo = p("wo")
        attn = p("bo")                   # (1, D); heads accumulate out-proj
        for hh in range(H):
            sl = slice(hh * Dh, (hh + 1) * Dh)
            qh, kh, vh = q[:, sl], k[:, sl], v[:, sl]
            s = jax.lax.dot_general(qh, kh, (((1,), (1,)), ((), ())),
                                    preferred_element_type=jnp.float32)  # (T,T)
            s = s - jnp.max(s, axis=-1, keepdims=True)
            e = jnp.exp(s)
            prob = e / jnp.sum(e, axis=-1, keepdims=True)
            oh = jnp.dot(prob, vh, preferred_element_type=jnp.float32)   # (T,Dh)
            # Accumulate out-projection per head: no lane-concat of heads.
            attn = attn + jnp.dot(oh, wo[sl, :],
                                  preferred_element_type=jnp.float32)
        x = x + attn

        # Conv module: LN -> pw-conv (split val/gate GLU) -> dwconv -> BN ->
        # SiLU -> pw-conv
        hn = layernorm(x, "conv_ln_g", "conv_ln_b")
        val = dense(hn, "pw_val_w", "pw_val_b")
        gate = dense(hn, "pw_gate_w", "pw_gate_b")
        g = val * sigmoid(gate)                                  # GLU(dim=channel)
        pad_ref[pad:pad + T, :] = g                              # zero-padded window
        dw = p("dw_w")                                           # (K, D)
        acc = jnp.zeros((T, D), jnp.float32)
        for kk in range(K):                                      # static taps
            acc = acc + pad_ref[kk:kk + T, :] * dw[kk:kk + 1, :]
        y = acc + p("dw_b")
        y = y * p("bn_scale") + p("bn_shift")  # BatchNorm1d (eval, init stats)
        y = silu(y)
        y = dense(y, "pw2_w", "pw2_b")
        x = x + y

        # FFN module 2 (half-step residual)
        h = layernorm(x, "ffn2_ln_g", "ffn2_ln_b")
        h = silu(dense(h, "ffn2_w1", "ffn2_b1"))
        h = dense(h, "ffn2_w2", "ffn2_b2")
        x = x + 0.5 * h

        x = layernorm(x, "final_ln_g", "final_ln_b")

    # ---- Pool (mean + max over time) + neck (option-D) + heads ----
    pooled = (jnp.mean(x, axis=0, keepdims=True)
              + jnp.max(x, axis=0, keepdims=True))               # (1, D)
    h = (jnp.dot(pooled, NP["neck_w1"][...], preferred_element_type=jnp.float32)
         + NP["neck_b1"][...])
    h = h * NP["neck_bn_scale"][...] + NP["neck_bn_shift"][...]  # BN (eval, init)
    h = jnp.where(h >= 0.0, h, NP["neck_prelu_a"][...] * h)      # PReLU
    emb = (jnp.dot(h, NP["neck_w2"][...], preferred_element_type=jnp.float32)
           + NP["neck_b2"][...])                                 # (1, E)
    emb_ref[0] = emb
    m = jnp.sum(emb * emb, axis=-1, keepdims=True) * inv_e       # (1, 1)
    mach_ref[0] = m * NP["machine_w"][...] + NP["machine_b"][...]
    sec_ref[0] = jnp.dot(emb, NP["section_w"][...],
                         preferred_element_type=jnp.float32)     # (1, out_dim)


def pallas_asd_conformer(frames, cos_w, sin_w, fb, kp, *, cfg):
    B, T, n_fft = frames.shape
    D = cfg["n_mels"]
    K = cfg["depthwise_conv_kernel_size"]
    E = cfg["embedding_size"]
    O = cfg["out_dim"]
    n_layers = cfg["num_blocks"]
    pad = (K - 1) // 2
    Tp = T + 2 * pad

    layer_arrays = [kp["layer"][name] for name in LAYER_PARAM_NAMES]
    neck_arrays = [kp[name] for name in NECK_PARAM_NAMES]

    def const_map(ndim):
        return lambda b, _n=ndim: (0,) * _n

    in_specs = [pl.BlockSpec((1, T, n_fft), lambda b: (b, 0, 0)),
                pl.BlockSpec(cos_w.shape, const_map(cos_w.ndim)),
                pl.BlockSpec(sin_w.shape, const_map(sin_w.ndim)),
                pl.BlockSpec(fb.shape, const_map(fb.ndim))]
    in_specs += [pl.BlockSpec(a.shape, const_map(a.ndim)) for a in layer_arrays]
    in_specs += [pl.BlockSpec(a.shape, const_map(a.ndim)) for a in neck_arrays]

    out_specs = (pl.BlockSpec((1, 1, E), lambda b: (b, 0, 0)),
                 pl.BlockSpec((1, 1, 1), lambda b: (b, 0, 0)),
                 pl.BlockSpec((1, 1, O), lambda b: (b, 0, 0)))
    out_shape = (jax.ShapeDtypeStruct((B, 1, E), jnp.float32),
                 jax.ShapeDtypeStruct((B, 1, 1), jnp.float32),
                 jax.ShapeDtypeStruct((B, 1, O), jnp.float32))

    kernel = functools.partial(
        _asd_conformer_kernel, num_layers=n_layers,
        num_heads=cfg["num_heads"], kernel_size=K, inv_e=1.0 / E)

    emb, mach, sec = pl.pallas_call(
        kernel,
        grid=(B,),
        in_specs=in_specs,
        out_specs=out_specs,
        out_shape=out_shape,
        scratch_shapes=[pltpu.VMEM((Tp, D), jnp.float32)],
        compiler_params=pltpu.CompilerParams(
            dimension_semantics=("parallel",)),
    )(frames, cos_w, sin_w, fb, *layer_arrays, *neck_arrays)

    return emb[:, 0, :], mach[:, 0, :], sec[:, 0, :]


# ----------------------------------------------------------------------------
# Frontend constants (Hann-windowed DFT matrices + HTK mel filterbank)
# ----------------------------------------------------------------------------
def mel_filterbank(n_freqs, n_mels, sample_rate, f_min=0.0, f_max=None):
    if f_max is None:
        f_max = sample_rate / 2.0
    all_freqs = jnp.linspace(0.0, sample_rate / 2.0, n_freqs)

    def hz_to_mel(f):
        return 2595.0 * jnp.log10(1.0 + f / 700.0)

    def mel_to_hz(m):
        return 700.0 * (10.0 ** (m / 2595.0) - 1.0)

    m_pts = jnp.linspace(hz_to_mel(jnp.float32(f_min)),
                         hz_to_mel(jnp.float32(f_max)), n_mels + 2)
    f_pts = mel_to_hz(m_pts)
    f_diff = f_pts[1:] - f_pts[:-1]
    slopes = f_pts[None, :] - all_freqs[:, None]          # (n_freqs, n_mels+2)
    down = -slopes[:, :-2] / f_diff[:-1]
    up = slopes[:, 2:] / f_diff[1:]
    return jnp.maximum(0.0, jnp.minimum(down, up))        # (n_freqs, n_mels)


def mel_frontend_constants(cfg):
    n_fft = cfg["n_fft"]
    n_freqs = n_fft // 2 + 1
    n = jnp.arange(n_fft, dtype=jnp.float32)
    win = 0.5 - 0.5 * jnp.cos(2.0 * jnp.pi * n / n_fft)   # periodic Hann
    k = jnp.arange(n_freqs, dtype=jnp.float32)
    ang = 2.0 * jnp.pi * n[:, None] * k[None, :] / n_fft
    cos_w = win[:, None] * jnp.cos(ang)                   # (n_fft, n_freqs)
    sin_w = win[:, None] * jnp.sin(ang)   # NOTE: +sin (magnitude unaffected)
    fb = mel_filterbank(n_freqs, cfg["n_mels"], cfg["sample_rate"])
    return cos_w, sin_w, fb


# ----------------------------------------------------------------------------
# Parameters (deterministic synthetic init)
# ----------------------------------------------------------------------------
def init_params(key, cfg):
    D = cfg["n_mels"]
    F = cfg["num_hidden_units"]
    K = cfg["depthwise_conv_kernel_size"]
    E = cfg["embedding_size"]
    O = cfg["out_dim"]

    keys = iter(jax.random.split(key, 256))

    def lin(fan_in, shape, scale=1.0):
        return (jax.random.normal(next(keys), shape, jnp.float32)
                * (scale / math.sqrt(fan_in)))

    def ones(shape):
        return jnp.ones(shape, jnp.float32)

    def zeros(shape):
        return jnp.zeros(shape, jnp.float32)

    layers = []
    for _ in range(cfg["num_blocks"]):
        layers.append(dict(
            ffn1_ln_g=ones((D,)), ffn1_ln_b=zeros((D,)),
            ffn1_w1=lin(D, (D, F)), ffn1_b1=lin(D, (F,), 0.1),
            ffn1_w2=lin(F, (F, D)), ffn1_b2=lin(F, (D,), 0.1),
            attn_ln_g=ones((D,)), attn_ln_b=zeros((D,)),
            # QKV pre-split (real checkpoints: split in_proj_weight rows + transpose)
            wq=lin(D, (D, D)), bq=lin(D, (D,), 0.1),
            wk=lin(D, (D, D)), bk=lin(D, (D,), 0.1),
            wv=lin(D, (D, D)), bv=lin(D, (D,), 0.1),
            wo=lin(D, (D, D)), bo=lin(D, (D,), 0.1),
            conv_ln_g=ones((D,)), conv_ln_b=zeros((D,)),
            # pointwise conv1 (2D outputs) pre-split into GLU value / gate halves
            pw_val_w=lin(D, (D, D)), pw_val_b=lin(D, (D,), 0.1),
            pw_gate_w=lin(D, (D, D)), pw_gate_b=lin(D, (D,), 0.1),
            dw_w=lin(K, (K, D)), dw_b=lin(K, (D,), 0.1),
            bn_g=ones((D,)), bn_b=zeros((D,)),
            pw2_w=lin(D, (D, D)), pw2_b=lin(D, (D,), 0.1),
            ffn2_ln_g=ones((D,)), ffn2_ln_b=zeros((D,)),
            ffn2_w1=lin(D, (D, F)), ffn2_b1=lin(D, (F,), 0.1),
            ffn2_w2=lin(F, (F, D)), ffn2_b2=lin(F, (D,), 0.1),
            final_ln_g=ones((D,)), final_ln_b=zeros((D,)),
        ))

    return dict(
        layers=layers,
        neck_w1=lin(D, (D, E)), neck_b1=lin(D, (E,), 0.1),
        neck_bn_g=ones((E,)), neck_bn_b=zeros((E,)),
        neck_prelu_a=jnp.asarray(0.25, jnp.float32),
        neck_w2=lin(E, (E, E)), neck_b2=lin(E, (E,), 0.1),
        machine_w=lin(1, (1, 1)), machine_b=lin(1, (1,), 0.1),
        section_w=lin(E, (E, O)),
    )


def _row(v):
    return jnp.asarray(v, jnp.float32).reshape(1, -1)


def prepare_params(params, cfg):
    """Fold attn scale / eval-BN, (1,n) bias rows, stack layers (done once)."""
    D = cfg["n_mels"]
    Dh = D // cfg["num_heads"]
    scale = 1.0 / math.sqrt(Dh)
    bn_eps = 1e-5

    layers = []
    for p in params["layers"]:
        bn_scale = p["bn_g"] / jnp.sqrt(1.0 + bn_eps)   # eval-mode BN, init stats
        bn_shift = p["bn_b"]
        layers.append(dict(
            ffn1_ln_g=_row(p["ffn1_ln_g"]), ffn1_ln_b=_row(p["ffn1_ln_b"]),
            ffn1_w1=p["ffn1_w1"], ffn1_b1=_row(p["ffn1_b1"]),
            ffn1_w2=p["ffn1_w2"], ffn1_b2=_row(p["ffn1_b2"]),
            attn_ln_g=_row(p["attn_ln_g"]), attn_ln_b=_row(p["attn_ln_b"]),
            wq=p["wq"] * scale, bq=_row(p["bq"]) * scale,   # fold 1/sqrt(Dh)
            wk=p["wk"], bk=_row(p["bk"]),
            wv=p["wv"], bv=_row(p["bv"]),
            wo=p["wo"], bo=_row(p["bo"]),
            conv_ln_g=_row(p["conv_ln_g"]), conv_ln_b=_row(p["conv_ln_b"]),
            pw_val_w=p["pw_val_w"], pw_val_b=_row(p["pw_val_b"]),
            pw_gate_w=p["pw_gate_w"], pw_gate_b=_row(p["pw_gate_b"]),
            dw_w=p["dw_w"], dw_b=_row(p["dw_b"]),
            bn_scale=_row(bn_scale), bn_shift=_row(bn_shift),
            pw2_w=p["pw2_w"], pw2_b=_row(p["pw2_b"]),
            ffn2_ln_g=_row(p["ffn2_ln_g"]), ffn2_ln_b=_row(p["ffn2_ln_b"]),
            ffn2_w1=p["ffn2_w1"], ffn2_b1=_row(p["ffn2_b1"]),
            ffn2_w2=p["ffn2_w2"], ffn2_b2=_row(p["ffn2_b2"]),
            final_ln_g=_row(p["final_ln_g"]), final_ln_b=_row(p["final_ln_b"]),
        ))

    stacked = {name: jnp.stack([lp[name] for lp in layers], axis=0)
               for name in LAYER_PARAM_NAMES}

    return dict(
        layer=stacked,
        neck_w1=params["neck_w1"], neck_b1=_row(params["neck_b1"]),
        neck_bn_scale=_row(params["neck_bn_g"] / jnp.sqrt(1.0 + bn_eps)),
        neck_bn_shift=_row(params["neck_bn_b"]),
        neck_prelu_a=jnp.reshape(params["neck_prelu_a"], (1, 1)).astype(jnp.float32),
        neck_w2=params["neck_w2"], neck_b2=_row(params["neck_b2"]),
        machine_w=jnp.reshape(params["machine_w"], (1, 1)),
        machine_b=jnp.reshape(params["machine_b"], (1, 1)),
        section_w=params["section_w"],
    )


# ----------------------------------------------------------------------------
# Full ASDConformer forward
# ----------------------------------------------------------------------------
def asd_conformer_forward(audio, kparams, consts, *, cfg):
    B, L = audio.shape
    n_fft, hop = cfg["n_fft"], cfg["hop_length"]
    cos_w, sin_w, fb = consts

    # MelSpectrogram framing (center=True reflect pad, periodic Hann handled
    # inside the kernel via the windowed DFT matrices).
    pad = n_fft // 2
    xp = jnp.pad(audio, ((0, 0), (pad, pad)), mode="reflect")
    n_frames = 1 + L // hop
    idx = jnp.arange(n_frames)[:, None] * hop + jnp.arange(n_fft)[None, :]
    frames = xp[:, idx]                                   # (B, T, n_fft)

    # add_header=False, use_position_encode=False (reference defaults).
    # lengths == full sequence length -> no key_padding_mask inside attention.
    emb, machine, section = pallas_asd_conformer(
        frames, cos_w, sin_w, fb, kparams, cfg=cfg)
    return {"embedding": emb, "machine": machine, "section": section}


# ----------------------------------------------------------------------------
if __name__ == "__main__":
    cfg = dict(
        n_mels=32, num_blocks=2, num_heads=4, num_hidden_units=64,
        depthwise_conv_kernel_size=31, embedding_size=128, out_dim=6,
        sample_rate=16000, n_fft=256, hop_length=64,
    )
    key = jax.random.PRNGKey(0)
    k_audio, k_params = jax.random.split(key)
    audio = jax.random.normal(k_audio, (2, 1024), jnp.float32)   # (B, L) waveform
    raw_params = init_params(k_params, cfg)
    kparams = prepare_params(raw_params, cfg)                    # prep once, outside jit
    consts = mel_frontend_constants(cfg)

    fwd = jax.jit(functools.partial(asd_conformer_forward, cfg=cfg))
    out = fwd(audio, kparams, consts)
    out = jax.tree_util.tree_map(jax.block_until_ready, out)

    assert out["embedding"].shape == (2, cfg["embedding_size"])
    assert out["machine"].shape == (2, 1)
    assert out["section"].shape == (2, cfg["out_dim"])
    assert all(bool(jnp.all(jnp.isfinite(v))) for v in out.values())
    print("KERNEL_OK")
</pallas_src>

<mosaic_0001>
module attributes {stable_mosaic.version = 11 : i64} {
  func.func @_asd_conformer_kernel(%arg0: i32, %arg1: memref<1x17x256xf32, #tpu.memory_space<vmem>>, %arg2: memref<256x129xf32, #tpu.memory_space<vmem>>, %arg3: memref<256x129xf32, #tpu.memory_space<vmem>>, %arg4: memref<129x32xf32, #tpu.memory_space<vmem>>, %arg5: memref<2x1x32xf32, #tpu.memory_space<vmem>>, %arg6: memref<2x1x32xf32, #tpu.memory_space<vmem>>, %arg7: memref<2x32x64xf32, #tpu.memory_space<vmem>>, %arg8: memref<2x1x64xf32, #tpu.memory_space<vmem>>, %arg9: memref<2x64x32xf32, #tpu.memory_space<vmem>>, %arg10: memref<2x1x32xf32, #tpu.memory_space<vmem>>, %arg11: memref<2x1x32xf32, #tpu.memory_space<vmem>>, %arg12: memref<2x1x32xf32, #tpu.memory_space<vmem>>, %arg13: memref<2x32x32xf32, #tpu.memory_space<vmem>>, %arg14: memref<2x1x32xf32, #tpu.memory_space<vmem>>, %arg15: memref<2x32x32xf32, #tpu.memory_space<vmem>>, %arg16: memref<2x1x32xf32, #tpu.memory_space<vmem>>, %arg17: memref<2x32x32xf32, #tpu.memory_space<vmem>>, %arg18: memref<2x1x32xf32, #tpu.memory_space<vmem>>, %arg19: memref<2x32x32xf32, #tpu.memory_space<vmem>>, %arg20: memref<2x1x32xf32, #tpu.memory_space<vmem>>, %arg21: memref<2x1x32xf32, #tpu.memory_space<vmem>>, %arg22: memref<2x1x32xf32, #tpu.memory_space<vmem>>, %arg23: memref<2x32x32xf32, #tpu.memory_space<vmem>>, %arg24: memref<2x1x32xf32, #tpu.memory_space<vmem>>, %arg25: memref<2x32x32xf32, #tpu.memory_space<vmem>>, %arg26: memref<2x1x32xf32, #tpu.memory_space<vmem>>, %arg27: memref<2x31x32xf32, #tpu.memory_space<vmem>>, %arg28: memref<2x1x32xf32, #tpu.memory_space<vmem>>, %arg29: memref<2x1x32xf32, #tpu.memory_space<vmem>>, %arg30: memref<2x1x32xf32, #tpu.memory_space<vmem>>, %arg31: memref<2x32x32xf32, #tpu.memory_space<vmem>>, %arg32: memref<2x1x32xf32, #tpu.memory_space<vmem>>, %arg33: memref<2x1x32xf32, #tpu.memory_space<vmem>>, %arg34: memref<2x1x32xf32, #tpu.memory_space<vmem>>, %arg35: memref<2x32x64xf32, #tpu.memory_space<vmem>>, %arg36: memref<2x1x64xf32, #tpu.memory_space<vmem>>, %arg37: memref<2x64x32xf32, #tpu.memory_space<vmem>>, %arg38: memref<2x1x32xf32, #tpu.memory_space<vmem>>, %arg39: memref<2x1x32xf32, #tpu.memory_space<vmem>>, %arg40: memref<2x1x32xf32, #tpu.memory_space<vmem>>, %arg41: memref<32x128xf32, #tpu.memory_space<vmem>>, %arg42: memref<1x128xf32, #tpu.memory_space<vmem>>, %arg43: memref<1x128xf32, #tpu.memory_space<vmem>>, %arg44: memref<1x128xf32, #tpu.memory_space<vmem>>, %arg45: memref<1x1xf32, #tpu.memory_space<vmem>>, %arg46: memref<128x128xf32, #tpu.memory_space<vmem>>, %arg47: memref<1x128xf32, #tpu.memory_space<vmem>>, %arg48: memref<1x1xf32, #tpu.memory_space<vmem>>, %arg49: memref<1x1xf32, #tpu.memory_space<vmem>>, %arg50: memref<128x6xf32, #tpu.memory_space<vmem>>, %arg51: memref<1x1x128xf32, #tpu.memory_space<vmem>>, %arg52: memref<1x1x1xf32, #tpu.memory_space<vmem>>, %arg53: memref<1x1x6xf32, #tpu.memory_space<vmem>>, %arg54: memref<47x32xf32, #tpu.memory_space<vmem>>) attributes {dimension_semantics = [#tpu.dimension_semantics<parallel>], iteration_bounds = array<i64: 2>, scalar_prefetch = 0 : i64, scratch_operands = 1 : i64, tpu.core_type = #tpu.core_type<tc>, window_params = [{transform_indices = @transform_0, window_bounds = array<i64: 1, 17, 256>}, {pipeline_mode = #tpu.pipeline_mode<synchronous>, transform_indices = @transform_1, window_bounds = array<i64: 256, 129>}, {pipeline_mode = #tpu.pipeline_mode<synchronous>, transform_indices = @transform_2, window_bounds = array<i64: 256, 129>}, {pipeline_mode = #tpu.pipeline_mode<synchronous>, transform_indices = @transform_3, window_bounds = array<i64: 129, 32>}, {pipeline_mode = #tpu.pipeline_mode<synchronous>, transform_indices = @transform_4, window_bounds = array<i64: 2, 1, 32>}, {pipeline_mode = #tpu.pipeline_mode<synchronous>, transform_indices = @transform_5, window_bounds = array<i64: 2, 1, 32>}, {pipeline_mode = #tpu.pipeline_mode<synchronous>, transform_indices = @transform_6, window_bounds = array<i64: 2, 32, 64>}, {pipeline_mode = #tpu.pipeline_mode<synchronous>, transform_indices = @transform_7, window_bounds = array<i64: 2, 1, 64>}, {pipeline_mode = #tpu.pipeline_mode<synchronous>, transform_indices = @transform_8, window_bounds = array<i64: 2, 64, 32>}, {pipeline_mode = #tpu.pipeline_mode<synchronous>, transform_indices = @transform_9, window_bounds = array<i64: 2, 1, 32>}, {pipeline_mode = #tpu.pipeline_mode<synchronous>, transform_indices = @transform_10, window_bounds = array<i64: 2, 1, 32>}, {pipeline_mode = #tpu.pipeline_mode<synchronous>, transform_indices = @transform_11, window_bounds = array<i64: 2, 1, 32>}, {pipeline_mode = #tpu.pipeline_mode<synchronous>, transform_indices = @transform_12, window_bounds = array<i64: 2, 32, 32>}, {pipeline_mode = #tpu.pipeline_mode<synchronous>, transform_indices = @transform_13, window_bounds = array<i64: 2, 1, 32>}, {pipeline_mode = #tpu.pipeline_mode<synchronous>, transform_indices = @transform_14, window_bounds = array<i64: 2, 32, 32>}, {pipeline_mode = #tpu.pipeline_mode<synchronous>, transform_indices = @transform_15, window_bounds = array<i64: 2, 1, 32>}, {pipeline_mode = #tpu.pipeline_mode<synchronous>, transform_indices = @transform_16, window_bounds = array<i64: 2, 32, 32>}, {pipeline_mode = #tpu.pipeline_mode<synchronous>, transform_indices = @transform_17, window_bounds = array<i64: 2, 1, 32>}, {pipeline_mode = #tpu.pipeline_mode<synchronous>, transform_indices = @transform_18, window_bounds = array<i64: 2, 32, 32>}, {pipeline_mode = #tpu.pipeline_mode<synchronous>, transform_indices = @transform_19, window_bounds = array<i64: 2, 1, 32>}, {pipeline_mode = #tpu.pipeline_mode<synchronous>, transform_indices = @transform_20, window_bounds = array<i64: 2, 1, 32>}, {pipeline_mode = #tpu.pipeline_mode<synchronous>, transform_indices = @transform_21, window_bounds = array<i64: 2, 1, 32>}, {pipeline_mode = #tpu.pipeline_mode<synchronous>, transform_indices = @transform_22, window_bounds = array<i64: 2, 32, 32>}, {pipeline_mode = #tpu.pipeline_mode<synchronous>, transform_indices = @transform_23, window_bounds = array<i64: 2, 1, 32>}, {pipeline_mode = #tpu.pipeline_mode<synchronous>, transform_indices = @transform_24, window_bounds = array<i64: 2, 32, 32>}, {pipeline_mode = #tpu.pipeline_mode<synchronous>, transform_indices = @transform_25, window_bounds = array<i64: 2, 1, 32>}, {pipeline_mode = #tpu.pipeline_mode<synchronous>, transform_indices = @transform_26, window_bounds = array<i64: 2, 31, 32>}, {pipeline_mode = #tpu.pipeline_mode<synchronous>, transform_indices = @transform_27, window_bounds = array<i64: 2, 1, 32>}, {pipeline_mode = #tpu.pipeline_mode<synchronous>, transform_indices = @transform_28, window_bounds = array<i64: 2, 1, 32>}, {pipeline_mode = #tpu.pipeline_mode<synchronous>, transform_indices = @transform_29, window_bounds = array<i64: 2, 1, 32>}, {pipeline_mode = #tpu.pipeline_mode<synchronous>, transform_indices = @transform_30, window_bounds = array<i64: 2, 32, 32>}, {pipeline_mode = #tpu.pipeline_mode<synchronous>, transform_indices = @transform_31, window_bounds = array<i64: 2, 1, 32>}, {pipeline_mode = #tpu.pipeline_mode<synchronous>, transform_indices = @transform_32, window_bounds = array<i64: 2, 1, 32>}, {pipeline_mode = #tpu.pipeline_mode<synchronous>, transform_indices = @transform_33, window_bounds = array<i64: 2, 1, 32>}, {pipeline_mode = #tpu.pipeline_mode<synchronous>, transform_indices = @transform_34, window_bounds = array<i64: 2, 32, 64>}, {pipeline_mode = #tpu.pipeline_mode<synchronous>, transform_indices = @transform_35, window_bounds = array<i64: 2, 1, 64>}, {pipeline_mode = #tpu.pipeline_mode<synchronous>, transform_indices = @transform_36, window_bounds = array<i64: 2, 64, 32>}, {pipeline_mode = #tpu.pipeline_mode<synchronous>, transform_indices = @transform_37, window_bounds = array<i64: 2, 1, 32>}, {pipeline_mode = #tpu.pipeline_mode<synchronous>, transform_indices = @transform_38, window_bounds = array<i64: 2, 1, 32>}, {pipeline_mode = #tpu.pipeline_mode<synchronous>, transform_indices = @transform_39, window_bounds = array<i64: 2, 1, 32>}, {pipeline_mode = #tpu.pipeline_mode<synchronous>, transform_indices = @transform_40, window_bounds = array<i64: 32, 128>}, {pipeline_mode = #tpu.pipeline_mode<synchronous>, transform_indices = @transform_41, window_bounds = array<i64: 1, 128>}, {pipeline_mode = #tpu.pipeline_mode<synchronous>, transform_indices = @transform_42, window_bounds = array<i64: 1, 128>}, {pipeline_mode = #tpu.pipeline_mode<synchronous>, transform_indices = @transform_43, window_bounds = array<i64: 1, 128>}, {pipeline_mode = #tpu.pipeline_mode<synchronous>, transform_indices = @transform_44, window_bounds = array<i64: 1, 1>}, {pipeline_mode = #tpu.pipeline_mode<synchronous>, transform_indices = @transform_45, window_bounds = array<i64: 128, 128>}, {pipeline_mode = #tpu.pipeline_mode<synchronous>, transform_indices = @transform_46, window_bounds = array<i64: 1, 128>}, {pipeline_mode = #tpu.pipeline_mode<synchronous>, transform_indices = @transform_47, window_bounds = array<i64: 1, 1>}, {pipeline_mode = #tpu.pipeline_mode<synchronous>, transform_indices = @transform_48, window_bounds = array<i64: 1, 1>}, {pipeline_mode = #tpu.pipeline_mode<synchronous>, transform_indices = @transform_49, window_bounds = array<i64: 128, 6>}, {transform_indices = @transform_50, window_bounds = array<i64: 1, 1, 128>}, {transform_indices = @transform_51, window_bounds = array<i64: 1, 1, 1>}, {transform_indices = @transform_52, window_bounds = array<i64: 1, 1, 6>}]} {
    %c0 = arith.constant 0 : index
    %c0_0 = arith.constant 0 : index
    %c0_1 = arith.constant 0 : index
    %0 = vector.load %arg1[%c0, %c0_0, %c0_1] : memref<1x17x256xf32, #tpu.memory_space<vmem>>, vector<1x17x256xf32>
    %1 = vector.shape_cast %0 : vector<1x17x256xf32> to vector<17x256xf32>
    %c0_2 = arith.constant 0 : index
    %c0_3 = arith.constant 0 : index
    %2 = vector.load %arg2[%c0_2, %c0_3] : memref<256x129xf32, #tpu.memory_space<vmem>>, vector<256x129xf32>
    %cst = arith.constant dense<0.000000e+00> : vector<17x129xf32>
    %3 = tpu.matmul %1, %2, %cst {dimension_numbers = #tpu.dot_dimension_numbers<[1], [0], [0], [1], [0, 0, 1, 1], [], []>} : vector<17x256xf32>, vector<256x129xf32>, vector<17x129xf32> -> vector<17x129xf32>
    %c0_4 = arith.constant 0 : index
    %c0_5 = arith.constant 0 : index
    %4 = vector.load %arg3[%c0_4, %c0_5] : memref<256x129xf32, #tpu.memory_space<vmem>>, vector<256x129xf32>
    %cst_6 = arith.constant dense<0.000000e+00> : vector<17x129xf32>
    %5 = tpu.matmul %1, %4, %cst_6 {dimension_numbers = #tpu.dot_dimension_numbers<[1], [0], [0], [1], [0, 0, 1, 1], [], []>} : vector<17x256xf32>, vector<256x129xf32>, vector<17x129xf32> -> vector<17x129xf32>
    %6 = arith.mulf %3, %3 : vector<17x129xf32>
    %7 = arith.mulf %5, %5 : vector<17x129xf32>
    %8 = arith.addf %6, %7 : vector<17x129xf32>
    %9 = math.sqrt %8 : vector<17x129xf32>
    %c0_7 = arith.constant 0 : index
    %c0_8 = arith.constant 0 : index
    %10 = vector.load %arg4[%c0_7, %c0_8] : memref<129x32xf32, #tpu.memory_space<vmem>>, vector<129x32xf32>
    %cst_9 = arith.constant dense<0.000000e+00> : vector<17x32xf32>
    %11 = tpu.matmul %9, %10, %cst_9 {dimension_numbers = #tpu.dot_dimension_numbers<[1], [0], [0], [1], [0, 0, 1, 1], [], []>} : vector<17x129xf32>, vector<129x32xf32>, vector<17x32xf32> -> vector<17x32xf32>
    %cst_10 = arith.constant 0.000000e+00 : f32
    %12 = vector.broadcast %cst_10 : f32 to vector<47x32xf32>
    %c0_11 = arith.constant 0 : index
    %c0_12 = arith.constant 0 : index
    %13 = vector.load %arg54[%c0_11, %c0_12] : memref<47x32xf32, #tpu.memory_space<vmem>>, vector<47x32xf32>
    tpu.vector_store %arg54[%c0_11, %c0_12], %12 {strides = array<i32>} : memref<47x32xf32, #tpu.memory_space<vmem>>, vector<47x32xf32>,
    %cst_13 = arith.constant dense<0.000000e+00> : vector<17xf32>
    %14 = vector.multi_reduction <add>, %11, %cst_13 [1] : vector<17x32xf32> to vector<17xf32>
    %15 = vector.shape_cast %14 : vector<17xf32> to vector<17x1xf32>
    %cst_14 = arith.constant 3.200000e+01 : f32
    %16 = vector.broadcast %cst_14 : f32 to vector<17x1xf32>
    %17 = arith.divf %15, %16 : vector<17x1xf32>
    %18 = vector.broadcast %17 : vector<17x1xf32> to vector<17x32xf32>
    %19 = arith.subf %11, %18 : vector<17x32xf32>
    %20 = arith.mulf %19, %19 : vector<17x32xf32>
    %cst_15 = arith.constant dense<0.000000e+00> : vector<17xf32>
    %21 = vector.multi_reduction <add>, %20, %cst_15 [1] : vector<17x32xf32> to vector<17xf32>
    %22 = vector.shape_cast %21 : vector<17xf32> to vector<17x1xf32>
    %cst_16 = arith.constant 3.200000e+01 : f32
    %23 = vector.broadcast %cst_16 : f32 to vector<17x1xf32>
    %24 = arith.divf %22, %23 : vector<17x1xf32>
    %cst_17 = arith.constant 9.99999974E-6 : f32
    %25 = vector.broadcast %cst_17 : f32 to vector<17x1xf32>
    %26 = arith.addf %24, %25 : vector<17x1xf32>
    %27 = math.rsqrt %26 : vector<17x1xf32>
    %28 = vector.broadcast %27 : vector<17x1xf32> to vector<17x32xf32>
    %29 = arith.mulf %19, %28 : vector<17x32xf32>
    %c0_18 = arith.constant 0 : index
    %c0_19 = arith.constant 0 : index
    %c0_20 = arith.constant 0 : index
    %30 = vector.load %arg5[%c0_18, %c0_19, %c0_20] : memref<2x1x32xf32, #tpu.memory_space<vmem>>, vector<1x1x32xf32>
    %31 = vector.shape_cast %30 : vector<1x1x32xf32> to vector<1x32xf32>
    %32 = vector.broadcast %31 : vector<1x32xf32> to vector<17x32xf32>
    %33 = arith.mulf %29, %32 : vector<17x32xf32>
    %c0_21 = arith.constant 0 : index
    %c0_22 = arith.constant 0 : index
    %c0_23 = arith.constant 0 : index
    %34 = vector.load %arg6[%c0_21, %c0_22, %c0_23] : memref<2x1x32xf32, #tpu.memory_space<vmem>>, vector<1x1x32xf32>
    %35 = vector.shape_cast %34 : vector<1x1x32xf32> to vector<1x32xf32>
    %36 = vector.broadcast %35 : vector<1x32xf32> to vector<17x32xf32>
    %37 = arith.addf %33, %36 : vector<17x32xf32>
    %c0_24 = arith.constant 0 : index
    %c0_25 = arith.constant 0 : index
    %c0_26 = arith.constant 0 : index
    %38 = vector.load %arg7[%c0_24, %c0_25, %c0_26] : memref<2x32x64xf32, #tpu.memory_space<vmem>>, vector<1x32x64xf32>
    %39 = vector.shape_cast %38 : vector<1x32x64xf32> to vector<32x64xf32>
    %cst_27 = arith.constant dense<0.000000e+00> : vector<17x64xf32>
    %40 = tpu.matmul %37, %39, %cst_27 {dimension_numbers = #tpu.dot_dimension_numbers<[1], [0], [0], [1], [0, 0, 1, 1], [], []>} : vector<17x32xf32>, vector<32x64xf32>, vector<17x64xf32> -> vector<17x64xf32>
    %c0_28 = arith.constant 0 : index
    %c0_29 = arith.constant 0 : index
    %c0_30 = arith.constant 0 : index
    %41 = vector.load %arg8[%c0_28, %c0_29, %c0_30] : memref<2x1x64xf32, #tpu.memory_space<vmem>>, vector<1x1x64xf32>
    %42 = vector.shape_cast %41 : vector<1x1x64xf32> to vector<1x64xf32>
    %43 = vector.broadcast %42 : vector<1x64xf32> to vector<17x64xf32>
    %44 = arith.addf %40, %43 : vector<17x64xf32>
    %cst_31 = arith.constant 0.000000e+00 : f32
    %45 = vector.broadcast %cst_31 : f32 to vector<17x64xf32>
    %46 = arith.subf %45, %44 : vector<17x64xf32>
    %47 = math.exp %46 : vector<17x64xf32>
    %cst_32 = arith.constant 1.000000e+00 : f32
    %48 = vector.broadcast %cst_32 : f32 to vector<17x64xf32>
    %49 = arith.addf %48, %47 : vector<17x64xf32>
    %cst_33 = arith.constant 1.000000e+00 : f32
    %50 = vector.broadcast %cst_33 : f32 to vector<17x64xf32>
    %51 = arith.divf %50, %49 : vector<17x64xf32>
    %52 = arith.mulf %44, %51 : vector<17x64xf32>
    %c0_34 = arith.constant 0 : index
    %c0_35 = arith.constant 0 : index
    %c0_36 = arith.constant 0 : index
    %53 = vector.load %arg9[%c0_34, %c0_35, %c0_36] : memref<2x64x32xf32, #tpu.memory_space<vmem>>, vector<1x64x32xf32>
    %54 = vector.shape_cast %53 : vector<1x64x32xf32> to vector<64x32xf32>
    %cst_37 = arith.constant dense<0.000000e+00> : vector<17x32xf32>
    %55 = tpu.matmul %52, %54, %cst_37 {dimension_numbers = #tpu.dot_dimension_numbers<[1], [0], [0], [1], [0, 0, 1, 1], [], []>} : vector<17x64xf32>, vector<64x32xf32>, vector<17x32xf32> -> vector<17x32xf32>
    %c0_38 = arith.constant 0 : index
    %c0_39 = arith.constant 0 : index
    %c0_40 = arith.constant 0 : index
    %56 = vector.load %arg10[%c0_38, %c0_39, %c0_40] : memref<2x1x32xf32, #tpu.memory_space<vmem>>, vector<1x1x32xf32>
    %57 = vector.shape_cast %56 : vector<1x1x32xf32> to vector<1x32xf32>
    %58 = vector.broadcast %57 : vector<1x32xf32> to vector<17x32xf32>
    %59 = arith.addf %55, %58 : vector<17x32xf32>
    %cst_41 = arith.constant 5.000000e-01 : f32
    %60 = vector.broadcast %cst_41 : f32 to vector<17x32xf32>
    %61 = arith.mulf %60, %59 : vector<17x32xf32>
    %62 = arith.addf %11, %61 : vector<17x32xf32>
    %cst_42 = arith.constant dense<0.000000e+00> : vector<17xf32>
    %63 = vector.multi_reduction <add>, %62, %cst_42 [1] : vector<17x32xf32> to vector<17xf32>
    %64 = vector.shape_cast %63 : vector<17xf32> to vector<17x1xf32>
    %cst_43 = arith.constant 3.200000e+01 : f32
    %65 = vector.broadcast %cst_43 : f32 to vector<17x1xf32>
    %66 = arith.divf %64, %65 : vector<17x1xf32>
    %67 = vector.broadcast %66 : vector<17x1xf32> to vector<17x32xf32>
    %68 = arith.subf %62, %67 : vector<17x32xf32>
    %69 = arith.mulf %68, %68 : vector<17x32xf32>
    %cst_44 = arith.constant dense<0.000000e+00> : vector<17xf32>
    %70 = vector.multi_reduction <add>, %69, %cst_44 [1] : vector<17x32xf32> to vector<17xf32>
    %71 = vector.shape_cast %70 : vector<17xf32> to vector<17x1xf32>
    %cst_45 = arith.constant 3.200000e+01 : f32
    %72 = vector.broadcast %cst_45 : f32 to vector<17x1xf32>
    %73 = arith.divf %71, %72 : vector<17x1xf32>
    %cst_46 = arith.constant 9.99999974E-6 : f32
    %74 = vector.broadcast %cst_46 : f32 to vector<17x1xf32>
    %75 = arith.addf %73, %74 : vector<17x1xf32>
    %76 = math.rsqrt %75 : vector<17x1xf32>
    %77 = vector.broadcast %76 : vector<17x1xf32> to vector<17x32xf32>
    %78 = arith.mulf %68, %77 : vector<17x32xf32>
    %c0_47 = arith.constant 0 : index
    %c0_48 = arith.constant 0 : index
    %c0_49 = arith.constant 0 : index
    %79 = vector.load %arg11[%c0_47, %c0_48, %c0_49] : memref<2x1x32xf32, #tpu.memory_space<vmem>>, vector<1x1x32xf32>
    %80 = vector.shape_cast %79 : vector<1x1x32xf32> to vector<1x32xf32>
    %81 = vector.broadcast %80 : vector<1x32xf32> to vector<17x32xf32>
    %82 = arith.mulf %78, %81 : vector<17x32xf32>
    %c0_50 = arith.constant 0 : index
    %c0_51 = arith.constant 0 : index
    %c0_52 = arith.constant 0 : index
    %83 = vector.load %arg12[%c0_50, %c0_51, %c0_52] : memref<2x1x32xf32, #tpu.memory_space<vmem>>, vector<1x1x32xf32>
    %84 = vector.shape_cast %83 : vector<1x1x32xf32> to vector<1x32xf32>
    %85 = vector.broadcast %84 : vector<1x32xf32> to vector<17x32xf32>
    %86 = arith.addf %82, %85 : vector<17x32xf32>
    %c0_53 = arith.constant 0 : index
    %c0_54 = arith.constant 0 : index
    %c0_55 = arith.constant 0 : index
    %87 = vector.load %arg13[%c0_53, %c0_54, %c0_55] : memref<2x32x32xf32, #tpu.memory_space<vmem>>, vector<1x32x32xf32>
    %88 = vector.shape_cast %87 : vector<1x32x32xf32> to vector<32x32xf32>
    %cst_56 = arith.constant dense<0.000000e+00> : vector<17x32xf32>
    %89 = tpu.matmul %86, %88, %cst_56 {dimension_numbers = #tpu.dot_dimension_numbers<[1], [0], [0], [1], [0, 0, 1, 1], [], []>} : vector<17x32xf32>, vector<32x32xf32>, vector<17x32xf32> -> vector<17x32xf32>
    %c0_57 = arith.constant 0 : index
    %c0_58 = arith.constant 0 : index
    %c0_59 = arith.constant 0 : index
    %90 = vector.load %arg14[%c0_57, %c0_58, %c0_59] : memref<2x1x32xf32, #tpu.memory_space<vmem>>, vector<1x1x32xf32>
    %91 = vector.shape_cast %90 : vector<1x1x32xf32> to vector<1x32xf32>
    %92 = vector.broadcast %91 : vector<1x32xf32> to vector<17x32xf32>
    %93 = arith.addf %89, %92 : vector<17x32xf32>
    %c0_60 = arith.constant 0 : index
    %c0_61 = arith.constant 0 : index
    %c0_62 = arith.constant 0 : index
    %94 = vector.load %arg15[%c0_60, %c0_61, %c0_62] : memref<2x32x32xf32, #tpu.memory_space<vmem>>, vector<1x32x32xf32>
    %95 = vector.shape_cast %94 : vector<1x32x32xf32> to vector<32x32xf32>
    %cst_63 = arith.constant dense<0.000000e+00> : vector<17x32xf32>
    %96 = tpu.matmul %86, %95, %cst_63 {dimension_numbers = #tpu.dot_dimension_numbers<[1], [0], [0], [1], [0, 0, 1, 1], [], []>} : vector<17x32xf32>, vector<32x32xf32>, vector<17x32xf32> -> vector<17x32xf32>
    %c0_64 = arith.constant 0 : index
    %c0_65 = arith.constant 0 : index
    %c0_66 = arith.constant 0 : index
    %97 = vector.load %arg16[%c0_64, %c0_65, %c0_66] : memref<2x1x32xf32, #tpu.memory_space<vmem>>, vector<1x1x32xf32>
    %98 = vector.shape_cast %97 : vector<1x1x32xf32> to vector<1x32xf32>
    %99 = vector.broadcast %98 : vector<1x32xf32> to vector<17x32xf32>
    %100 = arith.addf %96, %99 : vector<17x32xf32>
    %c0_67 = arith.constant 0 : index
    %c0_68 = arith.constant 0 : index
    %c0_69 = arith.constant 0 : index
    %101 = vector.load %arg17[%c0_67, %c0_68, %c0_69] : memref<2x32x32xf32, #tpu.memory_space<vmem>>, vector<1x32x32xf32>
    %102 = vector.shape_cast %101 : vector<1x32x32xf32> to vector<32x32xf32>
    %cst_70 = arith.constant dense<0.000000e+00> : vector<17x32xf32>
    %103 = tpu.matmul %86, %102, %cst_70 {dimension_numbers = #tpu.dot_dimension_numbers<[1], [0], [0], [1], [0, 0, 1, 1], [], []>} : vector<17x32xf32>, vector<32x32xf32>, vector<17x32xf32> -> vector<17x32xf32>
    %c0_71 = arith.constant 0 : index
    %c0_72 = arith.constant 0 : index
    %c0_73 = arith.constant 0 : index
    %104 = vector.load %arg18[%c0_71, %c0_72, %c0_73] : memref<2x1x32xf32, #tpu.memory_space<vmem>>, vector<1x1x32xf32>
    %105 = vector.shape_cast %104 : vector<1x1x32xf32> to vector<1x32xf32>
    %106 = vector.broadcast %105 : vector<1x32xf32> to vector<17x32xf32>
    %107 = arith.addf %103, %106 : vector<17x32xf32>
    %c0_74 = arith.constant 0 : index
    %c0_75 = arith.constant 0 : index
    %c0_76 = arith.constant 0 : index
    %108 = vector.load %arg19[%c0_74, %c0_75, %c0_76] : memref<2x32x32xf32, #tpu.memory_space<vmem>>, vector<1x32x32xf32>
    %109 = vector.shape_cast %108 : vector<1x32x32xf32> to vector<32x32xf32>
    %c0_77 = arith.constant 0 : index
    %c0_78 = arith.constant 0 : index
    %c0_79 = arith.constant 0 : index
    %110 = vector.load %arg20[%c0_77, %c0_78, %c0_79] : memref<2x1x32xf32, #tpu.memory_space<vmem>>, vector<1x1x32xf32>
    %111 = vector.shape_cast %110 : vector<1x1x32xf32> to vector<1x32xf32>
    %112 = vector.extract_strided_slice %93 {offsets = [0, 0], sizes = [17, 8], strides = [1, 1]} : vector<17x32xf32> to vector<17x8xf32>
    %113 = vector.extract_strided_slice %100 {offsets = [0, 0], sizes = [17, 8], strides = [1, 1]} : vector<17x32xf32> to vector<17x8xf32>
    %114 = vector.extract_strided_slice %107 {offsets = [0, 0], sizes = [17, 8], strides = [1, 1]} : vector<17x32xf32> to vector<17x8xf32>
    %cst_80 = arith.constant dense<0.000000e+00> : vector<17x17xf32>
    %115 = tpu.matmul %112, %113, %cst_80 {dimension_numbers = #tpu.dot_dimension_numbers<[1], [1], [0], [0], [0, 0, 1, 0], [], []>} : vector<17x8xf32>, vector<17x8xf32>, vector<17x17xf32> -> vector<17x17xf32>
    %cst_81 = arith.constant dense<0xFF800000> : vector<17xf32>
    %116 = vector.multi_reduction <maximumf>, %115, %cst_81 [1] : vector<17x17xf32> to vector<17xf32>
    %117 = vector.shape_cast %116 : vector<17xf32> to vector<17x1xf32>
    %118 = vector.broadcast %117 : vector<17x1xf32> to vector<17x17xf32>
    %119 = arith.subf %115, %118 : vector<17x17xf32>
    %120 = math.exp %119 : vector<17x17xf32>
    %cst_82 = arith.constant dense<0.000000e+00> : vector<17xf32>
    %121 = vector.multi_reduction <add>, %120, %cst_82 [1] : vector<17x17xf32> to vector<17xf32>
    %122 = vector.shape_cast %121 : vector<17xf32> to vector<17x1xf32>
    %123 = vector.broadcast %122 : vector<17x1xf32> to vector<17x17xf32>
    %124 = arith.divf %120, %123 : vector<17x17xf32>
    %cst_83 = arith.constant dense<0.000000e+00> : vector<17x8xf32>
    %125 = tpu.matmul %124, %114, %cst_83 {dimension_numbers = #tpu.dot_dimension_numbers<[1], [0], [0], [1], [0, 0, 1, 1], [], []>} : vector<17x17xf32>, vector<17x8xf32>, vector<17x8xf32> -> vector<17x8xf32>
    %126 = vector.extract_strided_slice %109 {offsets = [0, 0], sizes = [8, 32], strides = [1, 1]} : vector<32x32xf32> to vector<8x32xf32>
    %cst_84 = arith.constant dense<0.000000e+00> : vector<17x32xf32>
    %127 = tpu.matmul %125, %126, %cst_84 {dimension_numbers = #tpu.dot_dimension_numbers<[1], [0], [0], [1], [0, 0, 1, 1], [], []>} : vector<17x8xf32>, vector<8x32xf32>, vector<17x32xf32> -> vector<17x32xf32>
    %128 = vector.broadcast %111 : vector<1x32xf32> to vector<17x32xf32>
    %129 = arith.addf %128, %127 : vector<17x32xf32>
    %130 = vector.extract_strided_slice %93 {offsets = [0, 8], sizes = [17, 8], strides = [1, 1]} : vector<17x32xf32> to vector<17x8xf32>
    %131 = vector.extract_strided_slice %100 {offsets = [0, 8], sizes = [17, 8], strides = [1, 1]} : vector<17x32xf32> to vector<17x8xf32>
    %132 = vector.extract_strided_slice %107 {offsets = [0, 8], sizes = [17, 8], strides = [1, 1]} : vector<17x32xf32> to vector<17x8xf32>
    %cst_85 = arith.constant dense<0.000000e+00> : vector<17x17xf32>
    %133 = tpu.matmul %130, %131, %cst_85 {dimension_numbers = #tpu.dot_dimension_numbers<[1], [1], [0], [0], [0, 0, 1, 0], [], []>} : vector<17x8xf32>, vector<17x8xf32>, vector<17x17xf32> -> vector<17x17xf32>
    %cst_86 = arith.constant dense<0xFF800000> : vector<17xf32>
    %134 = vector.multi_reduction <maximumf>, %133, %cst_86 [1] : vector<17x17xf32> to vector<17xf32>
    %135 = vector.shape_cast %134 : vector<17xf32> to vector<17x1xf32>
    %136 = vector.broadcast %135 : vector<17x1xf32> to vector<17x17xf32>
    %137 = arith.subf %133, %136 : vector<17x17xf32>
    %138 = math.exp %137 : vector<17x17xf32>
    %cst_87 = arith.constant dense<0.000000e+00> : vector<17xf32>
    %139 = vector.multi_reduction <add>, %138, %cst_87 [1] : vector<17x17xf32> to vector<17xf32>
    %140 = vector.shape_cast %139 : vector<17xf32> to vector<17x1xf32>
    %141 = vector.broadcast %140 : vector<17x1xf32> to vector<17x17xf32>
    %142 = arith.divf %138, %141 : vector<17x17xf32>
    %cst_88 = arith.constant dense<0.000000e+00> : vector<17x8xf32>
    %143 = tpu.matmul %142, %132, %cst_88 {dimension_numbers = #tpu.dot_dimension_numbers<[1], [0], [0], [1], [0, 0, 1, 1], [], []>} : vector<17x17xf32>, vector<17x8xf32>, vector<17x8xf32> -> vector<17x8xf32>
    %144 = vector.extract_strided_slice %109 {offsets = [8, 0], sizes = [8, 32], strides = [1, 1]} : vector<32x32xf32> to vector<8x32xf32>
    %cst_89 = arith.constant dense<0.000000e+00> : vector<17x32xf32>
    %145 = tpu.matmul %143, %144, %cst_89 {dimension_numbers = #tpu.dot_dimension_numbers<[1], [0], [0], [1], [0, 0, 1, 1], [], []>} : vector<17x8xf32>, vector<8x32xf32>, vector<17x32xf32> -> vector<17x32xf32>
    %146 = arith.addf %129, %145 : vector<17x32xf32>
    %147 = vector.extract_strided_slice %93 {offsets = [0, 16], sizes = [17, 8], strides = [1, 1]} : vector<17x32xf32> to vector<17x8xf32>
    %148 = vector.extract_strided_slice %100 {offsets = [0, 16], sizes = [17, 8], strides = [1, 1]} : vector<17x32xf32> to vector<17x8xf32>
    %149 = vector.extract_strided_slice %107 {offsets = [0, 16], sizes = [17, 8], strides = [1, 1]} : vector<17x32xf32> to vector<17x8xf32>
    %cst_90 = arith.constant dense<0.000000e+00> : vector<17x17xf32>
    %150 = tpu.matmul %147, %148, %cst_90 {dimension_numbers = #tpu.dot_dimension_numbers<[1], [1], [0], [0], [0, 0, 1, 0], [], []>} : vector<17x8xf32>, vector<17x8xf32>, vector<17x17xf32> -> vector<17x17xf32>
    %cst_91 = arith.constant dense<0xFF800000> : vector<17xf32>
    %151 = vector.multi_reduction <maximumf>, %150, %cst_91 [1] : vector<17x17xf32> to vector<17xf32>
    %152 = vector.shape_cast %151 : vector<17xf32> to vector<17x1xf32>
    %153 = vector.broadcast %152 : vector<17x1xf32> to vector<17x17xf32>
    %154 = arith.subf %150, %153 : vector<17x17xf32>
    %155 = math.exp %154 : vector<17x17xf32>
    %cst_92 = arith.constant dense<0.000000e+00> : vector<17xf32>
    %156 = vector.multi_reduction <add>, %155, %cst_92 [1] : vector<17x17xf32> to vector<17xf32>
    %157 = vector.shape_cast %156 : vector<17xf32> to vector<17x1xf32>
    %158 = vector.broadcast %157 : vector<17x1xf32> to vector<17x17xf32>
    %159 = arith.divf %155, %158 : vector<17x17xf32>
    %cst_93 = arith.constant dense<0.000000e+00> : vector<17x8xf32>
    %160 = tpu.matmul %159, %149, %cst_93 {dimension_numbers = #tpu.dot_dimension_numbers<[1], [0], [0], [1], [0, 0, 1, 1], [], []>} : vector<17x17xf32>, vector<17x8xf32>, vector<17x8xf32> -> vector<17x8xf32>
    %161 = vector.extract_strided_slice %109 {offsets = [16, 0], sizes = [8, 32], strides = [1, 1]} : vector<32x32xf32> to vector<8x32xf32>
    %cst_94 = arith.constant dense<0.000000e+00> : vector<17x32xf32>
    %162 = tpu.matmul %160, %161, %cst_94 {dimension_numbers = #tpu.dot_dimension_numbers<[1], [0], [0], [1], [0, 0, 1, 1], [], []>} : vector<17x8xf32>, vector<8x32xf32>, vector<17x32xf32> -> vector<17x32xf32>
    %163 = arith.addf %146, %162 : vector<17x32xf32>
    %164 = vector.extract_strided_slice %93 {offsets = [0, 24], sizes = [17, 8], strides = [1, 1]} : vector<17x32xf32> to vector<17x8xf32>
    %165 = vector.extract_strided_slice %100 {offsets = [0, 24], sizes = [17, 8], strides = [1, 1]} : vector<17x32xf32> to vector<17x8xf32>
    %166 = vector.extract_strided_slice %107 {offsets = [0, 24], sizes = [17, 8], strides = [1, 1]} : vector<17x32xf32> to vector<17x8xf32>
    %cst_95 = arith.constant dense<0.000000e+00> : vector<17x17xf32>
    %167 = tpu.matmul %164, %165, %cst_95 {dimension_numbers = #tpu.dot_dimension_numbers<[1], [1], [0], [0], [0, 0, 1, 0], [], []>} : vector<17x8xf32>, vector<17x8xf32>, vector<17x17xf32> -> vector<17x17xf32>
    %cst_96 = arith.constant dense<0xFF800000> : vector<17xf32>
    %168 = vector.multi_reduction <maximumf>, %167, %cst_96 [1] : vector<17x17xf32> to vector<17xf32>
    %169 = vector.shape_cast %168 : vector<17xf32> to vector<17x1xf32>
    %170 = vector.broadcast %169 : vector<17x1xf32> to vector<17x17xf32>
    %171 = arith.subf %167, %170 : vector<17x17xf32>
    %172 = math.exp %171 : vector<17x17xf32>
    %cst_97 = arith.constant dense<0.000000e+00> : vector<17xf32>
    %173 = vector.multi_reduction <add>, %172, %cst_97 [1] : vector<17x17xf32> to vector<17xf32>
    %174 = vector.shape_cast %173 : vector<17xf32> to vector<17x1xf32>
    %175 = vector.broadcast %174 : vector<17x1xf32> to vector<17x17xf32>
    %176 = arith.divf %172, %175 : vector<17x17xf32>
    %cst_98 = arith.constant dense<0.000000e+00> : vector<17x8xf32>
    %177 = tpu.matmul %176, %166, %cst_98 {dimension_numbers = #tpu.dot_dimension_numbers<[1], [0], [0], [1], [0, 0, 1, 1], [], []>} : vector<17x17xf32>, vector<17x8xf32>, vector<17x8xf32> -> vector<17x8xf32>
    %178 = vector.extract_strided_slice %109 {offsets = [24, 0], sizes = [8, 32], strides = [1, 1]} : vector<32x32xf32> to vector<8x32xf32>
    %cst_99 = arith.constant dense<0.000000e+00> : vector<17x32xf32>
    %179 = tpu.matmul %177, %178, %cst_99 {dimension_numbers = #tpu.dot_dimension_numbers<[1], [0], [0], [1], [0, 0, 1, 1], [], []>} : vector<17x8xf32>, vector<8x32xf32>, vector<17x32xf32> -> vector<17x32xf32>
    %180 = arith.addf %163, %179 : vector<17x32xf32>
    %181 = arith.addf %62, %180 : vector<17x32xf32>
    %cst_100 = arith.constant dense<0.000000e+00> : vector<17xf32>
    %182 = vector.multi_reduction <add>, %181, %cst_100 [1] : vector<17x32xf32> to vector<17xf32>
    %183 = vector.shape_cast %182 : vector<17xf32> to vector<17x1xf32>
    %cst_101 = arith.constant 3.200000e+01 : f32
    %184 = vector.broadcast %cst_101 : f32 to vector<17x1xf32>
    %185 = arith.divf %183, %184 : vector<17x1xf32>
    %186 = vector.broadcast %185 : vector<17x1xf32> to vector<17x32xf32>
    %187 = arith.subf %181, %186 : vector<17x32xf32>
    %188 = arith.mulf %187, %187 : vector<17x32xf32>
    %cst_102 = arith.constant dense<0.000000e+00> : vector<17xf32>
    %189 = vector.multi_reduction <add>, %188, %cst_102 [1] : vector<17x32xf32> to vector<17xf32>
    %190 = vector.shape_cast %189 : vector<17xf32> to vector<17x1xf32>
    %cst_103 = arith.constant 3.200000e+01 : f32
    %191 = vector.broadcast %cst_103 : f32 to vector<17x1xf32>
    %192 = arith.divf %190, %191 : vector<17x1xf32>
    %cst_104 = arith.constant 9.99999974E-6 : f32
    %193 = vector.broadcast %cst_104 : f32 to vector<17x1xf32>
    %194 = arith.addf %192, %193 : vector<17x1xf32>
    %195 = math.rsqrt %194 : vector<17x1xf32>
    %196 = vector.broadcast %195 : vector<17x1xf32> to vector<17x32xf32>
    %197 = arith.mulf %187, %196 : vector<17x32xf32>
    %c0_105 = arith.constant 0 : index
    %c0_106 = arith.constant 0 : index
    %c0_107 = arith.constant 0 : index
    %198 = vector.load %arg21[%c0_105, %c0_106, %c0_107] : memref<2x1x32xf32, #tpu.memory_space<vmem>>, vector<1x1x32xf32>
    %199 = vector.shape_cast %198 : vector<1x1x32xf32> to vector<1x32xf32>
    %200 = vector.broadcast %199 : vector<1x32xf32> to vector<17x32xf32>
    %201 = arith.mulf %197, %200 : vector<17x32xf32>
    %c0_108 = arith.constant 0 : index
    %c0_109 = arith.constant 0 : index
    %c0_110 = arith.constant 0 : index
    %202 = vector.load %arg22[%c0_108, %c0_109, %c0_110] : memref<2x1x32xf32, #tpu.memory_space<vmem>>, vector<1x1x32xf32>
    %203 = vector.shape_cast %202 : vector<1x1x32xf32> to vector<1x32xf32>
    %204 = vector.broadcast %203 : vector<1x32xf32> to vector<17x32xf32>
    %205 = arith.addf %201, %204 : vector<17x32xf32>
    %c0_111 = arith.constant 0 : index
    %c0_112 = arith.constant 0 : index
    %c0_113 = arith.constant 0 : index
    %206 = vector.load %arg23[%c0_111, %c0_112, %c0_113] : memref<2x32x32xf32, #tpu.memory_space<vmem>>, vector<1x32x32xf32>
    %207 = vector.shape_cast %206 : vector<1x32x32xf32> to vector<32x32xf32>
    %cst_114 = arith.constant dense<0.000000e+00> : vector<17x32xf32>
    %208 = tpu.matmul %205, %207, %cst_114 {dimension_numbers = #tpu.dot_dimension_numbers<[1], [0], [0], [1], [0, 0, 1, 1], [], []>} : vector<17x32xf32>, vector<32x32xf32>, vector<17x32xf32> -> vector<17x32xf32>
    %c0_115 = arith.constant 0 : index
    %c0_116 = arith.constant 0 : index
    %c0_117 = arith.constant 0 : index
    %209 = vector.load %arg24[%c0_115, %c0_116, %c0_117] : memref<2x1x32xf32, #tpu.memory_space<vmem>>, vector<1x1x32xf32>
    %210 = vector.shape_cast %209 : vector<1x1x32xf32> to vector<1x32xf32>
    %211 = vector.broadcast %210 : vector<1x32xf32> to vector<17x32xf32>
    %212 = arith.addf %208, %211 : vector<17x32xf32>
    %c0_118 = arith.constant 0 : index
    %c0_119 = arith.constant 0 : index
    %c0_120 = arith.constant 0 : index
    %213 = vector.load %arg25[%c0_118, %c0_119, %c0_120] : memref<2x32x32xf32, #tpu.memory_space<vmem>>, vector<1x32x32xf32>
    %214 = vector.shape_cast %213 : vector<1x32x32xf32> to vector<32x32xf32>
    %cst_121 = arith.constant dense<0.000000e+00> : vector<17x32xf32>
    %215 = tpu.matmul %205, %214, %cst_121 {dimension_numbers = #tpu.dot_dimension_numbers<[1], [0], [0], [1], [0, 0, 1, 1], [], []>} : vector<17x32xf32>, vector<32x32xf32>, vector<17x32xf32> -> vector<17x32xf32>
    %c0_122 = arith.constant 0 : index
    %c0_123 = arith.constant 0 : index
    %c0_124 = arith.constant 0 : index
    %216 = vector.load %arg26[%c0_122, %c0_123, %c0_124] : memref<2x1x32xf32, #tpu.memory_space<vmem>>, vector<1x1x32xf32>
    %217 = vector.shape_cast %216 : vector<1x1x32xf32> to vector<1x32xf32>
    %218 = vector.broadcast %217 : vector<1x32xf32> to vector<17x32xf32>
    %219 = arith.addf %215, %218 : vector<17x32xf32>
    %cst_125 = arith.constant 0.000000e+00 : f32
    %220 = vector.broadcast %cst_125 : f32 to vector<17x32xf32>
    %221 = arith.subf %220, %219 : vector<17x32xf32>
    %222 = math.exp %221 : vector<17x32xf32>
    %cst_126 = arith.constant 1.000000e+00 : f32
    %223 = vector.broadcast %cst_126 : f32 to vector<17x32xf32>
    %224 = arith.addf %223, %222 : vector<17x32xf32>
    %cst_127 = arith.constant 1.000000e+00 : f32
    %225 = vector.broadcast %cst_127 : f32 to vector<17x32xf32>
    %226 = arith.divf %225, %224 : vector<17x32xf32>
    %227 = arith.mulf %212, %226 : vector<17x32xf32>
    %c15 = arith.constant 15 : index
    %c0_128 = arith.constant 0 : index
    %228 = vector.load %arg54[%c15, %c0_128] : memref<47x32xf32, #tpu.memory_space<vmem>>, vector<17x32xf32>
    tpu.vector_store %arg54[%c15, %c0_128], %227 {strides = array<i32>} : memref<47x32xf32, #tpu.memory_space<vmem>>, vector<17x32xf32>,
    %c0_129 = arith.constant 0 : index
    %c0_130 = arith.constant 0 : index
    %c0_131 = arith.constant 0 : index
    %229 = vector.load %arg27[%c0_129, %c0_130, %c0_131] : memref<2x31x32xf32, #tpu.memory_space<vmem>>, vector<1x31x32xf32>
    %230 = vector.shape_cast %229 : vector<1x31x32xf32> to vector<31x32xf32>
    %cst_132 = arith.constant 0.000000e+00 : f32
    %231 = vector.broadcast %cst_132 : f32 to vector<17x32xf32>
    %c0_133 = arith.constant 0 : index
    %c0_134 = arith.constant 0 : index
    %232 = vector.load %arg54[%c0_133, %c0_134] : memref<47x32xf32, #tpu.memory_space<vmem>>, vector<17x32xf32>
    %233 = vector.extract_strided_slice %230 {offsets = [0, 0], sizes = [1, 32], strides = [1, 1]} : vector<31x32xf32> to vector<1x32xf32>
    %234 = vector.broadcast %233 : vector<1x32xf32> to vector<17x32xf32>
    %235 = arith.mulf %232, %234 : vector<17x32xf32>
    %236 = arith.addf %231, %235 : vector<17x32xf32>
    %c1 = arith.constant 1 : index
    %c0_135 = arith.constant 0 : index
    %237 = vector.load %arg54[%c1, %c0_135] : memref<47x32xf32, #tpu.memory_space<vmem>>, vector<17x32xf32>
    %238 = vector.extract_strided_slice %230 {offsets = [1, 0], sizes = [1, 32], strides = [1, 1]} : vector<31x32xf32> to vector<1x32xf32>
    %239 = vector.broadcast %238 : vector<1x32xf32> to vector<17x32xf32>
    %240 = arith.mulf %237, %239 : vector<17x32xf32>
    %241 = arith.addf %236, %240 : vector<17x32xf32>
    %c2 = arith.constant 2 : index
    %c0_136 = arith.constant 0 : index
    %242 = vector.load %arg54[%c2, %c0_136] : memref<47x32xf32, #tpu.memory_space<vmem>>, vector<17x32xf32>
    %243 = vector.extract_strided_slice %230 {offsets = [2, 0], sizes = [1, 32], strides = [1, 1]} : vector<31x32xf32> to vector<1x32xf32>
    %244 = vector.broadcast %243 : vector<1x32xf32> to vector<17x32xf32>
    %245 = arith.mulf %242, %244 : vector<17x32xf32>
    %246 = arith.addf %241, %245 : vector<17x32xf32>
    %c3 = arith.constant 3 : index
    %c0_137 = arith.constant 0 : index
    %247 = vector.load %arg54[%c3, %c0_137] : memref<47x32xf32, #tpu.memory_space<vmem>>, vector<17x32xf32>
    %248 = vector.extract_strided_slice %230 {offsets = [3, 0], sizes = [1, 32], strides = [1, 1]} : vector<31x32xf32> to vector<1x32xf32>
    %249 = vector.broadcast %248 : vector<1x32xf32> to vector<17x32xf32>
    %250 = arith.mulf %247, %249 : vector<17x32xf32>
    %251 = arith.addf %246, %250 : vector<17x32xf32>
    %c4 = arith.constant 4 : index
    %c0_138 = arith.constant 0 : index
    %252 = vector.load %arg54[%c4, %c0_138] : memref<47x32xf32, #tpu.memory_space<vmem>>, vector<17x32xf32>
    %253 = vector.extract_strided_slice %230 {offsets = [4, 0], sizes = [1, 32], strides = [1, 1]} : vector<31x32xf32> to vector<1x32xf32>
    %254 = vector.broadcast %253 : vector<1x32xf32> to vector<17x32xf32>
    %255 = arith.mulf %252, %254 : vector<17x32xf32>
    %256 = arith.addf %251, %255 : vector<17x32xf32>
    %c5 = arith.constant 5 : index
    %c0_139 = arith.constant 0 : index
    %257 = vector.load %arg54[%c5, %c0_139] : memref<47x32xf32, #tpu.memory_space<vmem>>, vector<17x32xf32>
    %258 = vector.extract_strided_slice %230 {offsets = [5, 0], sizes = [1, 32], strides = [1, 1]} : vector<31x32xf32> to vector<1x32xf32>
    %259 = vector.broadcast %258 : vector<1x32xf32> to vector<17x32xf32>
    %260 = arith.mulf %257, %259 : vector<17x32xf32>
    %261 = arith.addf %256, %260 : vector<17x32xf32>
    %c6 = arith.constant 6 : index
    %c0_140 = arith.constant 0 : index
    %262 = vector.load %arg54[%c6, %c0_140] : memref<47x32xf32, #tpu.memory_space<vmem>>, vector<17x32xf32>
    %263 = vector.extract_strided_slice %230 {offsets = [6, 0], sizes = [1, 32], strides = [1, 1]} : vector<31x32xf32> to vector<1x32xf32>
    %264 = vector.broadcast %263 : vector<1x32xf32> to vector<17x32xf32>
    %265 = arith.mulf %262, %264 : vector<17x32xf32>
    %266 = arith.addf %261, %265 : vector<17x32xf32>
    %c7 = arith.constant 7 : index
    %c0_141 = arith.constant 0 : index
    %267 = vector.load %arg54[%c7, %c0_141] : memref<47x32xf32, #tpu.memory_space<vmem>>, vector<17x32xf32>
    %268 = vector.extract_strided_slice %230 {offsets = [7, 0], sizes = [1, 32], strides = [1, 1]} : vector<31x32xf32> to vector<1x32xf32>
    %269 = vector.broadcast %268 : vector<1x32xf32> to vector<17x32xf32>
    %270 = arith.mulf %267, %269 : vector<17x32xf32>
    %271 = arith.addf %266, %270 : vector<17x32xf32>
    %c8 = arith.constant 8 : index
    %c0_142 = arith.constant 0 : index
    %272 = vector.load %arg54[%c8, %c0_142] : memref<47x32xf32, #tpu.memory_space<vmem>>, vector<17x32xf32>
    %273 = vector.extract_strided_slice %230 {offsets = [8, 0], sizes = [1, 32], strides = [1, 1]} : vector<31x32xf32> to vector<1x32xf32>
    %274 = vector.broadcast %273 : vector<1x32xf32> to vector<17x32xf32>
    %275 = arith.mulf %272, %274 : vector<17x32xf32>
    %276 = arith.addf %271, %275 : vector<17x32xf32>
    %c9 = arith.constant 9 : index
    %c0_143 = arith.constant 0 : index
    %277 = vector.load %arg54[%c9, %c0_143] : memref<47x32xf32, #tpu.memory_space<vmem>>, vector<17x32xf32>
    %278 = vector.extract_strided_slice %230 {offsets = [9, 0], sizes = [1, 32], strides = [1, 1]} : vector<31x32xf32> to vector<1x32xf32>
    %279 = vector.broadcast %278 : vector<1x32xf32> to vector<17x32xf32>
    %280 = arith.mulf %277, %279 : vector<17x32xf32>
    %281 = arith.addf %276, %280 : vector<17x32xf32>
    %c10 = arith.constant 10 : index
    %c0_144 = arith.constant 0 : index
    %282 = vector.load %arg54[%c10, %c0_144] : memref<47x32xf32, #tpu.memory_space<vmem>>, vector<17x32xf32>
    %283 = vector.extract_strided_slice %230 {offsets = [10, 0], sizes = [1, 32], strides = [1, 1]} : vector<31x32xf32> to vector<1x32xf32>
    %284 = vector.broadcast %283 : vector<1x32xf32> to vector<17x32xf32>
    %285 = arith.mulf %282, %284 : vector<17x32xf32>
    %286 = arith.addf %281, %285 : vector<17x32xf32>
    %c11 = arith.constant 11 : index
    %c0_145 = arith.constant 0 : index
    %287 = vector.load %arg54[%c11, %c0_145] : memref<47x32xf32, #tpu.memory_space<vmem>>, vector<17x32xf32>
    %288 = vector.extract_strided_slice %230 {offsets = [11, 0], sizes = [1, 32], strides = [1, 1]} : vector<31x32xf32> to vector<1x32xf32>
    %289 = vector.broadcast %288 : vector<1x32xf32> to vector<17x32xf32>
    %290 = arith.mulf %287, %289 : vector<17x32xf32>
    %291 = arith.addf %286, %290 : vector<17x32xf32>
    %c12 = arith.constant 12 : index
    %c0_146 = arith.constant 0 : index
    %292 = vector.load %arg54[%c12, %c0_146] : memref<47x32xf32, #tpu.memory_space<vmem>>, vector<17x32xf32>
    %293 = vector.extract_strided_slice %230 {offsets = [12, 0], sizes = [1, 32], strides = [1, 1]} : vector<31x32xf32> to vector<1x32xf32>
    %294 = vector.broadcast %293 : vector<1x32xf32> to vector<17x32xf32>
    %295 = arith.mulf %292, %294 : vector<17x32xf32>
    %296 = arith.addf %291, %295 : vector<17x32xf32>
    %c13 = arith.constant 13 : index
    %c0_147 = arith.constant 0 : index
    %297 = vector.load %arg54[%c13, %c0_147] : memref<47x32xf32, #tpu.memory_space<vmem>>, vector<17x32xf32>
    %298 = vector.extract_strided_slice %230 {offsets = [13, 0], sizes = [1, 32], strides = [1, 1]} : vector<31x32xf32> to vector<1x32xf32>
    %299 = vector.broadcast %298 : vector<1x32xf32> to vector<17x32xf32>
    %300 = arith.mulf %297, %299 : vector<17x32xf32>
    %301 = arith.addf %296, %300 : vector<17x32xf32>
    %c14 = arith.constant 14 : index
    %c0_148 = arith.constant 0 : index
    %302 = vector.load %arg54[%c14, %c0_148] : memref<47x32xf32, #tpu.memory_space<vmem>>, vector<17x32xf32>
    %303 = vector.extract_strided_slice %230 {offsets = [14, 0], sizes = [1, 32], strides = [1, 1]} : vector<31x32xf32> to vector<1x32xf32>
    %304 = vector.broadcast %303 : vector<1x32xf32> to vector<17x32xf32>
    %305 = arith.mulf %302, %304 : vector<17x32xf32>
    %306 = arith.addf %301, %305 : vector<17x32xf32>
    %c15_149 = arith.constant 15 : index
    %c0_150 = arith.constant 0 : index
    %307 = vector.load %arg54[%c15_149, %c0_150] : memref<47x32xf32, #tpu.memory_space<vmem>>, vector<17x32xf32>
    %308 = vector.extract_strided_slice %230 {offsets = [15, 0], sizes = [1, 32], strides = [1, 1]} : vector<31x32xf32> to vector<1x32xf32>
    %309 = vector.broadcast %308 : vector<1x32xf32> to vector<17x32xf32>
    %310 = arith.mulf %307, %309 : vector<17x32xf32>
    %311 = arith.addf %306, %310 : vector<17x32xf32>
    %c16 = arith.constant 16 : index
    %c0_151 = arith.constant 0 : index
    %312 = vector.load %arg54[%c16, %c0_151] : memref<47x32xf32, #tpu.memory_space<vmem>>, vector<17x32xf32>
    %313 = vector.extract_strided_slice %230 {offsets = [16, 0], sizes = [1, 32], strides = [1, 1]} : vector<31x32xf32> to vector<1x32xf32>
    %314 = vector.broadcast %313 : vector<1x32xf32> to vector<17x32xf32>
    %315 = arith.mulf %312, %314 : vector<17x32xf32>
    %316 = arith.addf %311, %315 : vector<17x32xf32>
    %c17 = arith.constant 17 : index
    %c0_152 = arith.constant 0 : index
    %317 = vector.load %arg54[%c17, %c0_152] : memref<47x32xf32, #tpu.memory_space<vmem>>, vector<17x32xf32>
    %318 = vector.extract_strided_slice %230 {offsets = [17, 0], sizes = [1, 32], strides = [1, 1]} : vector<31x32xf32> to vector<1x32xf32>
    %319 = vector.broadcast %318 : vector<1x32xf32> to vector<17x32xf32>
    %320 = arith.mulf %317, %319 : vector<17x32xf32>
    %321 = arith.addf %316, %320 : vector<17x32xf32>
    %c18 = arith.constant 18 : index
    %c0_153 = arith.constant 0 : index
    %322 = vector.load %arg54[%c18, %c0_153] : memref<47x32xf32, #tpu.memory_space<vmem>>, vector<17x32xf32>
    %323 = vector.extract_strided_slice %230 {offsets = [18, 0], sizes = [1, 32], strides = [1, 1]} : vector<31x32xf32> to vector<1x32xf32>
    %324 = vector.broadcast %323 : vector<1x32xf32> to vector<17x32xf32>
    %325 = arith.mulf %322, %324 : vector<17x32xf32>
    %326 = arith.addf %321, %325 : vector<17x32xf32>
    %c19 = arith.constant 19 : index
    %c0_154 = arith.constant 0 : index
    %327 = vector.load %arg54[%c19, %c0_154] : memref<47x32xf32, #tpu.memory_space<vmem>>, vector<17x32xf32>
    %328 = vector.extract_strided_slice %230 {offsets = [19, 0], sizes = [1, 32], strides = [1, 1]} : vector<31x32xf32> to vector<1x32xf32>
    %329 = vector.broadcast %328 : vector<1x32xf32> to vector<17x32xf32>
    %330 = arith.mulf %327, %329 : vector<17x32xf32>
    %331 = arith.addf %326, %330 : vector<17x32xf32>
    %c20 = arith.constant 20 : index
    %c0_155 = arith.constant 0 : index
    %332 = vector.load %arg54[%c20, %c0_155] : memref<47x32xf32, #tpu.memory_space<vmem>>, vector<17x32xf32>
    %333 = vector.extract_strided_slice %230 {offsets = [20, 0], sizes = [1, 32], strides = [1, 1]} : vector<31x32xf32> to vector<1x32xf32>
    %334 = vector.broadcast %333 : vector<1x32xf32> to vector<17x32xf32>
    %335 = arith.mulf %332, %334 : vector<17x32xf32>
    %336 = arith.addf %331, %335 : vector<17x32xf32>
    %c21 = arith.constant 21 : index
    %c0_156 = arith.constant 0 : index
    %337 = vector.load %arg54[%c21, %c0_156] : memref<47x32xf32, #tpu.memory_space<vmem>>, vector<17x32xf32>
    %338 = vector.extract_strided_slice %230 {offsets = [21, 0], sizes = [1, 32], strides = [1, 1]} : vector<31x32xf32> to vector<1x32xf32>
    %339 = vector.broadcast %338 : vector<1x32xf32> to vector<17x32xf32>
    %340 = arith.mulf %337, %339 : vector<17x32xf32>
    %341 = arith.addf %336, %340 : vector<17x32xf32>
    %c22 = arith.constant 22 : index
    %c0_157 = arith.constant 0 : index
    %342 = vector.load %arg54[%c22, %c0_157] : memref<47x32xf32, #tpu.memory_space<vmem>>, vector<17x32xf32>
    %343 = vector.extract_strided_slice %230 {offsets = [22, 0], sizes = [1, 32], strides = [1, 1]} : vector<31x32xf32> to vector<1x32xf32>
    %344 = vector.broadcast %343 : vector<1x32xf32> to vector<17x32xf32>
    %345 = arith.mulf %342, %344 : vector<17x32xf32>
    %346 = arith.addf %341, %345 : vector<17x32xf32>
    %c23 = arith.constant 23 : index
    %c0_158 = arith.constant 0 : index
    %347 = vector.load %arg54[%c23, %c0_158] : memref<47x32xf32, #tpu.memory_space<vmem>>, vector<17x32xf32>
    %348 = vector.extract_strided_slice %230 {offsets = [23, 0], sizes = [1, 32], strides = [1, 1]} : vector<31x32xf32> to vector<1x32xf32>
    %349 = vector.broadcast %348 : vector<1x32xf32> to vector<17x32xf32>
    %350 = arith.mulf %347, %349 : vector<17x32xf32>
    %351 = arith.addf %346, %350 : vector<17x32xf32>
    %c24 = arith.constant 24 : index
    %c0_159 = arith.constant 0 : index
    %352 = vector.load %arg54[%c24, %c0_159] : memref<47x32xf32, #tpu.memory_space<vmem>>, vector<17x32xf32>
    %353 = vector.extract_strided_slice %230 {offsets = [24, 0], sizes = [1, 32], strides = [1, 1]} : vector<31x32xf32> to vector<1x32xf32>
    %354 = vector.broadcast %353 : vector<1x32xf32> to vector<17x32xf32>
    %355 = arith.mulf %352, %354 : vector<17x32xf32>
    %356 = arith.addf %351, %355 : vector<17x32xf32>
    %c25 = arith.constant 25 : index
    %c0_160 = arith.constant 0 : index
    %357 = vector.load %arg54[%c25, %c0_160] : memref<47x32xf32, #tpu.memory_space<vmem>>, vector<17x32xf32>
    %358 = vector.extract_strided_slice %230 {offsets = [25, 0], sizes = [1, 32], strides = [1, 1]} : vector<31x32xf32> to vector<1x32xf32>
    %359 = vector.broadcast %358 : vector<1x32xf32> to vector<17x32xf32>
    %360 = arith.mulf %357, %359 : vector<17x32xf32>
    %361 = arith.addf %356, %360 : vector<17x32xf32>
    %c26 = arith.constant 26 : index
    %c0_161 = arith.constant 0 : index
    %362 = vector.load %arg54[%c26, %c0_161] : memref<47x32xf32, #tpu.memory_space<vmem>>, vector<17x32xf32>
    %363 = vector.extract_strided_slice %230 {offsets = [26, 0], sizes = [1, 32], strides = [1, 1]} : vector<31x32xf32> to vector<1x32xf32>
    %364 = vector.broadcast %363 : vector<1x32xf32> to vector<17x32xf32>
    %365 = arith.mulf %362, %364 : vector<17x32xf32>
    %366 = arith.addf %361, %365 : vector<17x32xf32>
    %c27 = arith.constant 27 : index
    %c0_162 = arith.constant 0 : index
    %367 = vector.load %arg54[%c27, %c0_162] : memref<47x32xf32, #tpu.memory_space<vmem>>, vector<17x32xf32>
    %368 = vector.extract_strided_slice %230 {offsets = [27, 0], sizes = [1, 32], strides = [1, 1]} : vector<31x32xf32> to vector<1x32xf32>
    %369 = vector.broadcast %368 : vector<1x32xf32> to vector<17x32xf32>
    %370 = arith.mulf %367, %369 : vector<17x32xf32>
    %371 = arith.addf %366, %370 : vector<17x32xf32>
    %c28 = arith.constant 28 : index
    %c0_163 = arith.constant 0 : index
    %372 = vector.load %arg54[%c28, %c0_163] : memref<47x32xf32, #tpu.memory_space<vmem>>, vector<17x32xf32>
    %373 = vector.extract_strided_slice %230 {offsets = [28, 0], sizes = [1, 32], strides = [1, 1]} : vector<31x32xf32> to vector<1x32xf32>
    %374 = vector.broadcast %373 : vector<1x32xf32> to vector<17x32xf32>
    %375 = arith.mulf %372, %374 : vector<17x32xf32>
    %376 = arith.addf %371, %375 : vector<17x32xf32>
    %c29 = arith.constant 29 : index
    %c0_164 = arith.constant 0 : index
    %377 = vector.load %arg54[%c29, %c0_164] : memref<47x32xf32, #tpu.memory_space<vmem>>, vector<17x32xf32>
    %378 = vector.extract_strided_slice %230 {offsets = [29, 0], sizes = [1, 32], strides = [1, 1]} : vector<31x32xf32> to vector<1x32xf32>
    %379 = vector.broadcast %378 : vector<1x32xf32> to vector<17x32xf32>
    %380 = arith.mulf %377, %379 : vector<17x32xf32>
    %381 = arith.addf %376, %380 : vector<17x32xf32>
    %c30 = arith.constant 30 : index
    %c0_165 = arith.constant 0 : index
    %382 = vector.load %arg54[%c30, %c0_165] : memref<47x32xf32, #tpu.memory_space<vmem>>, vector<17x32xf32>
    %383 = vector.extract_strided_slice %230 {offsets = [30, 0], sizes = [1, 32], strides = [1, 1]} : vector<31x32xf32> to vector<1x32xf32>
    %384 = vector.broadcast %383 : vector<1x32xf32> to vector<17x32xf32>
    %385 = arith.mulf %382, %384 : vector<17x32xf32>
    %386 = arith.addf %381, %385 : vector<17x32xf32>
    %c0_166 = arith.constant 0 : index
    %c0_167 = arith.constant 0 : index
    %c0_168 = arith.constant 0 : index
    %387 = vector.load %arg28[%c0_166, %c0_167, %c0_168] : memref<2x1x32xf32, #tpu.memory_space<vmem>>, vector<1x1x32xf32>
    %388 = vector.shape_cast %387 : vector<1x1x32xf32> to vector<1x32xf32>
    %389 = vector.broadcast %388 : vector<1x32xf32> to vector<17x32xf32>
    %390 = arith.addf %386, %389 : vector<17x32xf32>
    %c0_169 = arith.constant 0 : index
    %c0_170 = arith.constant 0 : index
    %c0_171 = arith.constant 0 : index
    %391 = vector.load %arg29[%c0_169, %c0_170, %c0_171] : memref<2x1x32xf32, #tpu.memory_space<vmem>>, vector<1x1x32xf32>
    %392 = vector.shape_cast %391 : vector<1x1x32xf32> to vector<1x32xf32>
    %393 = vector.broadcast %392 : vector<1x32xf32> to vector<17x32xf32>
    %394 = arith.mulf %390, %393 : vector<17x32xf32>
    %c0_172 = arith.constant 0 : index
    %c0_173 = arith.constant 0 : index
    %c0_174 = arith.constant 0 : index
    %395 = vector.load %arg30[%c0_172, %c0_173, %c0_174] : memref<2x1x32xf32, #tpu.memory_space<vmem>>, vector<1x1x32xf32>
    %396 = vector.shape_cast %395 : vector<1x1x32xf32> to vector<1x32xf32>
    %397 = vector.broadcast %396 : vector<1x32xf32> to vector<17x32xf32>
    %398 = arith.addf %394, %397 : vector<17x32xf32>
    %cst_175 = arith.constant 0.000000e+00 : f32
    %399 = vector.broadcast %cst_175 : f32 to vector<17x32xf32>
    %400 = arith.subf %399, %398 : vector<17x32xf32>
    %401 = math.exp %400 : vector<17x32xf32>
    %cst_176 = arith.constant 1.000000e+00 : f32
    %402 = vector.broadcast %cst_176 : f32 to vector<17x32xf32>
    %403 = arith.addf %402, %401 : vector<17x32xf32>
    %cst_177 = arith.constant 1.000000e+00 : f32
    %404 = vector.broadcast %cst_177 : f32 to vector<17x32xf32>
    %405 = arith.divf %404, %403 : vector<17x32xf32>
    %406 = arith.mulf %398, %405 : vector<17x32xf32>
    %c0_178 = arith.constant 0 : index
    %c0_179 = arith.constant 0 : index
    %c0_180 = arith.constant 0 : index
    %407 = vector.load %arg31[%c0_178, %c0_179, %c0_180] : memref<2x32x32xf32, #tpu.memory_space<vmem>>, vector<1x32x32xf32>
    %408 = vector.shape_cast %407 : vector<1x32x32xf32> to vector<32x32xf32>
    %cst_181 = arith.constant dense<0.000000e+00> : vector<17x32xf32>
    %409 = tpu.matmul %406, %408, %cst_181 {dimension_numbers = #tpu.dot_dimension_numbers<[1], [0], [0], [1], [0, 0, 1, 1], [], []>} : vector<17x32xf32>, vector<32x32xf32>, vector<17x32xf32> -> vector<17x32xf32>
    %c0_182 = arith.constant 0 : index
    %c0_183 = arith.constant 0 : index
    %c0_184 = arith.constant 0 : index
    %410 = vector.load %arg32[%c0_182, %c0_183, %c0_184] : memref<2x1x32xf32, #tpu.memory_space<vmem>>, vector<1x1x32xf32>
    %411 = vector.shape_cast %410 : vector<1x1x32xf32> to vector<1x32xf32>
    %412 = vector.broadcast %411 : vector<1x32xf32> to vector<17x32xf32>
    %413 = arith.addf %409, %412 : vector<17x32xf32>
    %414 = arith.addf %181, %413 : vector<17x32xf32>
    %cst_185 = arith.constant dense<0.000000e+00> : vector<17xf32>
    %415 = vector.multi_reduction <add>, %414, %cst_185 [1] : vector<17x32xf32> to vector<17xf32>
    %416 = vector.shape_cast %415 : vector<17xf32> to vector<17x1xf32>
    %cst_186 = arith.constant 3.200000e+01 : f32
    %417 = vector.broadcast %cst_186 : f32 to vector<17x1xf32>
    %418 = arith.divf %416, %417 : vector<17x1xf32>
    %419 = vector.broadcast %418 : vector<17x1xf32> to vector<17x32xf32>
    %420 = arith.subf %414, %419 : vector<17x32xf32>
    %421 = arith.mulf %420, %420 : vector<17x32xf32>
    %cst_187 = arith.constant dense<0.000000e+00> : vector<17xf32>
    %422 = vector.multi_reduction <add>, %421, %cst_187 [1] : vector<17x32xf32> to vector<17xf32>
    %423 = vector.shape_cast %422 : vector<17xf32> to vector<17x1xf32>
    %cst_188 = arith.constant 3.200000e+01 : f32
    %424 = vector.broadcast %cst_188 : f32 to vector<17x1xf32>
    %425 = arith.divf %423, %424 : vector<17x1xf32>
    %cst_189 = arith.constant 9.99999974E-6 : f32
    %426 = vector.broadcast %cst_189 : f32 to vector<17x1xf32>
    %427 = arith.addf %425, %426 : vector<17x1xf32>
    %428 = math.rsqrt %427 : vector<17x1xf32>
    %429 = vector.broadcast %428 : vector<17x1xf32> to vector<17x32xf32>
    %430 = arith.mulf %420, %429 : vector<17x32xf32>
    %c0_190 = arith.constant 0 : index
    %c0_191 = arith.constant 0 : index
    %c0_192 = arith.constant 0 : index
    %431 = vector.load %arg33[%c0_190, %c0_191, %c0_192] : memref<2x1x32xf32, #tpu.memory_space<vmem>>, vector<1x1x32xf32>
    %432 = vector.shape_cast %431 : vector<1x1x32xf32> to vector<1x32xf32>
    %433 = vector.broadcast %432 : vector<1x32xf32> to vector<17x32xf32>
    %434 = arith.mulf %430, %433 : vector<17x32xf32>
    %c0_193 = arith.constant 0 : index
    %c0_194 = arith.constant 0 : index
    %c0_195 = arith.constant 0 : index
    %435 = vector.load %arg34[%c0_193, %c0_194, %c0_195] : memref<2x1x32xf32, #tpu.memory_space<vmem>>, vector<1x1x32xf32>
    %436 = vector.shape_cast %435 : vector<1x1x32xf32> to vector<1x32xf32>
    %437 = vector.broadcast %436 : vector<1x32xf32> to vector<17x32xf32>
    %438 = arith.addf %434, %437 : vector<17x32xf32>
    %c0_196 = arith.constant 0 : index
    %c0_197 = arith.constant 0 : index
    %c0_198 = arith.constant 0 : index
    %439 = vector.load %arg35[%c0_196, %c0_197, %c0_198] : memref<2x32x64xf32, #tpu.memory_space<vmem>>, vector<1x32x64xf32>
    %440 = vector.shape_cast %439 : vector<1x32x64xf32> to vector<32x64xf32>
    %cst_199 = arith.constant dense<0.000000e+00> : vector<17x64xf32>
    %441 = tpu.matmul %438, %440, %cst_199 {dimension_numbers = #tpu.dot_dimension_numbers<[1], [0], [0], [1], [0, 0, 1, 1], [], []>} : vector<17x32xf32>, vector<32x64xf32>, vector<17x64xf32> -> vector<17x64xf32>
    %c0_200 = arith.constant 0 : index
    %c0_201 = arith.constant 0 : index
    %c0_202 = arith.constant 0 : index
    %442 = vector.load %arg36[%c0_200, %c0_201, %c0_202] : memref<2x1x64xf32, #tpu.memory_space<vmem>>, vector<1x1x64xf32>
    %443 = vector.shape_cast %442 : vector<1x1x64xf32> to vector<1x64xf32>
    %444 = vector.broadcast %443 : vector<1x64xf32> to vector<17x64xf32>
    %445 = arith.addf %441, %444 : vector<17x64xf32>
    %cst_203 = arith.constant 0.000000e+00 : f32
    %446 = vector.broadcast %cst_203 : f32 to vector<17x64xf32>
    %447 = arith.subf %446, %445 : vector<17x64xf32>
    %448 = math.exp %447 : vector<17x64xf32>
    %cst_204 = arith.constant 1.000000e+00 : f32
    %449 = vector.broadcast %cst_204 : f32 to vector<17x64xf32>
    %450 = arith.addf %449, %448 : vector<17x64xf32>
    %cst_205 = arith.constant 1.000000e+00 : f32
    %451 = vector.broadcast %cst_205 : f32 to vector<17x64xf32>
    %452 = arith.divf %451, %450 : vector<17x64xf32>
    %453 = arith.mulf %445, %452 : vector<17x64xf32>
    %c0_206 = arith.constant 0 : index
    %c0_207 = arith.constant 0 : index
    %c0_208 = arith.constant 0 : index
    %454 = vector.load %arg37[%c0_206, %c0_207, %c0_208] : memref<2x64x32xf32, #tpu.memory_space<vmem>>, vector<1x64x32xf32>
    %455 = vector.shape_cast %454 : vector<1x64x32xf32> to vector<64x32xf32>
    %cst_209 = arith.constant dense<0.000000e+00> : vector<17x32xf32>
    %456 = tpu.matmul %453, %455, %cst_209 {dimension_numbers = #tpu.dot_dimension_numbers<[1], [0], [0], [1], [0, 0, 1, 1], [], []>} : vector<17x64xf32>, vector<64x32xf32>, vector<17x32xf32> -> vector<17x32xf32>
    %c0_210 = arith.constant 0 : index
    %c0_211 = arith.constant 0 : index
    %c0_212 = arith.constant 0 : index
    %457 = vector.load %arg38[%c0_210, %c0_211, %c0_212] : memref<2x1x32xf32, #tpu.memory_space<vmem>>, vector<1x1x32xf32>
    %458 = vector.shape_cast %457 : vector<1x1x32xf32> to vector<1x32xf32>
    %459 = vector.broadcast %458 : vector<1x32xf32> to vector<17x32xf32>
    %460 = arith.addf %456, %459 : vector<17x32xf32>
    %cst_213 = arith.constant 5.000000e-01 : f32
    %461 = vector.broadcast %cst_213 : f32 to vector<17x32xf32>
    %462 = arith.mulf %461, %460 : vector<17x32xf32>
    %463 = arith.addf %414, %462 : vector<17x32xf32>
    %cst_214 = arith.constant dense<0.000000e+00> : vector<17xf32>
    %464 = vector.multi_reduction <add>, %463, %cst_214 [1] : vector<17x32xf32> to vector<17xf32>
    %465 = vector.shape_cast %464 : vector<17xf32> to vector<17x1xf32>
    %cst_215 = arith.constant 3.200000e+01 : f32
    %466 = vector.broadcast %cst_215 : f32 to vector<17x1xf32>
    %467 = arith.divf %465, %466 : vector<17x1xf32>
    %468 = vector.broadcast %467 : vector<17x1xf32> to vector<17x32xf32>
    %469 = arith.subf %463, %468 : vector<17x32xf32>
    %470 = arith.mulf %469, %469 : vector<17x32xf32>
    %cst_216 = arith.constant dense<0.000000e+00> : vector<17xf32>
    %471 = vector.multi_reduction <add>, %470, %cst_216 [1] : vector<17x32xf32> to vector<17xf32>
    %472 = vector.shape_cast %471 : vector<17xf32> to vector<17x1xf32>
    %cst_217 = arith.constant 3.200000e+01 : f32
    %473 = vector.broadcast %cst_217 : f32 to vector<17x1xf32>
    %474 = arith.divf %472, %473 : vector<17x1xf32>
    %cst_218 = arith.constant 9.99999974E-6 : f32
    %475 = vector.broadcast %cst_218 : f32 to vector<17x1xf32>
    %476 = arith.addf %474, %475 : vector<17x1xf32>
    %477 = math.rsqrt %476 : vector<17x1xf32>
    %478 = vector.broadcast %477 : vector<17x1xf32> to vector<17x32xf32>
    %479 = arith.mulf %469, %478 : vector<17x32xf32>
    %c0_219 = arith.constant 0 : index
    %c0_220 = arith.constant 0 : index
    %c0_221 = arith.constant 0 : index
    %480 = vector.load %arg39[%c0_219, %c0_220, %c0_221] : memref<2x1x32xf32, #tpu.memory_space<vmem>>, vector<1x1x32xf32>
    %481 = vector.shape_cast %480 : vector<1x1x32xf32> to vector<1x32xf32>
    %482 = vector.broadcast %481 : vector<1x32xf32> to vector<17x32xf32>
    %483 = arith.mulf %479, %482 : vector<17x32xf32>
    %c0_222 = arith.constant 0 : index
    %c0_223 = arith.constant 0 : index
    %c0_224 = arith.constant 0 : index
    %484 = vector.load %arg40[%c0_222, %c0_223, %c0_224] : memref<2x1x32xf32, #tpu.memory_space<vmem>>, vector<1x1x32xf32>
    %485 = vector.shape_cast %484 : vector<1x1x32xf32> to vector<1x32xf32>
    %486 = vector.broadcast %485 : vector<1x32xf32> to vector<17x32xf32>
    %487 = arith.addf %483, %486 : vector<17x32xf32>
    %cst_225 = arith.constant dense<0.000000e+00> : vector<17xf32>
    %488 = vector.multi_reduction <add>, %487, %cst_225 [1] : vector<17x32xf32> to vector<17xf32>
    %489 = vector.shape_cast %488 : vector<17xf32> to vector<17x1xf32>
    %cst_226 = arith.constant 3.200000e+01 : f32
    %490 = vector.broadcast %cst_226 : f32 to vector<17x1xf32>
    %491 = arith.divf %489, %490 : vector<17x1xf32>
    %492 = vector.broadcast %491 : vector<17x1xf32> to vector<17x32xf32>
    %493 = arith.subf %487, %492 : vector<17x32xf32>
    %494 = arith.mulf %493, %493 : vector<17x32xf32>
    %cst_227 = arith.constant dense<0.000000e+00> : vector<17xf32>
    %495 = vector.multi_reduction <add>, %494, %cst_227 [1] : vector<17x32xf32> to vector<17xf32>
    %496 = vector.shape_cast %495 : vector<17xf32> to vector<17x1xf32>
    %cst_228 = arith.constant 3.200000e+01 : f32
    %497 = vector.broadcast %cst_228 : f32 to vector<17x1xf32>
    %498 = arith.divf %496, %497 : vector<17x1xf32>
    %cst_229 = arith.constant 9.99999974E-6 : f32
    %499 = vector.broadcast %cst_229 : f32 to vector<17x1xf32>
    %500 = arith.addf %498, %499 : vector<17x1xf32>
    %501 = math.rsqrt %500 : vector<17x1xf32>
    %502 = vector.broadcast %501 : vector<17x1xf32> to vector<17x32xf32>
    %503 = arith.mulf %493, %502 : vector<17x32xf32>
    %c1_230 = arith.constant 1 : index
    %c0_231 = arith.constant 0 : index
    %c0_232 = arith.constant 0 : index
    %504 = vector.load %arg5[%c1_230, %c0_231, %c0_232] : memref<2x1x32xf32, #tpu.memory_space<vmem>>, vector<1x1x32xf32>
    %505 = vector.shape_cast %504 : vector<1x1x32xf32> to vector<1x32xf32>
    %506 = vector.broadcast %505 : vector<1x32xf32> to vector<17x32xf32>
    %507 = arith.mulf %503, %506 : vector<17x32xf32>
    %c1_233 = arith.constant 1 : index
    %c0_234 = arith.constant 0 : index
    %c0_235 = arith.constant 0 : index
    %508 = vector.load %arg6[%c1_233, %c0_234, %c0_235] : memref<2x1x32xf32, #tpu.memory_space<vmem>>, vector<1x1x32xf32>
    %509 = vector.shape_cast %508 : vector<1x1x32xf32> to vector<1x32xf32>
    %510 = vector.broadcast %509 : vector<1x32xf32> to vector<17x32xf32>
    %511 = arith.addf %507, %510 : vector<17x32xf32>
    %c1_236 = arith.constant 1 : index
    %c0_237 = arith.constant 0 : index
    %c0_238 = arith.constant 0 : index
    %512 = vector.load %arg7[%c1_236, %c0_237, %c0_238] : memref<2x32x64xf32, #tpu.memory_space<vmem>>, vector<1x32x64xf32>
    %513 = vector.shape_cast %512 : vector<1x32x64xf32> to vector<32x64xf32>
    %cst_239 = arith.constant dense<0.000000e+00> : vector<17x64xf32>
    %514 = tpu.matmul %511, %513, %cst_239 {dimension_numbers = #tpu.dot_dimension_numbers<[1], [0], [0], [1], [0, 0, 1, 1], [], []>} : vector<17x32xf32>, vector<32x64xf32>, vector<17x64xf32> -> vector<17x64xf32>
    %c1_240 = arith.constant 1 : index
    %c0_241 = arith.constant 0 : index
    %c0_242 = arith.constant 0 : index
    %515 = vector.load %arg8[%c1_240, %c0_241, %c0_242] : memref<2x1x64xf32, #tpu.memory_space<vmem>>, vector<1x1x64xf32>
    %516 = vector.shape_cast %515 : vector<1x1x64xf32> to vector<1x64xf32>
    %517 = vector.broadcast %516 : vector<1x64xf32> to vector<17x64xf32>
    %518 = arith.addf %514, %517 : vector<17x64xf32>
    %cst_243 = arith.constant 0.000000e+00 : f32
    %519 = vector.broadcast %cst_243 : f32 to vector<17x64xf32>
    %520 = arith.subf %519, %518 : vector<17x64xf32>
    %521 = math.exp %520 : vector<17x64xf32>
    %cst_244 = arith.constant 1.000000e+00 : f32
    %522 = vector.broadcast %cst_244 : f32 to vector<17x64xf32>
    %523 = arith.addf %522, %521 : vector<17x64xf32>
    %cst_245 = arith.constant 1.000000e+00 : f32
    %524 = vector.broadcast %cst_245 : f32 to vector<17x64xf32>
    %525 = arith.divf %524, %523 : vector<17x64xf32>
    %526 = arith.mulf %518, %525 : vector<17x64xf32>
    %c1_246 = arith.constant 1 : index
    %c0_247 = arith.constant 0 : index
    %c0_248 = arith.constant 0 : index
    %527 = vector.load %arg9[%c1_246, %c0_247, %c0_248] : memref<2x64x32xf32, #tpu.memory_space<vmem>>, vector<1x64x32xf32>
    %528 = vector.shape_cast %527 : vector<1x64x32xf32> to vector<64x32xf32>
    %cst_249 = arith.constant dense<0.000000e+00> : vector<17x32xf32>
    %529 = tpu.matmul %526, %528, %cst_249 {dimension_numbers = #tpu.dot_dimension_numbers<[1], [0], [0], [1], [0, 0, 1, 1], [], []>} : vector<17x64xf32>, vector<64x32xf32>, vector<17x32xf32> -> vector<17x32xf32>
    %c1_250 = arith.constant 1 : index
    %c0_251 = arith.constant 0 : index
    %c0_252 = arith.constant 0 : index
    %530 = vector.load %arg10[%c1_250, %c0_251, %c0_252] : memref<2x1x32xf32, #tpu.memory_space<vmem>>, vector<1x1x32xf32>
    %531 = vector.shape_cast %530 : vector<1x1x32xf32> to vector<1x32xf32>
    %532 = vector.broadcast %531 : vector<1x32xf32> to vector<17x32xf32>
    %533 = arith.addf %529, %532 : vector<17x32xf32>
    %cst_253 = arith.constant 5.000000e-01 : f32
    %534 = vector.broadcast %cst_253 : f32 to vector<17x32xf32>
    %535 = arith.mulf %534, %533 : vector<17x32xf32>
    %536 = arith.addf %487, %535 : vector<17x32xf32>
    %cst_254 = arith.constant dense<0.000000e+00> : vector<17xf32>
    %537 = vector.multi_reduction <add>, %536, %cst_254 [1] : vector<17x32xf32> to vector<17xf32>
    %538 = vector.shape_cast %537 : vector<17xf32> to vector<17x1xf32>
    %cst_255 = arith.constant 3.200000e+01 : f32
    %539 = vector.broadcast %cst_255 : f32 to vector<17x1xf32>
    %540 = arith.divf %538, %539 : vector<17x1xf32>
    %541 = vector.broadcast %540 : vector<17x1xf32> to vector<17x32xf32>
    %542 = arith.subf %536, %541 : vector<17x32xf32>
    %543 = arith.mulf %542, %542 : vector<17x32xf32>
    %cst_256 = arith.constant dense<0.000000e+00> : vector<17xf32>
    %544 = vector.multi_reduction <add>, %543, %cst_256 [1] : vector<17x32xf32> to vector<17xf32>
    %545 = vector.shape_cast %544 : vector<17xf32> to vector<17x1xf32>
    %cst_257 = arith.constant 3.200000e+01 : f32
    %546 = vector.broadcast %cst_257 : f32 to vector<17x1xf32>
    %547 = arith.divf %545, %546 : vector<17x1xf32>
    %cst_258 = arith.constant 9.99999974E-6 : f32
    %548 = vector.broadcast %cst_258 : f32 to vector<17x1xf32>
    %549 = arith.addf %547, %548 : vector<17x1xf32>
    %550 = math.rsqrt %549 : vector<17x1xf32>
    %551 = vector.broadcast %550 : vector<17x1xf32> to vector<17x32xf32>
    %552 = arith.mulf %542, %551 : vector<17x32xf32>
    %c1_259 = arith.constant 1 : index
    %c0_260 = arith.constant 0 : index
    %c0_261 = arith.constant 0 : index
    %553 = vector.load %arg11[%c1_259, %c0_260, %c0_261] : memref<2x1x32xf32, #tpu.memory_space<vmem>>, vector<1x1x32xf32>
    %554 = vector.shape_cast %553 : vector<1x1x32xf32> to vector<1x32xf32>
    %555 = vector.broadcast %554 : vector<1x32xf32> to vector<17x32xf32>
    %556 = arith.mulf %552, %555 : vector<17x32xf32>
    %c1_262 = arith.constant 1 : index
    %c0_263 = arith.constant 0 : index
    %c0_264 = arith.constant 0 : index
    %557 = vector.load %arg12[%c1_262, %c0_263, %c0_264] : memref<2x1x32xf32, #tpu.memory_space<vmem>>, vector<1x1x32xf32>
    %558 = vector.shape_cast %557 : vector<1x1x32xf32> to vector<1x32xf32>
    %559 = vector.broadcast %558 : vector<1x32xf32> to vector<17x32xf32>
    %560 = arith.addf %556, %559 : vector<17x32xf32>
    %c1_265 = arith.constant 1 : index
    %c0_266 = arith.constant 0 : index
    %c0_267 = arith.constant 0 : index
    %561 = vector.load %arg13[%c1_265, %c0_266, %c0_267] : memref<2x32x32xf32, #tpu.memory_space<vmem>>, vector<1x32x32xf32>
    %562 = vector.shape_cast %561 : vector<1x32x32xf32> to vector<32x32xf32>
    %cst_268 = arith.constant dense<0.000000e+00> : vector<17x32xf32>
    %563 = tpu.matmul %560, %562, %cst_268 {dimension_numbers = #tpu.dot_dimension_numbers<[1], [0], [0], [1], [0, 0, 1, 1], [], []>} : vector<17x32xf32>, vector<32x32xf32>, vector<17x32xf32> -> vector<17x32xf32>
    %c1_269 = arith.constant 1 : index
    %c0_270 = arith.constant 0 : index
    %c0_271 = arith.constant 0 : index
    %564 = vector.load %arg14[%c1_269, %c0_270, %c0_271] : memref<2x1x32xf32, #tpu.memory_space<vmem>>, vector<1x1x32xf32>
    %565 = vector.shape_cast %564 : vector<1x1x32xf32> to vector<1x32xf32>
    %566 = vector.broadcast %565 : vector<1x32xf32> to vector<17x32xf32>
    %567 = arith.addf %563, %566 : vector<17x32xf32>
    %c1_272 = arith.constant 1 : index
    %c0_273 = arith.constant 0 : index
    %c0_274 = arith.constant 0 : index
    %568 = vector.load %arg15[%c1_272, %c0_273, %c0_274] : memref<2x32x32xf32, #tpu.memory_space<vmem>>, vector<1x32x32xf32>
    %569 = vector.shape_cast %568 : vector<1x32x32xf32> to vector<32x32xf32>
    %cst_275 = arith.constant dense<0.000000e+00> : vector<17x32xf32>
    %570 = tpu.matmul %560, %569, %cst_275 {dimension_numbers = #tpu.dot_dimension_numbers<[1], [0], [0], [1], [0, 0, 1, 1], [], []>} : vector<17x32xf32>, vector<32x32xf32>, vector<17x32xf32> -> vector<17x32xf32>
    %c1_276 = arith.constant 1 : index
    %c0_277 = arith.constant 0 : index
    %c0_278 = arith.constant 0 : index
    %571 = vector.load %arg16[%c1_276, %c0_277, %c0_278] : memref<2x1x32xf32, #tpu.memory_space<vmem>>, vector<1x1x32xf32>
    %572 = vector.shape_cast %571 : vector<1x1x32xf32> to vector<1x32xf32>
    %573 = vector.broadcast %572 : vector<1x32xf32> to vector<17x32xf32>
    %574 = arith.addf %570, %573 : vector<17x32xf32>
    %c1_279 = arith.constant 1 : index
    %c0_280 = arith.constant 0 : index
    %c0_281 = arith.constant 0 : index
    %575 = vector.load %arg17[%c1_279, %c0_280, %c0_281] : memref<2x32x32xf32, #tpu.memory_space<vmem>>, vector<1x32x32xf32>
    %576 = vector.shape_cast %575 : vector<1x32x32xf32> to vector<32x32xf32>
    %cst_282 = arith.constant dense<0.000000e+00> : vector<17x32xf32>
    %577 = tpu.matmul %560, %576, %cst_282 {dimension_numbers = #tpu.dot_dimension_numbers<[1], [0], [0], [1], [0, 0, 1, 1], [], []>} : vector<17x32xf32>, vector<32x32xf32>, vector<17x32xf32> -> vector<17x32xf32>
    %c1_283 = arith.constant 1 : index
    %c0_284 = arith.constant 0 : index
    %c0_285 = arith.constant 0 : index
    %578 = vector.load %arg18[%c1_283, %c0_284, %c0_285] : memref<2x1x32xf32, #tpu.memory_space<vmem>>, vector<1x1x32xf32>
    %579 = vector.shape_cast %578 : vector<1x1x32xf32> to vector<1x32xf32>
    %580 = vector.broadcast %579 : vector<1x32xf32> to vector<17x32xf32>
    %581 = arith.addf %577, %580 : vector<17x32xf32>
    %c1_286 = arith.constant 1 : index
    %c0_287 = arith.constant 0 : index
    %c0_288 = arith.constant 0 : index
    %582 = vector.load %arg19[%c1_286, %c0_287, %c0_288] : memref<2x32x32xf32, #tpu.memory_space<vmem>>, vector<1x32x32xf32>
    %583 = vector.shape_cast %582 : vector<1x32x32xf32> to vector<32x32xf32>
    %c1_289 = arith.constant 1 : index
    %c0_290 = arith.constant 0 : index
    %c0_291 = arith.constant 0 : index
    %584 = vector.load %arg20[%c1_289, %c0_290, %c0_291] : memref<2x1x32xf32, #tpu.memory_space<vmem>>, vector<1x1x32xf32>
    %585 = vector.shape_cast %584 : vector<1x1x32xf32> to vector<1x32xf32>
    %586 = vector.extract_strided_slice %567 {offsets = [0, 0], sizes = [17, 8], strides = [1, 1]} : vector<17x32xf32> to vector<17x8xf32>
    %587 = vector.extract_strided_slice %574 {offsets = [0, 0], sizes = [17, 8], strides = [1, 1]} : vector<17x32xf32> to vector<17x8xf32>
    %588 = vector.extract_strided_slice %581 {offsets = [0, 0], sizes = [17, 8], strides = [1, 1]} : vector<17x32xf32> to vector<17x8xf32>
    %cst_292 = arith.constant dense<0.000000e+00> : vector<17x17xf32>
    %589 = tpu.matmul %586, %587, %cst_292 {dimension_numbers = #tpu.dot_dimension_numbers<[1], [1], [0], [0], [0, 0, 1, 0], [], []>} : vector<17x8xf32>, vector<17x8xf32>, vector<17x17xf32> -> vector<17x17xf32>
    %cst_293 = arith.constant dense<0xFF800000> : vector<17xf32>
    %590 = vector.multi_reduction <maximumf>, %589, %cst_293 [1] : vector<17x17xf32> to vector<17xf32>
    %591 = vector.shape_cast %590 : vector<17xf32> to vector<17x1xf32>
    %592 = vector.broadcast %591 : vector<17x1xf32> to vector<17x17xf32>
    %593 = arith.subf %589, %592 : vector<17x17xf32>
    %594 = math.exp %593 : vector<17x17xf32>
    %cst_294 = arith.constant dense<0.000000e+00> : vector<17xf32>
    %595 = vector.multi_reduction <add>, %594, %cst_294 [1] : vector<17x17xf32> to vector<17xf32>
    %596 = vector.shape_cast %595 : vector<17xf32> to vector<17x1xf32>
    %597 = vector.broadcast %596 : vector<17x1xf32> to vector<17x17xf32>
    %598 = arith.divf %594, %597 : vector<17x17xf32>
    %cst_295 = arith.constant dense<0.000000e+00> : vector<17x8xf32>
    %599 = tpu.matmul %598, %588, %cst_295 {dimension_numbers = #tpu.dot_dimension_numbers<[1], [0], [0], [1], [0, 0, 1, 1], [], []>} : vector<17x17xf32>, vector<17x8xf32>, vector<17x8xf32> -> vector<17x8xf32>
    %600 = vector.extract_strided_slice %583 {offsets = [0, 0], sizes = [8, 32], strides = [1, 1]} : vector<32x32xf32> to vector<8x32xf32>
    %cst_296 = arith.constant dense<0.000000e+00> : vector<17x32xf32>
    %601 = tpu.matmul %599, %600, %cst_296 {dimension_numbers = #tpu.dot_dimension_numbers<[1], [0], [0], [1], [0, 0, 1, 1], [], []>} : vector<17x8xf32>, vector<8x32xf32>, vector<17x32xf32> -> vector<17x32xf32>
    %602 = vector.broadcast %585 : vector<1x32xf32> to vector<17x32xf32>
    %603 = arith.addf %602, %601 : vector<17x32xf32>
    %604 = vector.extract_strided_slice %567 {offsets = [0, 8], sizes = [17, 8], strides = [1, 1]} : vector<17x32xf32> to vector<17x8xf32>
    %605 = vector.extract_strided_slice %574 {offsets = [0, 8], sizes = [17, 8], strides = [1, 1]} : vector<17x32xf32> to vector<17x8xf32>
    %606 = vector.extract_strided_slice %581 {offsets = [0, 8], sizes = [17, 8], strides = [1, 1]} : vector<17x32xf32> to vector<17x8xf32>
    %cst_297 = arith.constant dense<0.000000e+00> : vector<17x17xf32>
    %607 = tpu.matmul %604, %605, %cst_297 {dimension_numbers = #tpu.dot_dimension_numbers<[1], [1], [0], [0], [0, 0, 1, 0], [], []>} : vector<17x8xf32>, vector<17x8xf32>, vector<17x17xf32> -> vector<17x17xf32>
    %cst_298 = arith.constant dense<0xFF800000> : vector<17xf32>
    %608 = vector.multi_reduction <maximumf>, %607, %cst_298 [1] : vector<17x17xf32> to vector<17xf32>
    %609 = vector.shape_cast %608 : vector<17xf32> to vector<17x1xf32>
    %610 = vector.broadcast %609 : vector<17x1xf32> to vector<17x17xf32>
    %611 = arith.subf %607, %610 : vector<17x17xf32>
    %612 = math.exp %611 : vector<17x17xf32>
    %cst_299 = arith.constant dense<0.000000e+00> : vector<17xf32>
    %613 = vector.multi_reduction <add>, %612, %cst_299 [1] : vector<17x17xf32> to vector<17xf32>
    %614 = vector.shape_cast %613 : vector<17xf32> to vector<17x1xf32>
    %615 = vector.broadcast %614 : vector<17x1xf32> to vector<17x17xf32>
    %616 = arith.divf %612, %615 : vector<17x17xf32>
    %cst_300 = arith.constant dense<0.000000e+00> : vector<17x8xf32>
    %617 = tpu.matmul %616, %606, %cst_300 {dimension_numbers = #tpu.dot_dimension_numbers<[1], [0], [0], [1], [0, 0, 1, 1], [], []>} : vector<17x17xf32>, vector<17x8xf32>, vector<17x8xf32> -> vector<17x8xf32>
    %618 = vector.extract_strided_slice %583 {offsets = [8, 0], sizes = [8, 32], strides = [1, 1]} : vector<32x32xf32> to vector<8x32xf32>
    %cst_301 = arith.constant dense<0.000000e+00> : vector<17x32xf32>
    %619 = tpu.matmul %617, %618, %cst_301 {dimension_numbers = #tpu.dot_dimension_numbers<[1], [0], [0], [1], [0, 0, 1, 1], [], []>} : vector<17x8xf32>, vector<8x32xf32>, vector<17x32xf32> -> vector<17x32xf32>
    %620 = arith.addf %603, %619 : vector<17x32xf32>
    %621 = vector.extract_strided_slice %567 {offsets = [0, 16], sizes = [17, 8], strides = [1, 1]} : vector<17x32xf32> to vector<17x8xf32>
    %622 = vector.extract_strided_slice %574 {offsets = [0, 16], sizes = [17, 8], strides = [1, 1]} : vector<17x32xf32> to vector<17x8xf32>
    %623 = vector.extract_strided_slice %581 {offsets = [0, 16], sizes = [17, 8], strides = [1, 1]} : vector<17x32xf32> to vector<17x8xf32>
    %cst_302 = arith.constant dense<0.000000e+00> : vector<17x17xf32>
    %624 = tpu.matmul %621, %622, %cst_302 {dimension_numbers = #tpu.dot_dimension_numbers<[1], [1], [0], [0], [0, 0, 1, 0], [], []>} : vector<17x8xf32>, vector<17x8xf32>, vector<17x17xf32> -> vector<17x17xf32>
    %cst_303 = arith.constant dense<0xFF800000> : vector<17xf32>
    %625 = vector.multi_reduction <maximumf>, %624, %cst_303 [1] : vector<17x17xf32> to vector<17xf32>
    %626 = vector.shape_cast %625 : vector<17xf32> to vector<17x1xf32>
    %627 = vector.broadcast %626 : vector<17x1xf32> to vector<17x17xf32>
    %628 = arith.subf %624, %627 : vector<17x17xf32>
    %629 = math.exp %628 : vector<17x17xf32>
    %cst_304 = arith.constant dense<0.000000e+00> : vector<17xf32>
    %630 = vector.multi_reduction <add>, %629, %cst_304 [1] : vector<17x17xf32> to vector<17xf32>
    %631 = vector.shape_cast %630 : vector<17xf32> to vector<17x1xf32>
    %632 = vector.broadcast %631 : vector<17x1xf32> to vector<17x17xf32>
    %633 = arith.divf %629, %632 : vector<17x17xf32>
    %cst_305 = arith.constant dense<0.000000e+00> : vector<17x8xf32>
    %634 = tpu.matmul %633, %623, %cst_305 {dimension_numbers = #tpu.dot_dimension_numbers<[1], [0], [0], [1], [0, 0, 1, 1], [], []>} : vector<17x17xf32>, vector<17x8xf32>, vector<17x8xf32> -> vector<17x8xf32>
    %635 = vector.extract_strided_slice %583 {offsets = [16, 0], sizes = [8, 32], strides = [1, 1]} : vector<32x32xf32> to vector<8x32xf32>
    %cst_306 = arith.constant dense<0.000000e+00> : vector<17x32xf32>
    %636 = tpu.matmul %634, %635, %cst_306 {dimension_numbers = #tpu.dot_dimension_numbers<[1], [0], [0], [1], [0, 0, 1, 1], [], []>} : vector<17x8xf32>, vector<8x32xf32>, vector<17x32xf32> -> vector<17x32xf32>
    %637 = arith.addf %620, %636 : vector<17x32xf32>
    %638 = vector.extract_strided_slice %567 {offsets = [0, 24], sizes = [17, 8], strides = [1, 1]} : vector<17x32xf32> to vector<17x8xf32>
    %639 = vector.extract_strided_slice %574 {offsets = [0, 24], sizes = [17, 8], strides = [1, 1]} : vector<17x32xf32> to vector<17x8xf32>
    %640 = vector.extract_strided_slice %581 {offsets = [0, 24], sizes = [17, 8], strides = [1, 1]} : vector<17x32xf32> to vector<17x8xf32>
    %cst_307 = arith.constant dense<0.000000e+00> : vector<17x17xf32>
    %641 = tpu.matmul %638, %639, %cst_307 {dimension_numbers = #tpu.dot_dimension_numbers<[1], [1], [0], [0], [0, 0, 1, 0], [], []>} : vector<17x8xf32>, vector<17x8xf32>, vector<17x17xf32> -> vector<17x17xf32>
    %cst_308 = arith.constant dense<0xFF800000> : vector<17xf32>
    %642 = vector.multi_reduction <maximumf>, %641, %cst_308 [1] : vector<17x17xf32> to vector<17xf32>
    %643 = vector.shape_cast %642 : vector<17xf32> to vector<17x1xf32>
    %644 = vector.broadcast %643 : vector<17x1xf32> to vector<17x17xf32>
    %645 = arith.subf %641, %644 : vector<17x17xf32>
    %646 = math.exp %645 : vector<17x17xf32>
    %cst_309 = arith.constant dense<0.000000e+00> : vector<17xf32>
    %647 = vector.multi_reduction <add>, %646, %cst_309 [1] : vector<17x17xf32> to vector<17xf32>
    %648 = vector.shape_cast %647 : vector<17xf32> to vector<17x1xf32>
    %649 = vector.broadcast %648 : vector<17x1xf32> to vector<17x17xf32>
    %650 = arith.divf %646, %649 : vector<17x17xf32>
    %cst_310 = arith.constant dense<0.000000e+00> : vector<17x8xf32>
    %651 = tpu.matmul %650, %640, %cst_310 {dimension_numbers = #tpu.dot_dimension_numbers<[1], [0], [0], [1], [0, 0, 1, 1], [], []>} : vector<17x17xf32>, vector<17x8xf32>, vector<17x8xf32> -> vector<17x8xf32>
    %652 = vector.extract_strided_slice %583 {offsets = [24, 0], sizes = [8, 32], strides = [1, 1]} : vector<32x32xf32> to vector<8x32xf32>
    %cst_311 = arith.constant dense<0.000000e+00> : vector<17x32xf32>
    %653 = tpu.matmul %651, %652, %cst_311 {dimension_numbers = #tpu.dot_dimension_numbers<[1], [0], [0], [1], [0, 0, 1, 1], [], []>} : vector<17x8xf32>, vector<8x32xf32>, vector<17x32xf32> -> vector<17x32xf32>
    %654 = arith.addf %637, %653 : vector<17x32xf32>
    %655 = arith.addf %536, %654 : vector<17x32xf32>
    %cst_312 = arith.constant dense<0.000000e+00> : vector<17xf32>
    %656 = vector.multi_reduction <add>, %655, %cst_312 [1] : vector<17x32xf32> to vector<17xf32>
    %657 = vector.shape_cast %656 : vector<17xf32> to vector<17x1xf32>
    %cst_313 = arith.constant 3.200000e+01 : f32
    %658 = vector.broadcast %cst_313 : f32 to vector<17x1xf32>
    %659 = arith.divf %657, %658 : vector<17x1xf32>
    %660 = vector.broadcast %659 : vector<17x1xf32> to vector<17x32xf32>
    %661 = arith.subf %655, %660 : vector<17x32xf32>
    %662 = arith.mulf %661, %661 : vector<17x32xf32>
    %cst_314 = arith.constant dense<0.000000e+00> : vector<17xf32>
    %663 = vector.multi_reduction <add>, %662, %cst_314 [1] : vector<17x32xf32> to vector<17xf32>
    %664 = vector.shape_cast %663 : vector<17xf32> to vector<17x1xf32>
    %cst_315 = arith.constant 3.200000e+01 : f32
    %665 = vector.broadcast %cst_315 : f32 to vector<17x1xf32>
    %666 = arith.divf %664, %665 : vector<17x1xf32>
    %cst_316 = arith.constant 9.99999974E-6 : f32
    %667 = vector.broadcast %cst_316 : f32 to vector<17x1xf32>
    %668 = arith.addf %666, %667 : vector<17x1xf32>
    %669 = math.rsqrt %668 : vector<17x1xf32>
    %670 = vector.broadcast %669 : vector<17x1xf32> to vector<17x32xf32>
    %671 = arith.mulf %661, %670 : vector<17x32xf32>
    %c1_317 = arith.constant 1 : index
    %c0_318 = arith.constant 0 : index
    %c0_319 = arith.constant 0 : index
    %672 = vector.load %arg21[%c1_317, %c0_318, %c0_319] : memref<2x1x32xf32, #tpu.memory_space<vmem>>, vector<1x1x32xf32>
    %673 = vector.shape_cast %672 : vector<1x1x32xf32> to vector<1x32xf32>
    %674 = vector.broadcast %673 : vector<1x32xf32> to vector<17x32xf32>
    %675 = arith.mulf %671, %674 : vector<17x32xf32>
    %c1_320 = arith.constant 1 : index
    %c0_321 = arith.constant 0 : index
    %c0_322 = arith.constant 0 : index
    %676 = vector.load %arg22[%c1_320, %c0_321, %c0_322] : memref<2x1x32xf32, #tpu.memory_space<vmem>>, vector<1x1x32xf32>
    %677 = vector.shape_cast %676 : vector<1x1x32xf32> to vector<1x32xf32>
    %678 = vector.broadcast %677 : vector<1x32xf32> to vector<17x32xf32>
    %679 = arith.addf %675, %678 : vector<17x32xf32>
    %c1_323 = arith.constant 1 : index
    %c0_324 = arith.constant 0 : index
    %c0_325 = arith.constant 0 : index
    %680 = vector.load %arg23[%c1_323, %c0_324, %c0_325] : memref<2x32x32xf32, #tpu.memory_space<vmem>>, vector<1x32x32xf32>
    %681 = vector.shape_cast %680 : vector<1x32x32xf32> to vector<32x32xf32>
    %cst_326 = arith.constant dense<0.000000e+00> : vector<17x32xf32>
    %682 = tpu.matmul %679, %681, %cst_326 {dimension_numbers = #tpu.dot_dimension_numbers<[1], [0], [0], [1], [0, 0, 1, 1], [], []>} : vector<17x32xf32>, vector<32x32xf32>, vector<17x32xf32> -> vector<17x32xf32>
    %c1_327 = arith.constant 1 : index
    %c0_328 = arith.constant 0 : index
    %c0_329 = arith.constant 0 : index
    %683 = vector.load %arg24[%c1_327, %c0_328, %c0_329] : memref<2x1x32xf32, #tpu.memory_space<vmem>>, vector<1x1x32xf32>
    %684 = vector.shape_cast %683 : vector<1x1x32xf32> to vector<1x32xf32>
    %685 = vector.broadcast %684 : vector<1x32xf32> to vector<17x32xf32>
    %686 = arith.addf %682, %685 : vector<17x32xf32>
    %c1_330 = arith.constant 1 : index
    %c0_331 = arith.constant 0 : index
    %c0_332 = arith.constant 0 : index
    %687 = vector.load %arg25[%c1_330, %c0_331, %c0_332] : memref<2x32x32xf32, #tpu.memory_space<vmem>>, vector<1x32x32xf32>
    %688 = vector.shape_cast %687 : vector<1x32x32xf32> to vector<32x32xf32>
    %cst_333 = arith.constant dense<0.000000e+00> : vector<17x32xf32>
    %689 = tpu.matmul %679, %688, %cst_333 {dimension_numbers = #tpu.dot_dimension_numbers<[1], [0], [0], [1], [0, 0, 1, 1], [], []>} : vector<17x32xf32>, vector<32x32xf32>, vector<17x32xf32> -> vector<17x32xf32>
    %c1_334 = arith.constant 1 : index
    %c0_335 = arith.constant 0 : index
    %c0_336 = arith.constant 0 : index
    %690 = vector.load %arg26[%c1_334, %c0_335, %c0_336] : memref<2x1x32xf32, #tpu.memory_space<vmem>>, vector<1x1x32xf32>
    %691 = vector.shape_cast %690 : vector<1x1x32xf32> to vector<1x32xf32>
    %692 = vector.broadcast %691 : vector<1x32xf32> to vector<17x32xf32>
    %693 = arith.addf %689, %692 : vector<17x32xf32>
    %cst_337 = arith.constant 0.000000e+00 : f32
    %694 = vector.broadcast %cst_337 : f32 to vector<17x32xf32>
    %695 = arith.subf %694, %693 : vector<17x32xf32>
    %696 = math.exp %695 : vector<17x32xf32>
    %cst_338 = arith.constant 1.000000e+00 : f32
    %697 = vector.broadcast %cst_338 : f32 to vector<17x32xf32>
    %698 = arith.addf %697, %696 : vector<17x32xf32>
    %cst_339 = arith.constant 1.000000e+00 : f32
    %699 = vector.broadcast %cst_339 : f32 to vector<17x32xf32>
    %700 = arith.divf %699, %698 : vector<17x32xf32>
    %701 = arith.mulf %686, %700 : vector<17x32xf32>
    %c15_340 = arith.constant 15 : index
    %c0_341 = arith.constant 0 : index
    %702 = vector.load %arg54[%c15_340, %c0_341] : memref<47x32xf32, #tpu.memory_space<vmem>>, vector<17x32xf32>
    tpu.vector_store %arg54[%c15_340, %c0_341], %701 {strides = array<i32>} : memref<47x32xf32, #tpu.memory_space<vmem>>, vector<17x32xf32>,
    %c1_342 = arith.constant 1 : index
    %c0_343 = arith.constant 0 : index
    %c0_344 = arith.constant 0 : index
    %703 = vector.load %arg27[%c1_342, %c0_343, %c0_344] : memref<2x31x32xf32, #tpu.memory_space<vmem>>, vector<1x31x32xf32>
    %704 = vector.shape_cast %703 : vector<1x31x32xf32> to vector<31x32xf32>
    %cst_345 = arith.constant 0.000000e+00 : f32
    %705 = vector.broadcast %cst_345 : f32 to vector<17x32xf32>
    %c0_346 = arith.constant 0 : index
    %c0_347 = arith.constant 0 : index
    %706 = vector.load %arg54[%c0_346, %c0_347] : memref<47x32xf32, #tpu.memory_space<vmem>>, vector<17x32xf32>
    %707 = vector.extract_strided_slice %704 {offsets = [0, 0], sizes = [1, 32], strides = [1, 1]} : vector<31x32xf32> to vector<1x32xf32>
    %708 = vector.broadcast %707 : vector<1x32xf32> to vector<17x32xf32>
    %709 = arith.mulf %706, %708 : vector<17x32xf32>
    %710 = arith.addf %705, %709 : vector<17x32xf32>
    %c1_348 = arith.constant 1 : index
    %c0_349 = arith.constant 0 : index
    %711 = vector.load %arg54[%c1_348, %c0_349] : memref<47x32xf32, #tpu.memory_space<vmem>>, vector<17x32xf32>
    %712 = vector.extract_strided_slice %704 {offsets = [1, 0], sizes = [1, 32], strides = [1, 1]} : vector<31x32xf32> to vector<1x32xf32>
    %713 = vector.broadcast %712 : vector<1x32xf32> to vector<17x32xf32>
    %714 = arith.mulf %711, %713 : vector<17x32xf32>
    %715 = arith.addf %710, %714 : vector<17x32xf32>
    %c2_350 = arith.constant 2 : index
    %c0_351 = arith.constant 0 : index
    %716 = vector.load %arg54[%c2_350, %c0_351] : memref<47x32xf32, #tpu.memory_space<vmem>>, vector<17x32xf32>
    %717 = vector.extract_strided_slice %704 {offsets = [2, 0], sizes = [1, 32], strides = [1, 1]} : vector<31x32xf32> to vector<1x32xf32>
    %718 = vector.broadcast %717 : vector<1x32xf32> to vector<17x32xf32>
    %719 = arith.mulf %716, %718 : vector<17x32xf32>
    %720 = arith.addf %715, %719 : vector<17x32xf32>
    %c3_352 = arith.constant 3 : index
    %c0_353 = arith.constant 0 : index
    %721 = vector.load %arg54[%c3_352, %c0_353] : memref<47x32xf32, #tpu.memory_space<vmem>>, vector<17x32xf32>
    %722 = vector.extract_strided_slice %704 {offsets = [3, 0], sizes = [1, 32], strides = [1, 1]} : vector<31x32xf32> to vector<1x32xf32>
    %723 = vector.broadcast %722 : vector<1x32xf32> to vector<17x32xf32>
    %724 = arith.mulf %721, %723 : vector<17x32xf32>
    %725 = arith.addf %720, %724 : vector<17x32xf32>
    %c4_354 = arith.constant 4 : index
    %c0_355 = arith.constant 0 : index
    %726 = vector.load %arg54[%c4_354, %c0_355] : memref<47x32xf32, #tpu.memory_space<vmem>>, vector<17x32xf32>
    %727 = vector.extract_strided_slice %704 {offsets = [4, 0], sizes = [1, 32], strides = [1, 1]} : vector<31x32xf32> to vector<1x32xf32>
    %728 = vector.broadcast %727 : vector<1x32xf32> to vector<17x32xf32>
    %729 = arith.mulf %726, %728 : vector<17x32xf32>
    %730 = arith.addf %725, %729 : vector<17x32xf32>
    %c5_356 = arith.constant 5 : index
    %c0_357 = arith.constant 0 : index
    %731 = vector.load %arg54[%c5_356, %c0_357] : memref<47x32xf32, #tpu.memory_space<vmem>>, vector<17x32xf32>
    %732 = vector.extract_strided_slice %704 {offsets = [5, 0], sizes = [1, 32], strides = [1, 1]} : vector<31x32xf32> to vector<1x32xf32>
    %733 = vector.broadcast %732 : vector<1x32xf32> to vector<17x32xf32>
    %734 = arith.mulf %731, %733 : vector<17x32xf32>
    %735 = arith.addf %730, %734 : vector<17x32xf32>
    %c6_358 = arith.constant 6 : index
    %c0_359 = arith.constant 0 : index
    %736 = vector.load %arg54[%c6_358, %c0_359] : memref<47x32xf32, #tpu.memory_space<vmem>>, vector<17x32xf32>
    %737 = vector.extract_strided_slice %704 {offsets = [6, 0], sizes = [1, 32], strides = [1, 1]} : vector<31x32xf32> to vector<1x32xf32>
    %738 = vector.broadcast %737 : vector<1x32xf32> to vector<17x32xf32>
    %739 = arith.mulf %736, %738 : vector<17x32xf32>
    %740 = arith.addf %735, %739 : vector<17x32xf32>
    %c7_360 = arith.constant 7 : index
    %c0_361 = arith.constant 0 : index
    %741 = vector.load %arg54[%c7_360, %c0_361] : memref<47x32xf32, #tpu.memory_space<vmem>>, vector<17x32xf32>
    %742 = vector.extract_strided_slice %704 {offsets = [7, 0], sizes = [1, 32], strides = [1, 1]} : vector<31x32xf32> to vector<1x32xf32>
    %743 = vector.broadcast %742 : vector<1x32xf32> to vector<17x32xf32>
    %744 = arith.mulf %741, %743 : vector<17x32xf32>
    %745 = arith.addf %740, %744 : vector<17x32xf32>
    %c8_362 = arith.constant 8 : index
    %c0_363 = arith.constant 0 : index
    %746 = vector.load %arg54[%c8_362, %c0_363] : memref<47x32xf32, #tpu.memory_space<vmem>>, vector<17x32xf32>
    %747 = vector.extract_strided_slice %704 {offsets = [8, 0], sizes = [1, 32], strides = [1, 1]} : vector<31x32xf32> to vector<1x32xf32>
    %748 = vector.broadcast %747 : vector<1x32xf32> to vector<17x32xf32>
    %749 = arith.mulf %746, %748 : vector<17x32xf32>
    %750 = arith.addf %745, %749 : vector<17x32xf32>
    %c9_364 = arith.constant 9 : index
    %c0_365 = arith.constant 0 : index
    %751 = vector.load %arg54[%c9_364, %c0_365] : memref<47x32xf32, #tpu.memory_space<vmem>>, vector<17x32xf32>
    %752 = vector.extract_strided_slice %704 {offsets = [9, 0], sizes = [1, 32], strides = [1, 1]} : vector<31x32xf32> to vector<1x32xf32>
    %753 = vector.broadcast %752 : vector<1x32xf32> to vector<17x32xf32>
    %754 = arith.mulf %751, %753 : vector<17x32xf32>
    %755 = arith.addf %750, %754 : vector<17x32xf32>
    %c10_366 = arith.constant 10 : index
    %c0_367 = arith.constant 0 : index
    %756 = vector.load %arg54[%c10_366, %c0_367] : memref<47x32xf32, #tpu.memory_space<vmem>>, vector<17x32xf32>
    %757 = vector.extract_strided_slice %704 {offsets = [10, 0], sizes = [1, 32], strides = [1, 1]} : vector<31x32xf32> to vector<1x32xf32>
    %758 = vector.broadcast %757 : vector<1x32xf32> to vector<17x32xf32>
    %759 = arith.mulf %756, %758 : vector<17x32xf32>
    %760 = arith.addf %755, %759 : vector<17x32xf32>
    %c11_368 = arith.constant 11 : index
    %c0_369 = arith.constant 0 : index
    %761 = vector.load %arg54[%c11_368, %c0_369] : memref<47x32xf32, #tpu.memory_space<vmem>>, vector<17x32xf32>
    %762 = vector.extract_strided_slice %704 {offsets = [11, 0], sizes = [1, 32], strides = [1, 1]} : vector<31x32xf32> to vector<1x32xf32>
    %763 = vector.broadcast %762 : vector<1x32xf32> to vector<17x32xf32>
    %764 = arith.mulf %761, %763 : vector<17x32xf32>
    %765 = arith.addf %760, %764 : vector<17x32xf32>
    %c12_370 = arith.constant 12 : index
    %c0_371 = arith.constant 0 : index
    %766 = vector.load %arg54[%c12_370, %c0_371] : memref<47x32xf32, #tpu.memory_space<vmem>>, vector<17x32xf32>
    %767 = vector.extract_strided_slice %704 {offsets = [12, 0], sizes = [1, 32], strides = [1, 1]} : vector<31x32xf32> to vector<1x32xf32>
    %768 = vector.broadcast %767 : vector<1x32xf32> to vector<17x32xf32>
    %769 = arith.mulf %766, %768 : vector<17x32xf32>
    %770 = arith.addf %765, %769 : vector<17x32xf32>
    %c13_372 = arith.constant 13 : index
    %c0_373 = arith.constant 0 : index
    %771 = vector.load %arg54[%c13_372, %c0_373] : memref<47x32xf32, #tpu.memory_space<vmem>>, vector<17x32xf32>
    %772 = vector.extract_strided_slice %704 {offsets = [13, 0], sizes = [1, 32], strides = [1, 1]} : vector<31x32xf32> to vector<1x32xf32>
    %773 = vector.broadcast %772 : vector<1x32xf32> to vector<17x32xf32>
    %774 = arith.mulf %771, %773 : vector<17x32xf32>
    %775 = arith.addf %770, %774 : vector<17x32xf32>
    %c14_374 = arith.constant 14 : index
    %c0_375 = arith.constant 0 : index
    %776 = vector.load %arg54[%c14_374, %c0_375] : memref<47x32xf32, #tpu.memory_space<vmem>>, vector<17x32xf32>
    %777 = vector.extract_strided_slice %704 {offsets = [14, 0], sizes = [1, 32], strides = [1, 1]} : vector<31x32xf32> to vector<1x32xf32>
    %778 = vector.broadcast %777 : vector<1x32xf32> to vector<17x32xf32>
    %779 = arith.mulf %776, %778 : vector<17x32xf32>
    %780 = arith.addf %775, %779 : vector<17x32xf32>
    %c15_376 = arith.constant 15 : index
    %c0_377 = arith.constant 0 : index
    %781 = vector.load %arg54[%c15_376, %c0_377] : memref<47x32xf32, #tpu.memory_space<vmem>>, vector<17x32xf32>
    %782 = vector.extract_strided_slice %704 {offsets = [15, 0], sizes = [1, 32], strides = [1, 1]} : vector<31x32xf32> to vector<1x32xf32>
    %783 = vector.broadcast %782 : vector<1x32xf32> to vector<17x32xf32>
    %784 = arith.mulf %781, %783 : vector<17x32xf32>
    %785 = arith.addf %780, %784 : vector<17x32xf32>
    %c16_378 = arith.constant 16 : index
    %c0_379 = arith.constant 0 : index
    %786 = vector.load %arg54[%c16_378, %c0_379] : memref<47x32xf32, #tpu.memory_space<vmem>>, vector<17x32xf32>
    %787 = vector.extract_strided_slice %704 {offsets = [16, 0], sizes = [1, 32], strides = [1, 1]} : vector<31x32xf32> to vector<1x32xf32>
    %788 = vector.broadcast %787 : vector<1x32xf32> to vector<17x32xf32>
    %789 = arith.mulf %786, %788 : vector<17x32xf32>
    %790 = arith.addf %785, %789 : vector<17x32xf32>
    %c17_380 = arith.constant 17 : index
    %c0_381 = arith.constant 0 : index
    %791 = vector.load %arg54[%c17_380, %c0_381] : memref<47x32xf32, #tpu.memory_space<vmem>>, vector<17x32xf32>
    %792 = vector.extract_strided_slice %704 {offsets = [17, 0], sizes = [1, 32], strides = [1, 1]} : vector<31x32xf32> to vector<1x32xf32>
    %793 = vector.broadcast %792 : vector<1x32xf32> to vector<17x32xf32>
    %794 = arith.mulf %791, %793 : vector<17x32xf32>
    %795 = arith.addf %790, %794 : vector<17x32xf32>
    %c18_382 = arith.constant 18 : index
    %c0_383 = arith.constant 0 : index
    %796 = vector.load %arg54[%c18_382, %c0_383] : memref<47x32xf32, #tpu.memory_space<vmem>>, vector<17x32xf32>
    %797 = vector.extract_strided_slice %704 {offsets = [18, 0], sizes = [1, 32], strides = [1, 1]} : vector<31x32xf32> to vector<1x32xf32>
    %798 = vector.broadcast %797 : vector<1x32xf32> to vector<17x32xf32>
    %799 = arith.mulf %796, %798 : vector<17x32xf32>
    %800 = arith.addf %795, %799 : vector<17x32xf32>
    %c19_384 = arith.constant 19 : index
    %c0_385 = arith.constant 0 : index
    %801 = vector.load %arg54[%c19_384, %c0_385] : memref<47x32xf32, #tpu.memory_space<vmem>>, vector<17x32xf32>
    %802 = vector.extract_strided_slice %704 {offsets = [19, 0], sizes = [1, 32], strides = [1, 1]} : vector<31x32xf32> to vector<1x32xf32>
    %803 = vector.broadcast %802 : vector<1x32xf32> to vector<17x32xf32>
    %804 = arith.mulf %801, %803 : vector<17x32xf32>
    %805 = arith.addf %800, %804 : vector<17x32xf32>
    %c20_386 = arith.constant 20 : index
    %c0_387 = arith.constant 0 : index
    %806 = vector.load %arg54[%c20_386, %c0_387] : memref<47x32xf32, #tpu.memory_space<vmem>>, vector<17x32xf32>
    %807 = vector.extract_strided_slice %704 {offsets = [20, 0], sizes = [1, 32], strides = [1, 1]} : vector<31x32xf32> to vector<1x32xf32>
    %808 = vector.broadcast %807 : vector<1x32xf32> to vector<17x32xf32>
    %809 = arith.mulf %806, %808 : vector<17x32xf32>
    %810 = arith.addf %805, %809 : vector<17x32xf32>
    %c21_388 = arith.constant 21 : index
    %c0_389 = arith.constant 0 : index
    %811 = vector.load %arg54[%c21_388, %c0_389] : memref<47x32xf32, #tpu.memory_space<vmem>>, vector<17x32xf32>
    %812 = vector.extract_strided_slice %704 {offsets = [21, 0], sizes = [1, 32], strides = [1, 1]} : vector<31x32xf32> to vector<1x32xf32>
    %813 = vector.broadcast %812 : vector<1x32xf32> to vector<17x32xf32>
    %814 = arith.mulf %811, %813 : vector<17x32xf32>
    %815 = arith.addf %810, %814 : vector<17x32xf32>
    %c22_390 = arith.constant 22 : index
    %c0_391 = arith.constant 0 : index
    %816 = vector.load %arg54[%c22_390, %c0_391] : memref<47x32xf32, #tpu.memory_space<vmem>>, vector<17x32xf32>
    %817 = vector.extract_strided_slice %704 {offsets = [22, 0], sizes = [1, 32], strides = [1, 1]} : vector<31x32xf32> to vector<1x32xf32>
    %818 = vector.broadcast %817 : vector<1x32xf32> to vector<17x32xf32>
    %819 = arith.mulf %816, %818 : vector<17x32xf32>
    %820 = arith.addf %815, %819 : vector<17x32xf32>
    %c23_392 = arith.constant 23 : index
    %c0_393 = arith.constant 0 : index
    %821 = vector.load %arg54[%c23_392, %c0_393] : memref<47x32xf32, #tpu.memory_space<vmem>>, vector<17x32xf32>
    %822 = vector.extract_strided_slice %704 {offsets = [23, 0], sizes = [1, 32], strides = [1, 1]} : vector<31x32xf32> to vector<1x32xf32>
    %823 = vector.broadcast %822 : vector<1x32xf32> to vector<17x32xf32>
    %824 = arith.mulf %821, %823 : vector<17x32xf32>
    %825 = arith.addf %820, %824 : vector<17x32xf32>
    %c24_394 = arith.constant 24 : index
    %c0_395 = arith.constant 0 : index
    %826 = vector.load %arg54[%c24_394, %c0_395] : memref<47x32xf32, #tpu.memory_space<vmem>>, vector<17x32xf32>
    %827 = vector.extract_strided_slice %704 {offsets = [24, 0], sizes = [1, 32], strides = [1, 1]} : vector<31x32xf32> to vector<1x32xf32>
    %828 = vector.broadcast %827 : vector<1x32xf32> to vector<17x32xf32>
    %829 = arith.mulf %826, %828 : vector<17x32xf32>
    %830 = arith.addf %825, %829 : vector<17x32xf32>
    %c25_396 = arith.constant 25 : index
    %c0_397 = arith.constant 0 : index
    %831 = vector.load %arg54[%c25_396, %c0_397] : memref<47x32xf32, #tpu.memory_space<vmem>>, vector<17x32xf32>
    %832 = vector.extract_strided_slice %704 {offsets = [25, 0], sizes = [1, 32], strides = [1, 1]} : vector<31x32xf32> to vector<1x32xf32>
    %833 = vector.broadcast %832 : vector<1x32xf32> to vector<17x32xf32>
    %834 = arith.mulf %831, %833 : vector<17x32xf32>
    %835 = arith.addf %830, %834 : vector<17x32xf32>
    %c26_398 = arith.constant 26 : index
    %c0_399 = arith.constant 0 : index
    %836 = vector.load %arg54[%c26_398, %c0_399] : memref<47x32xf32, #tpu.memory_space<vmem>>, vector<17x32xf32>
    %837 = vector.extract_strided_slice %704 {offsets = [26, 0], sizes = [1, 32], strides = [1, 1]} : vector<31x32xf32> to vector<1x32xf32>
    %838 = vector.broadcast %837 : vector<1x32xf32> to vector<17x32xf32>
    %839 = arith.mulf %836, %838 : vector<17x32xf32>
    %840 = arith.addf %835, %839 : vector<17x32xf32>
    %c27_400 = arith.constant 27 : index
    %c0_401 = arith.constant 0 : index
    %841 = vector.load %arg54[%c27_400, %c0_401] : memref<47x32xf32, #tpu.memory_space<vmem>>, vector<17x32xf32>
    %842 = vector.extract_strided_slice %704 {offsets = [27, 0], sizes = [1, 32], strides = [1, 1]} : vector<31x32xf32> to vector<1x32xf32>
    %843 = vector.broadcast %842 : vector<1x32xf32> to vector<17x32xf32>
    %844 = arith.mulf %841, %843 : vector<17x32xf32>
    %845 = arith.addf %840, %844 : vector<17x32xf32>
    %c28_402 = arith.constant 28 : index
    %c0_403 = arith.constant 0 : index
    %846 = vector.load %arg54[%c28_402, %c0_403] : memref<47x32xf32, #tpu.memory_space<vmem>>, vector<17x32xf32>
    %847 = vector.extract_strided_slice %704 {offsets = [28, 0], sizes = [1, 32], strides = [1, 1]} : vector<31x32xf32> to vector<1x32xf32>
    %848 = vector.broadcast %847 : vector<1x32xf32> to vector<17x32xf32>
    %849 = arith.mulf %846, %848 : vector<17x32xf32>
    %850 = arith.addf %845, %849 : vector<17x32xf32>
    %c29_404 = arith.constant 29 : index
    %c0_405 = arith.constant 0 : index
    %851 = vector.load %arg54[%c29_404, %c0_405] : memref<47x32xf32, #tpu.memory_space<vmem>>, vector<17x32xf32>
    %852 = vector.extract_strided_slice %704 {offsets = [29, 0], sizes = [1, 32], strides = [1, 1]} : vector<31x32xf32> to vector<1x32xf32>
    %853 = vector.broadcast %852 : vector<1x32xf32> to vector<17x32xf32>
    %854 = arith.mulf %851, %853 : vector<17x32xf32>
    %855 = arith.addf %850, %854 : vector<17x32xf32>
    %c30_406 = arith.constant 30 : index
    %c0_407 = arith.constant 0 : index
    %856 = vector.load %arg54[%c30_406, %c0_407] : memref<47x32xf32, #tpu.memory_space<vmem>>, vector<17x32xf32>
    %857 = vector.extract_strided_slice %704 {offsets = [30, 0], sizes = [1, 32], strides = [1, 1]} : vector<31x32xf32> to vector<1x32xf32>
    %858 = vector.broadcast %857 : vector<1x32xf32> to vector<17x32xf32>
    %859 = arith.mulf %856, %858 : vector<17x32xf32>
    %860 = arith.addf %855, %859 : vector<17x32xf32>
    %c1_408 = arith.constant 1 : index
    %c0_409 = arith.constant 0 : index
    %c0_410 = arith.constant 0 : index
    %861 = vector.load %arg28[%c1_408, %c0_409, %c0_410] : memref<2x1x32xf32, #tpu.memory_space<vmem>>, vector<1x1x32xf32>
    %862 = vector.shape_cast %861 : vector<1x1x32xf32> to vector<1x32xf32>
    %863 = vector.broadcast %862 : vector<1x32xf32> to vector<17x32xf32>
    %864 = arith.addf %860, %863 : vector<17x32xf32>
    %c1_411 = arith.constant 1 : index
    %c0_412 = arith.constant 0 : index
    %c0_413 = arith.constant 0 : index
    %865 = vector.load %arg29[%c1_411, %c0_412, %c0_413] : memref<2x1x32xf32, #tpu.memory_space<vmem>>, vector<1x1x32xf32>
    %866 = vector.shape_cast %865 : vector<1x1x32xf32> to vector<1x32xf32>
    %867 = vector.broadcast %866 : vector<1x32xf32> to vector<17x32xf32>
    %868 = arith.mulf %864, %867 : vector<17x32xf32>
    %c1_414 = arith.constant 1 : index
    %c0_415 = arith.constant 0 : index
    %c0_416 = arith.constant 0 : index
    %869 = vector.load %arg30[%c1_414, %c0_415, %c0_416] : memref<2x1x32xf32, #tpu.memory_space<vmem>>, vector<1x1x32xf32>
    %870 = vector.shape_cast %869 : vector<1x1x32xf32> to vector<1x32xf32>
    %871 = vector.broadcast %870 : vector<1x32xf32> to vector<17x32xf32>
    %872 = arith.addf %868, %871 : vector<17x32xf32>
    %cst_417 = arith.constant 0.000000e+00 : f32
    %873 = vector.broadcast %cst_417 : f32 to vector<17x32xf32>
    %874 = arith.subf %873, %872 : vector<17x32xf32>
    %875 = math.exp %874 : vector<17x32xf32>
    %cst_418 = arith.constant 1.000000e+00 : f32
    %876 = vector.broadcast %cst_418 : f32 to vector<17x32xf32>
    %877 = arith.addf %876, %875 : vector<17x32xf32>
    %cst_419 = arith.constant 1.000000e+00 : f32
    %878 = vector.broadcast %cst_419 : f32 to vector<17x32xf32>
    %879 = arith.divf %878, %877 : vector<17x32xf32>
    %880 = arith.mulf %872, %879 : vector<17x32xf32>
    %c1_420 = arith.constant 1 : index
    %c0_421 = arith.constant 0 : index
    %c0_422 = arith.constant 0 : index
    %881 = vector.load %arg31[%c1_420, %c0_421, %c0_422] : memref<2x32x32xf32, #tpu.memory_space<vmem>>, vector<1x32x32xf32>
    %882 = vector.shape_cast %881 : vector<1x32x32xf32> to vector<32x32xf32>
    %cst_423 = arith.constant dense<0.000000e+00> : vector<17x32xf32>
    %883 = tpu.matmul %880, %882, %cst_423 {dimension_numbers = #tpu.dot_dimension_numbers<[1], [0], [0], [1], [0, 0, 1, 1], [], []>} : vector<17x32xf32>, vector<32x32xf32>, vector<17x32xf32> -> vector<17x32xf32>
    %c1_424 = arith.constant 1 : index
    %c0_425 = arith.constant 0 : index
    %c0_426 = arith.constant 0 : index
    %884 = vector.load %arg32[%c1_424, %c0_425, %c0_426] : memref<2x1x32xf32, #tpu.memory_space<vmem>>, vector<1x1x32xf32>
    %885 = vector.shape_cast %884 : vector<1x1x32xf32> to vector<1x32xf32>
    %886 = vector.broadcast %885 : vector<1x32xf32> to vector<17x32xf32>
    %887 = arith.addf %883, %886 : vector<17x32xf32>
    %888 = arith.addf %655, %887 : vector<17x32xf32>
    %cst_427 = arith.constant dense<0.000000e+00> : vector<17xf32>
    %889 = vector.multi_reduction <add>, %888, %cst_427 [1] : vector<17x32xf32> to vector<17xf32>
    %890 = vector.shape_cast %889 : vector<17xf32> to vector<17x1xf32>
    %cst_428 = arith.constant 3.200000e+01 : f32
    %891 = vector.broadcast %cst_428 : f32 to vector<17x1xf32>
    %892 = arith.divf %890, %891 : vector<17x1xf32>
    %893 = vector.broadcast %892 : vector<17x1xf32> to vector<17x32xf32>
    %894 = arith.subf %888, %893 : vector<17x32xf32>
    %895 = arith.mulf %894, %894 : vector<17x32xf32>
    %cst_429 = arith.constant dense<0.000000e+00> : vector<17xf32>
    %896 = vector.multi_reduction <add>, %895, %cst_429 [1] : vector<17x32xf32> to vector<17xf32>
    %897 = vector.shape_cast %896 : vector<17xf32> to vector<17x1xf32>
    %cst_430 = arith.constant 3.200000e+01 : f32
    %898 = vector.broadcast %cst_430 : f32 to vector<17x1xf32>
    %899 = arith.divf %897, %898 : vector<17x1xf32>
    %cst_431 = arith.constant 9.99999974E-6 : f32
    %900 = vector.broadcast %cst_431 : f32 to vector<17x1xf32>
    %901 = arith.addf %899, %900 : vector<17x1xf32>
    %902 = math.rsqrt %901 : vector<17x1xf32>
    %903 = vector.broadcast %902 : vector<17x1xf32> to vector<17x32xf32>
    %904 = arith.mulf %894, %903 : vector<17x32xf32>
    %c1_432 = arith.constant 1 : index
    %c0_433 = arith.constant 0 : index
    %c0_434 = arith.constant 0 : index
    %905 = vector.load %arg33[%c1_432, %c0_433, %c0_434] : memref<2x1x32xf32, #tpu.memory_space<vmem>>, vector<1x1x32xf32>
    %906 = vector.shape_cast %905 : vector<1x1x32xf32> to vector<1x32xf32>
    %907 = vector.broadcast %906 : vector<1x32xf32> to vector<17x32xf32>
    %908 = arith.mulf %904, %907 : vector<17x32xf32>
    %c1_435 = arith.constant 1 : index
    %c0_436 = arith.constant 0 : index
    %c0_437 = arith.constant 0 : index
    %909 = vector.load %arg34[%c1_435, %c0_436, %c0_437] : memref<2x1x32xf32, #tpu.memory_space<vmem>>, vector<1x1x32xf32>
    %910 = vector.shape_cast %909 : vector<1x1x32xf32> to vector<1x32xf32>
    %911 = vector.broadcast %910 : vector<1x32xf32> to vector<17x32xf32>
    %912 = arith.addf %908, %911 : vector<17x32xf32>
    %c1_438 = arith.constant 1 : index
    %c0_439 = arith.constant 0 : index
    %c0_440 = arith.constant 0 : index
    %913 = vector.load %arg35[%c1_438, %c0_439, %c0_440] : memref<2x32x64xf32, #tpu.memory_space<vmem>>, vector<1x32x64xf32>
    %914 = vector.shape_cast %913 : vector<1x32x64xf32> to vector<32x64xf32>
    %cst_441 = arith.constant dense<0.000000e+00> : vector<17x64xf32>
    %915 = tpu.matmul %912, %914, %cst_441 {dimension_numbers = #tpu.dot_dimension_numbers<[1], [0], [0], [1], [0, 0, 1, 1], [], []>} : vector<17x32xf32>, vector<32x64xf32>, vector<17x64xf32> -> vector<17x64xf32>
    %c1_442 = arith.constant 1 : index
    %c0_443 = arith.constant 0 : index
    %c0_444 = arith.constant 0 : index
    %916 = vector.load %arg36[%c1_442, %c0_443, %c0_444] : memref<2x1x64xf32, #tpu.memory_space<vmem>>, vector<1x1x64xf32>
    %917 = vector.shape_cast %916 : vector<1x1x64xf32> to vector<1x64xf32>
    %918 = vector.broadcast %917 : vector<1x64xf32> to vector<17x64xf32>
    %919 = arith.addf %915, %918 : vector<17x64xf32>
    %cst_445 = arith.constant 0.000000e+00 : f32
    %920 = vector.broadcast %cst_445 : f32 to vector<17x64xf32>
    %921 = arith.subf %920, %919 : vector<17x64xf32>
    %922 = math.exp %921 : vector<17x64xf32>
    %cst_446 = arith.constant 1.000000e+00 : f32
    %923 = vector.broadcast %cst_446 : f32 to vector<17x64xf32>
    %924 = arith.addf %923, %922 : vector<17x64xf32>
    %cst_447 = arith.constant 1.000000e+00 : f32
    %925 = vector.broadcast %cst_447 : f32 to vector<17x64xf32>
    %926 = arith.divf %925, %924 : vector<17x64xf32>
    %927 = arith.mulf %919, %926 : vector<17x64xf32>
    %c1_448 = arith.constant 1 : index
    %c0_449 = arith.constant 0 : index
    %c0_450 = arith.constant 0 : index
    %928 = vector.load %arg37[%c1_448, %c0_449, %c0_450] : memref<2x64x32xf32, #tpu.memory_space<vmem>>, vector<1x64x32xf32>
    %929 = vector.shape_cast %928 : vector<1x64x32xf32> to vector<64x32xf32>
    %cst_451 = arith.constant dense<0.000000e+00> : vector<17x32xf32>
    %930 = tpu.matmul %927, %929, %cst_451 {dimension_numbers = #tpu.dot_dimension_numbers<[1], [0], [0], [1], [0, 0, 1, 1], [], []>} : vector<17x64xf32>, vector<64x32xf32>, vector<17x32xf32> -> vector<17x32xf32>
    %c1_452 = arith.constant 1 : index
    %c0_453 = arith.constant 0 : index
    %c0_454 = arith.constant 0 : index
    %931 = vector.load %arg38[%c1_452, %c0_453, %c0_454] : memref<2x1x32xf32, #tpu.memory_space<vmem>>, vector<1x1x32xf32>
    %932 = vector.shape_cast %931 : vector<1x1x32xf32> to vector<1x32xf32>
    %933 = vector.broadcast %932 : vector<1x32xf32> to vector<17x32xf32>
    %934 = arith.addf %930, %933 : vector<17x32xf32>
    %cst_455 = arith.constant 5.000000e-01 : f32
    %935 = vector.broadcast %cst_455 : f32 to vector<17x32xf32>
    %936 = arith.mulf %935, %934 : vector<17x32xf32>
    %937 = arith.addf %888, %936 : vector<17x32xf32>
    %cst_456 = arith.constant dense<0.000000e+00> : vector<17xf32>
    %938 = vector.multi_reduction <add>, %937, %cst_456 [1] : vector<17x32xf32> to vector<17xf32>
    %939 = vector.shape_cast %938 : vector<17xf32> to vector<17x1xf32>
    %cst_457 = arith.constant 3.200000e+01 : f32
    %940 = vector.broadcast %cst_457 : f32 to vector<17x1xf32>
    %941 = arith.divf %939, %940 : vector<17x1xf32>
    %942 = vector.broadcast %941 : vector<17x1xf32> to vector<17x32xf32>
    %943 = arith.subf %937, %942 : vector<17x32xf32>
    %944 = arith.mulf %943, %943 : vector<17x32xf32>
    %cst_458 = arith.constant dense<0.000000e+00> : vector<17xf32>
    %945 = vector.multi_reduction <add>, %944, %cst_458 [1] : vector<17x32xf32> to vector<17xf32>
    %946 = vector.shape_cast %945 : vector<17xf32> to vector<17x1xf32>
    %cst_459 = arith.constant 3.200000e+01 : f32
    %947 = vector.broadcast %cst_459 : f32 to vector<17x1xf32>
    %948 = arith.divf %946, %947 : vector<17x1xf32>
    %cst_460 = arith.constant 9.99999974E-6 : f32
    %949 = vector.broadcast %cst_460 : f32 to vector<17x1xf32>
    %950 = arith.addf %948, %949 : vector<17x1xf32>
    %951 = math.rsqrt %950 : vector<17x1xf32>
    %952 = vector.broadcast %951 : vector<17x1xf32> to vector<17x32xf32>
    %953 = arith.mulf %943, %952 : vector<17x32xf32>
    %c1_461 = arith.constant 1 : index
    %c0_462 = arith.constant 0 : index
    %c0_463 = arith.constant 0 : index
    %954 = vector.load %arg39[%c1_461, %c0_462, %c0_463] : memref<2x1x32xf32, #tpu.memory_space<vmem>>, vector<1x1x32xf32>
    %955 = vector.shape_cast %954 : vector<1x1x32xf32> to vector<1x32xf32>
    %956 = vector.broadcast %955 : vector<1x32xf32> to vector<17x32xf32>
    %957 = arith.mulf %953, %956 : vector<17x32xf32>
    %c1_464 = arith.constant 1 : index
    %c0_465 = arith.constant 0 : index
    %c0_466 = arith.constant 0 : index
    %958 = vector.load %arg40[%c1_464, %c0_465, %c0_466] : memref<2x1x32xf32, #tpu.memory_space<vmem>>, vector<1x1x32xf32>
    %959 = vector.shape_cast %958 : vector<1x1x32xf32> to vector<1x32xf32>
    %960 = vector.broadcast %959 : vector<1x32xf32> to vector<17x32xf32>
    %961 = arith.addf %957, %960 : vector<17x32xf32>
    %cst_467 = arith.constant dense<0.000000e+00> : vector<32xf32>
    %962 = vector.multi_reduction <add>, %961, %cst_467 [0] : vector<17x32xf32> to vector<32xf32>
    %963 = vector.shape_cast %962 : vector<32xf32> to vector<1x32xf32>
    %cst_468 = arith.constant 1.700000e+01 : f32
    %964 = vector.broadcast %cst_468 : f32 to vector<1x32xf32>
    %965 = arith.divf %963, %964 : vector<1x32xf32>
    %cst_469 = arith.constant dense<0xFF800000> : vector<32xf32>
    %966 = vector.multi_reduction <maximumf>, %961, %cst_469 [0] : vector<17x32xf32> to vector<32xf32>
    %967 = vector.shape_cast %966 : vector<32xf32> to vector<1x32xf32>
    %968 = arith.addf %965, %967 : vector<1x32xf32>
    %c0_470 = arith.constant 0 : index
    %c0_471 = arith.constant 0 : index
    %969 = vector.load %arg41[%c0_470, %c0_471] : memref<32x128xf32, #tpu.memory_space<vmem>>, vector<32x128xf32>
    %cst_472 = arith.constant dense<0.000000e+00> : vector<1x128xf32>
    %970 = tpu.matmul %968, %969, %cst_472 {dimension_numbers = #tpu.dot_dimension_numbers<[1], [0], [0], [1], [0, 0, 1, 1], [], []>} : vector<1x32xf32>, vector<32x128xf32>, vector<1x128xf32> -> vector<1x128xf32>
    %c0_473 = arith.constant 0 : index
    %c0_474 = arith.constant 0 : index
    %971 = vector.load %arg42[%c0_473, %c0_474] : memref<1x128xf32, #tpu.memory_space<vmem>>, vector<1x128xf32>
    %972 = arith.addf %970, %971 : vector<1x128xf32>
    %c0_475 = arith.constant 0 : index
    %c0_476 = arith.constant 0 : index
    %973 = vector.load %arg43[%c0_475, %c0_476] : memref<1x128xf32, #tpu.memory_space<vmem>>, vector<1x128xf32>
    %974 = arith.mulf %972, %973 : vector<1x128xf32>
    %c0_477 = arith.constant 0 : index
    %c0_478 = arith.constant 0 : index
    %975 = vector.load %arg44[%c0_477, %c0_478] : memref<1x128xf32, #tpu.memory_space<vmem>>, vector<1x128xf32>
    %976 = arith.addf %974, %975 : vector<1x128xf32>
    %cst_479 = arith.constant 0.000000e+00 : f32
    %977 = vector.broadcast %cst_479 : f32 to vector<1x128xf32>
    %978 = arith.cmpf oge, %976, %977 : vector<1x128xf32>
    %c0_480 = arith.constant 0 : index
    %c0_481 = arith.constant 0 : index
    %979 = vector.load %arg45[%c0_480, %c0_481] : memref<1x1xf32, #tpu.memory_space<vmem>>, vector<1x1xf32>
    %980 = vector.broadcast %979 : vector<1x1xf32> to vector<1x128xf32>
    %981 = arith.mulf %980, %976 : vector<1x128xf32>
    %982 = arith.select %978, %976, %981 : vector<1x128xi1>, vector<1x128xf32>
    %c0_482 = arith.constant 0 : index
    %c0_483 = arith.constant 0 : index
    %983 = vector.load %arg46[%c0_482, %c0_483] : memref<128x128xf32, #tpu.memory_space<vmem>>, vector<128x128xf32>
    %cst_484 = arith.constant dense<0.000000e+00> : vector<1x128xf32>
    %984 = tpu.matmul %982, %983, %cst_484 {dimension_numbers = #tpu.dot_dimension_numbers<[1], [0], [0], [1], [0, 0, 1, 1], [], []>} : vector<1x128xf32>, vector<128x128xf32>, vector<1x128xf32> -> vector<1x128xf32>
    %c0_485 = arith.constant 0 : index
    %c0_486 = arith.constant 0 : index
    %985 = vector.load %arg47[%c0_485, %c0_486] : memref<1x128xf32, #tpu.memory_space<vmem>>, vector<1x128xf32>
    %986 = arith.addf %984, %985 : vector<1x128xf32>
    %c0_487 = arith.constant 0 : index
    %c0_488 = arith.constant 0 : index
    %c0_489 = arith.constant 0 : index
    %987 = vector.load %arg51[%c0_487, %c0_488, %c0_489] : memref<1x1x128xf32, #tpu.memory_space<vmem>>, vector<1x1x128xf32>
    %988 = vector.shape_cast %987 : vector<1x1x128xf32> to vector<1x128xf32>
    %989 = vector.shape_cast %986 : vector<1x128xf32> to vector<1x1x128xf32>
    tpu.vector_store %arg51[%c0_487, %c0_488, %c0_489], %989 {strides = array<i32>} : memref<1x1x128xf32, #tpu.memory_space<vmem>>, vector<1x1x128xf32>,
    %990 = arith.mulf %986, %986 : vector<1x128xf32>
    %cst_490 = arith.constant dense<0.000000e+00> : vector<1xf32>
    %991 = vector.multi_reduction <add>, %990, %cst_490 [1] : vector<1x128xf32> to vector<1xf32>
    %992 = vector.shape_cast %991 : vector<1xf32> to vector<1x1xf32>
    %cst_491 = arith.constant 7.812500e-03 : f32
    %993 = vector.broadcast %cst_491 : f32 to vector<1x1xf32>
    %994 = arith.mulf %992, %993 : vector<1x1xf32>
    %c0_492 = arith.constant 0 : index
    %c0_493 = arith.constant 0 : index
    %995 = vector.load %arg48[%c0_492, %c0_493] : memref<1x1xf32, #tpu.memory_space<vmem>>, vector<1x1xf32>
    %996 = arith.mulf %994, %995 : vector<1x1xf32>
    %c0_494 = arith.constant 0 : index
    %c0_495 = arith.constant 0 : index
    %997 = vector.load %arg49[%c0_494, %c0_495] : memref<1x1xf32, #tpu.memory_space<vmem>>, vector<1x1xf32>
    %998 = arith.addf %996, %997 : vector<1x1xf32>
    %c0_496 = arith.constant 0 : index
    %c0_497 = arith.constant 0 : index
    %c0_498 = arith.constant 0 : index
    %999 = vector.load %arg52[%c0_496, %c0_497, %c0_498] : memref<1x1x1xf32, #tpu.memory_space<vmem>>, vector<1x1x1xf32>
    %1000 = vector.shape_cast %999 : vector<1x1x1xf32> to vector<1x1xf32>
    %1001 = vector.shape_cast %998 : vector<1x1xf32> to vector<1x1x1xf32>
    tpu.vector_store %arg52[%c0_496, %c0_497, %c0_498], %1001 {strides = array<i32>} : memref<1x1x1xf32, #tpu.memory_space<vmem>>, vector<1x1x1xf32>,
    %c0_499 = arith.constant 0 : index
    %c0_500 = arith.constant 0 : index
    %1002 = vector.load %arg50[%c0_499, %c0_500] : memref<128x6xf32, #tpu.memory_space<vmem>>, vector<128x6xf32>
    %cst_501 = arith.constant dense<0.000000e+00> : vector<1x6xf32>
    %1003 = tpu.matmul %986, %1002, %cst_501 {dimension_numbers = #tpu.dot_dimension_numbers<[1], [0], [0], [1], [0, 0, 1, 1], [], []>} : vector<1x128xf32>, vector<128x6xf32>, vector<1x6xf32> -> vector<1x6xf32>
    %c0_502 = arith.constant 0 : index
    %c0_503 = arith.constant 0 : index
    %c0_504 = arith.constant 0 : index
    %1004 = vector.load %arg53[%c0_502, %c0_503, %c0_504] : memref<1x1x6xf32, #tpu.memory_space<vmem>>, vector<1x1x6xf32>
    %1005 = vector.shape_cast %1004 : vector<1x1x6xf32> to vector<1x6xf32>
    %1006 = vector.shape_cast %1003 : vector<1x6xf32> to vector<1x1x6xf32>
    tpu.vector_store %arg53[%c0_502, %c0_503, %c0_504], %1006 {strides = array<i32>} : memref<1x1x6xf32, #tpu.memory_space<vmem>>, vector<1x1x6xf32>,
    return
  }
  func.func @transform_0(%arg0: i32) -> (i32, i32, i32) {
    %c0_i32 = arith.constant 0 : i32
    %c0_i32_0 = arith.constant 0 : i32
    %c0_i32_1 = arith.constant 0 : i32
    return %arg0, %c0_i32, %c0_i32_0 : i32, i32, i32
  }
  func.func @transform_1(%arg0: i32) -> (i32, i32) {
    %c0_i32 = arith.constant 0 : i32
    %c0_i32_0 = arith.constant 0 : i32
    %c0_i32_1 = arith.constant 0 : i32
    return %c0_i32, %c0_i32_0 : i32, i32
  }
  func.func @transform_2(%arg0: i32) -> (i32, i32) {
    %c0_i32 = arith.constant 0 : i32
    %c0_i32_0 = arith.constant 0 : i32
    %c0_i32_1 = arith.constant 0 : i32
    return %c0_i32, %c0_i32_0 : i32, i32
  }
  func.func @transform_3(%arg0: i32) -> (i32, i32) {
    %c0_i32 = arith.constant 0 : i32
    %c0_i32_0 = arith.constant 0 : i32
    %c0_i32_1 = arith.constant 0 : i32
    return %c0_i32, %c0_i32_0 : i32, i32
  }
  func.func @transform_4(%arg0: i32) -> (i32, i32, i32) {
    %c0_i32 = arith.constant 0 : i32
    %c0_i32_0 = arith.constant 0 : i32
    %c0_i32_1 = arith.constant 0 : i32
    %c0_i32_2 = arith.constant 0 : i32
    return %c0_i32, %c0_i32_0, %c0_i32_1 : i32, i32, i32
  }
  func.func @transform_5(%arg0: i32) -> (i32, i32, i32) {
    %c0_i32 = arith.constant 0 : i32
    %c0_i32_0 = arith.constant 0 : i32
    %c0_i32_1 = arith.constant 0 : i32
    %c0_i32_2 = arith.constant 0 : i32
    return %c0_i32, %c0_i32_0, %c0_i32_1 : i32, i32, i32
  }
  func.func @transform_6(%arg0: i32) -> (i32, i32, i32) {
    %c0_i32 = arith.constant 0 : i32
    %c0_i32_0 = arith.constant 0 : i32
    %c0_i32_1 = arith.constant 0 : i32
    %c0_i32_2 = arith.constant 0 : i32
    return %c0_i32, %c0_i32_0, %c0_i32_1 : i32, i32, i32
  }
  func.func @transform_7(%arg0: i32) -> (i32, i32, i32) {
    %c0_i32 = arith.constant 0 : i32
    %c0_i32_0 = arith.constant 0 : i32
    %c0_i32_1 = arith.constant 0 : i32
    %c0_i32_2 = arith.constant 0 : i32
    return %c0_i32, %c0_i32_0, %c0_i32_1 : i32, i32, i32
  }
  func.func @transform_8(%arg0: i32) -> (i32, i32, i32) {
    %c0_i32 = arith.constant 0 : i32
    %c0_i32_0 = arith.constant 0 : i32
    %c0_i32_1 = arith.constant 0 : i32
    %c0_i32_2 = arith.constant 0 : i32
    return %c0_i32, %c0_i32_0, %c0_i32_1 : i32, i32, i32
  }
  func.func @transform_9(%arg0: i32) -> (i32, i32, i32) {
    %c0_i32 = arith.constant 0 : i32
    %c0_i32_0 = arith.constant 0 : i32
    %c0_i32_1 = arith.constant 0 : i32
    %c0_i32_2 = arith.constant 0 : i32
    return %c0_i32, %c0_i32_0, %c0_i32_1 : i32, i32, i32
  }
  func.func @transform_10(%arg0: i32) -> (i32, i32, i32) {
    %c0_i32 = arith.constant 0 : i32
    %c0_i32_0 = arith.constant 0 : i32
    %c0_i32_1 = arith.constant 0 : i32
    %c0_i32_2 = arith.constant 0 : i32
    return %c0_i32, %c0_i32_0, %c0_i32_1 : i32, i32, i32
  }
  func.func @transform_11(%arg0: i32) -> (i32, i32, i32) {
    %c0_i32 = arith.constant 0 : i32
    %c0_i32_0 = arith.constant 0 : i32
    %c0_i32_1 = arith.constant 0 : i32
    %c0_i32_2 = arith.constant 0 : i32
    return %c0_i32, %c0_i32_0, %c0_i32_1 : i32, i32, i32
  }
  func.func @transform_12(%arg0: i32) -> (i32, i32, i32) {
    %c0_i32 = arith.constant 0 : i32
    %c0_i32_0 = arith.constant 0 : i32
    %c0_i32_1 = arith.constant 0 : i32
    %c0_i32_2 = arith.constant 0 : i32
    return %c0_i32, %c0_i32_0, %c0_i32_1 : i32, i32, i32
  }
  func.func @transform_13(%arg0: i32) -> (i32, i32, i32) {
    %c0_i32 = arith.constant 0 : i32
    %c0_i32_0 = arith.constant 0 : i32
    %c0_i32_1 = arith.constant 0 : i32
    %c0_i32_2 = arith.constant 0 : i32
    return %c0_i32, %c0_i32_0, %c0_i32_1 : i32, i32, i32
  }
  func.func @transform_14(%arg0: i32) -> (i32, i32, i32) {
    %c0_i32 = arith.constant 0 : i32
    %c0_i32_0 = arith.constant 0 : i32
    %c0_i32_1 = arith.constant 0 : i32
    %c0_i32_2 = arith.constant 0 : i32
    return %c0_i32, %c0_i32_0, %c0_i32_1 : i32, i32, i32
  }
  func.func @transform_15(%arg0: i32) -> (i32, i32, i32) {
    %c0_i32 = arith.constant 0 : i32
    %c0_i32_0 = arith.constant 0 : i32
    %c0_i32_1 = arith.constant 0 : i32
    %c0_i32_2 = arith.constant 0 : i32
    return %c0_i32, %c0_i32_0, %c0_i32_1 : i32, i32, i32
  }
  func.func @transform_16(%arg0: i32) -> (i32, i32, i32) {
    %c0_i32 = arith.constant 0 : i32
    %c0_i32_0 = arith.constant 0 : i32
    %c0_i32_1 = arith.constant 0 : i32
    %c0_i32_2 = arith.constant 0 : i32
    return %c0_i32, %c0_i32_0, %c0_i32_1 : i32, i32, i32
  }
  func.func @transform_17(%arg0: i32) -> (i32, i32, i32) {
    %c0_i32 = arith.constant 0 : i32
    %c0_i32_0 = arith.constant 0 : i32
    %c0_i32_1 = arith.constant 0 : i32
    %c0_i32_2 = arith.constant 0 : i32
    return %c0_i32, %c0_i32_0, %c0_i32_1 : i32, i32, i32
  }
  func.func @transform_18(%arg0: i32) -> (i32, i32, i32) {
    %c0_i32 = arith.constant 0 : i32
    %c0_i32_0 = arith.constant 0 : i32
    %c0_i32_1 = arith.constant 0 : i32
    %c0_i32_2 = arith.constant 0 : i32
    return %c0_i32, %c0_i32_0, %c0_i32_1 : i32, i32, i32
  }
  func.func @transform_19(%arg0: i32) -> (i32, i32, i32) {
    %c0_i32 = arith.constant 0 : i32
    %c0_i32_0 = arith.constant 0 : i32
    %c0_i32_1 = arith.constant 0 : i32
    %c0_i32_2 = arith.constant 0 : i32
    return %c0_i32, %c0_i32_0, %c0_i32_1 : i32, i32, i32
  }
  func.func @transform_20(%arg0: i32) -> (i32, i32, i32) {
    %c0_i32 = arith.constant 0 : i32
    %c0_i32_0 = arith.constant 0 : i32
    %c0_i32_1 = arith.constant 0 : i32
    %c0_i32_2 = arith.constant 0 : i32
    return %c0_i32, %c0_i32_0, %c0_i32_1 : i32, i32, i32
  }
  func.func @transform_21(%arg0: i32) -> (i32, i32, i32) {
    %c0_i32 = arith.constant 0 : i32
    %c0_i32_0 = arith.constant 0 : i32
    %c0_i32_1 = arith.constant 0 : i32
    %c0_i32_2 = arith.constant 0 : i32
    return %c0_i32, %c0_i32_0, %c0_i32_1 : i32, i32, i32
  }
  func.func @transform_22(%arg0: i32) -> (i32, i32, i32) {
    %c0_i32 = arith.constant 0 : i32
    %c0_i32_0 = arith.constant 0 : i32
    %c0_i32_1 = arith.constant 0 : i32
    %c0_i32_2 = arith.constant 0 : i32
    return %c0_i32, %c0_i32_0, %c0_i32_1 : i32, i32, i32
  }
  func.func @transform_23(%arg0: i32) -> (i32, i32, i32) {
    %c0_i32 = arith.constant 0 : i32
    %c0_i32_0 = arith.constant 0 : i32
    %c0_i32_1 = arith.constant 0 : i32
    %c0_i32_2 = arith.constant 0 : i32
    return %c0_i32, %c0_i32_0, %c0_i32_1 : i32, i32, i32
  }
  func.func @transform_24(%arg0: i32) -> (i32, i32, i32) {
    %c0_i32 = arith.constant 0 : i32
    %c0_i32_0 = arith.constant 0 : i32
    %c0_i32_1 = arith.constant 0 : i32
    %c0_i32_2 = arith.constant 0 : i32
    return %c0_i32, %c0_i32_0, %c0_i32_1 : i32, i32, i32
  }
  func.func @transform_25(%arg0: i32) -> (i32, i32, i32) {
    %c0_i32 = arith.constant 0 : i32
    %c0_i32_0 = arith.constant 0 : i32
    %c0_i32_1 = arith.constant 0 : i32
    %c0_i32_2 = arith.constant 0 : i32
    return %c0_i32, %c0_i32_0, %c0_i32_1 : i32, i32, i32
  }
  func.func @transform_26(%arg0: i32) -> (i32, i32, i32) {
    %c0_i32 = arith.constant 0 : i32
    %c0_i32_0 = arith.constant 0 : i32
    %c0_i32_1 = arith.constant 0 : i32
    %c0_i32_2 = arith.constant 0 : i32
    return %c0_i32, %c0_i32_0, %c0_i32_1 : i32, i32, i32
  }
  func.func @transform_27(%arg0: i32) -> (i32, i32, i32) {
    %c0_i32 = arith.constant 0 : i32
    %c0_i32_0 = arith.constant 0 : i32
    %c0_i32_1 = arith.constant 0 : i32
    %c0_i32_2 = arith.constant 0 : i32
    return %c0_i32, %c0_i32_0, %c0_i32_1 : i32, i32, i32
  }
  func.func @transform_28(%arg0: i32) -> (i32, i32, i32) {
    %c0_i32 = arith.constant 0 : i32
    %c0_i32_0 = arith.constant 0 : i32
    %c0_i32_1 = arith.constant 0 : i32
    %c0_i32_2 = arith.constant 0 : i32
    return %c0_i32, %c0_i32_0, %c0_i32_1 : i32, i32, i32
  }
  func.func @transform_29(%arg0: i32) -> (i32, i32, i32) {
    %c0_i32 = arith.constant 0 : i32
    %c0_i32_0 = arith.constant 0 : i32
    %c0_i32_1 = arith.constant 0 : i32
    %c0_i32_2 = arith.constant 0 : i32
    return %c0_i32, %c0_i32_0, %c0_i32_1 : i32, i32, i32
  }
  func.func @transform_30(%arg0: i32) -> (i32, i32, i32) {
    %c0_i32 = arith.constant 0 : i32
    %c0_i32_0 = arith.constant 0 : i32
    %c0_i32_1 = arith.constant 0 : i32
    %c0_i32_2 = arith.constant 0 : i32
    return %c0_i32, %c0_i32_0, %c0_i32_1 : i32, i32, i32
  }
  func.func @transform_31(%arg0: i32) -> (i32, i32, i32) {
    %c0_i32 = arith.constant 0 : i32
    %c0_i32_0 = arith.constant 0 : i32
    %c0_i32_1 = arith.constant 0 : i32
    %c0_i32_2 = arith.constant 0 : i32
    return %c0_i32, %c0_i32_0, %c0_i32_1 : i32, i32, i32
  }
  func.func @transform_32(%arg0: i32) -> (i32, i32, i32) {
    %c0_i32 = arith.constant 0 : i32
    %c0_i32_0 = arith.constant 0 : i32
    %c0_i32_1 = arith.constant 0 : i32
    %c0_i32_2 = arith.constant 0 : i32
    return %c0_i32, %c0_i32_0, %c0_i32_1 : i32, i32, i32
  }
  func.func @transform_33(%arg0: i32) -> (i32, i32, i32) {
    %c0_i32 = arith.constant 0 : i32
    %c0_i32_0 = arith.constant 0 : i32
    %c0_i32_1 = arith.constant 0 : i32
    %c0_i32_2 = arith.constant 0 : i32
    return %c0_i32, %c0_i32_0, %c0_i32_1 : i32, i32, i32
  }
  func.func @transform_34(%arg0: i32) -> (i32, i32, i32) {
    %c0_i32 = arith.constant 0 : i32
    %c0_i32_0 = arith.constant 0 : i32
    %c0_i32_1 = arith.constant 0 : i32
    %c0_i32_2 = arith.constant 0 : i32
    return %c0_i32, %c0_i32_0, %c0_i32_1 : i32, i32, i32
  }
  func.func @transform_35(%arg0: i32) -> (i32, i32, i32) {
    %c0_i32 = arith.constant 0 : i32
    %c0_i32_0 = arith.constant 0 : i32
    %c0_i32_1 = arith.constant 0 : i32
    %c0_i32_2 = arith.constant 0 : i32
    return %c0_i32, %c0_i32_0, %c0_i32_1 : i32, i32, i32
  }
  func.func @transform_36(%arg0: i32) -> (i32, i32, i32) {
    %c0_i32 = arith.constant 0 : i32
    %c0_i32_0 = arith.constant 0 : i32
    %c0_i32_1 = arith.constant 0 : i32
    %c0_i32_2 = arith.constant 0 : i32
    return %c0_i32, %c0_i32_0, %c0_i32_1 : i32, i32, i32
  }
  func.func @transform_37(%arg0: i32) -> (i32, i32, i32) {
    %c0_i32 = arith.constant 0 : i32
    %c0_i32_0 = arith.constant 0 : i32
    %c0_i32_1 = arith.constant 0 : i32
    %c0_i32_2 = arith.constant 0 : i32
    return %c0_i32, %c0_i32_0, %c0_i32_1 : i32, i32, i32
  }
  func.func @transform_38(%arg0: i32) -> (i32, i32, i32) {
    %c0_i32 = arith.constant 0 : i32
    %c0_i32_0 = arith.constant 0 : i32
    %c0_i32_1 = arith.constant 0 : i32
    %c0_i32_2 = arith.constant 0 : i32
    return %c0_i32, %c0_i32_0, %c0_i32_1 : i32, i32, i32
  }
  func.func @transform_39(%arg0: i32) -> (i32, i32, i32) {
    %c0_i32 = arith.constant 0 : i32
    %c0_i32_0 = arith.constant 0 : i32
    %c0_i32_1 = arith.constant 0 : i32
    %c0_i32_2 = arith.constant 0 : i32
    return %c0_i32, %c0_i32_0, %c0_i32_1 : i32, i32, i32
  }
  func.func @transform_40(%arg0: i32) -> (i32, i32) {
    %c0_i32 = arith.constant 0 : i32
    %c0_i32_0 = arith.constant 0 : i32
    %c0_i32_1 = arith.constant 0 : i32
    return %c0_i32, %c0_i32_0 : i32, i32
  }
  func.func @transform_41(%arg0: i32) -> (i32, i32) {
    %c0_i32 = arith.constant 0 : i32
    %c0_i32_0 = arith.constant 0 : i32
    %c0_i32_1 = arith.constant 0 : i32
    return %c0_i32, %c0_i32_0 : i32, i32
  }
  func.func @transform_42(%arg0: i32) -> (i32, i32) {
    %c0_i32 = arith.constant 0 : i32
    %c0_i32_0 = arith.constant 0 : i32
    %c0_i32_1 = arith.constant 0 : i32
    return %c0_i32, %c0_i32_0 : i32, i32
  }
  func.func @transform_43(%arg0: i32) -> (i32, i32) {
    %c0_i32 = arith.constant 0 : i32
    %c0_i32_0 = arith.constant 0 : i32
    %c0_i32_1 = arith.constant 0 : i32
    return %c0_i32, %c0_i32_0 : i32, i32
  }
  func.func @transform_44(%arg0: i32) -> (i32, i32) {
    %c0_i32 = arith.constant 0 : i32
    %c0_i32_0 = arith.constant 0 : i32
    %c0_i32_1 = arith.constant 0 : i32
    return %c0_i32, %c0_i32_0 : i32, i32
  }
  func.func @transform_45(%arg0: i32) -> (i32, i32) {
    %c0_i32 = arith.constant 0 : i32
    %c0_i32_0 = arith.constant 0 : i32
    %c0_i32_1 = arith.constant 0 : i32
    return %c0_i32, %c0_i32_0 : i32, i32
  }
  func.func @transform_46(%arg0: i32) -> (i32, i32) {
    %c0_i32 = arith.constant 0 : i32
    %c0_i32_0 = arith.constant 0 : i32
    %c0_i32_1 = arith.constant 0 : i32
    return %c0_i32, %c0_i32_0 : i32, i32
  }
  func.func @transform_47(%arg0: i32) -> (i32, i32) {
    %c0_i32 = arith.constant 0 : i32
    %c0_i32_0 = arith.constant 0 : i32
    %c0_i32_1 = arith.constant 0 : i32
    return %c0_i32, %c0_i32_0 : i32, i32
  }
  func.func @transform_48(%arg0: i32) -> (i32, i32) {
    %c0_i32 = arith.constant 0 : i32
    %c0_i32_0 = arith.constant 0 : i32
    %c0_i32_1 = arith.constant 0 : i32
    return %c0_i32, %c0_i32_0 : i32, i32
  }
  func.func @transform_49(%arg0: i32) -> (i32, i32) {
    %c0_i32 = arith.constant 0 : i32
    %c0_i32_0 = arith.constant 0 : i32
    %c0_i32_1 = arith.constant 0 : i32
    return %c0_i32, %c0_i32_0 : i32, i32
  }
  func.func @transform_50(%arg0: i32) -> (i32, i32, i32) {
    %c0_i32 = arith.constant 0 : i32
    %c0_i32_0 = arith.constant 0 : i32
    %c0_i32_1 = arith.constant 0 : i32
    return %arg0, %c0_i32, %c0_i32_0 : i32, i32, i32
  }
  func.func @transform_51(%arg0: i32) -> (i32, i32, i32) {
    %c0_i32 = arith.constant 0 : i32
    %c0_i32_0 = arith.constant 0 : i32
    %c0_i32_1 = arith.constant 0 : i32
    return %arg0, %c0_i32, %c0_i32_0 : i32, i32, i32
  }
  func.func @transform_52(%arg0: i32) -> (i32, i32, i32) {
    %c0_i32 = arith.constant 0 : i32
    %c0_i32_0 = arith.constant 0 : i32
    %c0_i32_1 = arith.constant 0 : i32
    return %arg0, %c0_i32, %c0_i32_0 : i32, i32, i32
  }
}

</mosaic_0001>

<llo_original>
// kernel: asd_conformer_forward.1
$region0: #{asd_conformer_forward.1}
  #allocation0 [shape = 'u32[]', space=smem, size = 0x4, offset = 0x4, fixed_abs, tag = 'smem constant byte address 0x4 - core index']
  #allocation1 [shape = 'u32[72,128]{1,0:T(1,128)}', space=vmem, size = 0x9000, scoped, tag = 'internal scratch']
  #allocation2 [shape = 'f32[47,32]{1,0:T(8,128)}', space=vmem, size = 0x6000, scoped, tag = 'scratch operand']
  #allocation3 [shape = 'f32[1,1]{1,0:T(1,128)S(1)}', space=vmem, size = 0x200, scoped, tag = 'scoped memory for asd_conformer_forward.1']
  #allocation4 [shape = 'f32[1,1]{1,0:T(1,128)S(1)}', space=vmem, size = 0x200, scoped, tag = 'scoped memory for asd_conformer_forward.1']
  #allocation5 [shape = 'f32[1,1]{1,0:T(1,128)S(1)}', space=vmem, size = 0x200, scoped, tag = 'scoped memory for asd_conformer_forward.1']
  %s0 = inlined_call_operand.smem [shape: u32[53], index: -1, kind: input, shape index: {}]
  %s1 = sld [smem:[%s0]]
  %s2 = scalar_lea.smem %s0, 1
  %s3 = sld [smem:[%s2]]
  %s4 = scalar_lea.smem %s0, 2
  %s5 = sld [smem:[%s4]]
  %s6 = scalar_lea.smem %s0, 3
  %s7 = sld [smem:[%s6]]
  %s8 = scalar_lea.smem %s0, 4
  %s9 = sld [smem:[%s8]]
  %s10 = scalar_lea.smem %s0, 5
  %s11 = sld [smem:[%s10]]
  %s12 = scalar_lea.smem %s0, 6
  %s13 = sld [smem:[%s12]]
  %s14 = scalar_lea.smem %s0, 7
  %s15 = sld [smem:[%s14]]
  %s16 = scalar_lea.smem %s0, 8
  %s17 = sld [smem:[%s16]]
  %s18 = scalar_lea.smem %s0, 9
  %s19 = sld [smem:[%s18]]
  %s20 = scalar_lea.smem %s0, 10
  %s21 = sld [smem:[%s20]]
  %s22 = scalar_lea.smem %s0, 11
  %s23 = sld [smem:[%s22]]
  %s24 = scalar_lea.smem %s0, 12
  %s25 = sld [smem:[%s24]]
  %s26 = scalar_lea.smem %s0, 13
  %s27 = sld [smem:[%s26]]
  %s28 = scalar_lea.smem %s0, 14
  %s29 = sld [smem:[%s28]]
  %s30 = scalar_lea.smem %s0, 15
  %s31 = sld [smem:[%s30]]
  %s32 = scalar_lea.smem %s0, 16
  %s33 = sld [smem:[%s32]]
  %s34 = scalar_lea.smem %s0, 17
  %s35 = sld [smem:[%s34]]
  %s36 = scalar_lea.smem %s0, 18
  %s37 = sld [smem:[%s36]]
  %s38 = scalar_lea.smem %s0, 19
  %s39 = sld [smem:[%s38]]
  %s40 = scalar_lea.smem %s0, 20
  %s41 = sld [smem:[%s40]]
  %s42 = scalar_lea.smem %s0, 21
  %s43 = sld [smem:[%s42]]
  %s44 = scalar_lea.smem %s0, 22
  %s45 = sld [smem:[%s44]]
  %s46 = scalar_lea.smem %s0, 23
  %s47 = sld [smem:[%s46]]
  %s48 = scalar_lea.smem %s0, 24
  %s49 = sld [smem:[%s48]]
  %s50 = scalar_lea.smem %s0, 25
  %s51 = sld [smem:[%s50]]
  %s52 = scalar_lea.smem %s0, 26
  %s53 = sld [smem:[%s52]]
  %s54 = scalar_lea.smem %s0, 27
  %s55 = sld [smem:[%s54]]
  %s56 = scalar_lea.smem %s0, 28
  %s57 = sld [smem:[%s56]]
  %s58 = scalar_lea.smem %s0, 29
  %s59 = sld [smem:[%s58]]
  %s60 = scalar_lea.smem %s0, 30
  %s61 = sld [smem:[%s60]]
  %s62 = scalar_lea.smem %s0, 31
  %s63 = sld [smem:[%s62]]
  %s64 = scalar_lea.smem %s0, 32
  %s65 = sld [smem:[%s64]]
  %s66 = scalar_lea.smem %s0, 33
  %s67 = sld [smem:[%s66]]
  %s68 = scalar_lea.smem %s0, 34
  %s69 = sld [smem:[%s68]]
  %s70 = scalar_lea.smem %s0, 35
  %s71 = sld [smem:[%s70]]
  %s72 = scalar_lea.smem %s0, 36
  %s73 = sld [smem:[%s72]]
  %s74 = scalar_lea.smem %s0, 37
  %s75 = sld [smem:[%s74]]
  %s76 = scalar_lea.smem %s0, 38
  %s77 = sld [smem:[%s76]]
  %s78 = scalar_lea.smem %s0, 39
  %s79 = sld [smem:[%s78]]
  %s80 = scalar_lea.smem %s0, 40
  %s81 = sld [smem:[%s80]]
  %s82 = scalar_lea.smem %s0, 41
  %s83 = sld [smem:[%s82]]
  %s84 = scalar_lea.smem %s0, 42
  %s85 = sld [smem:[%s84]]
  %s86 = scalar_lea.smem %s0, 43
  %s87 = sld [smem:[%s86]]
  %s88 = scalar_lea.smem %s0, 44
  %s89 = sld [smem:[%s88]]
  %s90 = scalar_lea.smem %s0, 45
  %s91 = sld [smem:[%s90]]
  %s92 = scalar_lea.smem %s0, 46
  %s93 = sld [smem:[%s92]]
  %s94 = scalar_lea.smem %s0, 47
  %s95 = sld [smem:[%s94]]
  %s96 = scalar_lea.smem %s0, 48
  %s97 = sld [smem:[%s96]]
  %s98 = scalar_lea.smem %s0, 49
  %s99 = sld [smem:[%s98]]
  %s100 = scalar_lea.smem %s0, 50
  %s101 = sld [smem:[%s100]]
  %s102 = scalar_lea.smem %s0, 51
  %s103 = sld [smem:[%s102]]
  %s104 = scalar_lea.smem %s0, 52
  %s105 = sld [smem:[%s104]]
  %106 = xla_tuple %s101, %s103, %s105
  %s107 = sld [smem:[#allocation0]]
  $region273: #{asd_conformer_forward.1} parent=0
    _
  %s109 = ssub.s32 1, %s107
  %s110 = scalar_select 0, %s109, %s107
  %v111 = vstv %s89
  %112 = vst [vmem:[#allocation3] sm:$0x1] %v111
  %v113 = vstv %s95
  %114 = vst [vmem:[#allocation4] sm:$0x1] %v113
  %v115 = vstv %s97
  %116 = vst [vmem:[#allocation5] sm:$0x1] %v115
  $region1: #{asd_conformer_forward.1} parent=0
    #allocation6 [shape = 'u8[1024]{0}', space=vmem, size = 0x400, scoped, tag = 'input window, operand 38, single buffered']
    #allocation7 [shape = 's32[2]{0}', space=sflag, size = 0x8, scoped, tag = 'scoped memory for asd_conformer_forward.1']
    #allocation8 [shape = 's32[2]{0}', space=sflag, size = 0x8, scoped, tag = 'scoped memory for asd_conformer_forward.1']
    #allocation9 [shape = 'u8[1024]{0}', space=vmem, size = 0x400, scoped, tag = 'input window, operand 39, single buffered']
    #allocation10 [shape = 's32[1]{0}', space=sflag, size = 0x4, scoped, tag = 'scoped memory for asd_conformer_forward.1']
    #allocation11 [shape = 'u8[512]{0}', space=vmem, size = 0x400, scoped, tag = 'input window, operand 41, single buffered']
    #allocation12 [shape = 'u8[512]{0}', space=vmem, size = 0x400, scoped, tag = 'input window, operand 42, single buffered']
    #allocation13 [shape = 's32[1]{0}', space=sflag, size = 0x4, scoped, tag = 'scoped memory for asd_conformer_forward.1']
    #allocation14 [shape = 'u8[512]{0}', space=vmem, size = 0x400, scoped, tag = 'input window, operand 43, single buffered']
    #allocation15 [shape = 'u8[512]{0}', space=vmem, size = 0x400, scoped, tag = 'input window, operand 46, single buffered']
    #allocation16 [shape = 's32[1]{0}', space=sflag, size = 0x4, scoped, tag = 'scoped memory for asd_conformer_forward.1']
    #allocation17 [shape = 'u8[1024]{0}', space=vmem, size = 0x400, scoped, tag = 'output window, operand 0']
    #allocation18 [shape = 'u8[1024]{0}', space=vmem, size = 0x400, scoped, tag = 'output window, operand 2']
    #allocation19 [shape = 's32[2]{0}', space=sflag, size = 0x8, scoped, tag = 'scoped memory for asd_conformer_forward.1']
    %117 = vsyncpa [#allocation7], 0
    %118 = vsyncpa [#allocation10], 0
    %119 = vsyncpa [#allocation13], 0
    %120 = vsyncpa [#allocation16], 0
    %121 = vsyncpa [#allocation8], 0
    %s122 = scalar_lea.sflag [#allocation8], 1
    %123 = vsyncpa %s122, 0
    %124 = vsyncpa [#allocation19], 0
    %s125 = scalar_lea.sflag [#allocation19], 1
    %126 = vsyncpa %s125, 0
    loop: start=0, step=1, limit=4
    $region2: #{asd_conformer_forward.1} parent=1 // loop_pre_header
      _
    $region3: #{asd_conformer_forward.1} parent=1 // loop_header
      %s128 = sphi 0, %s132
      %p129 = scmp.ge.s32.totalorder %s128, 4
      %s138 = sphi 0, %s140
      %s141 = sphi 0, %s138
      %s142 = sphi 0, %s141
      %s158 = sphi 0, %s142
      %s162 = sphi 0, %s162
      %s164 = sphi 0, %s162
      %s165 = sphi 0, %s164
      %s179 = sphi 0, %s165
      %s183 = sphi 0, %s183
      %s185 = sphi 0, %s183
      %s186 = sphi 0, %s185
      %s200 = sphi 0, %s186
      %s204 = sphi 0, %s204
      %s206 = sphi 0, %s204
      %s207 = sphi 0, %s206
      %s221 = sphi 0, %s207
      %s225 = sphi 0, %s225
      %s227 = sphi 0, %s225
      %s228 = sphi 0, %s227
      %s242 = sphi 0, %s228
      %s246 = sphi 0, %s246
      %s248 = sphi 0, %s246
      %s249 = sphi 0, %s248
      %s263 = sphi 0, %s249
      %s267 = sphi 0, %s267
      %s269 = sphi 0, %s267
      %s270 = sphi 0, %s269
      %s284 = sphi 0, %s270
      %s288 = sphi 0, %s288
      %s290 = sphi 0, %s288
      %s291 = sphi 0, %s290
      %s305 = sphi 0, %s291
      %s309 = sphi 0, %s309
      %s311 = sphi 0, %s309
      %s312 = sphi 0, %s311
      %s326 = sphi 0, %s312
      %s330 = sphi 0, %s330
      %s332 = sphi 0, %s330
      %s333 = sphi 0, %s332
      %s347 = sphi 0, %s333
      %s351 = sphi 0, %s351
      %s353 = sphi 0, %s351
      %s354 = sphi 0, %s353
      %s368 = sphi 0, %s354
      %s372 = sphi 0, %s372
      %s374 = sphi 0, %s372
      %s375 = sphi 0, %s374
      %s389 = sphi 0, %s375
      %s393 = sphi 0, %s393
      %s395 = sphi 0, %s393
      %s396 = sphi 0, %s395
      %s410 = sphi 0, %s396
      %s414 = sphi 0, %s414
      %s416 = sphi 0, %s414
      %s417 = sphi 0, %s416
      %s431 = sphi 0, %s417
      %s435 = sphi 0, %s435
      %s437 = sphi 0, %s435
      %s438 = sphi 0, %s437
      %s452 = sphi 0, %s438
      %s456 = sphi 0, %s456
      %s458 = sphi 0, %s456
      %s459 = sphi 0, %s458
      %s473 = sphi 0, %s459
      %s477 = sphi 0, %s477
      %s479 = sphi 0, %s477
      %s480 = sphi 0, %s479
      %s494 = sphi 0, %s480
      %s498 = sphi 0, %s498
      %s500 = sphi 0, %s498
      %s501 = sphi 0, %s500
      %s515 = sphi 0, %s501
      %s519 = sphi 0, %s519
      %s521 = sphi 0, %s519
      %s522 = sphi 0, %s521
      %s536 = sphi 0, %s522
      %s540 = sphi 0, %s540
      %s542 = sphi 0, %s540
      %s543 = sphi 0, %s542
      %s557 = sphi 0, %s543
      %s561 = sphi 0, %s561
      %s563 = sphi 0, %s561
      %s564 = sphi 0, %s563
      %s578 = sphi 0, %s564
      %s582 = sphi 0, %s582
      %s584 = sphi 0, %s582
      %s585 = sphi 0, %s584
      %s599 = sphi 0, %s585
      %s603 = sphi 0, %s603
      %s605 = sphi 0, %s603
      %s606 = sphi 0, %s605
      %s620 = sphi 0, %s606
      %s624 = sphi 0, %s624
      %s626 = sphi 0, %s624
      %s627 = sphi 0, %s626
      %s641 = sphi 0, %s627
      %s645 = sphi 0, %s645
      %s647 = sphi 0, %s645
      %s648 = sphi 0, %s647
      %s662 = sphi 0, %s648
      %s666 = sphi 0, %s666
      %s668 = sphi 0, %s666
      %s669 = sphi 0, %s668
      %s683 = sphi 0, %s669
      %s687 = sphi 0, %s687
      %s689 = sphi 0, %s687
      %s690 = sphi 0, %s689
      %s704 = sphi 0, %s690
      %s708 = sphi 0, %s708
      %s710 = sphi 0, %s708
      %s711 = sphi 0, %s710
      %s725 = sphi 0, %s711
      %s729 = sphi 0, %s729
      %s731 = sphi 0, %s729
      %s732 = sphi 0, %s731
      %s746 = sphi 0, %s732
      %s750 = sphi 0, %s750
      %s752 = sphi 0, %s750
      %s753 = sphi 0, %s752
      %s767 = sphi 0, %s753
      %s771 = sphi 0, %s771
      %s773 = sphi 0, %s771
      %s774 = sphi 0, %s773
      %s788 = sphi 0, %s774
      %s792 = sphi 0, %s792
      %s794 = sphi 0, %s792
      %s795 = sphi 0, %s794
      %s809 = sphi 0, %s795
      %s813 = sphi 0, %s813
      %s815 = sphi 0, %s813
      %s816 = sphi 0, %s815
      %s830 = sphi 0, %s816
      %s834 = sphi 0, %s834
      %s836 = sphi 0, %s834
      %s837 = sphi 0, %s836
      %s851 = sphi 0, %s837
      %s855 = sphi 0, %s855
      %s857 = sphi 0, %s855
      %s858 = sphi 0, %s857
      %s872 = sphi 0, %s858
      %s876 = sphi 0, %s876
      %s878 = sphi 0, %s876
      %s879 = sphi 0, %s878
      %s893 = sphi 0, %s879
      %s897 = sphi 0, %s897
      %s899 = sphi 0, %s897
      %s900 = sphi 0, %s899
      %s914 = sphi 0, %s900
      %s918 = sphi 0, %s918
      %s920 = sphi 0, %s918
      %s921 = sphi 0, %s920
      %s935 = sphi 0, %s921
      %s939 = sphi 0, %s939
      %s941 = sphi 0, %s939
      %s942 = sphi 0, %s941
      %s956 = sphi 0, %s942
      %s960 = sphi 0, %s960
      %s962 = sphi 0, %s960
      %s963 = sphi 0, %s962
      %s977 = sphi 0, %s963
      %s981 = sphi 0, %s981
      %s983 = sphi 0, %s981
      %s984 = sphi 0, %s983
      %s998 = sphi 0, %s984
      %s1002 = sphi 0, %s1002
      %s1004 = sphi 0, %s1002
      %s1005 = sphi 0, %s1004
      %s1019 = sphi 0, %s1005
      %s1023 = sphi 0, %s1023
      %s1025 = sphi 0, %s1023
      %s1026 = sphi 0, %s1025
      %s1040 = sphi 0, %s1026
      %s1044 = sphi 0, %s1044
      %s1046 = sphi 0, %s1044
      %s1047 = sphi 0, %s1046
      %s1061 = sphi 0, %s1047
      %s1065 = sphi 0, %s1065
      %s1067 = sphi 0, %s1065
      %s1068 = sphi 0, %s1067
      %s1082 = sphi 0, %s1068
      %s1086 = sphi 0, %s1086
      %s1088 = sphi 0, %s1086
      %s1089 = sphi 0, %s1088
      %s1103 = sphi 0, %s1089
      %s1107 = sphi 0, %s1107
      %s1109 = sphi 0, %s1107
      %s1110 = sphi 0, %s1109
      %s1124 = sphi 0, %s1110
      %s1128 = sphi 0, %s1128
      %s1130 = sphi 0, %s1128
      %s1131 = sphi 0, %s1130
      %s1145 = sphi 0, %s1131
      %s1149 = sphi 0, %s1149
      %s1151 = sphi 0, %s1149
      %s1152 = sphi 0, %s1151
      %s1166 = sphi 0, %s1152
      %s1170 = sphi 0, %s1170
      %s1172 = sphi 0, %s1170
      %s1173 = sphi 0, %s1172
      %s1187 = sphi 0, %s1173
      %s1193 = sphi 0, %s1195
      %s1196 = sphi 0, %s1193
      %s1197 = sphi 0, %s1196
      %s1213 = sphi 0, %s1197
      %s1219 = sphi 0, %s1221
      %s1222 = sphi 0, %s1219
      %s1223 = sphi 0, %s1222
      %s1239 = sphi 0, %s1223
      %s1245 = sphi 0, %s1247
      %s1248 = sphi 0, %s1245
      %s1249 = sphi 0, %s1248
      %s1265 = sphi 0, %s1249
    $region4: #{asd_conformer_forward.1} parent=1 // loop_header_branch
      %131 = sbr.rel (%p129) target = $region8
    $region5: #{asd_conformer_forward.1} parent=1 // loop_body
      %s133 = ssub.s32 %s128, 1
      %s134 = ssub.s32 %s128, 2
      %s135 = sadd.s32 %s128, 1
      %s136 = ssub.s32 %s128, %s135
      %p137 = scmp.eq.s32.totalorder %s136, 0
      %s139 = sadd.s32 %s138, 1
      %s140 = scalar_select %p137, %s138, %s139
      %p143 = pneg %p137
      %p144 = scmp.eq.s32.totalorder %s128, 1
      %p145 = por %p143, %p144
      %p146 = scmp.ne.s32.totalorder %s138, %s141
      %p147 = scmp.eq.s32.totalorder %s128, 0
      %p148 = por %p146, %p147
      %p149 = scmp.ne.s32.totalorder %s138, %s141
      %p150 = scmp.eq.s32.totalorder %s133, 1
      %p151 = por %p149, %p150
      %p152 = scmp.ne.s32.totalorder %s141, %s142
      %p153 = scmp.eq.s32.totalorder %s133, 0
      %p154 = por %p152, %p153
      %p155 = scmp.ne.s32.totalorder %s141, %s142
      %p156 = scmp.eq.s32.totalorder %s134, 1
      %p157 = por %p155, %p156
      %p159 = scmp.ne.s32.totalorder %s142, %s158
      %p160 = scmp.eq.s32.totalorder %s134, 0
      %p161 = por %p159, %p160
      %s163 = sadd.s32 %s162, 1
      %p166 = scmp.eq.s32.totalorder %s128, 1
      %p167 = scmp.ne.s32.totalorder %s162, %s164
      %p168 = scmp.eq.s32.totalorder %s128, 0
      %p169 = por %p167, %p168
      %p170 = scmp.ne.s32.totalorder %s162, %s164
      %p171 = scmp.eq.s32.totalorder %s133, 1
      %p172 = por %p170, %p171
      %p173 = scmp.ne.s32.totalorder %s164, %s165
      %p174 = scmp.eq.s32.totalorder %s133, 0
      %p175 = por %p173, %p174
      %p176 = scmp.ne.s32.totalorder %s164, %s165
      %p177 = scmp.eq.s32.totalorder %s134, 1
      %p178 = por %p176, %p177
      %p180 = scmp.ne.s32.totalorder %s165, %s179
      %p181 = scmp.eq.s32.totalorder %s134, 0
      %p182 = por %p180, %p181
      %s184 = sadd.s32 %s183, 1
      %p187 = scmp.eq.s32.totalorder %s128, 1
      %p188 = scmp.ne.s32.totalorder %s183, %s185
      %p189 = scmp.eq.s32.totalorder %s128, 0
      %p190 = por %p188, %p189
      %p191 = scmp.ne.s32.totalorder %s183, %s185
      %p192 = scmp.eq.s32.totalorder %s133, 1
      %p193 = por %p191, %p192
      %p194 = scmp.ne.s32.totalorder %s185, %s186
      %p195 = scmp.eq.s32.totalorder %s133, 0
      %p196 = por %p194, %p195
      %p197 = scmp.ne.s32.totalorder %s185, %s186
      %p198 = scmp.eq.s32.totalorder %s134, 1
      %p199 = por %p197, %p198
      %p201 = scmp.ne.s32.totalorder %s186, %s200
      %p202 = scmp.eq.s32.totalorder %s134, 0
      %p203 = por %p201, %p202
      %s205 = sadd.s32 %s204, 1
      %p208 = scmp.eq.s32.totalorder %s128, 1
      %p209 = scmp.ne.s32.totalorder %s204, %s206
      %p210 = scmp.eq.s32.totalorder %s128, 0
      %p211 = por %p209, %p210
      %p212 = scmp.ne.s32.totalorder %s204, %s206
      %p213 = scmp.eq.s32.totalorder %s133, 1
      %p214 = por %p212, %p213
      %p215 = scmp.ne.s32.totalorder %s206, %s207
      %p216 = scmp.eq.s32.totalorder %s133, 0
      %p217 = por %p215, %p216
      %p218 = scmp.ne.s32.totalorder %s206, %s207
      %p219 = scmp.eq.s32.totalorder %s134, 1
      %p220 = por %p218, %p219
      %p222 = scmp.ne.s32.totalorder %s207, %s221
      %p223 = scmp.eq.s32.totalorder %s134, 0
      %p224 = por %p222, %p223
      %s226 = sadd.s32 %s225, 1
      %p229 = scmp.eq.s32.totalorder %s128, 1
      %p230 = scmp.ne.s32.totalorder %s225, %s227
      %p231 = scmp.eq.s32.totalorder %s128, 0
      %p232 = por %p230, %p231
      %p233 = scmp.ne.s32.totalorder %s225, %s227
      %p234 = scmp.eq.s32.totalorder %s133, 1
      %p235 = por %p233, %p234
      %p236 = scmp.ne.s32.totalorder %s227, %s228
      %p237 = scmp.eq.s32.totalorder %s133, 0
      %p238 = por %p236, %p237
      %p239 = scmp.ne.s32.totalorder %s227, %s228
      %p240 = scmp.eq.s32.totalorder %s134, 1
      %p241 = por %p239, %p240
      %p243 = scmp.ne.s32.totalorder %s228, %s242
      %p244 = scmp.eq.s32.totalorder %s134, 0
      %p245 = por %p243, %p244
      %s247 = sadd.s32 %s246, 1
      %p250 = scmp.eq.s32.totalorder %s128, 1
      %p251 = scmp.ne.s32.totalorder %s246, %s248
      %p252 = scmp.eq.s32.totalorder %s128, 0
      %p253 = por %p251, %p252
      %p254 = scmp.ne.s32.totalorder %s246, %s248
      %p255 = scmp.eq.s32.totalorder %s133, 1
      %p256 = por %p254, %p255
      %p257 = scmp.ne.s32.totalorder %s248, %s249
      %p258 = scmp.eq.s32.totalorder %s133, 0
      %p259 = por %p257, %p258
      %p260 = scmp.ne.s32.totalorder %s248, %s249
      %p261 = scmp.eq.s32.totalorder %s134, 1
      %p262 = por %p260, %p261
      %p264 = scmp.ne.s32.totalorder %s249, %s263
      %p265 = scmp.eq.s32.totalorder %s134, 0
      %p266 = por %p264, %p265
      %s268 = sadd.s32 %s267, 1
      %p271 = scmp.eq.s32.totalorder %s128, 1
      %p272 = scmp.ne.s32.totalorder %s267, %s269
      %p273 = scmp.eq.s32.totalorder %s128, 0
      %p274 = por %p272, %p273
      %p275 = scmp.ne.s32.totalorder %s267, %s269
      %p276 = scmp.eq.s32.totalorder %s133, 1
      %p277 = por %p275, %p276
      %p278 = scmp.ne.s32.totalorder %s269, %s270
      %p279 = scmp.eq.s32.totalorder %s133, 0
      %p280 = por %p278, %p279
      %p281 = scmp.ne.s32.totalorder %s269, %s270
      %p282 = scmp.eq.s32.totalorder %s134, 1
      %p283 = por %p281, %p282
      %p285 = scmp.ne.s32.totalorder %s270, %s284
      %p286 = scmp.eq.s32.totalorder %s134, 0
      %p287 = por %p285, %p286
      %s289 = sadd.s32 %s288, 1
      %p292 = scmp.eq.s32.totalorder %s128, 1
      %p293 = scmp.ne.s32.totalorder %s288, %s290
      %p294 = scmp.eq.s32.totalorder %s128, 0
      %p295 = por %p293, %p294
      %p296 = scmp.ne.s32.totalorder %s288, %s290
      %p297 = scmp.eq.s32.totalorder %s133, 1
      %p298 = por %p296, %p297
      %p299 = scmp.ne.s32.totalorder %s290, %s291
      %p300 = scmp.eq.s32.totalorder %s133, 0
      %p301 = por %p299, %p300
      %p302 = scmp.ne.s32.totalorder %s290, %s291
      %p303 = scmp.eq.s32.totalorder %s134, 1
      %p304 = por %p302, %p303
      %p306 = scmp.ne.s32.totalorder %s291, %s305
      %p307 = scmp.eq.s32.totalorder %s134, 0
      %p308 = por %p306, %p307
      %s310 = sadd.s32 %s309, 1
      %p313 = scmp.eq.s32.totalorder %s128, 1
      %p314 = scmp.ne.s32.totalorder %s309, %s311
      %p315 = scmp.eq.s32.totalorder %s128, 0
      %p316 = por %p314, %p315
      %p317 = scmp.ne.s32.totalorder %s309, %s311
      %p318 = scmp.eq.s32.totalorder %s133, 1
      %p319 = por %p317, %p318
      %p320 = scmp.ne.s32.totalorder %s311, %s312
      %p321 = scmp.eq.s32.totalorder %s133, 0
      %p322 = por %p320, %p321
      %p323 = scmp.ne.s32.totalorder %s311, %s312
      %p324 = scmp.eq.s32.totalorder %s134, 1
      %p325 = por %p323, %p324
      %p327 = scmp.ne.s32.totalorder %s312, %s326
      %p328 = scmp.eq.s32.totalorder %s134, 0
      %p329 = por %p327, %p328
      %s331 = sadd.s32 %s330, 1
      %p334 = scmp.eq.s32.totalorder %s128, 1
      %p335 = scmp.ne.s32.totalorder %s330, %s332
      %p336 = scmp.eq.s32.totalorder %s128, 0
      %p337 = por %p335, %p336
      %p338 = scmp.ne.s32.totalorder %s330, %s332
      %p339 = scmp.eq.s32.totalorder %s133, 1
      %p340 = por %p338, %p339
      %p341 = scmp.ne.s32.totalorder %s332, %s333
      %p342 = scmp.eq.s32.totalorder %s133, 0
      %p343 = por %p341, %p342
      %p344 = scmp.ne.s32.totalorder %s332, %s333
      %p345 = scmp.eq.s32.totalorder %s134, 1
      %p346 = por %p344, %p345
      %p348 = scmp.ne.s32.totalorder %s333, %s347
      %p349 = scmp.eq.s32.totalorder %s134, 0
      %p350 = por %p348, %p349
      %s352 = sadd.s32 %s351, 1
      %p355 = scmp.eq.s32.totalorder %s128, 1
      %p356 = scmp.ne.s32.totalorder %s351, %s353
      %p357 = scmp.eq.s32.totalorder %s128, 0
      %p358 = por %p356, %p357
      %p359 = scmp.ne.s32.totalorder %s351, %s353
      %p360 = scmp.eq.s32.totalorder %s133, 1
      %p361 = por %p359, %p360
      %p362 = scmp.ne.s32.totalorder %s353, %s354
      %p363 = scmp.eq.s32.totalorder %s133, 0
      %p364 = por %p362, %p363
      %p365 = scmp.ne.s32.totalorder %s353, %s354
      %p366 = scmp.eq.s32.totalorder %s134, 1
      %p367 = por %p365, %p366
      %p369 = scmp.ne.s32.totalorder %s354, %s368
      %p370 = scmp.eq.s32.totalorder %s134, 0
      %p371 = por %p369, %p370
      %s373 = sadd.s32 %s372, 1
      %p376 = scmp.eq.s32.totalorder %s128, 1
      %p377 = scmp.ne.s32.totalorder %s372, %s374
      %p378 = scmp.eq.s32.totalorder %s128, 0
      %p379 = por %p377, %p378
      %p380 = scmp.ne.s32.totalorder %s372, %s374
      %p381 = scmp.eq.s32.totalorder %s133, 1
      %p382 = por %p380, %p381
      %p383 = scmp.ne.s32.totalorder %s374, %s375
      %p384 = scmp.eq.s32.totalorder %s133, 0
      %p385 = por %p383, %p384
      %p386 = scmp.ne.s32.totalorder %s374, %s375
      %p387 = scmp.eq.s32.totalorder %s134, 1
      %p388 = por %p386, %p387
      %p390 = scmp.ne.s32.totalorder %s375, %s389
      %p391 = scmp.eq.s32.totalorder %s134, 0
      %p392 = por %p390, %p391
      %s394 = sadd.s32 %s393, 1
      %p397 = scmp.eq.s32.totalorder %s128, 1
      %p398 = scmp.ne.s32.totalorder %s393, %s395
      %p399 = scmp.eq.s32.totalorder %s128, 0
      %p400 = por %p398, %p399
      %p401 = scmp.ne.s32.totalorder %s393, %s395
      %p402 = scmp.eq.s32.totalorder %s133, 1
      %p403 = por %p401, %p402
      %p404 = scmp.ne.s32.totalorder %s395, %s396
      %p405 = scmp.eq.s32.totalorder %s133, 0
      %p406 = por %p404, %p405
      %p407 = scmp.ne.s32.totalorder %s395, %s396
      %p408 = scmp.eq.s32.totalorder %s134, 1
      %p409 = por %p407, %p408
      %p411 = scmp.ne.s32.totalorder %s396, %s410
      %p412 = scmp.eq.s32.totalorder %s134, 0
      %p413 = por %p411, %p412
      %s415 = sadd.s32 %s414, 1
      %p418 = scmp.eq.s32.totalorder %s128, 1
      %p419 = scmp.ne.s32.totalorder %s414, %s416
      %p420 = scmp.eq.s32.totalorder %s128, 0
      %p421 = por %p419, %p420
      %p422 = scmp.ne.s32.totalorder %s414, %s416
      %p423 = scmp.eq.s32.totalorder %s133, 1
      %p424 = por %p422, %p423
      %p425 = scmp.ne.s32.totalorder %s416, %s417
      %p426 = scmp.eq.s32.totalorder %s133, 0
      %p427 = por %p425, %p426
      %p428 = scmp.ne.s32.totalorder %s416, %s417
      %p429 = scmp.eq.s32.totalorder %s134, 1
      %p430 = por %p428, %p429
      %p432 = scmp.ne.s32.totalorder %s417, %s431
      %p433 = scmp.eq.s32.totalorder %s134, 0
      %p434 = por %p432, %p433
      %s436 = sadd.s32 %s435, 1
      %p439 = scmp.eq.s32.totalorder %s128, 1
      %p440 = scmp.ne.s32.totalorder %s435, %s437
      %p441 = scmp.eq.s32.totalorder %s128, 0
      %p442 = por %p440, %p441
      %p443 = scmp.ne.s32.totalorder %s435, %s437
      %p444 = scmp.eq.s32.totalorder %s133, 1
      %p445 = por %p443, %p444
      %p446 = scmp.ne.s32.totalorder %s437, %s438
      %p447 = scmp.eq.s32.totalorder %s133, 0
      %p448 = por %p446, %p447
      %p449 = scmp.ne.s32.totalorder %s437, %s438
      %p450 = scmp.eq.s32.totalorder %s134, 1
      %p451 = por %p449, %p450
      %p453 = scmp.ne.s32.totalorder %s438, %s452
      %p454 = scmp.eq.s32.totalorder %s134, 0
      %p455 = por %p453, %p454
      %s457 = sadd.s32 %s456, 1
      %p460 = scmp.eq.s32.totalorder %s128, 1
      %p461 = scmp.ne.s32.totalorder %s456, %s458
      %p462 = scmp.eq.s32.totalorder %s128, 0
      %p463 = por %p461, %p462
      %p464 = scmp.ne.s32.totalorder %s456, %s458
      %p465 = scmp.eq.s32.totalorder %s133, 1
      %p466 = por %p464, %p465
      %p467 = scmp.ne.s32.totalorder %s458, %s459
      %p468 = scmp.eq.s32.totalorder %s133, 0
      %p469 = por %p467, %p468
      %p470 = scmp.ne.s32.totalorder %s458, %s459
      %p471 = scmp.eq.s32.totalorder %s134, 1
      %p472 = por %p470, %p471
      %p474 = scmp.ne.s32.totalorder %s459, %s473
      %p475 = scmp.eq.s32.totalorder %s134, 0
      %p476 = por %p474, %p475
      %s478 = sadd.s32 %s477, 1
      %p481 = scmp.eq.s32.totalorder %s128, 1
      %p482 = scmp.ne.s32.totalorder %s477, %s479
      %p483 = scmp.eq.s32.totalorder %s128, 0
      %p484 = por %p482, %p483
      %p485 = scmp.ne.s32.totalorder %s477, %s479
      %p486 = scmp.eq.s32.totalorder %s133, 1
      %p487 = por %p485, %p486
      %p488 = scmp.ne.s32.totalorder %s479, %s480
      %p489 = scmp.eq.s32.totalorder %s133, 0
      %p490 = por %p488, %p489
      %p491 = scmp.ne.s32.totalorder %s479, %s480
      %p492 = scmp.eq.s32.totalorder %s134, 1
      %p493 = por %p491, %p492
      %p495 = scmp.ne.s32.totalorder %s480, %s494
      %p496 = scmp.eq.s32.totalorder %s134, 0
      %p497 = por %p495, %p496
      %s499 = sadd.s32 %s498, 1
      %p502 = scmp.eq.s32.totalorder %s128, 1
      %p503 = scmp.ne.s32.totalorder %s498, %s500
      %p504 = scmp.eq.s32.totalorder %s128, 0
      %p505 = por %p503, %p504
      %p506 = scmp.ne.s32.totalorder %s498, %s500
      %p507 = scmp.eq.s32.totalorder %s133, 1
      %p508 = por %p506, %p507
      %p509 = scmp.ne.s32.totalorder %s500, %s501
      %p510 = scmp.eq.s32.totalorder %s133, 0
      %p511 = por %p509, %p510
      %p512 = scmp.ne.s32.totalorder %s500, %s501
      %p513 = scmp.eq.s32.totalorder %s134, 1
      %p514 = por %p512, %p513
      %p516 = scmp.ne.s32.totalorder %s501, %s515
      %p517 = scmp.eq.s32.totalorder %s134, 0
      %p518 = por %p516, %p517
      %s520 = sadd.s32 %s519, 1
      %p523 = scmp.eq.s32.totalorder %s128, 1
      %p524 = scmp.ne.s32.totalorder %s519, %s521
      %p525 = scmp.eq.s32.totalorder %s128, 0
      %p526 = por %p524, %p525
      %p527 = scmp.ne.s32.totalorder %s519, %s521
      %p528 = scmp.eq.s32.totalorder %s133, 1
      %p529 = por %p527, %p528
      %p530 = scmp.ne.s32.totalorder %s521, %s522
      %p531 = scmp.eq.s32.totalorder %s133, 0
      %p532 = por %p530, %p531
      %p533 = scmp.ne.s32.totalorder %s521, %s522
      %p534 = scmp.eq.s32.totalorder %s134, 1
      %p535 = por %p533, %p534
      %p537 = scmp.ne.s32.totalorder %s522, %s536
      %p538 = scmp.eq.s32.totalorder %s134, 0
      %p539 = por %p537, %p538
      %s541 = sadd.s32 %s540, 1
      %p544 = scmp.eq.s32.totalorder %s128, 1
      %p545 = scmp.ne.s32.totalorder %s540, %s542
      %p546 = scmp.eq.s32.totalorder %s128, 0
      %p547 = por %p545, %p546
      %p548 = scmp.ne.s32.totalorder %s540, %s542
      %p549 = scmp.eq.s32.totalorder %s133, 1
      %p550 = por %p548, %p549
      %p551 = scmp.ne.s32.totalorder %s542, %s543
      %p552 = scmp.eq.s32.totalorder %s133, 0
      %p553 = por %p551, %p552
      %p554 = scmp.ne.s32.totalorder %s542, %s543
      %p555 = scmp.eq.s32.totalorder %s134, 1
      %p556 = por %p554, %p555
      %p558 = scmp.ne.s32.totalorder %s543, %s557
      %p559 = scmp.eq.s32.totalorder %s134, 0
      %p560 = por %p558, %p559
      %s562 = sadd.s32 %s561, 1
      %p565 = scmp.eq.s32.totalorder %s128, 1
      %p566 = scmp.ne.s32.totalorder %s561, %s563
      %p567 = scmp.eq.s32.totalorder %s128, 0
      %p568 = por %p566, %p567
      %p569 = scmp.ne.s32.totalorder %s561, %s563
      %p570 = scmp.eq.s32.totalorder %s133, 1
      %p571 = por %p569, %p570
      %p572 = scmp.ne.s32.totalorder %s563, %s564
      %p573 = scmp.eq.s32.totalorder %s133, 0
      %p574 = por %p572, %p573
      %p575 = scmp.ne.s32.totalorder %s563, %s564
      %p576 = scmp.eq.s32.totalorder %s134, 1
      %p577 = por %p575, %p576
      %p579 = scmp.ne.s32.totalorder %s564, %s578
      %p580 = scmp.eq.s32.totalorder %s134, 0
      %p581 = por %p579, %p580
      %s583 = sadd.s32 %s582, 1
      %p586 = scmp.eq.s32.totalorder %s128, 1
      %p587 = scmp.ne.s32.totalorder %s582, %s584
      %p588 = scmp.eq.s32.totalorder %s128, 0
      %p589 = por %p587, %p588
      %p590 = scmp.ne.s32.totalorder %s582, %s584
      %p591 = scmp.eq.s32.totalorder %s133, 1
      %p592 = por %p590, %p591
      %p593 = scmp.ne.s32.totalorder %s584, %s585
      %p594 = scmp.eq.s32.totalorder %s133, 0
      %p595 = por %p593, %p594
      %p596 = scmp.ne.s32.totalorder %s584, %s585
      %p597 = scmp.eq.s32.totalorder %s134, 1
      %p598 = por %p596, %p597
      %p600 = scmp.ne.s32.totalorder %s585, %s599
      %p601 = scmp.eq.s32.totalorder %s134, 0
      %p602 = por %p600, %p601
      %s604 = sadd.s32 %s603, 1
      %p607 = scmp.eq.s32.totalorder %s128, 1
      %p608 = scmp.ne.s32.totalorder %s603, %s605
      %p609 = scmp.eq.s32.totalorder %s128, 0
      %p610 = por %p608, %p609
      %p611 = scmp.ne.s32.totalorder %s603, %s605
      %p612 = scmp.eq.s32.totalorder %s133, 1
      %p613 = por %p611, %p612
      %p614 = scmp.ne.s32.totalorder %s605, %s606
      %p615 = scmp.eq.s32.totalorder %s133, 0
      %p616 = por %p614, %p615
      %p617 = scmp.ne.s32.totalorder %s605, %s606
      %p618 = scmp.eq.s32.totalorder %s134, 1
      %p619 = por %p617, %p618
      %p621 = scmp.ne.s32.totalorder %s606, %s620
      %p622 = scmp.eq.s32.totalorder %s134, 0
      %p623 = por %p621, %p622
      %s625 = sadd.s32 %s624, 1
      %p628 = scmp.eq.s32.totalorder %s128, 1
      %p629 = scmp.ne.s32.totalorder %s624, %s626
      %p630 = scmp.eq.s32.totalorder %s128, 0
      %p631 = por %p629, %p630
      %p632 = scmp.ne.s32.totalorder %s624, %s626
      %p633 = scmp.eq.s32.totalorder %s133, 1
      %p634 = por %p632, %p633
      %p635 = scmp.ne.s32.totalorder %s626, %s627
      %p636 = scmp.eq.s32.totalorder %s133, 0
      %p637 = por %p635, %p636
      %p638 = scmp.ne.s32.totalorder %s626, %s627
      %p639 = scmp.eq.s32.totalorder %s134, 1
      %p640 = por %p638, %p639
      %p642 = scmp.ne.s32.totalorder %s627, %s641
      %p643 = scmp.eq.s32.totalorder %s134, 0
      %p644 = por %p642, %p643
      %s646 = sadd.s32 %s645, 1
      %p649 = scmp.eq.s32.totalorder %s128, 1
      %p650 = scmp.ne.s32.totalorder %s645, %s647
      %p651 = scmp.eq.s32.totalorder %s128, 0
      %p652 = por %p650, %p651
      %p653 = scmp.ne.s32.totalorder %s645, %s647
      %p654 = scmp.eq.s32.totalorder %s133, 1
      %p655 = por %p653, %p654
      %p656 = scmp.ne.s32.totalorder %s647, %s648
      %p657 = scmp.eq.s32.totalorder %s133, 0
      %p658 = por %p656, %p657
      %p659 = scmp.ne.s32.totalorder %s647, %s648
      %p660 = scmp.eq.s32.totalorder %s134, 1
      %p661 = por %p659, %p660
      %p663 = scmp.ne.s32.totalorder %s648, %s662
      %p664 = scmp.eq.s32.totalorder %s134, 0
      %p665 = por %p663, %p664
      %s667 = sadd.s32 %s666, 1
      %p670 = scmp.eq.s32.totalorder %s128, 1
      %p671 = scmp.ne.s32.totalorder %s666, %s668
      %p672 = scmp.eq.s32.totalorder %s128, 0
      %p673 = por %p671, %p672
      %p674 = scmp.ne.s32.totalorder %s666, %s668
      %p675 = scmp.eq.s32.totalorder %s133, 1
      %p676 = por %p674, %p675
      %p677 = scmp.ne.s32.totalorder %s668, %s669
      %p678 = scmp.eq.s32.totalorder %s133, 0
      %p679 = por %p677, %p678
      %p680 = scmp.ne.s32.totalorder %s668, %s669
      %p681 = scmp.eq.s32.totalorder %s134, 1
      %p682 = por %p680, %p681
      %p684 = scmp.ne.s32.totalorder %s669, %s683
      %p685 = scmp.eq.s32.totalorder %s134, 0
      %p686 = por %p684, %p685
      %s688 = sadd.s32 %s687, 1
      %p691 = scmp.eq.s32.totalorder %s128, 1
      %p692 = scmp.ne.s32.totalorder %s687, %s689
      %p693 = scmp.eq.s32.totalorder %s128, 0
      %p694 = por %p692, %p693
      %p695 = scmp.ne.s32.totalorder %s687, %s689
      %p696 = scmp.eq.s32.totalorder %s133, 1
      %p697 = por %p695, %p696
      %p698 = scmp.ne.s32.totalorder %s689, %s690
      %p699 = scmp.eq.s32.totalorder %s133, 0
      %p700 = por %p698, %p699
      %p701 = scmp.ne.s32.totalorder %s689, %s690
      %p702 = scmp.eq.s32.totalorder %s134, 1
      %p703 = por %p701, %p702
      %p705 = scmp.ne.s32.totalorder %s690, %s704
      %p706 = scmp.eq.s32.totalorder %s134, 0
      %p707 = por %p705, %p706
      %s709 = sadd.s32 %s708, 1
      %p712 = scmp.eq.s32.totalorder %s128, 1
      %p713 = scmp.ne.s32.totalorder %s708, %s710
      %p714 = scmp.eq.s32.totalorder %s128, 0
      %p715 = por %p713, %p714
      %p716 = scmp.ne.s32.totalorder %s708, %s710
      %p717 = scmp.eq.s32.totalorder %s133, 1
      %p718 = por %p716, %p717
      %p719 = scmp.ne.s32.totalorder %s710, %s711
      %p720 = scmp.eq.s32.totalorder %s133, 0
      %p721 = por %p719, %p720
      %p722 = scmp.ne.s32.totalorder %s710, %s711
      %p723 = scmp.eq.s32.totalorder %s134, 1
      %p724 = por %p722, %p723
      %p726 = scmp.ne.s32.totalorder %s711, %s725
      %p727 = scmp.eq.s32.totalorder %s134, 0
      %p728 = por %p726, %p727
      %s730 = sadd.s32 %s729, 1
      %p733 = scmp.eq.s32.totalorder %s128, 1
      %p734 = scmp.ne.s32.totalorder %s729, %s731
      %p735 = scmp.eq.s32.totalorder %s128, 0
      %p736 = por %p734, %p735
      %p737 = scmp.ne.s32.totalorder %s729, %s731
      %p738 = scmp.eq.s32.totalorder %s133, 1
      %p739 = por %p737, %p738
      %p740 = scmp.ne.s32.totalorder %s731, %s732
      %p741 = scmp.eq.s32.totalorder %s133, 0
      %p742 = por %p740, %p741
      %p743 = scmp.ne.s32.totalorder %s731, %s732
      %p744 = scmp.eq.s32.totalorder %s134, 1
      %p745 = por %p743, %p744
      %p747 = scmp.ne.s32.totalorder %s732, %s746
      %p748 = scmp.eq.s32.totalorder %s134, 0
      %p749 = por %p747, %p748
      %s751 = sadd.s32 %s750, 1
      %p754 = scmp.eq.s32.totalorder %s128, 1
      %p755 = scmp.ne.s32.totalorder %s750, %s752
      %p756 = scmp.eq.s32.totalorder %s128, 0
      %p757 = por %p755, %p756
      %p758 = scmp.ne.s32.totalorder %s750, %s752
      %p759 = scmp.eq.s32.totalorder %s133, 1
      %p760 = por %p758, %p759
      %p761 = scmp.ne.s32.totalorder %s752, %s753
      %p762 = scmp.eq.s32.totalorder %s133, 0
      %p763 = por %p761, %p762
      %p764 = scmp.ne.s32.totalorder %s752, %s753
      %p765 = scmp.eq.s32.totalorder %s134, 1
      %p766 = por %p764, %p765
      %p768 = scmp.ne.s32.totalorder %s753, %s767
      %p769 = scmp.eq.s32.totalorder %s134, 0
      %p770 = por %p768, %p769
      %s772 = sadd.s32 %s771, 1
      %p775 = scmp.eq.s32.totalorder %s128, 1
      %p776 = scmp.ne.s32.totalorder %s771, %s773
      %p777 = scmp.eq.s32.totalorder %s128, 0
      %p778 = por %p776, %p777
      %p779 = scmp.ne.s32.totalorder %s771, %s773
      %p780 = scmp.eq.s32.totalorder %s133, 1
      %p781 = por %p779, %p780
      %p782 = scmp.ne.s32.totalorder %s773, %s774
      %p783 = scmp.eq.s32.totalorder %s133, 0
      %p784 = por %p782, %p783
      %p785 = scmp.ne.s32.totalorder %s773, %s774
      %p786 = scmp.eq.s32.totalorder %s134, 1
      %p787 = por %p785, %p786
      %p789 = scmp.ne.s32.totalorder %s774, %s788
      %p790 = scmp.eq.s32.totalorder %s134, 0
      %p791 = por %p789, %p790
      %s793 = sadd.s32 %s792, 1
      %p796 = scmp.eq.s32.totalorder %s128, 1
      %p797 = scmp.ne.s32.totalorder %s792, %s794
      %p798 = scmp.eq.s32.totalorder %s128, 0
      %p799 = por %p797, %p798
      %p800 = scmp.ne.s32.totalorder %s792, %s794
      %p801 = scmp.eq.s32.totalorder %s133, 1
      %p802 = por %p800, %p801
      %p803 = scmp.ne.s32.totalorder %s794, %s795
      %p804 = scmp.eq.s32.totalorder %s133, 0
      %p805 = por %p803, %p804
      %p806 = scmp.ne.s32.totalorder %s794, %s795
      %p807 = scmp.eq.s32.totalorder %s134, 1
      %p808 = por %p806, %p807
      %p810 = scmp.ne.s32.totalorder %s795, %s809
      %p811 = scmp.eq.s32.totalorder %s134, 0
      %p812 = por %p810, %p811
      %s814 = sadd.s32 %s813, 1
      %p817 = scmp.eq.s32.totalorder %s128, 1
      %p818 = scmp.ne.s32.totalorder %s813, %s815
      %p819 = scmp.eq.s32.totalorder %s128, 0
      %p820 = por %p818, %p819
      %p821 = scmp.ne.s32.totalorder %s813, %s815
      %p822 = scmp.eq.s32.totalorder %s133, 1
      %p823 = por %p821, %p822
      %p824 = scmp.ne.s32.totalorder %s815, %s816
      %p825 = scmp.eq.s32.totalorder %s133, 0
      %p826 = por %p824, %p825
      %p827 = scmp.ne.s32.totalorder %s815, %s816
      %p828 = scmp.eq.s32.totalorder %s134, 1
      %p829 = por %p827, %p828
      %p831 = scmp.ne.s32.totalorder %s816, %s830
      %p832 = scmp.eq.s32.totalorder %s134, 0
      %p833 = por %p831, %p832
      %s835 = sadd.s32 %s834, 1
      %p838 = scmp.eq.s32.totalorder %s128, 1
      %p839 = scmp.ne.s32.totalorder %s834, %s836
      %p840 = scmp.eq.s32.totalorder %s128, 0
      %p841 = por %p839, %p840
      %p842 = scmp.ne.s32.totalorder %s834, %s836
      %p843 = scmp.eq.s32.totalorder %s133, 1
      %p844 = por %p842, %p843
      %p845 = scmp.ne.s32.totalorder %s836, %s837
      %p846 = scmp.eq.s32.totalorder %s133, 0
      %p847 = por %p845, %p846
      %p848 = scmp.ne.s32.totalorder %s836, %s837
      %p849 = scmp.eq.s32.totalorder %s134, 1
      %p850 = por %p848, %p849
      %p852 = scmp.ne.s32.totalorder %s837, %s851
      %p853 = scmp.eq.s32.totalorder %s134, 0
      %p854 = por %p852, %p853
      %s856 = sadd.s32 %s855, 1
      %p859 = scmp.eq.s32.totalorder %s128, 1
      %p860 = scmp.ne.s32.totalorder %s855, %s857
      %p861 = scmp.eq.s32.totalorder %s128, 0
      %p862 = por %p860, %p861
      %p863 = scmp.ne.s32.totalorder %s855, %s857
      %p864 = scmp.eq.s32.totalorder %s133, 1
      %p865 = por %p863, %p864
      %p866 = scmp.ne.s32.totalorder %s857, %s858
      %p867 = scmp.eq.s32.totalorder %s133, 0
      %p868 = por %p866, %p867
      %p869 = scmp.ne.s32.totalorder %s857, %s858
      %p870 = scmp.eq.s32.totalorder %s134, 1
      %p871 = por %p869, %p870
      %p873 = scmp.ne.s32.totalorder %s858, %s872
      %p874 = scmp.eq.s32.totalorder %s134, 0
      %p875 = por %p873, %p874
      %s877 = sadd.s32 %s876, 1
      %p880 = scmp.eq.s32.totalorder %s128, 1
      %p881 = scmp.ne.s32.totalorder %s876, %s878
      %p882 = scmp.eq.s32.totalorder %s128, 0
      %p883 = por %p881, %p882
      %p884 = scmp.ne.s32.totalorder %s876, %s878
      %p885 = scmp.eq.s32.totalorder %s133, 1
      %p886 = por %p884, %p885
      %p887 = scmp.ne.s32.totalorder %s878, %s879
      %p888 = scmp.eq.s32.totalorder %s133, 0
      %p889 = por %p887, %p888
      %p890 = scmp.ne.s32.totalorder %s878, %s879
      %p891 = scmp.eq.s32.totalorder %s134, 1
      %p892 = por %p890, %p891
      %p894 = scmp.ne.s32.totalorder %s879, %s893
      %p895 = scmp.eq.s32.totalorder %s134, 0
      %p896 = por %p894, %p895
      %s898 = sadd.s32 %s897, 1
      %p901 = scmp.eq.s32.totalorder %s128, 1
      %p902 = scmp.ne.s32.totalorder %s897, %s899
      %p903 = scmp.eq.s32.totalorder %s128, 0
      %p904 = por %p902, %p903
      %p905 = scmp.ne.s32.totalorder %s897, %s899
      %p906 = scmp.eq.s32.totalorder %s133, 1
      %p907 = por %p905, %p906
      %p908 = scmp.ne.s32.totalorder %s899, %s900
      %p909 = scmp.eq.s32.totalorder %s133, 0
      %p910 = por %p908, %p909
      %p911 = scmp.ne.s32.totalorder %s899, %s900
      %p912 = scmp.eq.s32.totalorder %s134, 1
      %p913 = por %p911, %p912
      %p915 = scmp.ne.s32.totalorder %s900, %s914
      %p916 = scmp.eq.s32.totalorder %s134, 0
      %p917 = por %p915, %p916
      %s919 = sadd.s32 %s918, 1
      %p922 = scmp.eq.s32.totalorder %s128, 1
      %p923 = scmp.ne.s32.totalorder %s918, %s920
      %p924 = scmp.eq.s32.totalorder %s128, 0
      %p925 = por %p923, %p924
      %p926 = scmp.ne.s32.totalorder %s918, %s920
      %p927 = scmp.eq.s32.totalorder %s133, 1
      %p928 = por %p926, %p927
      %p929 = scmp.ne.s32.totalorder %s920, %s921
      %p930 = scmp.eq.s32.totalorder %s133, 0
      %p931 = por %p929, %p930
      %p932 = scmp.ne.s32.totalorder %s920, %s921
      %p933 = scmp.eq.s32.totalorder %s134, 1
      %p934 = por %p932, %p933
      %p936 = scmp.ne.s32.totalorder %s921, %s935
      %p937 = scmp.eq.s32.totalorder %s134, 0
      %p938 = por %p936, %p937
      %s940 = sadd.s32 %s939, 1
      %p943 = scmp.eq.s32.totalorder %s128, 1
      %p944 = scmp.ne.s32.totalorder %s939, %s941
      %p945 = scmp.eq.s32.totalorder %s128, 0
      %p946 = por %p944, %p945
      %p947 = scmp.ne.s32.totalorder %s939, %s941
      %p948 = scmp.eq.s32.totalorder %s133, 1
      %p949 = por %p947, %p948
      %p950 = scmp.ne.s32.totalorder %s941, %s942
      %p951 = scmp.eq.s32.totalorder %s133, 0
      %p952 = por %p950, %p951
      %p953 = scmp.ne.s32.totalorder %s941, %s942
      %p954 = scmp.eq.s32.totalorder %s134, 1
      %p955 = por %p953, %p954
      %p957 = scmp.ne.s32.totalorder %s942, %s956
      %p958 = scmp.eq.s32.totalorder %s134, 0
      %p959 = por %p957, %p958
      %s961 = sadd.s32 %s960, 1
      %p964 = scmp.eq.s32.totalorder %s128, 1
      %p965 = scmp.ne.s32.totalorder %s960, %s962
      %p966 = scmp.eq.s32.totalorder %s128, 0
      %p967 = por %p965, %p966
      %p968 = scmp.ne.s32.totalorder %s960, %s962
      %p969 = scmp.eq.s32.totalorder %s133, 1
      %p970 = por %p968, %p969
      %p971 = scmp.ne.s32.totalorder %s962, %s963
      %p972 = scmp.eq.s32.totalorder %s133, 0
      %p973 = por %p971, %p972
      %p974 = scmp.ne.s32.totalorder %s962, %s963
      %p975 = scmp.eq.s32.totalorder %s134, 1
      %p976 = por %p974, %p975
      %p978 = scmp.ne.s32.totalorder %s963, %s977
      %p979 = scmp.eq.s32.totalorder %s134, 0
      %p980 = por %p978, %p979
      %s982 = sadd.s32 %s981, 1
      %p985 = scmp.eq.s32.totalorder %s128, 1
      %p986 = scmp.ne.s32.totalorder %s981, %s983
      %p987 = scmp.eq.s32.totalorder %s128, 0
      %p988 = por %p986, %p987
      %p989 = scmp.ne.s32.totalorder %s981, %s983
      %p990 = scmp.eq.s32.totalorder %s133, 1
      %p991 = por %p989, %p990
      %p992 = scmp.ne.s32.totalorder %s983, %s984
      %p993 = scmp.eq.s32.totalorder %s133, 0
      %p994 = por %p992, %p993
      %p995 = scmp.ne.s32.totalorder %s983, %s984
      %p996 = scmp.eq.s32.totalorder %s134, 1
      %p997 = por %p995, %p996
      %p999 = scmp.ne.s32.totalorder %s984, %s998
      %p1000 = scmp.eq.s32.totalorder %s134, 0
      %p1001 = por %p999, %p1000
      %s1003 = sadd.s32 %s1002, 1
      %p1006 = scmp.eq.s32.totalorder %s128, 1
      %p1007 = scmp.ne.s32.totalorder %s1002, %s1004
      %p1008 = scmp.eq.s32.totalorder %s128, 0
      %p1009 = por %p1007, %p1008
      %p1010 = scmp.ne.s32.totalorder %s1002, %s1004
      %p1011 = scmp.eq.s32.totalorder %s133, 1
      %p1012 = por %p1010, %p1011
      %p1013 = scmp.ne.s32.totalorder %s1004, %s1005
      %p1014 = scmp.eq.s32.totalorder %s133, 0
      %p1015 = por %p1013, %p1014
      %p1016 = scmp.ne.s32.totalorder %s1004, %s1005
      %p1017 = scmp.eq.s32.totalorder %s134, 1
      %p1018 = por %p1016, %p1017
      %p1020 = scmp.ne.s32.totalorder %s1005, %s1019
      %p1021 = scmp.eq.s32.totalorder %s134, 0
      %p1022 = por %p1020, %p1021
      %s1024 = sadd.s32 %s1023, 1
      %p1027 = scmp.eq.s32.totalorder %s128, 1
      %p1028 = scmp.ne.s32.totalorder %s1023, %s1025
      %p1029 = scmp.eq.s32.totalorder %s128, 0
      %p1030 = por %p1028, %p1029
      %p1031 = scmp.ne.s32.totalorder %s1023, %s1025
      %p1032 = scmp.eq.s32.totalorder %s133, 1
      %p1033 = por %p1031, %p1032
      %p1034 = scmp.ne.s32.totalorder %s1025, %s1026
      %p1035 = scmp.eq.s32.totalorder %s133, 0
      %p1036 = por %p1034, %p1035
      %p1037 = scmp.ne.s32.totalorder %s1025, %s1026
      %p1038 = scmp.eq.s32.totalorder %s134, 1
      %p1039 = por %p1037, %p1038
      %p1041 = scmp.ne.s32.totalorder %s1026, %s1040
      %p1042 = scmp.eq.s32.totalorder %s134, 0
      %p1043 = por %p1041, %p1042
      %s1045 = sadd.s32 %s1044, 1
      %p1048 = scmp.eq.s32.totalorder %s128, 1
      %p1049 = scmp.ne.s32.totalorder %s1044, %s1046
      %p1050 = scmp.eq.s32.totalorder %s128, 0
      %p1051 = por %p1049, %p1050
      %p1052 = scmp.ne.s32.totalorder %s1044, %s1046
      %p1053 = scmp.eq.s32.totalorder %s133, 1
      %p1054 = por %p1052, %p1053
      %p1055 = scmp.ne.s32.totalorder %s1046, %s1047
      %p1056 = scmp.eq.s32.totalorder %s133, 0
      %p1057 = por %p1055, %p1056
      %p1058 = scmp.ne.s32.totalorder %s1046, %s1047
      %p1059 = scmp.eq.s32.totalorder %s134, 1
      %p1060 = por %p1058, %p1059
      %p1062 = scmp.ne.s32.totalorder %s1047, %s1061
      %p1063 = scmp.eq.s32.totalorder %s134, 0
      %p1064 = por %p1062, %p1063
      %s1066 = sadd.s32 %s1065, 1
      %p1069 = scmp.eq.s32.totalorder %s128, 1
      %p1070 = scmp.ne.s32.totalorder %s1065, %s1067
      %p1071 = scmp.eq.s32.totalorder %s128, 0
      %p1072 = por %p1070, %p1071
      %p1073 = scmp.ne.s32.totalorder %s1065, %s1067
      %p1074 = scmp.eq.s32.totalorder %s133, 1
      %p1075 = por %p1073, %p1074
      %p1076 = scmp.ne.s32.totalorder %s1067, %s1068
      %p1077 = scmp.eq.s32.totalorder %s133, 0
      %p1078 = por %p1076, %p1077
      %p1079 = scmp.ne.s32.totalorder %s1067, %s1068
      %p1080 = scmp.eq.s32.totalorder %s134, 1
      %p1081 = por %p1079, %p1080
      %p1083 = scmp.ne.s32.totalorder %s1068, %s1082
      %p1084 = scmp.eq.s32.totalorder %s134, 0
      %p1085 = por %p1083, %p1084
      %s1087 = sadd.s32 %s1086, 1
      %p1090 = scmp.eq.s32.totalorder %s128, 1
      %p1091 = scmp.ne.s32.totalorder %s1086, %s1088
      %p1092 = scmp.eq.s32.totalorder %s128, 0
      %p1093 = por %p1091, %p1092
      %p1094 = scmp.ne.s32.totalorder %s1086, %s1088
      %p1095 = scmp.eq.s32.totalorder %s133, 1
      %p1096 = por %p1094, %p1095
      %p1097 = scmp.ne.s32.totalorder %s1088, %s1089
      %p1098 = scmp.eq.s32.totalorder %s133, 0
      %p1099 = por %p1097, %p1098
      %p1100 = scmp.ne.s32.totalorder %s1088, %s1089
      %p1101 = scmp.eq.s32.totalorder %s134, 1
      %p1102 = por %p1100, %p1101
      %p1104 = scmp.ne.s32.totalorder %s1089, %s1103
      %p1105 = scmp.eq.s32.totalorder %s134, 0
      %p1106 = por %p1104, %p1105
      %s1108 = sadd.s32 %s1107, 1
      %p1111 = scmp.eq.s32.totalorder %s128, 1
      %p1112 = scmp.ne.s32.totalorder %s1107, %s1109
      %p1113 = scmp.eq.s32.totalorder %s128, 0
      %p1114 = por %p1112, %p1113
      %p1115 = scmp.ne.s32.totalorder %s1107, %s1109
      %p1116 = scmp.eq.s32.totalorder %s133, 1
      %p1117 = por %p1115, %p1116
      %p1118 = scmp.ne.s32.totalorder %s1109, %s1110
      %p1119 = scmp.eq.s32.totalorder %s133, 0
      %p1120 = por %p1118, %p1119
      %p1121 = scmp.ne.s32.totalorder %s1109, %s1110
      %p1122 = scmp.eq.s32.totalorder %s134, 1
      %p1123 = por %p1121, %p1122
      %p1125 = scmp.ne.s32.totalorder %s1110, %s1124
      %p1126 = scmp.eq.s32.totalorder %s134, 0
      %p1127 = por %p1125, %p1126
      %s1129 = sadd.s32 %s1128, 1
      %p1132 = scmp.eq.s32.totalorder %s128, 1
      %p1133 = scmp.ne.s32.totalorder %s1128, %s1130
      %p1134 = scmp.eq.s32.totalorder %s128, 0
      %p1135 = por %p1133, %p1134
      %p1136 = scmp.ne.s32.totalorder %s1128, %s1130
      %p1137 = scmp.eq.s32.totalorder %s133, 1
      %p1138 = por %p1136, %p1137
      %p1139 = scmp.ne.s32.totalorder %s1130, %s1131
      %p1140 = scmp.eq.s32.totalorder %s133, 0
      %p1141 = por %p1139, %p1140
      %p1142 = scmp.ne.s32.totalorder %s1130, %s1131
      %p1143 = scmp.eq.s32.totalorder %s134, 1
      %p1144 = por %p1142, %p1143
      %p1146 = scmp.ne.s32.totalorder %s1131, %s1145
      %p1147 = scmp.eq.s32.totalorder %s134, 0
      %p1148 = por %p1146, %p1147
      %s1150 = sadd.s32 %s1149, 1
      %p1153 = scmp.eq.s32.totalorder %s128, 1
      %p1154 = scmp.ne.s32.totalorder %s1149, %s1151
      %p1155 = scmp.eq.s32.totalorder %s128, 0
      %p1156 = por %p1154, %p1155
      %p1157 = scmp.ne.s32.totalorder %s1149, %s1151
      %p1158 = scmp.eq.s32.totalorder %s133, 1
      %p1159 = por %p1157, %p1158
      %p1160 = scmp.ne.s32.totalorder %s1151, %s1152
      %p1161 = scmp.eq.s32.totalorder %s133, 0
      %p1162 = por %p1160, %p1161
      %p1163 = scmp.ne.s32.totalorder %s1151, %s1152
      %p1164 = scmp.eq.s32.totalorder %s134, 1
      %p1165 = por %p1163, %p1164
      %p1167 = scmp.ne.s32.totalorder %s1152, %s1166
      %p1168 = scmp.eq.s32.totalorder %s134, 0
      %p1169 = por %p1167, %p1168
      %s1171 = sadd.s32 %s1170, 1
      %p1174 = scmp.eq.s32.totalorder %s128, 1
      %p1175 = scmp.ne.s32.totalorder %s1170, %s1172
      %p1176 = scmp.eq.s32.totalorder %s128, 0
      %p1177 = por %p1175, %p1176
      %p1178 = scmp.ne.s32.totalorder %s1170, %s1172
      %p1179 = scmp.eq.s32.totalorder %s133, 1
      %p1180 = por %p1178, %p1179
      %p1181 = scmp.ne.s32.totalorder %s1172, %s1173
      %p1182 = scmp.eq.s32.totalorder %s133, 0
      %p1183 = por %p1181, %p1182
      %p1184 = scmp.ne.s32.totalorder %s1172, %s1173
      %p1185 = scmp.eq.s32.totalorder %s134, 1
      %p1186 = por %p1184, %p1185
      %p1188 = scmp.ne.s32.totalorder %s1173, %s1187
      %p1189 = scmp.eq.s32.totalorder %s134, 0
      %p1190 = por %p1188, %p1189
      %s1191 = ssub.s32 %s128, %s135
      %p1192 = scmp.eq.s32.totalorder %s1191, 0
      %s1194 = sadd.s32 %s1193, 1
      %s1195 = scalar_select %p1192, %s1193, %s1194
      %p1198 = pneg %p1192
      %p1199 = scmp.eq.s32.totalorder %s128, 1
      %p1200 = por %p1198, %p1199
      %p1201 = scmp.ne.s32.totalorder %s1193, %s1196
      %p1202 = scmp.eq.s32.totalorder %s128, 0
      %p1203 = por %p1201, %p1202
      %p1204 = scmp.ne.s32.totalorder %s1193, %s1196
      %p1205 = scmp.eq.s32.totalorder %s133, 1
      %p1206 = por %p1204, %p1205
      %p1207 = scmp.ne.s32.totalorder %s1196, %s1197
      %p1208 = scmp.eq.s32.totalorder %s133, 0
      %p1209 = por %p1207, %p1208
      %p1210 = scmp.ne.s32.totalorder %s1196, %s1197
      %p1211 = scmp.eq.s32.totalorder %s134, 1
      %p1212 = por %p1210, %p1211
      %p1214 = scmp.ne.s32.totalorder %s1197, %s1213
      %p1215 = scmp.eq.s32.totalorder %s134, 0
      %p1216 = por %p1214, %p1215
      %s1217 = ssub.s32 %s128, %s135
      %p1218 = scmp.eq.s32.totalorder %s1217, 0
      %s1220 = sadd.s32 %s1219, 1
      %s1221 = scalar_select %p1218, %s1219, %s1220
      %p1224 = pneg %p1218
      %p1225 = scmp.eq.s32.totalorder %s128, 1
      %p1226 = por %p1224, %p1225
      %p1227 = scmp.ne.s32.totalorder %s1219, %s1222
      %p1228 = scmp.eq.s32.totalorder %s128, 0
      %p1229 = por %p1227, %p1228
      %p1230 = scmp.ne.s32.totalorder %s1219, %s1222
      %p1231 = scmp.eq.s32.totalorder %s133, 1
      %p1232 = por %p1230, %p1231
      %p1233 = scmp.ne.s32.totalorder %s1222, %s1223
      %p1234 = scmp.eq.s32.totalorder %s133, 0
      %p1235 = por %p1233, %p1234
      %p1236 = scmp.ne.s32.totalorder %s1222, %s1223
      %p1237 = scmp.eq.s32.totalorder %s134, 1
      %p1238 = por %p1236, %p1237
      %p1240 = scmp.ne.s32.totalorder %s1223, %s1239
      %p1241 = scmp.eq.s32.totalorder %s134, 0
      %p1242 = por %p1240, %p1241
      %s1243 = ssub.s32 %s128, %s135
      %p1244 = scmp.eq.s32.totalorder %s1243, 0
      %s1246 = sadd.s32 %s1245, 1
      %s1247 = scalar_select %p1244, %s1245, %s1246
      %p1250 = pneg %p1244
      %p1251 = scmp.eq.s32.totalorder %s128, 1
      %p1252 = por %p1250, %p1251
      %p1253 = scmp.ne.s32.totalorder %s1245, %s1248
      %p1254 = scmp.eq.s32.totalorder %s128, 0
      %p1255 = por %p1253, %p1254
      %p1256 = scmp.ne.s32.totalorder %s1245, %s1248
      %p1257 = scmp.eq.s32.totalorder %s133, 1
      %p1258 = por %p1256, %p1257
      %p1259 = scmp.ne.s32.totalorder %s1248, %s1249
      %p1260 = scmp.eq.s32.totalorder %s133, 0
      %p1261 = por %p1259, %p1260
      %p1262 = scmp.ne.s32.totalorder %s1248, %s1249
      %p1263 = scmp.eq.s32.totalorder %s134, 1
      %p1264 = por %p1262, %p1263
      %p1266 = scmp.ne.s32.totalorder %s1249, %s1265
      %p1267 = scmp.eq.s32.totalorder %s134, 0
      %p1268 = por %p1266, %p1267
      %p1269 = scmp.le.s32.totalorder 1, %s128
      %p1270 = scmp.lt.s32.totalorder %s128, 3
      %p1271 = pnand %p1269, %p1270
      %p1272 = pneg %p1271
      // Predicated region
      $region9: #{asd_conformer_forward.1} parent=5 // pred_check
        _
      $region10: #{asd_conformer_forward.1} parent=5 // pred_check_branch
        %1274 = sbr.rel (%p1271) target = $region12
      $region11: #{asd_conformer_forward.1} parent=5 // pred_region
        %s1275 = ssub.s32 %s128, 1
        // Predicated region
        $region13: #{asd_conformer_forward.1} parent=11 // pred_check
          %p1276 = pneg %p175
        $region14: #{asd_conformer_forward.1} parent=11 // pred_check_branch
          %1278 = sbr.rel (%p1276) target = $region16
        $region15: #{asd_conformer_forward.1} parent=11 // pred_region
          _
        $region16: #{asd_conformer_forward.1} parent=11 // pred_fallthru
          _
        // Predicated region
        $region17: #{asd_conformer_forward.1} parent=11 // pred_check
          %p1279 = pneg %p196
        $region18: #{asd_conformer_forward.1} parent=11 // pred_check_branch
          %1281 = sbr.rel (%p1279) target = $region20
        $region19: #{asd_conformer_forward.1} parent=11 // pred_region
          _
        $region20: #{asd_conformer_forward.1} parent=11 // pred_fallthru
          _
        // Predicated region
        $region21: #{asd_conformer_forward.1} parent=11 // pred_check
          %p1282 = pneg %p217
        $region22: #{asd_conformer_forward.1} parent=11 // pred_check_branch
          %1284 = sbr.rel (%p1282) target = $region24
        $region23: #{asd_conformer_forward.1} parent=11 // pred_region
          _
        $region24: #{asd_conformer_forward.1} parent=11 // pred_fallthru
          _
        // Predicated region
        $region25: #{asd_conformer_forward.1} parent=11 // pred_check
          %p1285 = pneg %p238
        $region26: #{asd_conformer_forward.1} parent=11 // pred_check_branch
          %1287 = sbr.rel (%p1285) target = $region28
        $region27: #{asd_conformer_forward.1} parent=11 // pred_region
          _
        $region28: #{asd_conformer_forward.1} parent=11 // pred_fallthru
          _
        // Predicated region
        $region29: #{asd_conformer_forward.1} parent=11 // pred_check
          %p1288 = pneg %p259
        $region30: #{asd_conformer_forward.1} parent=11 // pred_check_branch
          %1290 = sbr.rel (%p1288) target = $region32
        $region31: #{asd_conformer_forward.1} parent=11 // pred_region
          _
        $region32: #{asd_conformer_forward.1} parent=11 // pred_fallthru
          _
        // Predicated region
        $region33: #{asd_conformer_forward.1} parent=11 // pred_check
          %p1291 = pneg %p280
        $region34: #{asd_conformer_forward.1} parent=11 // pred_check_branch
          %1293 = sbr.rel (%p1291) target = $region36
        $region35: #{asd_conformer_forward.1} parent=11 // pred_region
          _
        $region36: #{asd_conformer_forward.1} parent=11 // pred_fallthru
          _
        // Predicated region
        $region37: #{asd_conformer_forward.1} parent=11 // pred_check
          %p1294 = pneg %p301
        $region38: #{asd_conformer_forward.1} parent=11 // pred_check_branch
          %1296 = sbr.rel (%p1294) target = $region40
        $region39: #{asd_conformer_forward.1} parent=11 // pred_region
          _
        $region40: #{asd_conformer_forward.1} parent=11 // pred_fallthru
          _
        // Predicated region
        $region41: #{asd_conformer_forward.1} parent=11 // pred_check
          %p1297 = pneg %p322
        $region42: #{asd_conformer_forward.1} parent=11 // pred_check_branch
          %1299 = sbr.rel (%p1297) target = $region44
        $region43: #{asd_conformer_forward.1} parent=11 // pred_region
          _
        $region44: #{asd_conformer_forward.1} parent=11 // pred_fallthru
          _
        // Predicated region
        $region45: #{asd_conformer_forward.1} parent=11 // pred_check
          %p1300 = pneg %p343
        $region46: #{asd_conformer_forward.1} parent=11 // pred_check_branch
          %1302 = sbr.rel (%p1300) target = $region48
        $region47: #{asd_conformer_forward.1} parent=11 // pred_region
          _
        $region48: #{asd_conformer_forward.1} parent=11 // pred_fallthru
          _
        // Predicated region
        $region49: #{asd_conformer_forward.1} parent=11 // pred_check
          %p1303 = pneg %p364
        $region50: #{asd_conformer_forward.1} parent=11 // pred_check_branch
          %1305 = sbr.rel (%p1303) target = $region52
        $region51: #{asd_conformer_forward.1} parent=11 // pred_region
          _
        $region52: #{asd_conformer_forward.1} parent=11 // pred_fallthru
          _
        // Predicated region
        $region53: #{asd_conformer_forward.1} parent=11 // pred_check
          %p1306 = pneg %p385
        $region54: #{asd_conformer_forward.1} parent=11 // pred_check_branch
          %1308 = sbr.rel (%p1306) target = $region56
        $region55: #{asd_conformer_forward.1} parent=11 // pred_region
          _
        $region56: #{asd_conformer_forward.1} parent=11 // pred_fallthru
          _
        // Predicated region
        $region57: #{asd_conformer_forward.1} parent=11 // pred_check
          %p1309 = pneg %p406
        $region58: #{asd_conformer_forward.1} parent=11 // pred_check_branch
          %1311 = sbr.rel (%p1309) target = $region60
        $region59: #{asd_conformer_forward.1} parent=11 // pred_region
          _
        $region60: #{asd_conformer_forward.1} parent=11 // pred_fallthru
          _
        // Predicated region
        $region61: #{asd_conformer_forward.1} parent=11 // pred_check
          %p1312 = pneg %p427
        $region62: #{asd_conformer_forward.1} parent=11 // pred_check_branch
          %1314 = sbr.rel (%p1312) target = $region64
        $region63: #{asd_conformer_forward.1} parent=11 // pred_region
          _
        $region64: #{asd_conformer_forward.1} parent=11 // pred_fallthru
          _
        // Predicated region
        $region65: #{asd_conformer_forward.1} parent=11 // pred_check
          %p1315 = pneg %p448
        $region66: #{asd_conformer_forward.1} parent=11 // pred_check_branch
          %1317 = sbr.rel (%p1315) target = $region68
        $region67: #{asd_conformer_forward.1} parent=11 // pred_region
          _
        $region68: #{asd_conformer_forward.1} parent=11 // pred_fallthru
          _
        // Predicated region
        $region69: #{asd_conformer_forward.1} parent=11 // pred_check
          %p1318 = pneg %p469
        $region70: #{asd_conformer_forward.1} parent=11 // pred_check_branch
          %1320 = sbr.rel (%p1318) target = $region72
        $region71: #{asd_conformer_forward.1} parent=11 // pred_region
          _
        $region72: #{asd_conformer_forward.1} parent=11 // pred_fallthru
          _
        // Predicated region
        $region73: #{asd_conformer_forward.1} parent=11 // pred_check
          %p1321 = pneg %p490
        $region74: #{asd_conformer_forward.1} parent=11 // pred_check_branch
          %1323 = sbr.rel (%p1321) target = $region76
        $region75: #{asd_conformer_forward.1} parent=11 // pred_region
          _
        $region76: #{asd_conformer_forward.1} parent=11 // pred_fallthru
          _
        // Predicated region
        $region77: #{asd_conformer_forward.1} parent=11 // pred_check
          %p1324 = pneg %p511
        $region78: #{asd_conformer_forward.1} parent=11 // pred_check_branch
          %1326 = sbr.rel (%p1324) target = $region80
        $region79: #{asd_conformer_forward.1} parent=11 // pred_region
          _
        $region80: #{asd_conformer_forward.1} parent=11 // pred_fallthru
          _
        // Predicated region
        $region81: #{asd_conformer_forward.1} parent=11 // pred_check
          %p1327 = pneg %p532
        $region82: #{asd_conformer_forward.1} parent=11 // pred_check_branch
          %1329 = sbr.rel (%p1327) target = $region84
        $region83: #{asd_conformer_forward.1} parent=11 // pred_region
          _
        $region84: #{asd_conformer_forward.1} parent=11 // pred_fallthru
          _
        // Predicated region
        $region85: #{asd_conformer_forward.1} parent=11 // pred_check
          %p1330 = pneg %p553
        $region86: #{asd_conformer_forward.1} parent=11 // pred_check_branch
          %1332 = sbr.rel (%p1330) target = $region88
        $region87: #{asd_conformer_forward.1} parent=11 // pred_region
          _
        $region88: #{asd_conformer_forward.1} parent=11 // pred_fallthru
          _
        // Predicated region
        $region89: #{asd_conformer_forward.1} parent=11 // pred_check
          %p1333 = pneg %p574
        $region90: #{asd_conformer_forward.1} parent=11 // pred_check_branch
          %1335 = sbr.rel (%p1333) target = $region92
        $region91: #{asd_conformer_forward.1} parent=11 // pred_region
          _
        $region92: #{asd_conformer_forward.1} parent=11 // pred_fallthru
          _
        // Predicated region
        $region93: #{asd_conformer_forward.1} parent=11 // pred_check
          %p1336 = pneg %p595
        $region94: #{asd_conformer_forward.1} parent=11 // pred_check_branch
          %1338 = sbr.rel (%p1336) target = $region96
        $region95: #{asd_conformer_forward.1} parent=11 // pred_region
          _
        $region96: #{asd_conformer_forward.1} parent=11 // pred_fallthru
          _
        // Predicated region
        $region97: #{asd_conformer_forward.1} parent=11 // pred_check
          %p1339 = pneg %p616
        $region98: #{asd_conformer_forward.1} parent=11 // pred_check_branch
          %1341 = sbr.rel (%p1339) target = $region100
        $region99: #{asd_conformer_forward.1} parent=11 // pred_region
          _
        $region100: #{asd_conformer_forward.1} parent=11 // pred_fallthru
          _
        // Predicated region
        $region101: #{asd_conformer_forward.1} parent=11 // pred_check
          %p1342 = pneg %p637
        $region102: #{asd_conformer_forward.1} parent=11 // pred_check_branch
          %1344 = sbr.rel (%p1342) target = $region104
        $region103: #{asd_conformer_forward.1} parent=11 // pred_region
          _
        $region104: #{asd_conformer_forward.1} parent=11 // pred_fallthru
          _
        // Predicated region
        $region105: #{asd_conformer_forward.1} parent=11 // pred_check
          %p1345 = pneg %p658
        $region106: #{asd_conformer_forward.1} parent=11 // pred_check_branch
          %1347 = sbr.rel (%p1345) target = $region108
        $region107: #{asd_conformer_forward.1} parent=11 // pred_region
          _
        $region108: #{asd_conformer_forward.1} parent=11 // pred_fallthru
          _
        // Predicated region
        $region109: #{asd_conformer_forward.1} parent=11 // pred_check
          %p1348 = pneg %p679
        $region110: #{asd_conformer_forward.1} parent=11 // pred_check_branch
          %1350 = sbr.rel (%p1348) target = $region112
        $region111: #{asd_conformer_forward.1} parent=11 // pred_region
          _
        $region112: #{asd_conformer_forward.1} parent=11 // pred_fallthru
          _
        // Predicated region
        $region113: #{asd_conformer_forward.1} parent=11 // pred_check
          %p1351 = pneg %p700
        $region114: #{asd_conformer_forward.1} parent=11 // pred_check_branch
          %1353 = sbr.rel (%p1351) target = $region116
        $region115: #{asd_conformer_forward.1} parent=11 // pred_region
          _
        $region116: #{asd_conformer_forward.1} parent=11 // pred_fallthru
          _
        // Predicated region
        $region117: #{asd_conformer_forward.1} parent=11 // pred_check
          %p1354 = pneg %p721
        $region118: #{asd_conformer_forward.1} parent=11 // pred_check_branch
          %1356 = sbr.rel (%p1354) target = $region120
        $region119: #{asd_conformer_forward.1} parent=11 // pred_region
          _
        $region120: #{asd_conformer_forward.1} parent=11 // pred_fallthru
          _
        // Predicated region
        $region121: #{asd_conformer_forward.1} parent=11 // pred_check
          %p1357 = pneg %p742
        $region122: #{asd_conformer_forward.1} parent=11 // pred_check_branch
          %1359 = sbr.rel (%p1357) target = $region124
        $region123: #{asd_conformer_forward.1} parent=11 // pred_region
          _
        $region124: #{asd_conformer_forward.1} parent=11 // pred_fallthru
          _
        // Predicated region
        $region125: #{asd_conformer_forward.1} parent=11 // pred_check
          %p1360 = pneg %p763
        $region126: #{asd_conformer_forward.1} parent=11 // pred_check_branch
          %1362 = sbr.rel (%p1360) target = $region128
        $region127: #{asd_conformer_forward.1} parent=11 // pred_region
          _
        $region128: #{asd_conformer_forward.1} parent=11 // pred_fallthru
          _
        // Predicated region
        $region129: #{asd_conformer_forward.1} parent=11 // pred_check
          %p1363 = pneg %p784
        $region130: #{asd_conformer_forward.1} parent=11 // pred_check_branch
          %1365 = sbr.rel (%p1363) target = $region132
        $region131: #{asd_conformer_forward.1} parent=11 // pred_region
          _
        $region132: #{asd_conformer_forward.1} parent=11 // pred_fallthru
          _
        // Predicated region
        $region133: #{asd_conformer_forward.1} parent=11 // pred_check
          %p1366 = pneg %p805
        $region134: #{asd_conformer_forward.1} parent=11 // pred_check_branch
          %1368 = sbr.rel (%p1366) target = $region136
        $region135: #{asd_conformer_forward.1} parent=11 // pred_region
          _
        $region136: #{asd_conformer_forward.1} parent=11 // pred_fallthru
          _
        // Predicated region
        $region137: #{asd_conformer_forward.1} parent=11 // pred_check
          %p1369 = pneg %p826
        $region138: #{asd_conformer_forward.1} parent=11 // pred_check_branch
          %1371 = sbr.rel (%p1369) target = $region140
        $region139: #{asd_conformer_forward.1} parent=11 // pred_region
          _
        $region140: #{asd_conformer_forward.1} parent=11 // pred_fallthru
          _
        // Predicated region
        $region141: #{asd_conformer_forward.1} parent=11 // pred_check
          %p1372 = pneg %p847
        $region142: #{asd_conformer_forward.1} parent=11 // pred_check_branch
          %1374 = sbr.rel (%p1372) target = $region144
        $region143: #{asd_conformer_forward.1} parent=11 // pred_region
          _
        $region144: #{asd_conformer_forward.1} parent=11 // pred_fallthru
          _
        // Predicated region
        $region145: #{asd_conformer_forward.1} parent=11 // pred_check
          %p1375 = pneg %p868
        $region146: #{asd_conformer_forward.1} parent=11 // pred_check_branch
          %1377 = sbr.rel (%p1375) target = $region148
        $region147: #{asd_conformer_forward.1} parent=11 // pred_region
          _
        $region148: #{asd_conformer_forward.1} parent=11 // pred_fallthru
          _
        // Predicated region
        $region149: #{asd_conformer_forward.1} parent=11 // pred_check
          %p1378 = pneg %p889
        $region150: #{asd_conformer_forward.1} parent=11 // pred_check_branch
          %1380 = sbr.rel (%p1378) target = $region152
        $region151: #{asd_conformer_forward.1} parent=11 // pred_region
          _
        $region152: #{asd_conformer_forward.1} parent=11 // pred_fallthru
          _
        // Predicated region
        $region153: #{asd_conformer_forward.1} parent=11 // pred_check
          %p1381 = pneg %p910
        $region154: #{asd_conformer_forward.1} parent=11 // pred_check_branch
          %1383 = sbr.rel (%p1381) target = $region156
        $region155: #{asd_conformer_forward.1} parent=11 // pred_region
          _
        $region156: #{asd_conformer_forward.1} parent=11 // pred_fallthru
          _
        // Predicated region
        $region157: #{asd_conformer_forward.1} parent=11 // pred_check
          %p1384 = pneg %p931
        $region158: #{asd_conformer_forward.1} parent=11 // pred_check_branch
          %1386 = sbr.rel (%p1384) target = $region160
        $region159: #{asd_conformer_forward.1} parent=11 // pred_region
          _
        $region160: #{asd_conformer_forward.1} parent=11 // pred_fallthru
          _
        // Predicated region
        $region161: #{asd_conformer_forward.1} parent=11 // pred_check
          %p1387 = pneg %p952
        $region162: #{asd_conformer_forward.1} parent=11 // pred_check_branch
          %1389 = sbr.rel (%p1387) target = $region164
        $region163: #{asd_conformer_forward.1} parent=11 // pred_region
          %1391 = vsyncadd [#allocation7], 0
          %s1392 = sshll.u32 %s77, 4
          %s1393 = int_to_ptr.hbm [resolvable:$true] %s1392
          %s1394 = sshll.u32 [#allocation6], 4
          %s1395 = int_to_ptr.vmem [resolvable:$true] %s1394
          %1400 = dma.hbm_to_vmem [thread:$0]  %s1393, 32, %s1395, [#allocation7], 16, 16, 1
        $region164: #{asd_conformer_forward.1} parent=11 // pred_fallthru
          _
        // Predicated region
        $region165: #{asd_conformer_forward.1} parent=11 // pred_check
          %p1401 = pneg %p973
        $region166: #{asd_conformer_forward.1} parent=11 // pred_check_branch
          %1403 = sbr.rel (%p1401) target = $region168
        $region167: #{asd_conformer_forward.1} parent=11 // pred_region
          %1405 = vsyncadd [#allocation10], 0
          %s1406 = sshll.u32 %s79, 4
          %s1407 = int_to_ptr.hbm [resolvable:$true] %s1406
          %s1408 = sshll.u32 [#allocation9], 4
          %s1409 = int_to_ptr.vmem [resolvable:$true] %s1408
          %1414 = dma.hbm_to_vmem [thread:$0]  %s1407, 32, %s1409, [#allocation10], 16, 16, 1
        $region168: #{asd_conformer_forward.1} parent=11 // pred_fallthru
          _
        // Predicated region
        $region169: #{asd_conformer_forward.1} parent=11 // pred_check
          %p1415 = pneg %p994
        $region170: #{asd_conformer_forward.1} parent=11 // pred_check_branch
          %1417 = sbr.rel (%p1415) target = $region172
        $region171: #{asd_conformer_forward.1} parent=11 // pred_region
          _
        $region172: #{asd_conformer_forward.1} parent=11 // pred_fallthru
          _
        // Predicated region
        $region173: #{asd_conformer_forward.1} parent=11 // pred_check
          %p1418 = pneg %p1015
        $region174: #{asd_conformer_forward.1} parent=11 // pred_check_branch
          %1420 = sbr.rel (%p1418) target = $region176
        $region175: #{asd_conformer_forward.1} parent=11 // pred_region
          %1422 = vsyncadd [#allocation10], 0
          %s1424 = sshll.u32 %s83, 4
          %s1425 = int_to_ptr.hbm [resolvable:$true] %s1424
          %s1426 = sshll.u32 [#allocation11], 4
          %s1427 = int_to_ptr.vmem [resolvable:$true] %s1426
          %1429 = dma.hbm_to_vmem [thread:$0]  %s1425, 16, %s1427, [#allocation10]
        $region176: #{asd_conformer_forward.1} parent=11 // pred_fallthru
          _
        // Predicated region
        $region177: #{asd_conformer_forward.1} parent=11 // pred_check
          %p1430 = pneg %p1036
        $region178: #{asd_conformer_forward.1} parent=11 // pred_check_branch
          %1432 = sbr.rel (%p1430) target = $region180
        $region179: #{asd_conformer_forward.1} parent=11 // pred_region
          %1434 = vsyncadd [#allocation13], 0
          %s1436 = sshll.u32 %s85, 4
          %s1437 = int_to_ptr.hbm [resolvable:$true] %s1436
          %s1438 = sshll.u32 [#allocation12], 4
          %s1439 = int_to_ptr.vmem [resolvable:$true] %s1438
          %1441 = dma.hbm_to_vmem [thread:$0]  %s1437, 16, %s1439, [#allocation13]
        $region180: #{asd_conformer_forward.1} parent=11 // pred_fallthru
          _
        // Predicated region
        $region181: #{asd_conformer_forward.1} parent=11 // pred_check
          %p1442 = pneg %p1057
        $region182: #{asd_conformer_forward.1} parent=11 // pred_check_branch
          %1444 = sbr.rel (%p1442) target = $region184
        $region183: #{asd_conformer_forward.1} parent=11 // pred_region
          %1446 = vsyncadd [#allocation13], 0
          %s1448 = sshll.u32 %s87, 4
          %s1449 = int_to_ptr.hbm [resolvable:$true] %s1448
          %s1450 = sshll.u32 [#allocation14], 4
          %s1451 = int_to_ptr.vmem [resolvable:$true] %s1450
          %1453 = dma.hbm_to_vmem [thread:$0]  %s1449, 16, %s1451, [#allocation13]
        $region184: #{asd_conformer_forward.1} parent=11 // pred_fallthru
          _
        // Predicated region
        $region185: #{asd_conformer_forward.1} parent=11 // pred_check
          %p1454 = pneg %p1078
        $region186: #{asd_conformer_forward.1} parent=11 // pred_check_branch
          %1456 = sbr.rel (%p1454) target = $region188
        $region187: #{asd_conformer_forward.1} parent=11 // pred_region
          _
        $region188: #{asd_conformer_forward.1} parent=11 // pred_fallthru
          _
        // Predicated region
        $region189: #{asd_conformer_forward.1} parent=11 // pred_check
          %p1457 = pneg %p1099
        $region190: #{asd_conformer_forward.1} parent=11 // pred_check_branch
          %1459 = sbr.rel (%p1457) target = $region192
        $region191: #{asd_conformer_forward.1} parent=11 // pred_region
          _
        $region192: #{asd_conformer_forward.1} parent=11 // pred_fallthru
          _
        // Predicated region
        $region193: #{asd_conformer_forward.1} parent=11 // pred_check
          %p1460 = pneg %p1120
        $region194: #{asd_conformer_forward.1} parent=11 // pred_check_branch
          %1462 = sbr.rel (%p1460) target = $region196
        $region195: #{asd_conformer_forward.1} parent=11 // pred_region
          %1464 = vsyncadd [#allocation16], 0
          %s1466 = sshll.u32 %s93, 4
          %s1467 = int_to_ptr.hbm [resolvable:$true] %s1466
          %s1468 = sshll.u32 [#allocation15], 4
          %s1469 = int_to_ptr.vmem [resolvable:$true] %s1468
          %1471 = dma.hbm_to_vmem [thread:$0]  %s1467, 16, %s1469, [#allocation16]
        $region196: #{asd_conformer_forward.1} parent=11 // pred_fallthru
          _
        // Predicated region
        $region197: #{asd_conformer_forward.1} parent=11 // pred_check
          %p1472 = pneg %p1141
        $region198: #{asd_conformer_forward.1} parent=11 // pred_check_branch
          %1474 = sbr.rel (%p1472) target = $region200
        $region199: #{asd_conformer_forward.1} parent=11 // pred_region
          _
        $region200: #{asd_conformer_forward.1} parent=11 // pred_fallthru
          _
        // Predicated region
        $region201: #{asd_conformer_forward.1} parent=11 // pred_check
          %p1475 = pneg %p1162
        $region202: #{asd_conformer_forward.1} parent=11 // pred_check_branch
          %1477 = sbr.rel (%p1475) target = $region204
        $region203: #{asd_conformer_forward.1} parent=11 // pred_region
          _
        $region204: #{asd_conformer_forward.1} parent=11 // pred_fallthru
          _
        // Predicated region
        $region205: #{asd_conformer_forward.1} parent=11 // pred_check
          %p1478 = pneg %p1183
        $region206: #{asd_conformer_forward.1} parent=11 // pred_check_branch
          %1480 = sbr.rel (%p1478) target = $region208
        $region207: #{asd_conformer_forward.1} parent=11 // pred_region
          _
        $region208: #{asd_conformer_forward.1} parent=11 // pred_fallthru
          _
      $region12: #{asd_conformer_forward.1} parent=5 // pred_fallthru
        _
      %p1481 = scmp.lt.s32.totalorder %s128, 2
      // Predicated region
      $region209: #{asd_conformer_forward.1} parent=5 // pred_check
        %p1482 = pneg %p1481
      $region210: #{asd_conformer_forward.1} parent=5 // pred_check_branch
        %1484 = sbr.rel (%p1482) target = $region212
      $region211: #{asd_conformer_forward.1} parent=5 // pred_region
        // Predicated region
        $region213: #{asd_conformer_forward.1} parent=211 // pred_check
          %p1485 = pneg %p148
        $region214: #{asd_conformer_forward.1} parent=211 // pred_check_branch
          %1487 = sbr.rel (%p1485) target = $region216
        $region215: #{asd_conformer_forward.1} parent=211 // pred_region
          %p1488 = scmp.lt.s32.totalorder %s128, 1
          %s1489 = scalar_select %p1488, %s128, 1
          %s1490 = smul.addr %s1489, 6
          %s1491 = smul.addr %s1490, 8
          %s1492 = scalar_lea.vmem %s1, %s1491
        $region216: #{asd_conformer_forward.1} parent=211 // pred_fallthru
          _
      $region212: #{asd_conformer_forward.1} parent=5 // pred_fallthru
        _
      %p1493 = scmp.le.s32.totalorder 1, %s128
      %p1494 = scmp.lt.s32.totalorder %s128, 3
      %p1495 = pnand %p1493, %p1494
      %p1496 = pneg %p1495
      // Predicated region
      $region217: #{asd_conformer_forward.1} parent=5 // pred_check
        _
      $region218: #{asd_conformer_forward.1} parent=5 // pred_check_branch
        %1498 = sbr.rel (%p1495) target = $region220
      $region219: #{asd_conformer_forward.1} parent=5 // pred_region
        %s1499 = ssub.s32 %s128, 1
        // Predicated region
        $region221: #{asd_conformer_forward.1} parent=219 // pred_check
          %p1500 = pneg %p952
        $region222: #{asd_conformer_forward.1} parent=219 // pred_check_branch
          %1502 = sbr.rel (%p1500) target = $region224
        $region223: #{asd_conformer_forward.1} parent=219 // pred_region
          %1504 = dma.done [#allocation7], 32
        $region224: #{asd_conformer_forward.1} parent=219 // pred_fallthru
          _
        // Predicated region
        $region225: #{asd_conformer_forward.1} parent=219 // pred_check
          %p1505 = pneg %p973
        $region226: #{asd_conformer_forward.1} parent=219 // pred_check_branch
          %1507 = sbr.rel (%p1505) target = $region228
        $region227: #{asd_conformer_forward.1} parent=219 // pred_region
          %1509 = dma.done [#allocation10], 32
        $region228: #{asd_conformer_forward.1} parent=219 // pred_fallthru
          _
        // Predicated region
        $region229: #{asd_conformer_forward.1} parent=219 // pred_check
          %p1510 = pneg %p1015
        $region230: #{asd_conformer_forward.1} parent=219 // pred_check_branch
          %1512 = sbr.rel (%p1510) target = $region232
        $region231: #{asd_conformer_forward.1} parent=219 // pred_region
          %1514 = dma.done [#allocation10], 16
        $region232: #{asd_conformer_forward.1} parent=219 // pred_fallthru
          _
        // Predicated region
        $region233: #{asd_conformer_forward.1} parent=219 // pred_check
          %p1515 = pneg %p1036
        $region234: #{asd_conformer_forward.1} parent=219 // pred_check_branch
          %1517 = sbr.rel (%p1515) target = $region236
        $region235: #{asd_conformer_forward.1} parent=219 // pred_region
          %1519 = dma.done [#allocation13], 16
        $region236: #{asd_conformer_forward.1} parent=219 // pred_fallthru
          _
        // Predicated region
        $region237: #{asd_conformer_forward.1} parent=219 // pred_check
          %p1520 = pneg %p1057
        $region238: #{asd_conformer_forward.1} parent=219 // pred_check_branch
          %1522 = sbr.rel (%p1520) target = $region240
        $region239: #{asd_conformer_forward.1} parent=219 // pred_region
          %1524 = dma.done [#allocation13], 16
        $region240: #{asd_conformer_forward.1} parent=219 // pred_fallthru
          _
        // Predicated region
        $region241: #{asd_conformer_forward.1} parent=219 // pred_check
          %p1525 = pneg %p1120
        $region242: #{asd_conformer_forward.1} parent=219 // pred_check_branch
          %1527 = sbr.rel (%p1525) target = $region244
        $region243: #{asd_conformer_forward.1} parent=219 // pred_region
          %1529 = dma.done [#allocation16], 16
        $region244: #{asd_conformer_forward.1} parent=219 // pred_fallthru
          _
        %p1530 = scmp.lt.s32.totalorder %s133, 1
        %s1531 = scalar_select %p1530, %s133, 1
        %s1532 = smul.addr %s1531, 6
        %s1533 = smul.addr %s1532, 8
        %s1534 = scalar_lea.vmem %s1, %s1533
        %p1535 = pneg %p154
        %p1536 = pneg %p151
        %p1537 = pneg %p175
        %p1538 = pneg %p172
        %p1539 = pneg %p196
        %p1540 = pneg %p193
        %p1541 = pneg %p217
        %p1542 = pneg %p214
        %p1543 = pneg %p238
        %p1544 = pneg %p235
        %p1545 = pneg %p259
        %p1546 = pneg %p256
        %p1547 = pneg %p280
        %p1548 = pneg %p277
        %p1549 = pneg %p301
        %p1550 = pneg %p298
        %p1551 = pneg %p322
        %p1552 = pneg %p319
        %p1553 = pneg %p343
        %p1554 = pneg %p340
        %p1555 = pneg %p364
        %p1556 = pneg %p361
        %p1557 = pneg %p385
        %p1558 = pneg %p382
        %p1559 = pneg %p406
        %p1560 = pneg %p403
        %p1561 = pneg %p427
        %p1562 = pneg %p424
        %p1563 = pneg %p448
        %p1564 = pneg %p445
        %p1565 = pneg %p469
        %p1566 = pneg %p466
        %p1567 = pneg %p490
        %p1568 = pneg %p487
        %p1569 = pneg %p511
        %p1570 = pneg %p508
        %p1571 = pneg %p532
        %p1572 = pneg %p529
        %p1573 = pneg %p553
        %p1574 = pneg %p550
        %p1575 = pneg %p574
        %p1576 = pneg %p571
        %p1577 = pneg %p595
        %p1578 = pneg %p592
        %p1579 = pneg %p616
        %p1580 = pneg %p613
        %p1581 = pneg %p637
        %p1582 = pneg %p634
        %p1583 = pneg %p658
        %p1584 = pneg %p655
        %p1585 = pneg %p679
        %p1586 = pneg %p676
        %p1587 = pneg %p700
        %p1588 = pneg %p697
        %p1589 = pneg %p721
        %p1590 = pneg %p718
        %p1591 = pneg %p742
        %p1592 = pneg %p739
        %p1593 = pneg %p763
        %p1594 = pneg %p760
        %p1595 = pneg %p784
        %p1596 = pneg %p781
        %p1597 = pneg %p805
        %p1598 = pneg %p802
        %p1599 = pneg %p826
        %p1600 = pneg %p823
        %p1601 = pneg %p847
        %p1602 = pneg %p844
        %p1603 = pneg %p868
        %p1604 = pneg %p865
        %p1605 = pneg %p889
        %p1606 = pneg %p886
        %p1607 = pneg %p910
        %p1608 = pneg %p907
        %p1609 = pneg %p931
        %p1610 = pneg %p928
        %p1611 = pneg %p952
        %p1612 = pneg %p949
        %p1613 = pneg %p973
        %p1614 = pneg %p970
        %p1615 = pneg %p994
        %p1616 = pneg %p991
        %p1617 = pneg %p1015
        %p1618 = pneg %p1012
        %p1619 = pneg %p1036
        %p1620 = pneg %p1033
        %p1621 = pneg %p1057
        %p1622 = pneg %p1054
        %p1623 = pneg %p1078
        %p1624 = pneg %p1075
        %p1625 = pneg %p1099
        %p1626 = pneg %p1096
        %p1627 = pneg %p1120
        %p1628 = pneg %p1117
        %p1629 = pneg %p1141
        %p1630 = pneg %p1138
        %p1631 = pneg %p1162
        %p1632 = pneg %p1159
        %p1633 = pneg %p1183
        %p1634 = pneg %p1180
        %p1635 = pneg %p1209
        %p1636 = pneg %p1206
        %s1637 = sand.u32 %s1196, 1
        %s1638 = scalar_lea.sflag [#allocation8], %s1637
        %s1639 = sand.u32 %s1196, 1
        %s1640 = scalar_lea.vmem [#allocation17], %s1639
        %p1641 = pneg %p1235
        %p1642 = pneg %p1232
        %p1643 = scmp.lt.s32.totalorder %s133, 1
        %s1644 = scalar_select %p1643, %s133, 1
        %s1645 = scalar_lea.vmem %s103, %s1644
        %p1646 = pneg %p1261
        %p1647 = pneg %p1258
        %s1648 = sand.u32 %s1248, 1
        %s1649 = scalar_lea.sflag [#allocation19], %s1648
        %s1650 = sand.u32 %s1248, 1
        %s1651 = scalar_lea.vmem [#allocation18], %s1650
        %p1652 = scmp.lt.s32.totalorder %s133, 1
        %s1653 = scalar_select %p1652, %s133, 1
        %s1654 = smul.addr %s1653, 6
        %s1655 = smul.addr %s1654, 8
        %s1656 = scalar_lea.vmem %s1, %s1655
        %p1657 = scmp.lt.s32.totalorder %s133, 1
        %s1658 = scalar_select %p1657, %s133, 1
        %s1659 = scalar_lea.vmem %s103, %s1658
        %v1660 = vld [vmem:[%s1656] sm:$0xff]
        %v1661 = vld [vmem:[%s1656 + $0x8] sm:$0xff]
        %v1662 = vld [vmem:[%s1656 + $0x10] sm:$0xff]
        %v1663 = vld [vmem:[%s1656 + $0x18] sm:$0xff]
        %v1664 = vld [vmem:[%s1656 + $0x20] sm:$0x1]
        %v1665 = vld [vmem:[%s1656 + $0x28] sm:$0x1]
        %v1666 = vld [vmem:[%s3] sm:$0xff]
        %v1667 = vld [vmem:[%s3 + $0x8] sm:$0xff]
        %v1668 = vld [vmem:[%s3 + $0x10] sm:$0xff]
        %v1669 = vld [vmem:[%s3 + $0x18] sm:$0xff]
        %v1670 = vld [vmem:[%s3 + $0x20] sm:$0xff]
        %v1671 = vld [vmem:[%s3 + $0x28] sm:$0xff]
        %v1672 = vld [vmem:[%s3 + $0x30] sm:$0xff]
        %v1673 = vld [vmem:[%s3 + $0x38] sm:$0xff]
        %v1674 = vld [vmem:[%s3 + $0x40] sm:$0xff]
        %v1675 = vld [vmem:[%s3 + $0x48] sm:$0xff]
        %v1676 = vld [vmem:[%s3 + $0x50] sm:$0xff]
        %v1677 = vld [vmem:[%s3 + $0x58] sm:$0xff]
        %v1678 = vld [vmem:[%s3 + $0x60] sm:$0xff]
        %v1679 = vld [vmem:[%s3 + $0x68] sm:$0xff]
        %v1680 = vld [vmem:[%s3 + $0x70] sm:$0xff]
        %v1681 = vld [vmem:[%s3 + $0x78] sm:$0xff]
        %v1682 = vld [vmem:[%s3 + $0x80] sm:$0xff]
        %v1683 = vld [vmem:[%s3 + $0x88] sm:$0xff]
        %v1684 = vld [vmem:[%s3 + $0x90] sm:$0xff]
        %v1685 = vld [vmem:[%s3 + $0x98] sm:$0xff]
        %v1686 = vld [vmem:[%s3 + $0xa0] sm:$0xff]
        %v1687 = vld [vmem:[%s3 + $0xa8] sm:$0xff]
        %v1688 = vld [vmem:[%s3 + $0xb0] sm:$0xff]
        %v1689 = vld [vmem:[%s3 + $0xb8] sm:$0xff]
        %v1690 = vld [vmem:[%s3 + $0xc0] sm:$0xff]
        %v1691 = vld [vmem:[%s3 + $0xc8] sm:$0xff]
        %v1692 = vld [vmem:[%s3 + $0xd0] sm:$0xff]
        %v1693 = vld [vmem:[%s3 + $0xd8] sm:$0xff]
        %v1694 = vld [vmem:[%s3 + $0xe0] sm:$0xff]
        %v1695 = vld [vmem:[%s3 + $0xe8] sm:$0xff]
        %v1696 = vld [vmem:[%s3 + $0xf0] sm:$0xff]
        %v1697 = vld [vmem:[%s3 + $0xf8] sm:$0xff]
        %v1698 = vld [vmem:[%s3 + $0x100] sm:$0xff]
        %v1699 = vld [vmem:[%s3 + $0x108] sm:$0xff]
        %v1700 = vld [vmem:[%s3 + $0x110] sm:$0xff]
        %v1701 = vld [vmem:[%s3 + $0x118] sm:$0xff]
        %v1702 = vld [vmem:[%s3 + $0x120] sm:$0xff]
        %v1703 = vld [vmem:[%s3 + $0x128] sm:$0xff]
        %v1704 = vld [vmem:[%s3 + $0x130] sm:$0xff]
        %v1705 = vld [vmem:[%s3 + $0x138] sm:$0xff]
        %v1706 = vld [vmem:[%s3 + $0x140] sm:$0xff]
        %v1707 = vld [vmem:[%s3 + $0x148] sm:$0xff]
        %v1708 = vld [vmem:[%s3 + $0x150] sm:$0xff]
        %v1709 = vld [vmem:[%s3 + $0x158] sm:$0xff]
        %v1710 = vld [vmem:[%s3 + $0x160] sm:$0xff]
        %v1711 = vld [vmem:[%s3 + $0x168] sm:$0xff]
        %v1712 = vld [vmem:[%s3 + $0x170] sm:$0xff]
        %v1713 = vld [vmem:[%s3 + $0x178] sm:$0xff]
        %v1714 = vld [vmem:[%s3 + $0x180] sm:$0xff]
        %v1715 = vld [vmem:[%s3 + $0x188] sm:$0xff]
        %v1716 = vld [vmem:[%s3 + $0x190] sm:$0xff]
        %v1717 = vld [vmem:[%s3 + $0x198] sm:$0xff]
        %v1718 = vld [vmem:[%s3 + $0x1a0] sm:$0xff]
        %v1719 = vld [vmem:[%s3 + $0x1a8] sm:$0xff]
        %v1720 = vld [vmem:[%s3 + $0x1b0] sm:$0xff]
        %v1721 = vld [vmem:[%s3 + $0x1b8] sm:$0xff]
        %v1722 = vld [vmem:[%s3 + $0x1c0] sm:$0xff]
        %v1723 = vld [vmem:[%s3 + $0x1c8] sm:$0xff]
        %v1724 = vld [vmem:[%s3 + $0x1d0] sm:$0xff]
        %v1725 = vld [vmem:[%s3 + $0x1d8] sm:$0xff]
        %v1726 = vld [vmem:[%s3 + $0x1e0] sm:$0xff]
        %v1727 = vld [vmem:[%s3 + $0x1e8] sm:$0xff]
        %v1728 = vld [vmem:[%s3 + $0x1f0] sm:$0xff]
        %v1729 = vld [vmem:[%s3 + $0x1f8] sm:$0xff]
        %1730 = vmatpush.msra.mxu0 %v1696
        %1731 = vmatpush.msra.mxu0 %v1694
        %1732 = vmatpush.msra.mxu0 %v1692
        %1733 = vmatpush.msra.mxu0 %v1690
        %1734 = vmatpush.msra.mxu0 %v1688
        %1735 = vmatpush.msra.mxu0 %v1686
        %1736 = vmatpush.msra.mxu0 %v1684
        %1737 = vmatpush.msra.mxu0 %v1682
        %1738 = vmatpush.msra.mxu0 %v1680
        %1739 = vmatpush.msra.mxu0 %v1678
        %1740 = vmatpush.msra.mxu0 %v1676
        %1741 = vmatpush.msra.mxu0 %v1674
        %1742 = vmatpush.msra.mxu0 %v1672
        %1743 = vmatpush.msra.mxu0 %v1670
        %1744 = vmatpush.msra.mxu0 %v1668
        %1745 = vmatpush.msra.mxu0 %v1666
        %1746 = vmatmul.f32.gmra.mxu0 %v1660
        %v1747 = vpop.f32.mrf.mxu0
        %v1748 = vadd.f32 0.0, %v1747
        %1749 = vmatmul.f32.gmra.mxu0 %v1662
        %v1750 = vpop.f32.mrf.mxu0
        %v1751 = vadd.f32 0.0, %v1750
        %1752 = vmatmul.f32.gmra.mxu0 %v1664
        %v1753 = vpop.f32.mrf.mxu0
        %v1754 = vadd.f32 0.0, %v1753
        %1755 = vdwg.mxu0
        %1756 = vmatpush.msra.mxu0 %v1728
        %1757 = vmatpush.msra.mxu0 %v1726
        %1758 = vmatpush.msra.mxu0 %v1724
        %1759 = vmatpush.msra.mxu0 %v1722
        %1760 = vmatpush.msra.mxu0 %v1720
        %1761 = vmatpush.msra.mxu0 %v1718
        %1762 = vmatpush.msra.mxu0 %v1716
        %1763 = vmatpush.msra.mxu0 %v1714
        %1764 = vmatpush.msra.mxu0 %v1712
        %1765 = vmatpush.msra.mxu0 %v1710
        %1766 = vmatpush.msra.mxu0 %v1708
        %1767 = vmatpush.msra.mxu0 %v1706
        %1768 = vmatpush.msra.mxu0 %v1704
        %1769 = vmatpush.msra.mxu0 %v1702
        %1770 = vmatpush.msra.mxu0 %v1700
        %1771 = vmatpush.msra.mxu0 %v1698
        %1772 = vmatmul.f32.gmra.mxu0 %v1661
        %v1773 = vpop.f32.mrf.mxu0
        %v1774 = vadd.f32 %v1748, %v1773
        %1775 = vmatmul.f32.gmra.mxu0 %v1663
        %v1776 = vpop.f32.mrf.mxu0
        %v1777 = vadd.f32 %v1751, %v1776
        %1778 = vmatmul.f32.gmra.mxu0 %v1665
        %v1779 = vpop.f32.mrf.mxu0
        %v1780 = vadd.f32 %v1754, %v1779
        %1781 = vdwg.mxu0
        %1782 = vmatpush.msra.mxu0 %v1697
        %1783 = vmatpush.msra.mxu0 %v1695
        %1784 = vmatpush.msra.mxu0 %v1693
        %1785 = vmatpush.msra.mxu0 %v1691
        %1786 = vmatpush.msra.mxu0 %v1689
        %1787 = vmatpush.msra.mxu0 %v1687
        %1788 = vmatpush.msra.mxu0 %v1685
        %1789 = vmatpush.msra.mxu0 %v1683
        %1790 = vmatpush.msra.mxu0 %v1681
        %1791 = vmatpush.msra.mxu0 %v1679
        %1792 = vmatpush.msra.mxu0 %v1677
        %1793 = vmatpush.msra.mxu0 %v1675
        %1794 = vmatpush.msra.mxu0 %v1673
        %1795 = vmatpush.msra.mxu0 %v1671
        %1796 = vmatpush.msra.mxu0 %v1669
        %1797 = vmatpush.msra.mxu0 %v1667
        %1798 = vmatmul.f32.gmra.mxu0 %v1660
        %v1799 = vpop.f32.mrf.mxu0
        %v1800 = vadd.f32 0.0, %v1799
        %1801 = vmatmul.f32.gmra.mxu0 %v1662
        %v1802 = vpop.f32.mrf.mxu0
        %v1803 = vadd.f32 0.0, %v1802
        %1804 = vmatmul.f32.gmra.mxu0 %v1664
        %v1805 = vpop.f32.mrf.mxu0
        %v1806 = vadd.f32 0.0, %v1805
        %1807 = vdwg.mxu0
        %1808 = vmatpush.msra.mxu0 %v1729
        %1809 = vmatpush.msra.mxu0 %v1727
        %1810 = vmatpush.msra.mxu0 %v1725
        %1811 = vmatpush.msra.mxu0 %v1723
        %1812 = vmatpush.msra.mxu0 %v1721
        %1813 = vmatpush.msra.mxu0 %v1719
        %1814 = vmatpush.msra.mxu0 %v1717
        %1815 = vmatpush.msra.mxu0 %v1715
        %1816 = vmatpush.msra.mxu0 %v1713
        %1817 = vmatpush.msra.mxu0 %v1711
        %1818 = vmatpush.msra.mxu0 %v1709
        %1819 = vmatpush.msra.mxu0 %v1707
        %1820 = vmatpush.msra.mxu0 %v1705
        %1821 = vmatpush.msra.mxu0 %v1703
        %1822 = vmatpush.msra.mxu0 %v1701
        %1823 = vmatpush.msra.mxu0 %v1699
        %1824 = vmatmul.f32.gmra.mxu0 %v1661
        %v1825 = vpop.f32.mrf.mxu0
        %v1826 = vadd.f32 %v1800, %v1825
        %1827 = vmatmul.f32.gmra.mxu0 %v1663
        %v1828 = vpop.f32.mrf.mxu0
        %v1829 = vadd.f32 %v1803, %v1828
        %1830 = vmatmul.f32.gmra.mxu0 %v1665
        %v1831 = vpop.f32.mrf.mxu0
        %v1832 = vadd.f32 %v1806, %v1831
        %1833 = vdwg.mxu0
        %v1834 = vld [vmem:[%s5] sm:$0xff]
        %v1835 = vld [vmem:[%s5 + $0x8] sm:$0xff]
        %v1836 = vld [vmem:[%s5 + $0x10] sm:$0xff]
        %v1837 = vld [vmem:[%s5 + $0x18] sm:$0xff]
        %v1838 = vld [vmem:[%s5 + $0x20] sm:$0xff]
        %v1839 = vld [vmem:[%s5 + $0x28] sm:$0xff]
        %v1840 = vld [vmem:[%s5 + $0x30] sm:$0xff]
        %v1841 = vld [vmem:[%s5 + $0x38] sm:$0xff]
        %v1842 = vld [vmem:[%s5 + $0x40] sm:$0xff]
        %v1843 = vld [vmem:[%s5 + $0x48] sm:$0xff]
        %v1844 = vld [vmem:[%s5 + $0x50] sm:$0xff]
        %v1845 = vld [vmem:[%s5 + $0x58] sm:$0xff]
        %v1846 = vld [vmem:[%s5 + $0x60] sm:$0xff]
        %v1847 = vld [vmem:[%s5 + $0x68] sm:$0xff]
        %v1848 = vld [vmem:[%s5 + $0x70] sm:$0xff]
        %v1849 = vld [vmem:[%s5 + $0x78] sm:$0xff]
        %v1850 = vld [vmem:[%s5 + $0x80] sm:$0xff]
        %v1851 = vld [vmem:[%s5 + $0x88] sm:$0xff]
        %v1852 = vld [vmem:[%s5 + $0x90] sm:$0xff]
        %v1853 = vld [vmem:[%s5 + $0x98] sm:$0xff]
        %v1854 = vld [vmem:[%s5 + $0xa0] sm:$0xff]
        %v1855 = vld [vmem:[%s5 + $0xa8] sm:$0xff]
        %v1856 = vld [vmem:[%s5 + $0xb0] sm:$0xff]
        %v1857 = vld [vmem:[%s5 + $0xb8] sm:$0xff]
        %v1858 = vld [vmem:[%s5 + $0xc0] sm:$0xff]
        %v1859 = vld [vmem:[%s5 + $0xc8] sm:$0xff]
        %v1860 = vld [vmem:[%s5 + $0xd0] sm:$0xff]
        %v1861 = vld [vmem:[%s5 + $0xd8] sm:$0xff]
        %v1862 = vld [vmem:[%s5 + $0xe0] sm:$0xff]
        %v1863 = vld [vmem:[%s5 + $0xe8] sm:$0xff]
        %v1864 = vld [vmem:[%s5 + $0xf0] sm:$0xff]
        %v1865 = vld [vmem:[%s5 + $0xf8] sm:$0xff]
        %v1866 = vld [vmem:[%s5 + $0x100] sm:$0xff]
        %v1867 = vld [vmem:[%s5 + $0x108] sm:$0xff]
        %v1868 = vld [vmem:[%s5 + $0x110] sm:$0xff]
        %v1869 = vld [vmem:[%s5 + $0x118] sm:$0xff]
        %v1870 = vld [vmem:[%s5 + $0x120] sm:$0xff]
        %v1871 = vld [vmem:[%s5 + $0x128] sm:$0xff]
        %v1872 = vld [vmem:[%s5 + $0x130] sm:$0xff]
        %v1873 = vld [vmem:[%s5 + $0x138] sm:$0xff]
        %v1874 = vld [vmem:[%s5 + $0x140] sm:$0xff]
        %v1875 = vld [vmem:[%s5 + $0x148] sm:$0xff]
        %v1876 = vld [vmem:[%s5 + $0x150] sm:$0xff]
        %v1877 = vld [vmem:[%s5 + $0x158] sm:$0xff]
        %v1878 = vld [vmem:[%s5 + $0x160] sm:$0xff]
        %v1879 = vld [vmem:[%s5 + $0x168] sm:$0xff]
        %v1880 = vld [vmem:[%s5 + $0x170] sm:$0xff]
        %v1881 = vld [vmem:[%s5 + $0x178] sm:$0xff]
        %v1882 = vld [vmem:[%s5 + $0x180] sm:$0xff]
        %v1883 = vld [vmem:[%s5 + $0x188] sm:$0xff]
        %v1884 = vld [vmem:[%s5 + $0x190] sm:$0xff]
        %v1885 = vld [vmem:[%s5 + $0x198] sm:$0xff]
        %v1886 = vld [vmem:[%s5 + $0x1a0] sm:$0xff]
        %v1887 = vld [vmem:[%s5 + $0x1a8] sm:$0xff]
        %v1888 = vld [vmem:[%s5 + $0x1b0] sm:$0xff]
        %v1889 = vld [vmem:[%s5 + $0x1b8] sm:$0xff]
        %v1890 = vld [vmem:[%s5 + $0x1c0] sm:$0xff]
        %v1891 = vld [vmem:[%s5 + $0x1c8] sm:$0xff]
        %v1892 = vld [vmem:[%s5 + $0x1d0] sm:$0xff]
        %v1893 = vld [vmem:[%s5 + $0x1d8] sm:$0xff]
        %v1894 = vld [vmem:[%s5 + $0x1e0] sm:$0xff]
        %v1895 = vld [vmem:[%s5 + $0x1e8] sm:$0xff]
        %v1896 = vld [vmem:[%s5 + $0x1f0] sm:$0xff]
        %v1897 = vld [vmem:[%s5 + $0x1f8] sm:$0xff]
        %1898 = vmatpush.msra.mxu0 %v1864
        %1899 = vmatpush.msra.mxu0 %v1862
        %1900 = vmatpush.msra.mxu0 %v1860
        %1901 = vmatpush.msra.mxu0 %v1858
        %1902 = vmatpush.msra.mxu0 %v1856
        %1903 = vmatpush.msra.mxu0 %v1854
        %1904 = vmatpush.msra.mxu0 %v1852
        %1905 = vmatpush.msra.mxu0 %v1850
        %1906 = vmatpush.msra.mxu0 %v1848
        %1907 = vmatpush.msra.mxu0 %v1846
        %1908 = vmatpush.msra.mxu0 %v1844
        %1909 = vmatpush.msra.mxu0 %v1842
        %1910 = vmatpush.msra.mxu0 %v1840
        %1911 = vmatpush.msra.mxu0 %v1838
        %1912 = vmatpush.msra.mxu0 %v1836
        %1913 = vmatpush.msra.mxu0 %v1834
        %1914 = vmatmul.f32.gmra.mxu0 %v1660
        %v1915 = vpop.f32.mrf.mxu0
        %v1916 = vadd.f32 0.0, %v1915
        %1917 = vmatmul.f32.gmra.mxu0 %v1662
        %v1918 = vpop.f32.mrf.mxu0
        %v1919 = vadd.f32 0.0, %v1918
        %1920 = vmatmul.f32.gmra.mxu0 %v1664
        %v1921 = vpop.f32.mrf.mxu0
        %v1922 = vadd.f32 0.0, %v1921
        %1923 = vdwg.mxu0
        %1924 = vmatpush.msra.mxu0 %v1896
        %1925 = vmatpush.msra.mxu0 %v1894
        %1926 = vmatpush.msra.mxu0 %v1892
        %1927 = vmatpush.msra.mxu0 %v1890
        %1928 = vmatpush.msra.mxu0 %v1888
        %1929 = vmatpush.msra.mxu0 %v1886
        %1930 = vmatpush.msra.mxu0 %v1884
        %1931 = vmatpush.msra.mxu0 %v1882
        %1932 = vmatpush.msra.mxu0 %v1880
        %1933 = vmatpush.msra.mxu0 %v1878
        %1934 = vmatpush.msra.mxu0 %v1876
        %1935 = vmatpush.msra.mxu0 %v1874
        %1936 = vmatpush.msra.mxu0 %v1872
        %1937 = vmatpush.msra.mxu0 %v1870
        %1938 = vmatpush.msra.mxu0 %v1868
        %1939 = vmatpush.msra.mxu0 %v1866
        %1940 = vmatmul.f32.gmra.mxu0 %v1661
        %v1941 = vpop.f32.mrf.mxu0
        %v1942 = vadd.f32 %v1916, %v1941
        %1943 = vmatmul.f32.gmra.mxu0 %v1663
        %v1944 = vpop.f32.mrf.mxu0
        %v1945 = vadd.f32 %v1919, %v1944
        %1946 = vmatmul.f32.gmra.mxu0 %v1665
        %v1947 = vpop.f32.mrf.mxu0
        %v1948 = vadd.f32 %v1922, %v1947
        %1949 = vdwg.mxu0
        %1950 = vmatpush.msra.mxu0 %v1865
        %1951 = vmatpush.msra.mxu0 %v1863
        %1952 = vmatpush.msra.mxu0 %v1861
        %1953 = vmatpush.msra.mxu0 %v1859
        %1954 = vmatpush.msra.mxu0 %v1857
        %1955 = vmatpush.msra.mxu0 %v1855
        %1956 = vmatpush.msra.mxu0 %v1853
        %1957 = vmatpush.msra.mxu0 %v1851
        %1958 = vmatpush.msra.mxu0 %v1849
        %1959 = vmatpush.msra.mxu0 %v1847
        %1960 = vmatpush.msra.mxu0 %v1845
        %1961 = vmatpush.msra.mxu0 %v1843
        %1962 = vmatpush.msra.mxu0 %v1841
        %1963 = vmatpush.msra.mxu0 %v1839
        %1964 = vmatpush.msra.mxu0 %v1837
        %1965 = vmatpush.msra.mxu0 %v1835
        %1966 = vmatmul.f32.gmra.mxu0 %v1660
        %v1967 = vpop.f32.mrf.mxu0
        %v1968 = vadd.f32 0.0, %v1967
        %1969 = vmatmul.f32.gmra.mxu0 %v1662
        %v1970 = vpop.f32.mrf.mxu0
        %v1971 = vadd.f32 0.0, %v1970
        %1972 = vmatmul.f32.gmra.mxu0 %v1664
        %v1973 = vpop.f32.mrf.mxu0
        %v1974 = vadd.f32 0.0, %v1973
        %1975 = vdwg.mxu0
        %1976 = vmatpush.msra.mxu0 %v1897
        %1977 = vmatpush.msra.mxu0 %v1895
        %1978 = vmatpush.msra.mxu0 %v1893
        %1979 = vmatpush.msra.mxu0 %v1891
        %1980 = vmatpush.msra.mxu0 %v1889
        %1981 = vmatpush.msra.mxu0 %v1887
        %1982 = vmatpush.msra.mxu0 %v1885
        %1983 = vmatpush.msra.mxu0 %v1883
        %1984 = vmatpush.msra.mxu0 %v1881
        %1985 = vmatpush.msra.mxu0 %v1879
        %1986 = vmatpush.msra.mxu0 %v1877
        %1987 = vmatpush.msra.mxu0 %v1875
        %1988 = vmatpush.msra.mxu0 %v1873
        %1989 = vmatpush.msra.mxu0 %v1871
        %1990 = vmatpush.msra.mxu0 %v1869
        %1991 = vmatpush.msra.mxu0 %v1867
        %1992 = vmatmul.f32.gmra.mxu0 %v1661
        %v1993 = vpop.f32.mrf.mxu0
        %v1994 = vadd.f32 %v1968, %v1993
        %1995 = vmatmul.f32.gmra.mxu0 %v1663
        %v1996 = vpop.f32.mrf.mxu0
        %v1997 = vadd.f32 %v1971, %v1996
        %1998 = vmatmul.f32.gmra.mxu0 %v1665
        %v1999 = vpop.f32.mrf.mxu0
        %v2000 = vadd.f32 %v1974, %v1999
        %2001 = vdwg.mxu0
        %v2002 = vmul.f32 %v1774, %v1774
        %v2003 = vmul.f32 %v1826, %v1826
        %v2004 = vmul.f32 %v1777, %v1777
        %v2005 = vmul.f32 %v1829, %v1829
        %v2006 = vmul.f32 %v1780, %v1780
        %v2007 = vmul.f32 %v1832, %v1832
        %v2008 = vmul.f32 %v1942, %v1942
        %v2009 = vmul.f32 %v1994, %v1994
        %v2010 = vmul.f32 %v1945, %v1945
        %v2011 = vmul.f32 %v1997, %v1997
        %v2012 = vmul.f32 %v1948, %v1948
        %v2013 = vmul.f32 %v2000, %v2000
        %v2014 = vadd.f32 %v2002, %v2008
        %v2015 = vadd.f32 %v2003, %v2009
        %v2016 = vadd.f32 %v2004, %v2010
        %v2017 = vadd.f32 %v2005, %v2011
        %v2018 = vadd.f32 %v2006, %v2012
        %v2019 = vadd.f32 %v2007, %v2013
        %v2020 = vrsqrt.pop %v2014
        %v2021 = vmul.f32 %v2020, %v2014
        %v2022 = vmul.f32 %v2021, %v2020
        %v2023 = vmul.f32 0.5, %v2022
        %v2024 = vsub.f32 1.5, %v2023
        %v2025 = vmul.f32 %v2020, %v2024
        %v2026 = vmul.f32 %v2014, %v2025
        %vm2027 = vcmp.eq.f32.partialorder %v2014, inf
        %v2028 = vsel %vm2027, %v2014, %v2026
        %vm2029 = vcmp.eq.f32.partialorder %v2014, 0.0
        %v2030 = vand.u32 %v2014, 2147483648
        %v2031 = vsel %vm2029, %v2030, %v2028
        %v2032 = vrsqrt.pop %v2015
        %v2033 = vmul.f32 %v2032, %v2015
        %v2034 = vmul.f32 %v2033, %v2032
        %v2035 = vmul.f32 0.5, %v2034
        %v2036 = vsub.f32 1.5, %v2035
        %v2037 = vmul.f32 %v2032, %v2036
        %v2038 = vmul.f32 %v2015, %v2037
        %vm2039 = vcmp.eq.f32.partialorder %v2015, inf
        %v2040 = vsel %vm2039, %v2015, %v2038
        %vm2041 = vcmp.eq.f32.partialorder %v2015, 0.0
        %v2042 = vand.u32 %v2015, 2147483648
        %v2043 = vsel %vm2041, %v2042, %v2040
        %v2044 = vrsqrt.pop %v2016
        %v2045 = vmul.f32 %v2044, %v2016
        %v2046 = vmul.f32 %v2045, %v2044
        %v2047 = vmul.f32 0.5, %v2046
        %v2048 = vsub.f32 1.5, %v2047
        %v2049 = vmul.f32 %v2044, %v2048
        %v2050 = vmul.f32 %v2016, %v2049
        %vm2051 = vcmp.eq.f32.partialorder %v2016, inf
        %v2052 = vsel %vm2051, %v2016, %v2050
        %vm2053 = vcmp.eq.f32.partialorder %v2016, 0.0
        %v2054 = vand.u32 %v2016, 2147483648
        %v2055 = vsel %vm2053, %v2054, %v2052
        %v2056 = vrsqrt.pop %v2017
        %v2057 = vmul.f32 %v2056, %v2017
        %v2058 = vmul.f32 %v2057, %v2056
        %v2059 = vmul.f32 0.5, %v2058
        %v2060 = vsub.f32 1.5, %v2059
        %v2061 = vmul.f32 %v2056, %v2060
        %v2062 = vmul.f32 %v2017, %v2061
        %vm2063 = vcmp.eq.f32.partialorder %v2017, inf
        %v2064 = vsel %vm2063, %v2017, %v2062
        %vm2065 = vcmp.eq.f32.partialorder %v2017, 0.0
        %v2066 = vand.u32 %v2017, 2147483648
        %v2067 = vsel %vm2065, %v2066, %v2064
        %v2068 = vrsqrt.pop %v2018
        %v2069 = vmul.f32 %v2068, %v2018
        %v2070 = vmul.f32 %v2069, %v2068
        %v2071 = vmul.f32 0.5, %v2070
        %v2072 = vsub.f32 1.5, %v2071
        %v2073 = vmul.f32 %v2068, %v2072
        %v2074 = vmul.f32 %v2018, %v2073
        %vm2075 = vcmp.eq.f32.partialorder %v2018, inf
        %v2076 = vsel %vm2075, %v2018, %v2074
        %vm2077 = vcmp.eq.f32.partialorder %v2018, 0.0
        %v2078 = vand.u32 %v2018, 2147483648
        %v2079 = vsel %vm2077, %v2078, %v2076
        %v2080 = vrsqrt.pop %v2019
        %v2081 = vmul.f32 %v2080, %v2019
        %v2082 = vmul.f32 %v2081, %v2080
        %v2083 = vmul.f32 0.5, %v2082
        %v2084 = vsub.f32 1.5, %v2083
        %v2085 = vmul.f32 %v2080, %v2084
        %v2086 = vmul.f32 %v2019, %v2085
        %vm2087 = vcmp.eq.f32.partialorder %v2019, inf
        %v2088 = vsel %vm2087, %v2019, %v2086
        %vm2089 = vcmp.eq.f32.partialorder %v2019, 0.0
        %v2090 = vand.u32 %v2019, 2147483648
        %v2091 = vsel %vm2089, %v2090, %v2088
        %v2092 = vld [vmem:[%s7] sm:$0xff]
        %v2093 = vld [vmem:[%s7 + $0x8] sm:$0xff]
        %v2094 = vld [vmem:[%s7 + $0x10] sm:$0xff]
        %v2095 = vld [vmem:[%s7 + $0x18] sm:$0xff]
        %v2096 = vld [vmem:[%s7 + $0x20] sm:$0xff]
        %v2097 = vld [vmem:[%s7 + $0x28] sm:$0xff]
        %v2098 = vld [vmem:[%s7 + $0x30] sm:$0xff]
        %v2099 = vld [vmem:[%s7 + $0x38] sm:$0xff]
        %v2100 = vld [vmem:[%s7 + $0x40] sm:$0xff]
        %v2101 = vld [vmem:[%s7 + $0x48] sm:$0xff]
        %v2102 = vld [vmem:[%s7 + $0x50] sm:$0xff]
        %v2103 = vld [vmem:[%s7 + $0x58] sm:$0xff]
        %v2104 = vld [vmem:[%s7 + $0x60] sm:$0xff]
        %v2105 = vld [vmem:[%s7 + $0x68] sm:$0xff]
        %v2106 = vld [vmem:[%s7 + $0x70] sm:$0xff]
        %v2107 = vld [vmem:[%s7 + $0x78] sm:$0xff]
        %v2108 = vld [vmem:[%s7 + $0x80] sm:$0x1]
        %vm2109 = vcmask 7168
        %v2111 = vsel %vm2109, %v2043, 0
        %v2114 = vsel %vm2109, %v2067, 0
        %v2117 = vsel %vm2109, %v2091, 0
        %vm2119 = vcmask 1040384
        %v2121 = vsel %vm2119, %v2108, 0
        %2123 = vmatpush.msra.mxu0 %v2107
        %2124 = vmatpush.msra.mxu0 %v2106
        %2125 = vmatpush.msra.mxu0 %v2105
        %2126 = vmatpush.msra.mxu0 %v2104
        %2127 = vmatpush.msra.mxu0 %v2103
        %2128 = vmatpush.msra.mxu0 %v2102
        %2129 = vmatpush.msra.mxu0 %v2101
        %2130 = vmatpush.msra.mxu0 %v2100
        %2131 = vmatpush.msra.mxu0 %v2099
        %2132 = vmatpush.msra.mxu0 %v2098
        %2133 = vmatpush.msra.mxu0 %v2097
        %2134 = vmatpush.msra.mxu0 %v2096
        %2135 = vmatpush.msra.mxu0 %v2095
        %2136 = vmatpush.msra.mxu0 %v2094
        %2137 = vmatpush.msra.mxu0 %v2093
        %2138 = vmatpush.msra.mxu0 %v2092
        %2139 = vmatmul.f32.gmra.mxu0 %v2031
        %v2140 = vpop.f32.mrf.mxu0
        %v2141 = vadd.f32 0.0, %v2140
        %2142 = vmatmul.f32.gmra.mxu0 %v2055
        %v2143 = vpop.f32.mrf.mxu0
        %v2144 = vadd.f32 0.0, %v2143
        %2145 = vmatmul.f32.gmra.mxu0 %v2079
        %v2146 = vpop.f32.mrf.mxu0
        %v2147 = vadd.f32 0.0, %v2146
        %2148 = vdwg.mxu0
        %2149 = vmatpush.msra.mxu0 0.0
        %2150 = vmatpush.msra.mxu0 0.0
        %2151 = vmatpush.msra.mxu0 0.0
        %2152 = vmatpush.msra.mxu0 0.0
        %2153 = vmatpush.msra.mxu0 0.0
        %2154 = vmatpush.msra.mxu0 0.0
        %2155 = vmatpush.msra.mxu0 0.0
        %2156 = vmatpush.msra.mxu0 0.0
        %2157 = vmatpush.msra.mxu0 0.0
        %2158 = vmatpush.msra.mxu0 0.0
        %2159 = vmatpush.msra.mxu0 0.0
        %2160 = vmatpush.msra.mxu0 0.0
        %2161 = vmatpush.msra.mxu0 0.0
        %2162 = vmatpush.msra.mxu0 0.0
        %2163 = vmatpush.msra.mxu0 0.0
        %2164 = vmatpush.msra.mxu0 %v2121
        %2165 = vmatmul.f32.gmra.mxu0 %v2111
        %v2166 = vpop.f32.mrf.mxu0
        %v2167 = vadd.f32 %v2141, %v2166
        %2168 = vmatmul.f32.gmra.mxu0 %v2114
        %v2169 = vpop.f32.mrf.mxu0
        %v2170 = vadd.f32 %v2144, %v2169
        %2171 = vmatmul.f32.gmra.mxu0 %v2117
        %v2172 = vpop.f32.mrf.mxu0
        %v2173 = vadd.f32 %v2147, %v2172
        %2174 = vdwg.mxu0
        %vm2175 = vcmask 261120
        %2176 = vst.msk [vmem:[#allocation2] sm:$0xff] %vm2175, 0.0
        %2177 = vst.msk [vmem:[#allocation2 + $0x8] sm:$0xff] %vm2175, 0.0
        %2178 = vst.msk [vmem:[#allocation2 + $0x10] sm:$0xff] %vm2175, 0.0
        %2179 = vst.msk [vmem:[#allocation2 + $0x18] sm:$0xff] %vm2175, 0.0
        %2180 = vst.msk [vmem:[#allocation2 + $0x20] sm:$0xff] %vm2175, 0.0
        %vm2181 = vcmask 260096
        %2182 = vst.msk [vmem:[#allocation2 + $0x28] sm:$0x7f] %vm2181, 0.0
        %v2183 = vsel %vm2175, %v2167, 0.0
        %2184 = vadd.xlane.f32.xlu0 %v2183
        %v2185 = vpop.xlane.xlu0 %2184
        %v2186 = vsel %vm2175, %v2170, 0.0
        %2187 = vadd.xlane.f32.xlu0 %v2186
        %v2188 = vpop.xlane.xlu0 %2187
        %vm2189 = vcmask 253952
        %v2190 = vsel %vm2189, %v2173, 0.0
        %2191 = vadd.xlane.f32.xlu0 %v2190
        %v2192 = vpop.xlane.xlu0 %2191
        %v2193 = vrcp.pop 32.0
        %v2194 = vmul.f32 32.0, %v2193
        %v2195 = vsub.f32 1.0, %v2194
        %v2196 = vmul.f32 %v2193, %v2195
        %v2197 = vadd.f32 %v2193, %v2196
        %vm2198 = vweird.f32 %v2193
        %v2199 = vsel %vm2198, %v2193, %v2197
        %v2200 = vmul.f32 %v2185, %v2199
        %v2201 = vmul.f32 %v2188, %v2199
        %v2202 = vmul.f32 %v2192, %v2199
        %v2203 = vsub.f32 %v2167, %v2200
        %v2204 = vsub.f32 %v2170, %v2201
        %v2205 = vsub.f32 %v2173, %v2202
        %v2206 = vmul.f32 %v2203, %v2203
        %v2207 = vmul.f32 %v2204, %v2204
        %v2208 = vmul.f32 %v2205, %v2205
        %v2209 = vsel %vm2175, %v2206, 0.0
        %2210 = vadd.xlane.f32.xlu0 %v2209
        %v2211 = vpop.xlane.xlu0 %2210
        %v2212 = vsel %vm2175, %v2207, 0.0
        %2213 = vadd.xlane.f32.xlu0 %v2212
        %v2214 = vpop.xlane.xlu0 %2213
        %v2215 = vsel %vm2189, %v2208, 0.0
        %2216 = vadd.xlane.f32.xlu0 %v2215
        %v2217 = vpop.xlane.xlu0 %2216
        %v2218 = vmul.f32 %v2211, %v2199
        %v2219 = vmul.f32 %v2214, %v2199
        %v2220 = vmul.f32 %v2217, %v2199
        %v2221 = vadd.f32 %v2218, 1e-05
        %v2222 = vadd.f32 %v2219, 1e-05
        %v2223 = vadd.f32 %v2220, 1e-05
        %v2224 = vrsqrt.pop %v2221
        %v2225 = vmul.f32 %v2224, %v2221
        %v2226 = vmul.f32 %v2225, %v2224
        %v2227 = vmul.f32 0.5, %v2226
        %v2228 = vsub.f32 1.5, %v2227
        %v2229 = vmul.f32 %v2224, %v2228
        %vm2230 = vweird.f32 %v2221
        %vm2231 = vweird.f32 %v2224
        %vm2232 = vmor %vm2230, %vm2231
        %v2233 = vsel %vm2232, %v2224, %v2229
        %v2234 = vrsqrt.pop %v2222
        %v2235 = vmul.f32 %v2234, %v2222
        %v2236 = vmul.f32 %v2235, %v2234
        %v2237 = vmul.f32 0.5, %v2236
        %v2238 = vsub.f32 1.5, %v2237
        %v2239 = vmul.f32 %v2234, %v2238
        %vm2240 = vweird.f32 %v2222
        %vm2241 = vweird.f32 %v2234
        %vm2242 = vmor %vm2240, %vm2241
        %v2243 = vsel %vm2242, %v2234, %v2239
        %v2244 = vrsqrt.pop %v2223
        %v2245 = vmul.f32 %v2244, %v2223
        %v2246 = vmul.f32 %v2245, %v2244
        %v2247 = vmul.f32 0.5, %v2246
        %v2248 = vsub.f32 1.5, %v2247
        %v2249 = vmul.f32 %v2244, %v2248
        %vm2250 = vweird.f32 %v2223
        %vm2251 = vweird.f32 %v2244
        %vm2252 = vmor %vm2250, %vm2251
        %v2253 = vsel %vm2252, %v2244, %v2249
        %v2254 = vmul.f32 %v2203, %v2233
        %v2255 = vmul.f32 %v2204, %v2243
        %v2256 = vmul.f32 %v2205, %v2253
        %v2257 = vld [vmem:[%s9] sm:$0x1]
        %v2259 = vperm.slane %v2257, 0
        %v2261 = vmul.f32 %v2254, %v2259
        %v2262 = vmul.f32 %v2255, %v2259
        %v2263 = vmul.f32 %v2256, %v2259
        %v2264 = vld [vmem:[%s11] sm:$0x1]
        %v2266 = vperm.slane %v2264, 0
        %v2268 = vadd.f32 %v2261, %v2266
        %v2269 = vadd.f32 %v2262, %v2266
        %v2270 = vadd.f32 %v2263, %v2266
        %v2271 = vld [vmem:[%s13] sm:$0xff]
        %v2272 = vld [vmem:[%s13 + $0x8] sm:$0xff]
        %v2273 = vld [vmem:[%s13 + $0x10] sm:$0xff]
        %v2274 = vld [vmem:[%s13 + $0x18] sm:$0xff]
        %v2275 = vld [vmem:[%s15] sm:$0x1]
        %v2277 = vperm.slane %v2275, 0
        %v2280 = vsel %vm2175, %v2268, 0
        %v2283 = vsel %vm2175, %v2269, 0
        %v2286 = vsel %vm2175, %v2270, 0
        %2288 = vmatpush.msra.mxu0 0.0
        %2289 = vmatpush.msra.mxu0 0.0
        %2290 = vmatpush.msra.mxu0 0.0
        %2291 = vmatpush.msra.mxu0 0.0
        %2292 = vmatpush.msra.mxu0 0.0
        %2293 = vmatpush.msra.mxu0 0.0
        %2294 = vmatpush.msra.mxu0 0.0
        %2295 = vmatpush.msra.mxu0 0.0
        %2296 = vmatpush.msra.mxu0 0.0
        %2297 = vmatpush.msra.mxu0 0.0
        %2298 = vmatpush.msra.mxu0 0.0
        %2299 = vmatpush.msra.mxu0 0.0
        %2300 = vmatpush.msra.mxu0 %v2274
        %2301 = vmatpush.msra.mxu0 %v2273
        %2302 = vmatpush.msra.mxu0 %v2272
        %2303 = vmatpush.msra.mxu0 %v2271
        %2304 = vmatmul.f32.gmra.mxu0 %v2280
        %v2305 = vpop.f32.mrf.mxu0
        %v2306 = vadd.f32 %v2277, %v2305
        %2307 = vmatmul.f32.gmra.mxu0 %v2283
        %v2308 = vpop.f32.mrf.mxu0
        %v2309 = vadd.f32 %v2277, %v2308
        %2310 = vmatmul.f32.gmra.mxu0 %v2286
        %v2311 = vpop.f32.mrf.mxu0
        %v2312 = vadd.f32 %v2277, %v2311
        %2313 = vdwg.mxu0
        %v2314 = vsub.f32 0.0, %v2306
        %v2315 = vsub.f32 0.0, %v2309
        %v2316 = vsub.f32 0.0, %v2312
        %v2317 = vmul.f32 %v2314, 1.442695
        %v2318 = vpow.pop %v2317
        %v2319 = vmul.f32 %v2315, 1.442695
        %v2320 = vpow.pop %v2319
        %v2321 = vmul.f32 %v2316, 1.442695
        %v2322 = vpow.pop %v2321
        %v2323 = vadd.f32 %v2318, 1.0
        %v2324 = vadd.f32 %v2320, 1.0
        %v2325 = vadd.f32 %v2322, 1.0
        %v2326 = vrcp.pop %v2323
        %v2327 = vmul.f32 %v2323, %v2326
        %v2328 = vsub.f32 1.0, %v2327
        %v2329 = vmul.f32 %v2326, %v2328
        %v2330 = vadd.f32 %v2326, %v2329
        %vm2331 = vweird.f32 %v2323
        %vm2332 = vweird.f32 %v2326
        %vm2333 = vmor %vm2331, %vm2332
        %v2334 = vsel %vm2333, %v2326, %v2330
        %v2335 = vand.u32 2147483647, %v2323
        %vm2336 = vcmp.eq.f32.partialorder %v2335, 8.507059e+37
        %v2337 = vand.u32 %v2323, 2147483648
        %v2338 = vor.u32 1.1754944e-38, %v2337
        %v2339 = vsel %vm2336, %v2338, %v2334
        %v2340 = vmul.f32 1.0, %v2339
        %v2341 = vrcp.pop %v2324
        %v2342 = vmul.f32 %v2324, %v2341
        %v2343 = vsub.f32 1.0, %v2342
        %v2344 = vmul.f32 %v2341, %v2343
        %v2345 = vadd.f32 %v2341, %v2344
        %vm2346 = vweird.f32 %v2324
        %vm2347 = vweird.f32 %v2341
        %vm2348 = vmor %vm2346, %vm2347
        %v2349 = vsel %vm2348, %v2341, %v2345
        %v2350 = vand.u32 2147483647, %v2324
        %vm2351 = vcmp.eq.f32.partialorder %v2350, 8.507059e+37
        %v2352 = vand.u32 %v2324, 2147483648
        %v2353 = vor.u32 1.1754944e-38, %v2352
        %v2354 = vsel %vm2351, %v2353, %v2349
        %v2355 = vmul.f32 1.0, %v2354
        %v2356 = vrcp.pop %v2325
        %v2357 = vmul.f32 %v2325, %v2356
        %v2358 = vsub.f32 1.0, %v2357
        %v2359 = vmul.f32 %v2356, %v2358
        %v2360 = vadd.f32 %v2356, %v2359
        %vm2361 = vweird.f32 %v2325
        %vm2362 = vweird.f32 %v2356
        %vm2363 = vmor %vm2361, %vm2362
        %v2364 = vsel %vm2363, %v2356, %v2360
        %v2365 = vand.u32 2147483647, %v2325
        %vm2366 = vcmp.eq.f32.partialorder %v2365, 8.507059e+37
        %v2367 = vand.u32 %v2325, 2147483648
        %v2368 = vor.u32 1.1754944e-38, %v2367
        %v2369 = vsel %vm2366, %v2368, %v2364
        %v2370 = vmul.f32 1.0, %v2369
        %v2371 = vmul.f32 %v2306, %v2340
        %v2372 = vmul.f32 %v2309, %v2355
        %v2373 = vmul.f32 %v2312, %v2370
        %v2374 = vld [vmem:[%s17] sm:$0xff]
        %v2375 = vld [vmem:[%s17 + $0x8] sm:$0xff]
        %v2376 = vld [vmem:[%s17 + $0x10] sm:$0xff]
        %v2377 = vld [vmem:[%s17 + $0x18] sm:$0xff]
        %v2378 = vld [vmem:[%s17 + $0x20] sm:$0xff]
        %v2379 = vld [vmem:[%s17 + $0x28] sm:$0xff]
        %v2380 = vld [vmem:[%s17 + $0x30] sm:$0xff]
        %v2381 = vld [vmem:[%s17 + $0x38] sm:$0xff]
        %v2382 = vld [vmem:[%s19] sm:$0x1]
        %v2384 = vperm.slane %v2382, 0
        %vm2386 = vcmask 523264
        %v2388 = vsel %vm2386, %v2371, 0
        %v2391 = vsel %vm2386, %v2372, 0
        %v2394 = vsel %vm2386, %v2373, 0
        %2396 = vmatpush.msra.mxu0 0.0
        %2397 = vmatpush.msra.mxu0 0.0
        %2398 = vmatpush.msra.mxu0 0.0
        %2399 = vmatpush.msra.mxu0 0.0
        %2400 = vmatpush.msra.mxu0 0.0
        %2401 = vmatpush.msra.mxu0 0.0
        %2402 = vmatpush.msra.mxu0 0.0
        %2403 = vmatpush.msra.mxu0 0.0
        %2404 = vmatpush.msra.mxu0 %v2381
        %2405 = vmatpush.msra.mxu0 %v2380
        %2406 = vmatpush.msra.mxu0 %v2379
        %2407 = vmatpush.msra.mxu0 %v2378
        %2408 = vmatpush.msra.mxu0 %v2377
        %2409 = vmatpush.msra.mxu0 %v2376
        %2410 = vmatpush.msra.mxu0 %v2375
        %2411 = vmatpush.msra.mxu0 %v2374
        %2412 = vmatmul.f32.gmra.mxu0 %v2388
        %v2413 = vpop.f32.mrf.mxu0
        %v2414 = vadd.f32 %v2384, %v2413
        %2415 = vmatmul.f32.gmra.mxu0 %v2391
        %v2416 = vpop.f32.mrf.mxu0
        %v2417 = vadd.f32 %v2384, %v2416
        %2418 = vmatmul.f32.gmra.mxu0 %v2394
        %v2419 = vpop.f32.mrf.mxu0
        %v2420 = vadd.f32 %v2384, %v2419
        %2421 = vdwg.mxu0
        %v2422 = vmul.f32 %v2414, 0.5
        %v2423 = vmul.f32 %v2417, 0.5
        %v2424 = vmul.f32 %v2420, 0.5
        %v2425 = vadd.f32 %v2167, %v2422
        %v2426 = vadd.f32 %v2170, %v2423
        %v2427 = vadd.f32 %v2173, %v2424
        %v2428 = vsel %vm2175, %v2425, 0.0
        %2429 = vadd.xlane.f32.xlu0 %v2428
        %v2430 = vpop.xlane.xlu0 %2429
        %v2431 = vsel %vm2175, %v2426, 0.0
        %2432 = vadd.xlane.f32.xlu0 %v2431
        %v2433 = vpop.xlane.xlu0 %2432
        %v2434 = vsel %vm2189, %v2427, 0.0
        %2435 = vadd.xlane.f32.xlu0 %v2434
        %v2436 = vpop.xlane.xlu0 %2435
        %v2437 = vmul.f32 %v2430, %v2199
        %v2438 = vmul.f32 %v2433, %v2199
        %v2439 = vmul.f32 %v2436, %v2199
        %v2440 = vsub.f32 %v2425, %v2437
        %v2441 = vsub.f32 %v2426, %v2438
        %v2442 = vsub.f32 %v2427, %v2439
        %v2443 = vmul.f32 %v2440, %v2440
        %v2444 = vmul.f32 %v2441, %v2441
        %v2445 = vmul.f32 %v2442, %v2442
        %v2446 = vsel %vm2175, %v2443, 0.0
        %2447 = vadd.xlane.f32.xlu0 %v2446
        %v2448 = vpop.xlane.xlu0 %2447
        %v2449 = vsel %vm2175, %v2444, 0.0
        %2450 = vadd.xlane.f32.xlu0 %v2449
        %v2451 = vpop.xlane.xlu0 %2450
        %v2452 = vsel %vm2189, %v2445, 0.0
        %2453 = vadd.xlane.f32.xlu0 %v2452
        %v2454 = vpop.xlane.xlu0 %2453
        %v2455 = vmul.f32 %v2448, %v2199
        %v2456 = vmul.f32 %v2451, %v2199
        %v2457 = vmul.f32 %v2454, %v2199
        %v2458 = vadd.f32 %v2455, 1e-05
        %v2459 = vadd.f32 %v2456, 1e-05
        %v2460 = vadd.f32 %v2457, 1e-05
        %v2461 = vrsqrt.pop %v2458
        %v2462 = vmul.f32 %v2461, %v2458
        %v2463 = vmul.f32 %v2462, %v2461
        %v2464 = vmul.f32 0.5, %v2463
        %v2465 = vsub.f32 1.5, %v2464
        %v2466 = vmul.f32 %v2461, %v2465
        %vm2467 = vweird.f32 %v2458
        %vm2468 = vweird.f32 %v2461
        %vm2469 = vmor %vm2467, %vm2468
        %v2470 = vsel %vm2469, %v2461, %v2466
        %v2471 = vrsqrt.pop %v2459
        %v2472 = vmul.f32 %v2471, %v2459
        %v2473 = vmul.f32 %v2472, %v2471
        %v2474 = vmul.f32 0.5, %v2473
        %v2475 = vsub.f32 1.5, %v2474
        %v2476 = vmul.f32 %v2471, %v2475
        %vm2477 = vweird.f32 %v2459
        %vm2478 = vweird.f32 %v2471
        %vm2479 = vmor %vm2477, %vm2478
        %v2480 = vsel %vm2479, %v2471, %v2476
        %v2481 = vrsqrt.pop %v2460
        %v2482 = vmul.f32 %v2481, %v2460
        %v2483 = vmul.f32 %v2482, %v2481
        %v2484 = vmul.f32 0.5, %v2483
        %v2485 = vsub.f32 1.5, %v2484
        %v2486 = vmul.f32 %v2481, %v2485
        %vm2487 = vweird.f32 %v2460
        %vm2488 = vweird.f32 %v2481
        %vm2489 = vmor %vm2487, %vm2488
        %v2490 = vsel %vm2489, %v2481, %v2486
        %v2491 = vmul.f32 %v2440, %v2470
        %v2492 = vmul.f32 %v2441, %v2480
        %v2493 = vmul.f32 %v2442, %v2490
        %v2494 = vld [vmem:[%s21] sm:$0x1]
        %v2496 = vperm.slane %v2494, 0
        %v2498 = vmul.f32 %v2491, %v2496
        %v2499 = vmul.f32 %v2492, %v2496
        %v2500 = vmul.f32 %v2493, %v2496
        %v2501 = vld [vmem:[%s23] sm:$0x1]
        %v2503 = vperm.slane %v2501, 0
        %v2505 = vadd.f32 %v2498, %v2503
        %v2506 = vadd.f32 %v2499, %v2503
        %v2507 = vadd.f32 %v2500, %v2503
        %v2508 = vld [vmem:[%s25] sm:$0xff]
        %v2509 = vld [vmem:[%s25 + $0x8] sm:$0xff]
        %v2510 = vld [vmem:[%s25 + $0x10] sm:$0xff]
        %v2511 = vld [vmem:[%s25 + $0x18] sm:$0xff]
        %v2512 = vld [vmem:[%s27] sm:$0x1]
        %v2514 = vperm.slane %v2512, 0
        %v2517 = vsel %vm2175, %v2505, 0
        %v2520 = vsel %vm2175, %v2506, 0
        %v2523 = vsel %vm2175, %v2507, 0
        %2525 = vmatpush.msra.mxu0 0.0
        %2526 = vmatpush.msra.mxu0 0.0
        %2527 = vmatpush.msra.mxu0 0.0
        %2528 = vmatpush.msra.mxu0 0.0
        %2529 = vmatpush.msra.mxu0 0.0
        %2530 = vmatpush.msra.mxu0 0.0
        %2531 = vmatpush.msra.mxu0 0.0
        %2532 = vmatpush.msra.mxu0 0.0
        %2533 = vmatpush.msra.mxu0 0.0
        %2534 = vmatpush.msra.mxu0 0.0
        %2535 = vmatpush.msra.mxu0 0.0
        %2536 = vmatpush.msra.mxu0 0.0
        %2537 = vmatpush.msra.mxu0 %v2511
        %2538 = vmatpush.msra.mxu0 %v2510
        %2539 = vmatpush.msra.mxu0 %v2509
        %2540 = vmatpush.msra.mxu0 %v2508
        %2541 = vmatmul.f32.gmra.mxu0 %v2517
        %v2542 = vpop.f32.mrf.mxu0
        %v2543 = vadd.f32 %v2514, %v2542
        %2544 = vmatmul.f32.gmra.mxu0 %v2520
        %v2545 = vpop.f32.mrf.mxu0
        %v2546 = vadd.f32 %v2514, %v2545
        %2547 = vmatmul.f32.gmra.mxu0 %v2523
        %v2548 = vpop.f32.mrf.mxu0
        %v2549 = vadd.f32 %v2514, %v2548
        %2550 = vdwg.mxu0
        %v2551 = vld [vmem:[%s29] sm:$0xff]
        %v2552 = vld [vmem:[%s29 + $0x8] sm:$0xff]
        %v2553 = vld [vmem:[%s29 + $0x10] sm:$0xff]
        %v2554 = vld [vmem:[%s29 + $0x18] sm:$0xff]
        %v2555 = vld [vmem:[%s31] sm:$0x1]
        %v2557 = vperm.slane %v2555, 0
        %2559 = vmatpush.msra.mxu0 0.0
        %2560 = vmatpush.msra.mxu0 0.0
        %2561 = vmatpush.msra.mxu0 0.0
        %2562 = vmatpush.msra.mxu0 0.0
        %2563 = vmatpush.msra.mxu0 0.0
        %2564 = vmatpush.msra.mxu0 0.0
        %2565 = vmatpush.msra.mxu0 0.0
        %2566 = vmatpush.msra.mxu0 0.0
        %2567 = vmatpush.msra.mxu0 0.0
        %2568 = vmatpush.msra.mxu0 0.0
        %2569 = vmatpush.msra.mxu0 0.0
        %2570 = vmatpush.msra.mxu0 0.0
        %2571 = vmatpush.msra.mxu0 %v2554
        %2572 = vmatpush.msra.mxu0 %v2553
        %2573 = vmatpush.msra.mxu0 %v2552
        %2574 = vmatpush.msra.mxu0 %v2551
        %2575 = vmatmul.f32.gmra.mxu0 %v2517
        %v2576 = vpop.f32.mrf.mxu0
        %v2577 = vadd.f32 %v2557, %v2576
        %2578 = vmatmul.f32.gmra.mxu0 %v2520
        %v2579 = vpop.f32.mrf.mxu0
        %v2580 = vadd.f32 %v2557, %v2579
        %2581 = vmatmul.f32.gmra.mxu0 %v2523
        %v2582 = vpop.f32.mrf.mxu0
        %v2583 = vadd.f32 %v2557, %v2582
        %2584 = vdwg.mxu0
        %v2585 = vld [vmem:[%s33] sm:$0xff]
        %v2586 = vld [vmem:[%s33 + $0x8] sm:$0xff]
        %v2587 = vld [vmem:[%s33 + $0x10] sm:$0xff]
        %v2588 = vld [vmem:[%s33 + $0x18] sm:$0xff]
        %v2589 = vld [vmem:[%s35] sm:$0x1]
        %v2591 = vperm.slane %v2589, 0
        %2593 = vmatpush.msra.mxu0 0.0
        %2594 = vmatpush.msra.mxu0 0.0
        %2595 = vmatpush.msra.mxu0 0.0
        %2596 = vmatpush.msra.mxu0 0.0
        %2597 = vmatpush.msra.mxu0 0.0
        %2598 = vmatpush.msra.mxu0 0.0
        %2599 = vmatpush.msra.mxu0 0.0
        %2600 = vmatpush.msra.mxu0 0.0
        %2601 = vmatpush.msra.mxu0 0.0
        %2602 = vmatpush.msra.mxu0 0.0
        %2603 = vmatpush.msra.mxu0 0.0
        %2604 = vmatpush.msra.mxu0 0.0
        %2605 = vmatpush.msra.mxu0 %v2588
        %2606 = vmatpush.msra.mxu0 %v2587
        %2607 = vmatpush.msra.mxu0 %v2586
        %2608 = vmatpush.msra.mxu0 %v2585
        %2609 = vmatmul.f32.gmra.mxu0 %v2517
        %v2610 = vpop.f32.mrf.mxu0
        %v2611 = vadd.f32 %v2591, %v2610
        %2612 = vmatmul.f32.gmra.mxu0 %v2520
        %v2613 = vpop.f32.mrf.mxu0
        %v2614 = vadd.f32 %v2591, %v2613
        %2615 = vmatmul.f32.gmra.mxu0 %v2523
        %v2616 = vpop.f32.mrf.mxu0
        %v2617 = vadd.f32 %v2591, %v2616
        %2618 = vdwg.mxu0
        %v2619 = vld [vmem:[%s37] sm:$0xff]
        %v2620 = vld [vmem:[%s37 + $0x8] sm:$0xff]
        %v2621 = vld [vmem:[%s37 + $0x10] sm:$0xff]
        %v2622 = vld [vmem:[%s37 + $0x18] sm:$0xff]
        %v2623 = vld [vmem:[%s39] sm:$0x1]
        %vm2624 = vcmask 64512
        %v2626 = vsel %vm2624, %v2543, 0
        %v2629 = vsel %vm2624, %v2546, 0
        %v2632 = vsel %vm2624, %v2549, 0
        %v2635 = vsel %vm2624, %v2577, 0
        %v2638 = vsel %vm2624, %v2580, 0
        %v2641 = vsel %vm2624, %v2583, 0
        %2643 = vmatpush.xpose.msra.mxu0 0.0
        %2644 = vmatpush.xpose.msra.mxu0 0.0
        %2645 = vmatpush.xpose.msra.mxu0 0.0
        %2646 = vmatpush.xpose.msra.mxu0 0.0
        %2647 = vmatpush.xpose.msra.mxu0 0.0
        %2648 = vmatpush.xpose.msra.mxu0 0.0
        %2649 = vmatpush.xpose.msra.mxu0 0.0
        %2650 = vmatpush.xpose.msra.mxu0 0.0
        %2651 = vmatpush.xpose.msra.mxu0 0.0
        %2652 = vmatpush.xpose.msra.mxu0 0.0
        %2653 = vmatpush.xpose.msra.mxu0 0.0
        %2654 = vmatpush.xpose.msra.mxu0 0.0
        %2655 = vmatpush.xpose.msra.mxu0 0.0
        %2656 = vmatpush.xpose.msra.mxu0 %v2641
        %2657 = vmatpush.xpose.msra.mxu0 %v2638
        %2658 = vmatpush.xpose.msra.mxu0 %v2635
        %2659 = vmatmul.f32.gmra.mxu0 %v2626
        %v2660 = vpop.f32.mrf.mxu0
        %v2661 = vadd.f32 0.0, %v2660
        %2662 = vmatmul.f32.gmra.mxu0 %v2629
        %v2663 = vpop.f32.mrf.mxu0
        %v2664 = vadd.f32 0.0, %v2663
        %2665 = vmatmul.f32.gmra.mxu0 %v2632
        %v2666 = vpop.f32.mrf.mxu0
        %v2667 = vadd.f32 0.0, %v2666
        %2668 = vdwg.mxu0
        %vm2669 = vcmask 138240
        %v2670 = vsel %vm2669, %v2661, -inf
        %2671 = vmax.xlane.f32.xlu0 %v2670
        %v2672 = vpop.xlane.xlu0 %2671
        %v2673 = vsel %vm2669, %v2664, -inf
        %2674 = vmax.xlane.f32.xlu0 %v2673
        %v2675 = vpop.xlane.xlu0 %2674
        %vm2676 = vcmask 131072
        %v2677 = vsel %vm2676, %v2667, -inf
        %2678 = vmax.xlane.f32.xlu0 %v2677
        %v2679 = vpop.xlane.xlu0 %2678
        %v2680 = vsub.f32 %v2661, %v2672
        %v2681 = vsub.f32 %v2664, %v2675
        %v2682 = vsub.f32 %v2667, %v2679
        %v2683 = vmul.f32 %v2680, 1.442695
        %v2684 = vpow.pop %v2683
        %v2685 = vmul.f32 %v2681, 1.442695
        %v2686 = vpow.pop %v2685
        %v2687 = vmul.f32 %v2682, 1.442695
        %v2688 = vpow.pop %v2687
        %v2689 = vsel %vm2669, %v2684, 0.0
        %2690 = vadd.xlane.f32.xlu0 %v2689
        %v2691 = vpop.xlane.xlu0 %2690
        %v2692 = vsel %vm2669, %v2686, 0.0
        %2693 = vadd.xlane.f32.xlu0 %v2692
        %v2694 = vpop.xlane.xlu0 %2693
        %v2695 = vsel %vm2676, %v2688, 0.0
        %2696 = vadd.xlane.f32.xlu0 %v2695
        %v2697 = vpop.xlane.xlu0 %2696
        %v2698 = vrcp.pop %v2691
        %v2699 = vmul.f32 %v2691, %v2698
        %v2700 = vsub.f32 1.0, %v2699
        %v2701 = vmul.f32 %v2698, %v2700
        %v2702 = vadd.f32 %v2698, %v2701
        %vm2703 = vweird.f32 %v2691
        %vm2704 = vweird.f32 %v2698
        %vm2705 = vmor %vm2703, %vm2704
        %v2706 = vsel %vm2705, %v2698, %v2702
        %v2707 = vand.u32 2147483647, %v2691
        %vm2708 = vcmp.eq.f32.partialorder %v2707, 8.507059e+37
        %v2709 = vand.u32 %v2691, 2147483648
        %v2710 = vor.u32 1.1754944e-38, %v2709
        %v2711 = vsel %vm2708, %v2710, %v2706
        %v2712 = vmul.f32 %v2684, %v2711
        %v2713 = vrcp.pop %v2694
        %v2714 = vmul.f32 %v2694, %v2713
        %v2715 = vsub.f32 1.0, %v2714
        %v2716 = vmul.f32 %v2713, %v2715
        %v2717 = vadd.f32 %v2713, %v2716
        %vm2718 = vweird.f32 %v2694
        %vm2719 = vweird.f32 %v2713
        %vm2720 = vmor %vm2718, %vm2719
        %v2721 = vsel %vm2720, %v2713, %v2717
        %v2722 = vand.u32 2147483647, %v2694
        %vm2723 = vcmp.eq.f32.partialorder %v2722, 8.507059e+37
        %v2724 = vand.u32 %v2694, 2147483648
        %v2725 = vor.u32 1.1754944e-38, %v2724
        %v2726 = vsel %vm2723, %v2725, %v2721
        %v2727 = vmul.f32 %v2686, %v2726
        %v2728 = vrcp.pop %v2697
        %v2729 = vmul.f32 %v2697, %v2728
        %v2730 = vsub.f32 1.0, %v2729
        %v2731 = vmul.f32 %v2728, %v2730
        %v2732 = vadd.f32 %v2728, %v2731
        %vm2733 = vweird.f32 %v2697
        %vm2734 = vweird.f32 %v2728
        %vm2735 = vmor %vm2733, %vm2734
        %v2736 = vsel %vm2735, %v2728, %v2732
        %v2737 = vand.u32 2147483647, %v2697
        %vm2738 = vcmp.eq.f32.partialorder %v2737, 8.507059e+37
        %v2739 = vand.u32 %v2697, 2147483648
        %v2740 = vor.u32 1.1754944e-38, %v2739
        %v2741 = vsel %vm2738, %v2740, %v2736
        %v2742 = vmul.f32 %v2688, %v2741
        %v2744 = vsel %vm2669, %v2712, 0
        %v2747 = vsel %vm2669, %v2727, 0
        %v2750 = vsel %vm2669, %v2742, 0
        %v2753 = vsel %vm2119, %v2617, 0
        %2755 = vmatpush.msra.mxu0 0.0
        %2756 = vmatpush.msra.mxu0 0.0
        %2757 = vmatpush.msra.mxu0 0.0
        %2758 = vmatpush.msra.mxu0 0.0
        %2759 = vmatpush.msra.mxu0 0.0
        %2760 = vmatpush.msra.mxu0 0.0
        %2761 = vmatpush.msra.mxu0 0.0
        %2762 = vmatpush.msra.mxu0 0.0
        %2763 = vmatpush.msra.mxu0 0.0
        %2764 = vmatpush.msra.mxu0 0.0
        %2765 = vmatpush.msra.mxu0 0.0
        %2766 = vmatpush.msra.mxu0 0.0
        %2767 = vmatpush.msra.mxu0 0.0
        %2768 = vmatpush.msra.mxu0 %v2753
        %2769 = vmatpush.msra.mxu0 %v2614
        %2770 = vmatpush.msra.mxu0 %v2611
        %2771 = vmatmul.f32.gmra.mxu0 %v2744
        %v2772 = vpop.f32.mrf.mxu0
        %v2773 = vadd.f32 0.0, %v2772
        %2774 = vmatmul.f32.gmra.mxu0 %v2747
        %v2775 = vpop.f32.mrf.mxu0
        %v2776 = vadd.f32 0.0, %v2775
        %2777 = vmatmul.f32.gmra.mxu0 %v2750
        %v2778 = vpop.f32.mrf.mxu0
        %v2779 = vadd.f32 0.0, %v2778
        %2780 = vdwg.mxu0
        %v2782 = vsel %vm2624, %v2773, 0
        %v2785 = vsel %vm2624, %v2776, 0
        %v2788 = vsel %vm2624, %v2779, 0
        %2790 = vmatpush.msra.mxu0 0.0
        %2791 = vmatpush.msra.mxu0 0.0
        %2792 = vmatpush.msra.mxu0 0.0
        %2793 = vmatpush.msra.mxu0 0.0
        %2794 = vmatpush.msra.mxu0 0.0
        %2795 = vmatpush.msra.mxu0 0.0
        %2796 = vmatpush.msra.mxu0 0.0
        %2797 = vmatpush.msra.mxu0 0.0
        %2798 = vmatpush.msra.mxu0 0.0
        %2799 = vmatpush.msra.mxu0 0.0
        %2800 = vmatpush.msra.mxu0 0.0
        %2801 = vmatpush.msra.mxu0 0.0
        %2802 = vmatpush.msra.mxu0 0.0
        %2803 = vmatpush.msra.mxu0 0.0
        %2804 = vmatpush.msra.mxu0 0.0
        %2805 = vmatpush.msra.mxu0 %v2619
        %2806 = vmatmul.f32.gmra.mxu0 %v2782
        %v2807 = vpop.f32.mrf.mxu0
        %v2808 = vadd.f32 0.0, %v2807
        %2809 = vmatmul.f32.gmra.mxu0 %v2785
        %v2810 = vpop.f32.mrf.mxu0
        %v2811 = vadd.f32 0.0, %v2810
        %2812 = vmatmul.f32.gmra.mxu0 %v2788
        %v2813 = vpop.f32.mrf.mxu0
        %v2814 = vadd.f32 0.0, %v2813
        %2815 = vdwg.mxu0
        %v2817 = vperm.slane %v2623, 0
        %v2819 = vadd.f32 %v2817, %v2808
        %v2820 = vadd.f32 %v2817, %v2811
        %v2821 = vadd.f32 %v2817, %v2814
        %2822 = vrot.lane.b32.xlu0 %v2543, 120
        %v2823 = vpop.permute.xlu0 %2822
        %2824 = vrot.lane.b32.xlu0 %v2546, 120
        %v2825 = vpop.permute.xlu0 %2824
        %2826 = vrot.lane.b32.xlu0 %v2549, 120
        %v2827 = vpop.permute.xlu0 %2826
        %2828 = vrot.lane.b32.xlu0 %v2577, 120
        %v2829 = vpop.permute.xlu0 %2828
        %2830 = vrot.lane.b32.xlu0 %v2580, 120
        %v2831 = vpop.permute.xlu0 %2830
        %2832 = vrot.lane.b32.xlu0 %v2583, 120
        %v2833 = vpop.permute.xlu0 %2832
        %v2834 = vsel %vm2624, %v2823, 0
        %v2836 = vsel %vm2624, %v2825, 0
        %v2838 = vsel %vm2624, %v2827, 0
        %v2840 = vsel %vm2624, %v2829, 0
        %v2842 = vsel %vm2624, %v2831, 0
        %v2844 = vsel %vm2624, %v2833, 0
        %2846 = vmatpush.xpose.msra.mxu0 0.0
        %2847 = vmatpush.xpose.msra.mxu0 0.0
        %2848 = vmatpush.xpose.msra.mxu0 0.0
        %2849 = vmatpush.xpose.msra.mxu0 0.0
        %2850 = vmatpush.xpose.msra.mxu0 0.0
        %2851 = vmatpush.xpose.msra.mxu0 0.0
        %2852 = vmatpush.xpose.msra.mxu0 0.0
        %2853 = vmatpush.xpose.msra.mxu0 0.0
        %2854 = vmatpush.xpose.msra.mxu0 0.0
        %2855 = vmatpush.xpose.msra.mxu0 0.0
        %2856 = vmatpush.xpose.msra.mxu0 0.0
        %2857 = vmatpush.xpose.msra.mxu0 0.0
        %2858 = vmatpush.xpose.msra.mxu0 0.0
        %2859 = vmatpush.xpose.msra.mxu0 %v2844
        %2860 = vmatpush.xpose.msra.mxu0 %v2842
        %2861 = vmatpush.xpose.msra.mxu0 %v2840
        %2862 = vmatmul.f32.gmra.mxu0 %v2834
        %v2863 = vpop.f32.mrf.mxu0
        %v2864 = vadd.f32 0.0, %v2863
        %2865 = vmatmul.f32.gmra.mxu0 %v2836
        %v2866 = vpop.f32.mrf.mxu0
        %v2867 = vadd.f32 0.0, %v2866
        %2868 = vmatmul.f32.gmra.mxu0 %v2838
        %v2869 = vpop.f32.mrf.mxu0
        %v2870 = vadd.f32 0.0, %v2869
        %2871 = vdwg.mxu0
        %v2872 = vsel %vm2669, %v2864, -inf
        %2873 = vmax.xlane.f32.xlu0 %v2872
        %v2874 = vpop.xlane.xlu0 %2873
        %v2875 = vsel %vm2669, %v2867, -inf
        %2876 = vmax.xlane.f32.xlu0 %v2875
        %v2877 = vpop.xlane.xlu0 %2876
        %v2878 = vsel %vm2676, %v2870, -inf
        %2879 = vmax.xlane.f32.xlu0 %v2878
        %v2880 = vpop.xlane.xlu0 %2879
        %v2881 = vsub.f32 %v2864, %v2874
        %v2882 = vsub.f32 %v2867, %v2877
        %v2883 = vsub.f32 %v2870, %v2880
        %v2884 = vmul.f32 %v2881, 1.442695
        %v2885 = vpow.pop %v2884
        %v2886 = vmul.f32 %v2882, 1.442695
        %v2887 = vpow.pop %v2886
        %v2888 = vmul.f32 %v2883, 1.442695
        %v2889 = vpow.pop %v2888
        %v2890 = vsel %vm2669, %v2885, 0.0
        %2891 = vadd.xlane.f32.xlu0 %v2890
        %v2892 = vpop.xlane.xlu0 %2891
        %v2893 = vsel %vm2669, %v2887, 0.0
        %2894 = vadd.xlane.f32.xlu0 %v2893
        %v2895 = vpop.xlane.xlu0 %2894
        %v2896 = vsel %vm2676, %v2889, 0.0
        %2897 = vadd.xlane.f32.xlu0 %v2896
        %v2898 = vpop.xlane.xlu0 %2897
        %v2899 = vrcp.pop %v2892
        %v2900 = vmul.f32 %v2892, %v2899
        %v2901 = vsub.f32 1.0, %v2900
        %v2902 = vmul.f32 %v2899, %v2901
        %v2903 = vadd.f32 %v2899, %v2902
        %vm2904 = vweird.f32 %v2892
        %vm2905 = vweird.f32 %v2899
        %vm2906 = vmor %vm2904, %vm2905
        %v2907 = vsel %vm2906, %v2899, %v2903
        %v2908 = vand.u32 2147483647, %v2892
        %vm2909 = vcmp.eq.f32.partialorder %v2908, 8.507059e+37
        %v2910 = vand.u32 %v2892, 2147483648
        %v2911 = vor.u32 1.1754944e-38, %v2910
        %v2912 = vsel %vm2909, %v2911, %v2907
        %v2913 = vmul.f32 %v2885, %v2912
        %v2914 = vrcp.pop %v2895
        %v2915 = vmul.f32 %v2895, %v2914
        %v2916 = vsub.f32 1.0, %v2915
        %v2917 = vmul.f32 %v2914, %v2916
        %v2918 = vadd.f32 %v2914, %v2917
        %vm2919 = vweird.f32 %v2895
        %vm2920 = vweird.f32 %v2914
        %vm2921 = vmor %vm2919, %vm2920
        %v2922 = vsel %vm2921, %v2914, %v2918
        %v2923 = vand.u32 2147483647, %v2895
        %vm2924 = vcmp.eq.f32.partialorder %v2923, 8.507059e+37
        %v2925 = vand.u32 %v2895, 2147483648
        %v2926 = vor.u32 1.1754944e-38, %v2925
        %v2927 = vsel %vm2924, %v2926, %v2922
        %v2928 = vmul.f32 %v2887, %v2927
        %v2929 = vrcp.pop %v2898
        %v2930 = vmul.f32 %v2898, %v2929
        %v2931 = vsub.f32 1.0, %v2930
        %v2932 = vmul.f32 %v2929, %v2931
        %v2933 = vadd.f32 %v2929, %v2932
        %vm2934 = vweird.f32 %v2898
        %vm2935 = vweird.f32 %v2929
        %vm2936 = vmor %vm2934, %vm2935
        %v2937 = vsel %vm2936, %v2929, %v2933
        %v2938 = vand.u32 2147483647, %v2898
        %vm2939 = vcmp.eq.f32.partialorder %v2938, 8.507059e+37
        %v2940 = vand.u32 %v2898, 2147483648
        %v2941 = vor.u32 1.1754944e-38, %v2940
        %v2942 = vsel %vm2939, %v2941, %v2937
        %v2943 = vmul.f32 %v2889, %v2942
        %2946 = vrot.lane.b32.xlu0 %v2611, 120
        %v2947 = vpop.permute.xlu0 %2946
        %2948 = vrot.lane.b32.xlu0 %v2614, 120
        %v2949 = vpop.permute.xlu0 %2948
        %2950 = vrot.lane.b32.xlu0 %v2617, 120
        %v2951 = vpop.permute.xlu0 %2950
        %v2955 = vsel %vm2669, %v2913, 0
        %v2958 = vsel %vm2669, %v2928, 0
        %v2961 = vsel %vm2669, %v2943, 0
        %v2963 = vsel %vm2119, %v2951, 0
        %2965 = vmatpush.msra.mxu0 0.0
        %2966 = vmatpush.msra.mxu0 0.0
        %2967 = vmatpush.msra.mxu0 0.0
        %2968 = vmatpush.msra.mxu0 0.0
        %2969 = vmatpush.msra.mxu0 0.0
        %2970 = vmatpush.msra.mxu0 0.0
        %2971 = vmatpush.msra.mxu0 0.0
        %2972 = vmatpush.msra.mxu0 0.0
        %2973 = vmatpush.msra.mxu0 0.0
        %2974 = vmatpush.msra.mxu0 0.0
        %2975 = vmatpush.msra.mxu0 0.0
        %2976 = vmatpush.msra.mxu0 0.0
        %2977 = vmatpush.msra.mxu0 0.0
        %2978 = vmatpush.msra.mxu0 %v2963
        %2979 = vmatpush.msra.mxu0 %v2949
        %2980 = vmatpush.msra.mxu0 %v2947
        %2981 = vmatmul.f32.gmra.mxu0 %v2955
        %v2982 = vpop.f32.mrf.mxu0
        %v2983 = vadd.f32 0.0, %v2982
        %2984 = vmatmul.f32.gmra.mxu0 %v2958
        %v2985 = vpop.f32.mrf.mxu0
        %v2986 = vadd.f32 0.0, %v2985
        %2987 = vmatmul.f32.gmra.mxu0 %v2961
        %v2988 = vpop.f32.mrf.mxu0
        %v2989 = vadd.f32 0.0, %v2988
        %2990 = vdwg.mxu0
        %v2992 = vsel %vm2624, %v2983, 0
        %v2995 = vsel %vm2624, %v2986, 0
        %v2998 = vsel %vm2624, %v2989, 0
        %3000 = vmatpush.msra.mxu0 0.0
        %3001 = vmatpush.msra.mxu0 0.0
        %3002 = vmatpush.msra.mxu0 0.0
        %3003 = vmatpush.msra.mxu0 0.0
        %3004 = vmatpush.msra.mxu0 0.0
        %3005 = vmatpush.msra.mxu0 0.0
        %3006 = vmatpush.msra.mxu0 0.0
        %3007 = vmatpush.msra.mxu0 0.0
        %3008 = vmatpush.msra.mxu0 0.0
        %3009 = vmatpush.msra.mxu0 0.0
        %3010 = vmatpush.msra.mxu0 0.0
        %3011 = vmatpush.msra.mxu0 0.0
        %3012 = vmatpush.msra.mxu0 0.0
        %3013 = vmatpush.msra.mxu0 0.0
        %3014 = vmatpush.msra.mxu0 0.0
        %3015 = vmatpush.msra.mxu0 %v2620
        %3016 = vmatmul.f32.gmra.mxu0 %v2992
        %v3017 = vpop.f32.mrf.mxu0
        %v3018 = vadd.f32 0.0, %v3017
        %3019 = vmatmul.f32.gmra.mxu0 %v2995
        %v3020 = vpop.f32.mrf.mxu0
        %v3021 = vadd.f32 0.0, %v3020
        %3022 = vmatmul.f32.gmra.mxu0 %v2998
        %v3023 = vpop.f32.mrf.mxu0
        %v3024 = vadd.f32 0.0, %v3023
        %3025 = vdwg.mxu0
        %v3026 = vadd.f32 %v2819, %v3018
        %v3027 = vadd.f32 %v2820, %v3021
        %v3028 = vadd.f32 %v2821, %v3024
        %3029 = vrot.lane.b32.xlu0 %v2543, 112
        %v3030 = vpop.permute.xlu0 %3029
        %3031 = vrot.lane.b32.xlu0 %v2546, 112
        %v3032 = vpop.permute.xlu0 %3031
        %3033 = vrot.lane.b32.xlu0 %v2549, 112
        %v3034 = vpop.permute.xlu0 %3033
        %3035 = vrot.lane.b32.xlu0 %v2577, 112
        %v3036 = vpop.permute.xlu0 %3035
        %3037 = vrot.lane.b32.xlu0 %v2580, 112
        %v3038 = vpop.permute.xlu0 %3037
        %3039 = vrot.lane.b32.xlu0 %v2583, 112
        %v3040 = vpop.permute.xlu0 %3039
        %v3041 = vsel %vm2624, %v3030, 0
        %v3043 = vsel %vm2624, %v3032, 0
        %v3045 = vsel %vm2624, %v3034, 0
        %v3047 = vsel %vm2624, %v3036, 0
        %v3049 = vsel %vm2624, %v3038, 0
        %v3051 = vsel %vm2624, %v3040, 0
        %3053 = vmatpush.xpose.msra.mxu0 0.0
        %3054 = vmatpush.xpose.msra.mxu0 0.0
        %3055 = vmatpush.xpose.msra.mxu0 0.0
        %3056 = vmatpush.xpose.msra.mxu0 0.0
        %3057 = vmatpush.xpose.msra.mxu0 0.0
        %3058 = vmatpush.xpose.msra.mxu0 0.0
        %3059 = vmatpush.xpose.msra.mxu0 0.0
        %3060 = vmatpush.xpose.msra.mxu0 0.0
        %3061 = vmatpush.xpose.msra.mxu0 0.0
        %3062 = vmatpush.xpose.msra.mxu0 0.0
        %3063 = vmatpush.xpose.msra.mxu0 0.0
        %3064 = vmatpush.xpose.msra.mxu0 0.0
        %3065 = vmatpush.xpose.msra.mxu0 0.0
        %3066 = vmatpush.xpose.msra.mxu0 %v3051
        %3067 = vmatpush.xpose.msra.mxu0 %v3049
        %3068 = vmatpush.xpose.msra.mxu0 %v3047
        %3069 = vmatmul.f32.gmra.mxu0 %v3041
        %v3070 = vpop.f32.mrf.mxu0
        %v3071 = vadd.f32 0.0, %v3070
        %3072 = vmatmul.f32.gmra.mxu0 %v3043
        %v3073 = vpop.f32.mrf.mxu0
        %v3074 = vadd.f32 0.0, %v3073
        %3075 = vmatmul.f32.gmra.mxu0 %v3045
        %v3076 = vpop.f32.mrf.mxu0
        %v3077 = vadd.f32 0.0, %v3076
        %3078 = vdwg.mxu0
        %v3079 = vsel %vm2669, %v3071, -inf
        %3080 = vmax.xlane.f32.xlu0 %v3079
        %v3081 = vpop.xlane.xlu0 %3080
        %v3082 = vsel %vm2669, %v3074, -inf
        %3083 = vmax.xlane.f32.xlu0 %v3082
        %v3084 = vpop.xlane.xlu0 %3083
        %v3085 = vsel %vm2676, %v3077, -inf
        %3086 = vmax.xlane.f32.xlu0 %v3085
        %v3087 = vpop.xlane.xlu0 %3086
        %v3088 = vsub.f32 %v3071, %v3081
        %v3089 = vsub.f32 %v3074, %v3084
        %v3090 = vsub.f32 %v3077, %v3087
        %v3091 = vmul.f32 %v3088, 1.442695
        %v3092 = vpow.pop %v3091
        %v3093 = vmul.f32 %v3089, 1.442695
        %v3094 = vpow.pop %v3093
        %v3095 = vmul.f32 %v3090, 1.442695
        %v3096 = vpow.pop %v3095
        %v3097 = vsel %vm2669, %v3092, 0.0
        %3098 = vadd.xlane.f32.xlu0 %v3097
        %v3099 = vpop.xlane.xlu0 %3098
        %v3100 = vsel %vm2669, %v3094, 0.0
        %3101 = vadd.xlane.f32.xlu0 %v3100
        %v3102 = vpop.xlane.xlu0 %3101
        %v3103 = vsel %vm2676, %v3096, 0.0
        %3104 = vadd.xlane.f32.xlu0 %v3103
        %v3105 = vpop.xlane.xlu0 %3104
        %v3106 = vrcp.pop %v3099
        %v3107 = vmul.f32 %v3099, %v3106
        %v3108 = vsub.f32 1.0, %v3107
        %v3109 = vmul.f32 %v3106, %v3108
        %v3110 = vadd.f32 %v3106, %v3109
        %vm3111 = vweird.f32 %v3099
        %vm3112 = vweird.f32 %v3106
        %vm3113 = vmor %vm3111, %vm3112
        %v3114 = vsel %vm3113, %v3106, %v3110
        %v3115 = vand.u32 2147483647, %v3099
        %vm3116 = vcmp.eq.f32.partialorder %v3115, 8.507059e+37
        %v3117 = vand.u32 %v3099, 2147483648
        %v3118 = vor.u32 1.1754944e-38, %v3117
        %v3119 = vsel %vm3116, %v3118, %v3114
        %v3120 = vmul.f32 %v3092, %v3119
        %v3121 = vrcp.pop %v3102
        %v3122 = vmul.f32 %v3102, %v3121
        %v3123 = vsub.f32 1.0, %v3122
        %v3124 = vmul.f32 %v3121, %v3123
        %v3125 = vadd.f32 %v3121, %v3124
        %vm3126 = vweird.f32 %v3102
        %vm3127 = vweird.f32 %v3121
        %vm3128 = vmor %vm3126, %vm3127
        %v3129 = vsel %vm3128, %v3121, %v3125
        %v3130 = vand.u32 2147483647, %v3102
        %vm3131 = vcmp.eq.f32.partialorder %v3130, 8.507059e+37
        %v3132 = vand.u32 %v3102, 2147483648
        %v3133 = vor.u32 1.1754944e-38, %v3132
        %v3134 = vsel %vm3131, %v3133, %v3129
        %v3135 = vmul.f32 %v3094, %v3134
        %v3136 = vrcp.pop %v3105
        %v3137 = vmul.f32 %v3105, %v3136
        %v3138 = vsub.f32 1.0, %v3137
        %v3139 = vmul.f32 %v3136, %v3138
        %v3140 = vadd.f32 %v3136, %v3139
        %vm3141 = vweird.f32 %v3105
        %vm3142 = vweird.f32 %v3136
        %vm3143 = vmor %vm3141, %vm3142
        %v3144 = vsel %vm3143, %v3136, %v3140
        %v3145 = vand.u32 2147483647, %v3105
        %vm3146 = vcmp.eq.f32.partialorder %v3145, 8.507059e+37
        %v3147 = vand.u32 %v3105, 2147483648
        %v3148 = vor.u32 1.1754944e-38, %v3147
        %v3149 = vsel %vm3146, %v3148, %v3144
        %v3150 = vmul.f32 %v3096, %v3149
        %3151 = vrot.lane.b32.xlu0 %v2611, 112
        %v3152 = vpop.permute.xlu0 %3151
        %3153 = vrot.lane.b32.xlu0 %v2614, 112
        %v3154 = vpop.permute.xlu0 %3153
        %3155 = vrot.lane.b32.xlu0 %v2617, 112
        %v3156 = vpop.permute.xlu0 %3155
        %v3160 = vsel %vm2669, %v3120, 0
        %v3163 = vsel %vm2669, %v3135, 0
        %v3166 = vsel %vm2669, %v3150, 0
        %v3168 = vsel %vm2119, %v3156, 0
        %3170 = vmatpush.msra.mxu0 0.0
        %3171 = vmatpush.msra.mxu0 0.0
        %3172 = vmatpush.msra.mxu0 0.0
        %3173 = vmatpush.msra.mxu0 0.0
        %3174 = vmatpush.msra.mxu0 0.0
        %3175 = vmatpush.msra.mxu0 0.0
        %3176 = vmatpush.msra.mxu0 0.0
        %3177 = vmatpush.msra.mxu0 0.0
        %3178 = vmatpush.msra.mxu0 0.0
        %3179 = vmatpush.msra.mxu0 0.0
        %3180 = vmatpush.msra.mxu0 0.0
        %3181 = vmatpush.msra.mxu0 0.0
        %3182 = vmatpush.msra.mxu0 0.0
        %3183 = vmatpush.msra.mxu0 %v3168
        %3184 = vmatpush.msra.mxu0 %v3154
        %3185 = vmatpush.msra.mxu0 %v3152
        %3186 = vmatmul.f32.gmra.mxu0 %v3160
        %v3187 = vpop.f32.mrf.mxu0
        %v3188 = vadd.f32 0.0, %v3187
        %3189 = vmatmul.f32.gmra.mxu0 %v3163
        %v3190 = vpop.f32.mrf.mxu0
        %v3191 = vadd.f32 0.0, %v3190
        %3192 = vmatmul.f32.gmra.mxu0 %v3166
        %v3193 = vpop.f32.mrf.mxu0
        %v3194 = vadd.f32 0.0, %v3193
        %3195 = vdwg.mxu0
        %v3197 = vsel %vm2624, %v3188, 0
        %v3200 = vsel %vm2624, %v3191, 0
        %v3203 = vsel %vm2624, %v3194, 0
        %3205 = vmatpush.msra.mxu0 0.0
        %3206 = vmatpush.msra.mxu0 0.0
        %3207 = vmatpush.msra.mxu0 0.0
        %3208 = vmatpush.msra.mxu0 0.0
        %3209 = vmatpush.msra.mxu0 0.0
        %3210 = vmatpush.msra.mxu0 0.0
        %3211 = vmatpush.msra.mxu0 0.0
        %3212 = vmatpush.msra.mxu0 0.0
        %3213 = vmatpush.msra.mxu0 0.0
        %3214 = vmatpush.msra.mxu0 0.0
        %3215 = vmatpush.msra.mxu0 0.0
        %3216 = vmatpush.msra.mxu0 0.0
        %3217 = vmatpush.msra.mxu0 0.0
        %3218 = vmatpush.msra.mxu0 0.0
        %3219 = vmatpush.msra.mxu0 0.0
        %3220 = vmatpush.msra.mxu0 %v2621
        %3221 = vmatmul.f32.gmra.mxu0 %v3197
        %v3222 = vpop.f32.mrf.mxu0
        %v3223 = vadd.f32 0.0, %v3222
        %3224 = vmatmul.f32.gmra.mxu0 %v3200
        %v3225 = vpop.f32.mrf.mxu0
        %v3226 = vadd.f32 0.0, %v3225
        %3227 = vmatmul.f32.gmra.mxu0 %v3203
        %v3228 = vpop.f32.mrf.mxu0
        %v3229 = vadd.f32 0.0, %v3228
        %3230 = vdwg.mxu0
        %v3231 = vadd.f32 %v3026, %v3223
        %v3232 = vadd.f32 %v3027, %v3226
        %v3233 = vadd.f32 %v3028, %v3229
        %3234 = vrot.lane.b32.xlu0 %v2543, 104
        %v3235 = vpop.permute.xlu0 %3234
        %3236 = vrot.lane.b32.xlu0 %v2546, 104
        %v3237 = vpop.permute.xlu0 %3236
        %3238 = vrot.lane.b32.xlu0 %v2549, 104
        %v3239 = vpop.permute.xlu0 %3238
        %3240 = vrot.lane.b32.xlu0 %v2577, 104
        %v3241 = vpop.permute.xlu0 %3240
        %3242 = vrot.lane.b32.xlu0 %v2580, 104
        %v3243 = vpop.permute.xlu0 %3242
        %3244 = vrot.lane.b32.xlu0 %v2583, 104
        %v3245 = vpop.permute.xlu0 %3244
        %v3246 = vsel %vm2624, %v3235, 0
        %v3248 = vsel %vm2624, %v3237, 0
        %v3250 = vsel %vm2624, %v3239, 0
        %v3252 = vsel %vm2624, %v3241, 0
        %v3254 = vsel %vm2624, %v3243, 0
        %v3256 = vsel %vm2624, %v3245, 0
        %3258 = vmatpush.xpose.msra.mxu0 0.0
        %3259 = vmatpush.xpose.msra.mxu0 0.0
        %3260 = vmatpush.xpose.msra.mxu0 0.0
        %3261 = vmatpush.xpose.msra.mxu0 0.0
        %3262 = vmatpush.xpose.msra.mxu0 0.0
        %3263 = vmatpush.xpose.msra.mxu0 0.0
        %3264 = vmatpush.xpose.msra.mxu0 0.0
        %3265 = vmatpush.xpose.msra.mxu0 0.0
        %3266 = vmatpush.xpose.msra.mxu0 0.0
        %3267 = vmatpush.xpose.msra.mxu0 0.0
        %3268 = vmatpush.xpose.msra.mxu0 0.0
        %3269 = vmatpush.xpose.msra.mxu0 0.0
        %3270 = vmatpush.xpose.msra.mxu0 0.0
        %3271 = vmatpush.xpose.msra.mxu0 %v3256
        %3272 = vmatpush.xpose.msra.mxu0 %v3254
        %3273 = vmatpush.xpose.msra.mxu0 %v3252
        %3274 = vmatmul.f32.gmra.mxu0 %v3246
        %v3275 = vpop.f32.mrf.mxu0
        %v3276 = vadd.f32 0.0, %v3275
        %3277 = vmatmul.f32.gmra.mxu0 %v3248
        %v3278 = vpop.f32.mrf.mxu0
        %v3279 = vadd.f32 0.0, %v3278
        %3280 = vmatmul.f32.gmra.mxu0 %v3250
        %v3281 = vpop.f32.mrf.mxu0
        %v3282 = vadd.f32 0.0, %v3281
        %3283 = vdwg.mxu0
        %v3284 = vsel %vm2669, %v3276, -inf
        %3285 = vmax.xlane.f32.xlu0 %v3284
        %v3286 = vpop.xlane.xlu0 %3285
        %v3287 = vsel %vm2669, %v3279, -inf
        %3288 = vmax.xlane.f32.xlu0 %v3287
        %v3289 = vpop.xlane.xlu0 %3288
        %v3290 = vsel %vm2676, %v3282, -inf
        %3291 = vmax.xlane.f32.xlu0 %v3290
        %v3292 = vpop.xlane.xlu0 %3291
        %v3293 = vsub.f32 %v3276, %v3286
        %v3294 = vsub.f32 %v3279, %v3289
        %v3295 = vsub.f32 %v3282, %v3292
        %v3296 = vmul.f32 %v3293, 1.442695
        %v3297 = vpow.pop %v3296
        %v3298 = vmul.f32 %v3294, 1.442695
        %v3299 = vpow.pop %v3298
        %v3300 = vmul.f32 %v3295, 1.442695
        %v3301 = vpow.pop %v3300
        %v3302 = vsel %vm2669, %v3297, 0.0
        %3303 = vadd.xlane.f32.xlu0 %v3302
        %v3304 = vpop.xlane.xlu0 %3303
        %v3305 = vsel %vm2669, %v3299, 0.0
        %3306 = vadd.xlane.f32.xlu0 %v3305
        %v3307 = vpop.xlane.xlu0 %3306
        %v3308 = vsel %vm2676, %v3301, 0.0
        %3309 = vadd.xlane.f32.xlu0 %v3308
        %v3310 = vpop.xlane.xlu0 %3309
        %v3311 = vrcp.pop %v3304
        %v3312 = vmul.f32 %v3304, %v3311
        %v3313 = vsub.f32 1.0, %v3312
        %v3314 = vmul.f32 %v3311, %v3313
        %v3315 = vadd.f32 %v3311, %v3314
        %vm3316 = vweird.f32 %v3304
        %vm3317 = vweird.f32 %v3311
        %vm3318 = vmor %vm3316, %vm3317
        %v3319 = vsel %vm3318, %v3311, %v3315
        %v3320 = vand.u32 2147483647, %v3304
        %vm3321 = vcmp.eq.f32.partialorder %v3320, 8.507059e+37
        %v3322 = vand.u32 %v3304, 2147483648
        %v3323 = vor.u32 1.1754944e-38, %v3322
        %v3324 = vsel %vm3321, %v3323, %v3319
        %v3325 = vmul.f32 %v3297, %v3324
        %v3326 = vrcp.pop %v3307
        %v3327 = vmul.f32 %v3307, %v3326
        %v3328 = vsub.f32 1.0, %v3327
        %v3329 = vmul.f32 %v3326, %v3328
        %v3330 = vadd.f32 %v3326, %v3329
        %vm3331 = vweird.f32 %v3307
        %vm3332 = vweird.f32 %v3326
        %vm3333 = vmor %vm3331, %vm3332
        %v3334 = vsel %vm3333, %v3326, %v3330
        %v3335 = vand.u32 2147483647, %v3307
        %vm3336 = vcmp.eq.f32.partialorder %v3335, 8.507059e+37
        %v3337 = vand.u32 %v3307, 2147483648
        %v3338 = vor.u32 1.1754944e-38, %v3337
        %v3339 = vsel %vm3336, %v3338, %v3334
        %v3340 = vmul.f32 %v3299, %v3339
        %v3341 = vrcp.pop %v3310
        %v3342 = vmul.f32 %v3310, %v3341
        %v3343 = vsub.f32 1.0, %v3342
        %v3344 = vmul.f32 %v3341, %v3343
        %v3345 = vadd.f32 %v3341, %v3344
        %vm3346 = vweird.f32 %v3310
        %vm3347 = vweird.f32 %v3341
        %vm3348 = vmor %vm3346, %vm3347
        %v3349 = vsel %vm3348, %v3341, %v3345
        %v3350 = vand.u32 2147483647, %v3310
        %vm3351 = vcmp.eq.f32.partialorder %v3350, 8.507059e+37
        %v3352 = vand.u32 %v3310, 2147483648
        %v3353 = vor.u32 1.1754944e-38, %v3352
        %v3354 = vsel %vm3351, %v3353, %v3349
        %v3355 = vmul.f32 %v3301, %v3354
        %3356 = vrot.lane.b32.xlu0 %v2611, 104
        %v3357 = vpop.permute.xlu0 %3356
        %3358 = vrot.lane.b32.xlu0 %v2614, 104
        %v3359 = vpop.permute.xlu0 %3358
        %3360 = vrot.lane.b32.xlu0 %v2617, 104
        %v3361 = vpop.permute.xlu0 %3360
        %v3365 = vsel %vm2669, %v3325, 0
        %v3368 = vsel %vm2669, %v3340, 0
        %v3371 = vsel %vm2669, %v3355, 0
        %v3373 = vsel %vm2119, %v3361, 0
        %3375 = vmatpush.msra.mxu0 0.0
        %3376 = vmatpush.msra.mxu0 0.0
        %3377 = vmatpush.msra.mxu0 0.0
        %3378 = vmatpush.msra.mxu0 0.0
        %3379 = vmatpush.msra.mxu0 0.0
        %3380 = vmatpush.msra.mxu0 0.0
        %3381 = vmatpush.msra.mxu0 0.0
        %3382 = vmatpush.msra.mxu0 0.0
        %3383 = vmatpush.msra.mxu0 0.0
        %3384 = vmatpush.msra.mxu0 0.0
        %3385 = vmatpush.msra.mxu0 0.0
        %3386 = vmatpush.msra.mxu0 0.0
        %3387 = vmatpush.msra.mxu0 0.0
        %3388 = vmatpush.msra.mxu0 %v3373
        %3389 = vmatpush.msra.mxu0 %v3359
        %3390 = vmatpush.msra.mxu0 %v3357
        %3391 = vmatmul.f32.gmra.mxu0 %v3365
        %v3392 = vpop.f32.mrf.mxu0
        %v3393 = vadd.f32 0.0, %v3392
        %3394 = vmatmul.f32.gmra.mxu0 %v3368
        %v3395 = vpop.f32.mrf.mxu0
        %v3396 = vadd.f32 0.0, %v3395
        %3397 = vmatmul.f32.gmra.mxu0 %v3371
        %v3398 = vpop.f32.mrf.mxu0
        %v3399 = vadd.f32 0.0, %v3398
        %3400 = vdwg.mxu0
        %v3402 = vsel %vm2624, %v3393, 0
        %v3405 = vsel %vm2624, %v3396, 0
        %v3408 = vsel %vm2624, %v3399, 0
        %3410 = vmatpush.msra.mxu0 0.0
        %3411 = vmatpush.msra.mxu0 0.0
        %3412 = vmatpush.msra.mxu0 0.0
        %3413 = vmatpush.msra.mxu0 0.0
        %3414 = vmatpush.msra.mxu0 0.0
        %3415 = vmatpush.msra.mxu0 0.0
        %3416 = vmatpush.msra.mxu0 0.0
        %3417 = vmatpush.msra.mxu0 0.0
        %3418 = vmatpush.msra.mxu0 0.0
        %3419 = vmatpush.msra.mxu0 0.0
        %3420 = vmatpush.msra.mxu0 0.0
        %3421 = vmatpush.msra.mxu0 0.0
        %3422 = vmatpush.msra.mxu0 0.0
        %3423 = vmatpush.msra.mxu0 0.0
        %3424 = vmatpush.msra.mxu0 0.0
        %3425 = vmatpush.msra.mxu0 %v2622
        %3426 = vmatmul.f32.gmra.mxu0 %v3402
        %v3427 = vpop.f32.mrf.mxu0
        %v3428 = vadd.f32 0.0, %v3427
        %3429 = vmatmul.f32.gmra.mxu0 %v3405
        %v3430 = vpop.f32.mrf.mxu0
        %v3431 = vadd.f32 0.0, %v3430
        %3432 = vmatmul.f32.gmra.mxu0 %v3408
        %v3433 = vpop.f32.mrf.mxu0
        %v3434 = vadd.f32 0.0, %v3433
        %3435 = vdwg.mxu0
        %v3436 = vadd.f32 %v3231, %v3428
        %v3437 = vadd.f32 %v3232, %v3431
        %v3438 = vadd.f32 %v3233, %v3434
        %v3439 = vadd.f32 %v2425, %v3436
        %v3440 = vadd.f32 %v2426, %v3437
        %v3441 = vadd.f32 %v2427, %v3438
        %v3442 = vsel %vm2175, %v3439, 0.0
        %3443 = vadd.xlane.f32.xlu0 %v3442
        %v3444 = vpop.xlane.xlu0 %3443
        %v3445 = vsel %vm2175, %v3440, 0.0
        %3446 = vadd.xlane.f32.xlu0 %v3445
        %v3447 = vpop.xlane.xlu0 %3446
        %v3448 = vsel %vm2189, %v3441, 0.0
        %3449 = vadd.xlane.f32.xlu0 %v3448
        %v3450 = vpop.xlane.xlu0 %3449
        %v3451 = vmul.f32 %v3444, %v2199
        %v3452 = vmul.f32 %v3447, %v2199
        %v3453 = vmul.f32 %v3450, %v2199
        %v3454 = vsub.f32 %v3439, %v3451
        %v3455 = vsub.f32 %v3440, %v3452
        %v3456 = vsub.f32 %v3441, %v3453
        %v3457 = vmul.f32 %v3454, %v3454
        %v3458 = vmul.f32 %v3455, %v3455
        %v3459 = vmul.f32 %v3456, %v3456
        %v3460 = vsel %vm2175, %v3457, 0.0
        %3461 = vadd.xlane.f32.xlu0 %v3460
        %v3462 = vpop.xlane.xlu0 %3461
        %v3463 = vsel %vm2175, %v3458, 0.0
        %3464 = vadd.xlane.f32.xlu0 %v3463
        %v3465 = vpop.xlane.xlu0 %3464
        %v3466 = vsel %vm2189, %v3459, 0.0
        %3467 = vadd.xlane.f32.xlu0 %v3466
        %v3468 = vpop.xlane.xlu0 %3467
        %v3469 = vmul.f32 %v3462, %v2199
        %v3470 = vmul.f32 %v3465, %v2199
        %v3471 = vmul.f32 %v3468, %v2199
        %v3472 = vadd.f32 %v3469, 1e-05
        %v3473 = vadd.f32 %v3470, 1e-05
        %v3474 = vadd.f32 %v3471, 1e-05
        %v3475 = vrsqrt.pop %v3472
        %v3476 = vmul.f32 %v3475, %v3472
        %v3477 = vmul.f32 %v3476, %v3475
        %v3478 = vmul.f32 0.5, %v3477
        %v3479 = vsub.f32 1.5, %v3478
        %v3480 = vmul.f32 %v3475, %v3479
        %vm3481 = vweird.f32 %v3472
        %vm3482 = vweird.f32 %v3475
        %vm3483 = vmor %vm3481, %vm3482
        %v3484 = vsel %vm3483, %v3475, %v3480
        %v3485 = vrsqrt.pop %v3473
        %v3486 = vmul.f32 %v3485, %v3473
        %v3487 = vmul.f32 %v3486, %v3485
        %v3488 = vmul.f32 0.5, %v3487
        %v3489 = vsub.f32 1.5, %v3488
        %v3490 = vmul.f32 %v3485, %v3489
        %vm3491 = vweird.f32 %v3473
        %vm3492 = vweird.f32 %v3485
        %vm3493 = vmor %vm3491, %vm3492
        %v3494 = vsel %vm3493, %v3485, %v3490
        %v3495 = vrsqrt.pop %v3474
        %v3496 = vmul.f32 %v3495, %v3474
        %v3497 = vmul.f32 %v3496, %v3495
        %v3498 = vmul.f32 0.5, %v3497
        %v3499 = vsub.f32 1.5, %v3498
        %v3500 = vmul.f32 %v3495, %v3499
        %vm3501 = vweird.f32 %v3474
        %vm3502 = vweird.f32 %v3495
        %vm3503 = vmor %vm3501, %vm3502
        %v3504 = vsel %vm3503, %v3495, %v3500
        %v3505 = vmul.f32 %v3454, %v3484
        %v3506 = vmul.f32 %v3455, %v3494
        %v3507 = vmul.f32 %v3456, %v3504
        %v3508 = vld [vmem:[%s41] sm:$0x1]
        %v3510 = vperm.slane %v3508, 0
        %v3512 = vmul.f32 %v3505, %v3510
        %v3513 = vmul.f32 %v3506, %v3510
        %v3514 = vmul.f32 %v3507, %v3510
        %v3515 = vld [vmem:[%s43] sm:$0x1]
        %v3517 = vperm.slane %v3515, 0
        %v3519 = vadd.f32 %v3512, %v3517
        %v3520 = vadd.f32 %v3513, %v3517
        %v3521 = vadd.f32 %v3514, %v3517
        %v3522 = vld [vmem:[%s45] sm:$0xff]
        %v3523 = vld [vmem:[%s45 + $0x8] sm:$0xff]
        %v3524 = vld [vmem:[%s45 + $0x10] sm:$0xff]
        %v3525 = vld [vmem:[%s45 + $0x18] sm:$0xff]
        %v3526 = vld [vmem:[%s47] sm:$0x1]
        %v3528 = vperm.slane %v3526, 0
        %v3531 = vsel %vm2175, %v3519, 0
        %v3534 = vsel %vm2175, %v3520, 0
        %v3537 = vsel %vm2175, %v3521, 0
        %3539 = vmatpush.msra.mxu0 0.0
        %3540 = vmatpush.msra.mxu0 0.0
        %3541 = vmatpush.msra.mxu0 0.0
        %3542 = vmatpush.msra.mxu0 0.0
        %3543 = vmatpush.msra.mxu0 0.0
        %3544 = vmatpush.msra.mxu0 0.0
        %3545 = vmatpush.msra.mxu0 0.0
        %3546 = vmatpush.msra.mxu0 0.0
        %3547 = vmatpush.msra.mxu0 0.0
        %3548 = vmatpush.msra.mxu0 0.0
        %3549 = vmatpush.msra.mxu0 0.0
        %3550 = vmatpush.msra.mxu0 0.0
        %3551 = vmatpush.msra.mxu0 %v3525
        %3552 = vmatpush.msra.mxu0 %v3524
        %3553 = vmatpush.msra.mxu0 %v3523
        %3554 = vmatpush.msra.mxu0 %v3522
        %3555 = vmatmul.f32.gmra.mxu0 %v3531
        %v3556 = vpop.f32.mrf.mxu0
        %v3557 = vadd.f32 %v3528, %v3556
        %3558 = vmatmul.f32.gmra.mxu0 %v3534
        %v3559 = vpop.f32.mrf.mxu0
        %v3560 = vadd.f32 %v3528, %v3559
        %3561 = vmatmul.f32.gmra.mxu0 %v3537
        %v3562 = vpop.f32.mrf.mxu0
        %v3563 = vadd.f32 %v3528, %v3562
        %3564 = vdwg.mxu0
        %v3565 = vld [vmem:[%s49] sm:$0xff]
        %v3566 = vld [vmem:[%s49 + $0x8] sm:$0xff]
        %v3567 = vld [vmem:[%s49 + $0x10] sm:$0xff]
        %v3568 = vld [vmem:[%s49 + $0x18] sm:$0xff]
        %v3569 = vld [vmem:[%s51] sm:$0x1]
        %v3571 = vperm.slane %v3569, 0
        %3573 = vmatpush.msra.mxu0 0.0
        %3574 = vmatpush.msra.mxu0 0.0
        %3575 = vmatpush.msra.mxu0 0.0
        %3576 = vmatpush.msra.mxu0 0.0
        %3577 = vmatpush.msra.mxu0 0.0
        %3578 = vmatpush.msra.mxu0 0.0
        %3579 = vmatpush.msra.mxu0 0.0
        %3580 = vmatpush.msra.mxu0 0.0
        %3581 = vmatpush.msra.mxu0 0.0
        %3582 = vmatpush.msra.mxu0 0.0
        %3583 = vmatpush.msra.mxu0 0.0
        %3584 = vmatpush.msra.mxu0 0.0
        %3585 = vmatpush.msra.mxu0 %v3568
        %3586 = vmatpush.msra.mxu0 %v3567
        %3587 = vmatpush.msra.mxu0 %v3566
        %3588 = vmatpush.msra.mxu0 %v3565
        %3589 = vmatmul.f32.gmra.mxu0 %v3531
        %v3590 = vpop.f32.mrf.mxu0
        %v3591 = vadd.f32 %v3571, %v3590
        %3592 = vmatmul.f32.gmra.mxu0 %v3534
        %v3593 = vpop.f32.mrf.mxu0
        %v3594 = vadd.f32 %v3571, %v3593
        %3595 = vmatmul.f32.gmra.mxu0 %v3537
        %v3596 = vpop.f32.mrf.mxu0
        %v3597 = vadd.f32 %v3571, %v3596
        %3598 = vdwg.mxu0
        %v3599 = vsub.f32 0.0, %v3591
        %v3600 = vsub.f32 0.0, %v3594
        %v3601 = vsub.f32 0.0, %v3597
        %v3602 = vmul.f32 %v3599, 1.442695
        %v3603 = vpow.pop %v3602
        %v3604 = vmul.f32 %v3600, 1.442695
        %v3605 = vpow.pop %v3604
        %v3606 = vmul.f32 %v3601, 1.442695
        %v3607 = vpow.pop %v3606
        %v3608 = vadd.f32 %v3603, 1.0
        %v3609 = vadd.f32 %v3605, 1.0
        %v3610 = vadd.f32 %v3607, 1.0
        %v3611 = vrcp.pop %v3608
        %v3612 = vmul.f32 %v3608, %v3611
        %v3613 = vsub.f32 1.0, %v3612
        %v3614 = vmul.f32 %v3611, %v3613
        %v3615 = vadd.f32 %v3611, %v3614
        %vm3616 = vweird.f32 %v3608
        %vm3617 = vweird.f32 %v3611
        %vm3618 = vmor %vm3616, %vm3617
        %v3619 = vsel %vm3618, %v3611, %v3615
        %v3620 = vand.u32 2147483647, %v3608
        %vm3621 = vcmp.eq.f32.partialorder %v3620, 8.507059e+37
        %v3622 = vand.u32 %v3608, 2147483648
        %v3623 = vor.u32 1.1754944e-38, %v3622
        %v3624 = vsel %vm3621, %v3623, %v3619
        %v3625 = vmul.f32 1.0, %v3624
        %v3626 = vrcp.pop %v3609
        %v3627 = vmul.f32 %v3609, %v3626
        %v3628 = vsub.f32 1.0, %v3627
        %v3629 = vmul.f32 %v3626, %v3628
        %v3630 = vadd.f32 %v3626, %v3629
        %vm3631 = vweird.f32 %v3609
        %vm3632 = vweird.f32 %v3626
        %vm3633 = vmor %vm3631, %vm3632
        %v3634 = vsel %vm3633, %v3626, %v3630
        %v3635 = vand.u32 2147483647, %v3609
        %vm3636 = vcmp.eq.f32.partialorder %v3635, 8.507059e+37
        %v3637 = vand.u32 %v3609, 2147483648
        %v3638 = vor.u32 1.1754944e-38, %v3637
        %v3639 = vsel %vm3636, %v3638, %v3634
        %v3640 = vmul.f32 1.0, %v3639
        %v3641 = vrcp.pop %v3610
        %v3642 = vmul.f32 %v3610, %v3641
        %v3643 = vsub.f32 1.0, %v3642
        %v3644 = vmul.f32 %v3641, %v3643
        %v3645 = vadd.f32 %v3641, %v3644
        %vm3646 = vweird.f32 %v3610
        %vm3647 = vweird.f32 %v3641
        %vm3648 = vmor %vm3646, %vm3647
        %v3649 = vsel %vm3648, %v3641, %v3645
        %v3650 = vand.u32 2147483647, %v3610
        %vm3651 = vcmp.eq.f32.partialorder %v3650, 8.507059e+37
        %v3652 = vand.u32 %v3610, 2147483648
        %v3653 = vor.u32 1.1754944e-38, %v3652
        %v3654 = vsel %vm3651, %v3653, %v3649
        %v3655 = vmul.f32 1.0, %v3654
        %v3656 = vmul.f32 %v3557, %v3625
        %v3657 = vmul.f32 %v3560, %v3640
        %v3658 = vmul.f32 %v3563, %v3655
        %3659 = vst.msk [vmem:[#allocation2 + $0xf] sm:$0xff] %vm2175, %v3656
        %3660 = vst.msk [vmem:[#allocation2 + $0x17] sm:$0xff] %vm2175, %v3657
        %3661 = vst.msk [vmem:[#allocation2 + $0x1f] sm:$0x1] %vm2189, %v3658
        %v3662 = vld [vmem:[%s53] sm:$0xff]
        %v3663 = vld [vmem:[%s53 + $0x8] sm:$0xff]
        %v3664 = vld [vmem:[%s53 + $0x10] sm:$0xff]
        %v3665 = vld [vmem:[%s53 + $0x18] sm:$0x7f]
        %v3666 = vld [vmem:[#allocation2] sm:$0xff]
        %v3667 = vld [vmem:[#allocation2 + $0x8] sm:$0xff]
        %v3668 = vld [vmem:[#allocation2 + $0x10] sm:$0x1]
        %v3669 = vperm.slane %v3662, 0
        %v3670 = vmul.f32 %v3666, %v3669
        %v3671 = vmul.f32 %v3667, %v3669
        %v3672 = vmul.f32 %v3668, %v3669
        %v3673 = vadd.f32 %v3670, 0.0
        %v3674 = vadd.f32 %v3671, 0.0
        %v3675 = vadd.f32 %v3672, 0.0
        %v3676 = vld [vmem:[#allocation2 + $0x1] sm:$0xff]
        %v3677 = vld [vmem:[#allocation2 + $0x9] sm:$0xff]
        %v3678 = vld [vmem:[#allocation2 + $0x11] sm:$0x1]
        %v3679 = vperm.slane %v3662, 1
        %v3680 = vmul.f32 %v3676, %v3679
        %v3681 = vmul.f32 %v3677, %v3679
        %v3682 = vmul.f32 %v3678, %v3679
        %v3683 = vadd.f32 %v3673, %v3680
        %v3684 = vadd.f32 %v3674, %v3681
        %v3685 = vadd.f32 %v3675, %v3682
        %v3686 = vld [vmem:[#allocation2 + $0x2] sm:$0xff]
        %v3687 = vld [vmem:[#allocation2 + $0xa] sm:$0xff]
        %v3688 = vld [vmem:[#allocation2 + $0x12] sm:$0x1]
        %v3689 = vperm.slane %v3662, 2
        %v3690 = vmul.f32 %v3686, %v3689
        %v3691 = vmul.f32 %v3687, %v3689
        %v3692 = vmul.f32 %v3688, %v3689
        %v3693 = vadd.f32 %v3683, %v3690
        %v3694 = vadd.f32 %v3684, %v3691
        %v3695 = vadd.f32 %v3685, %v3692
        %v3696 = vld [vmem:[#allocation2 + $0x3] sm:$0xff]
        %v3697 = vld [vmem:[#allocation2 + $0xb] sm:$0xff]
        %v3698 = vld [vmem:[#allocation2 + $0x13] sm:$0x1]
        %v3699 = vperm.slane %v3662, 3
        %v3700 = vmul.f32 %v3696, %v3699
        %v3701 = vmul.f32 %v3697, %v3699
        %v3702 = vmul.f32 %v3698, %v3699
        %v3703 = vadd.f32 %v3693, %v3700
        %v3704 = vadd.f32 %v3694, %v3701
        %v3705 = vadd.f32 %v3695, %v3702
        %v3706 = vld [vmem:[#allocation2 + $0x4] sm:$0xff]
        %v3707 = vld [vmem:[#allocation2 + $0xc] sm:$0xff]
        %v3708 = vld [vmem:[#allocation2 + $0x14] sm:$0x1]
        %v3709 = vperm.slane %v3662, 4
        %v3710 = vmul.f32 %v3706, %v3709
        %v3711 = vmul.f32 %v3707, %v3709
        %v3712 = vmul.f32 %v3708, %v3709
        %v3713 = vadd.f32 %v3703, %v3710
        %v3714 = vadd.f32 %v3704, %v3711
        %v3715 = vadd.f32 %v3705, %v3712
        %v3716 = vld [vmem:[#allocation2 + $0x5] sm:$0xff]
        %v3717 = vld [vmem:[#allocation2 + $0xd] sm:$0xff]
        %v3718 = vld [vmem:[#allocation2 + $0x15] sm:$0x1]
        %v3719 = vperm.slane %v3662, 5
        %v3720 = vmul.f32 %v3716, %v3719
        %v3721 = vmul.f32 %v3717, %v3719
        %v3722 = vmul.f32 %v3718, %v3719
        %v3723 = vadd.f32 %v3713, %v3720
        %v3724 = vadd.f32 %v3714, %v3721
        %v3725 = vadd.f32 %v3715, %v3722
        %v3726 = vld [vmem:[#allocation2 + $0x6] sm:$0xff]
        %v3727 = vld [vmem:[#allocation2 + $0xe] sm:$0xff]
        %v3728 = vld [vmem:[#allocation2 + $0x16] sm:$0x1]
        %v3729 = vperm.slane %v3662, 6
        %v3730 = vmul.f32 %v3726, %v3729
        %v3731 = vmul.f32 %v3727, %v3729
        %v3732 = vmul.f32 %v3728, %v3729
        %v3733 = vadd.f32 %v3723, %v3730
        %v3734 = vadd.f32 %v3724, %v3731
        %v3735 = vadd.f32 %v3725, %v3732
        %v3736 = vld [vmem:[#allocation2 + $0x7] sm:$0xff]
        %v3737 = vld [vmem:[#allocation2 + $0xf] sm:$0xff]
        %v3738 = vld [vmem:[#allocation2 + $0x17] sm:$0x1]
        %v3739 = vperm.slane %v3662, 7
        %v3740 = vmul.f32 %v3736, %v3739
        %v3741 = vmul.f32 %v3737, %v3739
        %v3742 = vmul.f32 %v3738, %v3739
        %v3743 = vadd.f32 %v3733, %v3740
        %v3744 = vadd.f32 %v3734, %v3741
        %v3745 = vadd.f32 %v3735, %v3742
        %v3746 = vld [vmem:[#allocation2 + $0x10] sm:$0xff]
        %v3747 = vld [vmem:[#allocation2 + $0x18] sm:$0x1]
        %v3748 = vperm.slane %v3663, 0
        %v3749 = vmul.f32 %v3667, %v3748
        %v3750 = vmul.f32 %v3746, %v3748
        %v3751 = vmul.f32 %v3747, %v3748
        %v3752 = vadd.f32 %v3743, %v3749
        %v3753 = vadd.f32 %v3744, %v3750
        %v3754 = vadd.f32 %v3745, %v3751
        %v3755 = vld [vmem:[#allocation2 + $0x11] sm:$0xff]
        %v3756 = vld [vmem:[#allocation2 + $0x19] sm:$0x1]
        %v3757 = vperm.slane %v3663, 1
        %v3758 = vmul.f32 %v3677, %v3757
        %v3759 = vmul.f32 %v3755, %v3757
        %v3760 = vmul.f32 %v3756, %v3757
        %v3761 = vadd.f32 %v3752, %v3758
        %v3762 = vadd.f32 %v3753, %v3759
        %v3763 = vadd.f32 %v3754, %v3760
        %v3764 = vld [vmem:[#allocation2 + $0x12] sm:$0xff]
        %v3765 = vld [vmem:[#allocation2 + $0x1a] sm:$0x1]
        %v3766 = vperm.slane %v3663, 2
        %v3767 = vmul.f32 %v3687, %v3766
        %v3768 = vmul.f32 %v3764, %v3766
        %v3769 = vmul.f32 %v3765, %v3766
        %v3770 = vadd.f32 %v3761, %v3767
        %v3771 = vadd.f32 %v3762, %v3768
        %v3772 = vadd.f32 %v3763, %v3769
        %v3773 = vld [vmem:[#allocation2 + $0x13] sm:$0xff]
        %v3774 = vld [vmem:[#allocation2 + $0x1b] sm:$0x1]
        %v3775 = vperm.slane %v3663, 3
        %v3776 = vmul.f32 %v3697, %v3775
        %v3777 = vmul.f32 %v3773, %v3775
        %v3778 = vmul.f32 %v3774, %v3775
        %v3779 = vadd.f32 %v3770, %v3776
        %v3780 = vadd.f32 %v3771, %v3777
        %v3781 = vadd.f32 %v3772, %v3778
        %v3782 = vld [vmem:[#allocation2 + $0x14] sm:$0xff]
        %v3783 = vld [vmem:[#allocation2 + $0x1c] sm:$0x1]
        %v3784 = vperm.slane %v3663, 4
        %v3785 = vmul.f32 %v3707, %v3784
        %v3786 = vmul.f32 %v3782, %v3784
        %v3787 = vmul.f32 %v3783, %v3784
        %v3788 = vadd.f32 %v3779, %v3785
        %v3789 = vadd.f32 %v3780, %v3786
        %v3790 = vadd.f32 %v3781, %v3787
        %v3791 = vld [vmem:[#allocation2 + $0x15] sm:$0xff]
        %v3792 = vld [vmem:[#allocation2 + $0x1d] sm:$0x1]
        %v3793 = vperm.slane %v3663, 5
        %v3794 = vmul.f32 %v3717, %v3793
        %v3795 = vmul.f32 %v3791, %v3793
        %v3796 = vmul.f32 %v3792, %v3793
        %v3797 = vadd.f32 %v3788, %v3794
        %v3798 = vadd.f32 %v3789, %v3795
        %v3799 = vadd.f32 %v3790, %v3796
        %v3800 = vld [vmem:[#allocation2 + $0x16] sm:$0xff]
        %v3801 = vld [vmem:[#allocation2 + $0x1e] sm:$0x1]
        %v3802 = vperm.slane %v3663, 6
        %v3803 = vmul.f32 %v3727, %v3802
        %v3804 = vmul.f32 %v3800, %v3802
        %v3805 = vmul.f32 %v3801, %v3802
        %v3806 = vadd.f32 %v3797, %v3803
        %v3807 = vadd.f32 %v3798, %v3804
        %v3808 = vadd.f32 %v3799, %v3805
        %v3809 = vld [vmem:[#allocation2 + $0x17] sm:$0xff]
        %v3810 = vld [vmem:[#allocation2 + $0x1f] sm:$0x1]
        %v3811 = vperm.slane %v3663, 7
        %v3812 = vmul.f32 %v3737, %v3811
        %v3813 = vmul.f32 %v3809, %v3811
        %v3814 = vmul.f32 %v3810, %v3811
        %v3815 = vadd.f32 %v3806, %v3812
        %v3816 = vadd.f32 %v3807, %v3813
        %v3817 = vadd.f32 %v3808, %v3814
        %v3818 = vld [vmem:[#allocation2 + $0x18] sm:$0xff]
        %v3819 = vld [vmem:[#allocation2 + $0x20] sm:$0x1]
        %v3820 = vperm.slane %v3664, 0
        %v3821 = vmul.f32 %v3746, %v3820
        %v3822 = vmul.f32 %v3818, %v3820
        %v3823 = vmul.f32 %v3819, %v3820
        %v3824 = vadd.f32 %v3815, %v3821
        %v3825 = vadd.f32 %v3816, %v3822
        %v3826 = vadd.f32 %v3817, %v3823
        %v3827 = vld [vmem:[#allocation2 + $0x19] sm:$0xff]
        %v3828 = vld [vmem:[#allocation2 + $0x21] sm:$0x1]
        %v3829 = vperm.slane %v3664, 1
        %v3830 = vmul.f32 %v3755, %v3829
        %v3831 = vmul.f32 %v3827, %v3829
        %v3832 = vmul.f32 %v3828, %v3829
        %v3833 = vadd.f32 %v3824, %v3830
        %v3834 = vadd.f32 %v3825, %v3831
        %v3835 = vadd.f32 %v3826, %v3832
        %v3836 = vld [vmem:[#allocation2 + $0x1a] sm:$0xff]
        %v3837 = vld [vmem:[#allocation2 + $0x22] sm:$0x1]
        %v3838 = vperm.slane %v3664, 2
        %v3839 = vmul.f32 %v3764, %v3838
        %v3840 = vmul.f32 %v3836, %v3838
        %v3841 = vmul.f32 %v3837, %v3838
        %v3842 = vadd.f32 %v3833, %v3839
        %v3843 = vadd.f32 %v3834, %v3840
        %v3844 = vadd.f32 %v3835, %v3841
        %v3845 = vld [vmem:[#allocation2 + $0x1b] sm:$0xff]
        %v3846 = vld [vmem:[#allocation2 + $0x23] sm:$0x1]
        %v3847 = vperm.slane %v3664, 3
        %v3848 = vmul.f32 %v3773, %v3847
        %v3849 = vmul.f32 %v3845, %v3847
        %v3850 = vmul.f32 %v3846, %v3847
        %v3851 = vadd.f32 %v3842, %v3848
        %v3852 = vadd.f32 %v3843, %v3849
        %v3853 = vadd.f32 %v3844, %v3850
        %v3854 = vld [vmem:[#allocation2 + $0x1c] sm:$0xff]
        %v3855 = vld [vmem:[#allocation2 + $0x24] sm:$0x1]
        %v3856 = vperm.slane %v3664, 4
        %v3857 = vmul.f32 %v3782, %v3856
        %v3858 = vmul.f32 %v3854, %v3856
        %v3859 = vmul.f32 %v3855, %v3856
        %v3860 = vadd.f32 %v3851, %v3857
        %v3861 = vadd.f32 %v3852, %v3858
        %v3862 = vadd.f32 %v3853, %v3859
        %v3863 = vld [vmem:[#allocation2 + $0x1d] sm:$0xff]
        %v3864 = vld [vmem:[#allocation2 + $0x25] sm:$0x1]
        %v3865 = vperm.slane %v3664, 5
        %v3866 = vmul.f32 %v3791, %v3865
        %v3867 = vmul.f32 %v3863, %v3865
        %v3868 = vmul.f32 %v3864, %v3865
        %v3869 = vadd.f32 %v3860, %v3866
        %v3870 = vadd.f32 %v3861, %v3867
        %v3871 = vadd.f32 %v3862, %v3868
        %v3872 = vld [vmem:[#allocation2 + $0x1e] sm:$0xff]
        %v3873 = vld [vmem:[#allocation2 + $0x26] sm:$0x1]
        %v3874 = vperm.slane %v3664, 6
        %v3875 = vmul.f32 %v3800, %v3874
        %v3876 = vmul.f32 %v3872, %v3874
        %v3877 = vmul.f32 %v3873, %v3874
        %v3878 = vadd.f32 %v3869, %v3875
        %v3879 = vadd.f32 %v3870, %v3876
        %v3880 = vadd.f32 %v3871, %v3877
        %v3881 = vld [vmem:[#allocation2 + $0x1f] sm:$0xff]
        %v3882 = vld [vmem:[#allocation2 + $0x27] sm:$0x1]
        %v3883 = vperm.slane %v3664, 7
        %v3884 = vmul.f32 %v3809, %v3883
        %v3885 = vmul.f32 %v3881, %v3883
        %v3886 = vmul.f32 %v3882, %v3883
        %v3887 = vadd.f32 %v3878, %v3884
        %v3888 = vadd.f32 %v3879, %v3885
        %v3889 = vadd.f32 %v3880, %v3886
        %v3890 = vld [vmem:[#allocation2 + $0x20] sm:$0xff]
        %v3891 = vld [vmem:[#allocation2 + $0x28] sm:$0x1]
        %v3892 = vperm.slane %v3665, 0
        %v3893 = vmul.f32 %v3818, %v3892
        %v3894 = vmul.f32 %v3890, %v3892
        %v3895 = vmul.f32 %v3891, %v3892
        %v3896 = vadd.f32 %v3887, %v3893
        %v3897 = vadd.f32 %v3888, %v3894
        %v3898 = vadd.f32 %v3889, %v3895
        %v3899 = vld [vmem:[#allocation2 + $0x21] sm:$0xff]
        %v3900 = vld [vmem:[#allocation2 + $0x29] sm:$0x1]
        %v3901 = vperm.slane %v3665, 1
        %v3902 = vmul.f32 %v3827, %v3901
        %v3903 = vmul.f32 %v3899, %v3901
        %v3904 = vmul.f32 %v3900, %v3901
        %v3905 = vadd.f32 %v3896, %v3902
        %v3906 = vadd.f32 %v3897, %v3903
        %v3907 = vadd.f32 %v3898, %v3904
        %v3908 = vld [vmem:[#allocation2 + $0x22] sm:$0xff]
        %v3909 = vld [vmem:[#allocation2 + $0x2a] sm:$0x1]
        %v3910 = vperm.slane %v3665, 2
        %v3911 = vmul.f32 %v3836, %v3910
        %v3912 = vmul.f32 %v3908, %v3910
        %v3913 = vmul.f32 %v3909, %v3910
        %v3914 = vadd.f32 %v3905, %v3911
        %v3915 = vadd.f32 %v3906, %v3912
        %v3916 = vadd.f32 %v3907, %v3913
        %v3917 = vld [vmem:[#allocation2 + $0x23] sm:$0xff]
        %v3918 = vld [vmem:[#allocation2 + $0x2b] sm:$0x1]
        %v3919 = vperm.slane %v3665, 3
        %v3920 = vmul.f32 %v3845, %v3919
        %v3921 = vmul.f32 %v3917, %v3919
        %v3922 = vmul.f32 %v3918, %v3919
        %v3923 = vadd.f32 %v3914, %v3920
        %v3924 = vadd.f32 %v3915, %v3921
        %v3925 = vadd.f32 %v3916, %v3922
        %v3926 = vld [vmem:[#allocation2 + $0x24] sm:$0xff]
        %v3927 = vld [vmem:[#allocation2 + $0x2c] sm:$0x1]
        %v3928 = vperm.slane %v3665, 4
        %v3929 = vmul.f32 %v3854, %v3928
        %v3930 = vmul.f32 %v3926, %v3928
        %v3931 = vmul.f32 %v3927, %v3928
        %v3932 = vadd.f32 %v3923, %v3929
        %v3933 = vadd.f32 %v3924, %v3930
        %v3934 = vadd.f32 %v3925, %v3931
        %v3935 = vld [vmem:[#allocation2 + $0x25] sm:$0xff]
        %v3936 = vld [vmem:[#allocation2 + $0x2d] sm:$0x1]
        %v3937 = vperm.slane %v3665, 5
        %v3938 = vmul.f32 %v3863, %v3937
        %v3939 = vmul.f32 %v3935, %v3937
        %v3940 = vmul.f32 %v3936, %v3937
        %v3941 = vadd.f32 %v3932, %v3938
        %v3942 = vadd.f32 %v3933, %v3939
        %v3943 = vadd.f32 %v3934, %v3940
        %v3944 = vld [vmem:[#allocation2 + $0x26] sm:$0xff]
        %v3945 = vld [vmem:[#allocation2 + $0x2e] sm:$0x1]
        %v3946 = vperm.slane %v3665, 6
        %v3947 = vmul.f32 %v3872, %v3946
        %v3948 = vmul.f32 %v3944, %v3946
        %v3949 = vmul.f32 %v3945, %v3946
        %v3950 = vadd.f32 %v3941, %v3947
        %v3951 = vadd.f32 %v3942, %v3948
        %v3952 = vadd.f32 %v3943, %v3949
        %v3953 = vld [vmem:[%s55] sm:$0x1]
        %v3955 = vperm.slane %v3953, 0
        %v3957 = vadd.f32 %v3950, %v3955
        %v3958 = vadd.f32 %v3951, %v3955
        %v3959 = vadd.f32 %v3952, %v3955
        %v3960 = vld [vmem:[%s57] sm:$0x1]
        %v3962 = vperm.slane %v3960, 0
        %v3964 = vmul.f32 %v3957, %v3962
        %v3965 = vmul.f32 %v3958, %v3962
        %v3966 = vmul.f32 %v3959, %v3962
        %v3967 = vld [vmem:[%s59] sm:$0x1]
        %v3969 = vperm.slane %v3967, 0
        %v3971 = vadd.f32 %v3964, %v3969
        %v3972 = vadd.f32 %v3965, %v3969
        %v3973 = vadd.f32 %v3966, %v3969
        %v3974 = vsub.f32 0.0, %v3971
        %v3975 = vsub.f32 0.0, %v3972
        %v3976 = vsub.f32 0.0, %v3973
        %v3977 = vmul.f32 %v3974, 1.442695
        %v3978 = vpow.pop %v3977
        %v3979 = vmul.f32 %v3975, 1.442695
        %v3980 = vpow.pop %v3979
        %v3981 = vmul.f32 %v3976, 1.442695
        %v3982 = vpow.pop %v3981
        %v3983 = vadd.f32 %v3978, 1.0
        %v3984 = vadd.f32 %v3980, 1.0
        %v3985 = vadd.f32 %v3982, 1.0
        %v3986 = vrcp.pop %v3983
        %v3987 = vmul.f32 %v3983, %v3986
        %v3988 = vsub.f32 1.0, %v3987
        %v3989 = vmul.f32 %v3986, %v3988
        %v3990 = vadd.f32 %v3986, %v3989
        %vm3991 = vweird.f32 %v3983
        %vm3992 = vweird.f32 %v3986
        %vm3993 = vmor %vm3991, %vm3992
        %v3994 = vsel %vm3993, %v3986, %v3990
        %v3995 = vand.u32 2147483647, %v3983
        %vm3996 = vcmp.eq.f32.partialorder %v3995, 8.507059e+37
        %v3997 = vand.u32 %v3983, 2147483648
        %v3998 = vor.u32 1.1754944e-38, %v3997
        %v3999 = vsel %vm3996, %v3998, %v3994
        %v4000 = vmul.f32 1.0, %v3999
        %v4001 = vrcp.pop %v3984
        %v4002 = vmul.f32 %v3984, %v4001
        %v4003 = vsub.f32 1.0, %v4002
        %v4004 = vmul.f32 %v4001, %v4003
        %v4005 = vadd.f32 %v4001, %v4004
        %vm4006 = vweird.f32 %v3984
        %vm4007 = vweird.f32 %v4001
        %vm4008 = vmor %vm4006, %vm4007
        %v4009 = vsel %vm4008, %v4001, %v4005
        %v4010 = vand.u32 2147483647, %v3984
        %vm4011 = vcmp.eq.f32.partialorder %v4010, 8.507059e+37
        %v4012 = vand.u32 %v3984, 2147483648
        %v4013 = vor.u32 1.1754944e-38, %v4012
        %v4014 = vsel %vm4011, %v4013, %v4009
        %v4015 = vmul.f32 1.0, %v4014
        %v4016 = vrcp.pop %v3985
        %v4017 = vmul.f32 %v3985, %v4016
        %v4018 = vsub.f32 1.0, %v4017
        %v4019 = vmul.f32 %v4016, %v4018
        %v4020 = vadd.f32 %v4016, %v4019
        %vm4021 = vweird.f32 %v3985
        %vm4022 = vweird.f32 %v4016
        %vm4023 = vmor %vm4021, %vm4022
        %v4024 = vsel %vm4023, %v4016, %v4020
        %v4025 = vand.u32 2147483647, %v3985
        %vm4026 = vcmp.eq.f32.partialorder %v4025, 8.507059e+37
        %v4027 = vand.u32 %v3985, 2147483648
        %v4028 = vor.u32 1.1754944e-38, %v4027
        %v4029 = vsel %vm4026, %v4028, %v4024
        %v4030 = vmul.f32 1.0, %v4029
        %v4031 = vmul.f32 %v3971, %v4000
        %v4032 = vmul.f32 %v3972, %v4015
        %v4033 = vmul.f32 %v3973, %v4030
        %v4034 = vld [vmem:[%s61] sm:$0xff]
        %v4035 = vld [vmem:[%s61 + $0x8] sm:$0xff]
        %v4036 = vld [vmem:[%s61 + $0x10] sm:$0xff]
        %v4037 = vld [vmem:[%s61 + $0x18] sm:$0xff]
        %v4038 = vld [vmem:[%s63] sm:$0x1]
        %v4040 = vperm.slane %v4038, 0
        %v4043 = vsel %vm2175, %v4031, 0
        %v4046 = vsel %vm2175, %v4032, 0
        %v4049 = vsel %vm2175, %v4033, 0
        %4051 = vmatpush.msra.mxu0 0.0
        %4052 = vmatpush.msra.mxu0 0.0
        %4053 = vmatpush.msra.mxu0 0.0
        %4054 = vmatpush.msra.mxu0 0.0
        %4055 = vmatpush.msra.mxu0 0.0
        %4056 = vmatpush.msra.mxu0 0.0
        %4057 = vmatpush.msra.mxu0 0.0
        %4058 = vmatpush.msra.mxu0 0.0
        %4059 = vmatpush.msra.mxu0 0.0
        %4060 = vmatpush.msra.mxu0 0.0
        %4061 = vmatpush.msra.mxu0 0.0
        %4062 = vmatpush.msra.mxu0 0.0
        %4063 = vmatpush.msra.mxu0 %v4037
        %4064 = vmatpush.msra.mxu0 %v4036
        %4065 = vmatpush.msra.mxu0 %v4035
        %4066 = vmatpush.msra.mxu0 %v4034
        %4067 = vmatmul.f32.gmra.mxu0 %v4043
        %v4068 = vpop.f32.mrf.mxu0
        %v4069 = vadd.f32 %v4040, %v4068
        %4070 = vmatmul.f32.gmra.mxu0 %v4046
        %v4071 = vpop.f32.mrf.mxu0
        %v4072 = vadd.f32 %v4040, %v4071
        %4073 = vmatmul.f32.gmra.mxu0 %v4049
        %v4074 = vpop.f32.mrf.mxu0
        %v4075 = vadd.f32 %v4040, %v4074
        %4076 = vdwg.mxu0
        %v4077 = vadd.f32 %v3439, %v4069
        %v4078 = vadd.f32 %v3440, %v4072
        %v4079 = vadd.f32 %v3441, %v4075
        %v4080 = vsel %vm2175, %v4077, 0.0
        %4081 = vadd.xlane.f32.xlu0 %v4080
        %v4082 = vpop.xlane.xlu0 %4081
        %v4083 = vsel %vm2175, %v4078, 0.0
        %4084 = vadd.xlane.f32.xlu0 %v4083
        %v4085 = vpop.xlane.xlu0 %4084
        %v4086 = vsel %vm2189, %v4079, 0.0
        %4087 = vadd.xlane.f32.xlu0 %v4086
        %v4088 = vpop.xlane.xlu0 %4087
        %v4089 = vmul.f32 %v4082, %v2199
        %v4090 = vmul.f32 %v4085, %v2199
        %v4091 = vmul.f32 %v4088, %v2199
        %v4092 = vsub.f32 %v4077, %v4089
        %v4093 = vsub.f32 %v4078, %v4090
        %v4094 = vsub.f32 %v4079, %v4091
        %v4095 = vmul.f32 %v4092, %v4092
        %v4096 = vmul.f32 %v4093, %v4093
        %v4097 = vmul.f32 %v4094, %v4094
        %v4098 = vsel %vm2175, %v4095, 0.0
        %4099 = vadd.xlane.f32.xlu0 %v4098
        %v4100 = vpop.xlane.xlu0 %4099
        %v4101 = vsel %vm2175, %v4096, 0.0
        %4102 = vadd.xlane.f32.xlu0 %v4101
        %v4103 = vpop.xlane.xlu0 %4102
        %v4104 = vsel %vm2189, %v4097, 0.0
        %4105 = vadd.xlane.f32.xlu0 %v4104
        %v4106 = vpop.xlane.xlu0 %4105
        %v4107 = vmul.f32 %v4100, %v2199
        %v4108 = vmul.f32 %v4103, %v2199
        %v4109 = vmul.f32 %v4106, %v2199
        %v4110 = vadd.f32 %v4107, 1e-05
        %v4111 = vadd.f32 %v4108, 1e-05
        %v4112 = vadd.f32 %v4109, 1e-05
        %v4113 = vrsqrt.pop %v4110
        %v4114 = vmul.f32 %v4113, %v4110
        %v4115 = vmul.f32 %v4114, %v4113
        %v4116 = vmul.f32 0.5, %v4115
        %v4117 = vsub.f32 1.5, %v4116
        %v4118 = vmul.f32 %v4113, %v4117
        %vm4119 = vweird.f32 %v4110
        %vm4120 = vweird.f32 %v4113
        %vm4121 = vmor %vm4119, %vm4120
        %v4122 = vsel %vm4121, %v4113, %v4118
        %v4123 = vrsqrt.pop %v4111
        %v4124 = vmul.f32 %v4123, %v4111
        %v4125 = vmul.f32 %v4124, %v4123
        %v4126 = vmul.f32 0.5, %v4125
        %v4127 = vsub.f32 1.5, %v4126
        %v4128 = vmul.f32 %v4123, %v4127
        %vm4129 = vweird.f32 %v4111
        %vm4130 = vweird.f32 %v4123
        %vm4131 = vmor %vm4129, %vm4130
        %v4132 = vsel %vm4131, %v4123, %v4128
        %v4133 = vrsqrt.pop %v4112
        %v4134 = vmul.f32 %v4133, %v4112
        %v4135 = vmul.f32 %v4134, %v4133
        %v4136 = vmul.f32 0.5, %v4135
        %v4137 = vsub.f32 1.5, %v4136
        %v4138 = vmul.f32 %v4133, %v4137
        %vm4139 = vweird.f32 %v4112
        %vm4140 = vweird.f32 %v4133
        %vm4141 = vmor %vm4139, %vm4140
        %v4142 = vsel %vm4141, %v4133, %v4138
        %v4143 = vmul.f32 %v4092, %v4122
        %v4144 = vmul.f32 %v4093, %v4132
        %v4145 = vmul.f32 %v4094, %v4142
        %v4146 = vld [vmem:[%s65] sm:$0x1]
        %v4148 = vperm.slane %v4146, 0
        %v4150 = vmul.f32 %v4143, %v4148
        %v4151 = vmul.f32 %v4144, %v4148
        %v4152 = vmul.f32 %v4145, %v4148
        %v4153 = vld [vmem:[%s67] sm:$0x1]
        %v4155 = vperm.slane %v4153, 0
        %v4157 = vadd.f32 %v4150, %v4155
        %v4158 = vadd.f32 %v4151, %v4155
        %v4159 = vadd.f32 %v4152, %v4155
        %v4160 = vld [vmem:[%s69] sm:$0xff]
        %v4161 = vld [vmem:[%s69 + $0x8] sm:$0xff]
        %v4162 = vld [vmem:[%s69 + $0x10] sm:$0xff]
        %v4163 = vld [vmem:[%s69 + $0x18] sm:$0xff]
        %v4164 = vld [vmem:[%s71] sm:$0x1]
        %v4166 = vperm.slane %v4164, 0
        %v4169 = vsel %vm2175, %v4157, 0
        %v4172 = vsel %vm2175, %v4158, 0
        %v4175 = vsel %vm2175, %v4159, 0
        %4177 = vmatpush.msra.mxu0 0.0
        %4178 = vmatpush.msra.mxu0 0.0
        %4179 = vmatpush.msra.mxu0 0.0
        %4180 = vmatpush.msra.mxu0 0.0
        %4181 = vmatpush.msra.mxu0 0.0
        %4182 = vmatpush.msra.mxu0 0.0
        %4183 = vmatpush.msra.mxu0 0.0
        %4184 = vmatpush.msra.mxu0 0.0
        %4185 = vmatpush.msra.mxu0 0.0
        %4186 = vmatpush.msra.mxu0 0.0
        %4187 = vmatpush.msra.mxu0 0.0
        %4188 = vmatpush.msra.mxu0 0.0
        %4189 = vmatpush.msra.mxu0 %v4163
        %4190 = vmatpush.msra.mxu0 %v4162
        %4191 = vmatpush.msra.mxu0 %v4161
        %4192 = vmatpush.msra.mxu0 %v4160
        %4193 = vmatmul.f32.gmra.mxu0 %v4169
        %v4194 = vpop.f32.mrf.mxu0
        %v4195 = vadd.f32 %v4166, %v4194
        %4196 = vmatmul.f32.gmra.mxu0 %v4172
        %v4197 = vpop.f32.mrf.mxu0
        %v4198 = vadd.f32 %v4166, %v4197
        %4199 = vmatmul.f32.gmra.mxu0 %v4175
        %v4200 = vpop.f32.mrf.mxu0
        %v4201 = vadd.f32 %v4166, %v4200
        %4202 = vdwg.mxu0
        %v4203 = vsub.f32 0.0, %v4195
        %v4204 = vsub.f32 0.0, %v4198
        %v4205 = vsub.f32 0.0, %v4201
        %v4206 = vmul.f32 %v4203, 1.442695
        %v4207 = vpow.pop %v4206
        %v4208 = vmul.f32 %v4204, 1.442695
        %v4209 = vpow.pop %v4208
        %v4210 = vmul.f32 %v4205, 1.442695
        %v4211 = vpow.pop %v4210
        %v4212 = vadd.f32 %v4207, 1.0
        %v4213 = vadd.f32 %v4209, 1.0
        %v4214 = vadd.f32 %v4211, 1.0
        %v4215 = vrcp.pop %v4212
        %v4216 = vmul.f32 %v4212, %v4215
        %v4217 = vsub.f32 1.0, %v4216
        %v4218 = vmul.f32 %v4215, %v4217
        %v4219 = vadd.f32 %v4215, %v4218
        %vm4220 = vweird.f32 %v4212
        %vm4221 = vweird.f32 %v4215
        %vm4222 = vmor %vm4220, %vm4221
        %v4223 = vsel %vm4222, %v4215, %v4219
        %v4224 = vand.u32 2147483647, %v4212
        %vm4225 = vcmp.eq.f32.partialorder %v4224, 8.507059e+37
        %v4226 = vand.u32 %v4212, 2147483648
        %v4227 = vor.u32 1.1754944e-38, %v4226
        %v4228 = vsel %vm4225, %v4227, %v4223
        %v4229 = vmul.f32 1.0, %v4228
        %v4230 = vrcp.pop %v4213
        %v4231 = vmul.f32 %v4213, %v4230
        %v4232 = vsub.f32 1.0, %v4231
        %v4233 = vmul.f32 %v4230, %v4232
        %v4234 = vadd.f32 %v4230, %v4233
        %vm4235 = vweird.f32 %v4213
        %vm4236 = vweird.f32 %v4230
        %vm4237 = vmor %vm4235, %vm4236
        %v4238 = vsel %vm4237, %v4230, %v4234
        %v4239 = vand.u32 2147483647, %v4213
        %vm4240 = vcmp.eq.f32.partialorder %v4239, 8.507059e+37
        %v4241 = vand.u32 %v4213, 2147483648
        %v4242 = vor.u32 1.1754944e-38, %v4241
        %v4243 = vsel %vm4240, %v4242, %v4238
        %v4244 = vmul.f32 1.0, %v4243
        %v4245 = vrcp.pop %v4214
        %v4246 = vmul.f32 %v4214, %v4245
        %v4247 = vsub.f32 1.0, %v4246
        %v4248 = vmul.f32 %v4245, %v4247
        %v4249 = vadd.f32 %v4245, %v4248
        %vm4250 = vweird.f32 %v4214
        %vm4251 = vweird.f32 %v4245
        %vm4252 = vmor %vm4250, %vm4251
        %v4253 = vsel %vm4252, %v4245, %v4249
        %v4254 = vand.u32 2147483647, %v4214
        %vm4255 = vcmp.eq.f32.partialorder %v4254, 8.507059e+37
        %v4256 = vand.u32 %v4214, 2147483648
        %v4257 = vor.u32 1.1754944e-38, %v4256
        %v4258 = vsel %vm4255, %v4257, %v4253
        %v4259 = vmul.f32 1.0, %v4258
        %v4260 = vmul.f32 %v4195, %v4229
        %v4261 = vmul.f32 %v4198, %v4244
        %v4262 = vmul.f32 %v4201, %v4259
        %v4263 = vld [vmem:[%s73] sm:$0xff]
        %v4264 = vld [vmem:[%s73 + $0x8] sm:$0xff]
        %v4265 = vld [vmem:[%s73 + $0x10] sm:$0xff]
        %v4266 = vld [vmem:[%s73 + $0x18] sm:$0xff]
        %v4267 = vld [vmem:[%s73 + $0x20] sm:$0xff]
        %v4268 = vld [vmem:[%s73 + $0x28] sm:$0xff]
        %v4269 = vld [vmem:[%s73 + $0x30] sm:$0xff]
        %v4270 = vld [vmem:[%s73 + $0x38] sm:$0xff]
        %v4271 = vld [vmem:[%s75] sm:$0x1]
        %v4273 = vperm.slane %v4271, 0
        %v4276 = vsel %vm2386, %v4260, 0
        %v4279 = vsel %vm2386, %v4261, 0
        %v4282 = vsel %vm2386, %v4262, 0
        %4284 = vmatpush.msra.mxu0 0.0
        %4285 = vmatpush.msra.mxu0 0.0
        %4286 = vmatpush.msra.mxu0 0.0
        %4287 = vmatpush.msra.mxu0 0.0
        %4288 = vmatpush.msra.mxu0 0.0
        %4289 = vmatpush.msra.mxu0 0.0
        %4290 = vmatpush.msra.mxu0 0.0
        %4291 = vmatpush.msra.mxu0 0.0
        %4292 = vmatpush.msra.mxu0 %v4270
        %4293 = vmatpush.msra.mxu0 %v4269
        %4294 = vmatpush.msra.mxu0 %v4268
        %4295 = vmatpush.msra.mxu0 %v4267
        %4296 = vmatpush.msra.mxu0 %v4266
        %4297 = vmatpush.msra.mxu0 %v4265
        %4298 = vmatpush.msra.mxu0 %v4264
        %4299 = vmatpush.msra.mxu0 %v4263
        %4300 = vmatmul.f32.gmra.mxu0 %v4276
        %v4301 = vpop.f32.mrf.mxu0
        %v4302 = vadd.f32 %v4273, %v4301
        %4303 = vmatmul.f32.gmra.mxu0 %v4279
        %v4304 = vpop.f32.mrf.mxu0
        %v4305 = vadd.f32 %v4273, %v4304
        %4306 = vmatmul.f32.gmra.mxu0 %v4282
        %v4307 = vpop.f32.mrf.mxu0
        %v4308 = vadd.f32 %v4273, %v4307
        %4309 = vdwg.mxu0
        %v4310 = vmul.f32 %v4302, 0.5
        %v4311 = vmul.f32 %v4305, 0.5
        %v4312 = vmul.f32 %v4308, 0.5
        %v4313 = vadd.f32 %v4077, %v4310
        %v4314 = vadd.f32 %v4078, %v4311
        %v4315 = vadd.f32 %v4079, %v4312
        %v4316 = vsel %vm2175, %v4313, 0.0
        %4317 = vadd.xlane.f32.xlu0 %v4316
        %v4318 = vpop.xlane.xlu0 %4317
        %v4319 = vsel %vm2175, %v4314, 0.0
        %4320 = vadd.xlane.f32.xlu0 %v4319
        %v4321 = vpop.xlane.xlu0 %4320
        %v4322 = vsel %vm2189, %v4315, 0.0
        %4323 = vadd.xlane.f32.xlu0 %v4322
        %v4324 = vpop.xlane.xlu0 %4323
        %v4325 = vmul.f32 %v4318, %v2199
        %v4326 = vmul.f32 %v4321, %v2199
        %v4327 = vmul.f32 %v4324, %v2199
        %v4328 = vsub.f32 %v4313, %v4325
        %v4329 = vsub.f32 %v4314, %v4326
        %v4330 = vsub.f32 %v4315, %v4327
        %v4331 = vmul.f32 %v4328, %v4328
        %v4332 = vmul.f32 %v4329, %v4329
        %v4333 = vmul.f32 %v4330, %v4330
        %v4334 = vsel %vm2175, %v4331, 0.0
        %4335 = vadd.xlane.f32.xlu0 %v4334
        %v4336 = vpop.xlane.xlu0 %4335
        %v4337 = vsel %vm2175, %v4332, 0.0
        %4338 = vadd.xlane.f32.xlu0 %v4337
        %v4339 = vpop.xlane.xlu0 %4338
        %v4340 = vsel %vm2189, %v4333, 0.0
        %4341 = vadd.xlane.f32.xlu0 %v4340
        %v4342 = vpop.xlane.xlu0 %4341
        %v4343 = vmul.f32 %v4336, %v2199
        %v4344 = vmul.f32 %v4339, %v2199
        %v4345 = vmul.f32 %v4342, %v2199
        %v4346 = vadd.f32 %v4343, 1e-05
        %v4347 = vadd.f32 %v4344, 1e-05
        %v4348 = vadd.f32 %v4345, 1e-05
        %v4349 = vrsqrt.pop %v4346
        %v4350 = vmul.f32 %v4349, %v4346
        %v4351 = vmul.f32 %v4350, %v4349
        %v4352 = vmul.f32 0.5, %v4351
        %v4353 = vsub.f32 1.5, %v4352
        %v4354 = vmul.f32 %v4349, %v4353
        %vm4355 = vweird.f32 %v4346
        %vm4356 = vweird.f32 %v4349
        %vm4357 = vmor %vm4355, %vm4356
        %v4358 = vsel %vm4357, %v4349, %v4354
        %v4359 = vrsqrt.pop %v4347
        %v4360 = vmul.f32 %v4359, %v4347
        %v4361 = vmul.f32 %v4360, %v4359
        %v4362 = vmul.f32 0.5, %v4361
        %v4363 = vsub.f32 1.5, %v4362
        %v4364 = vmul.f32 %v4359, %v4363
        %vm4365 = vweird.f32 %v4347
        %vm4366 = vweird.f32 %v4359
        %vm4367 = vmor %vm4365, %vm4366
        %v4368 = vsel %vm4367, %v4359, %v4364
        %v4369 = vrsqrt.pop %v4348
        %v4370 = vmul.f32 %v4369, %v4348
        %v4371 = vmul.f32 %v4370, %v4369
        %v4372 = vmul.f32 0.5, %v4371
        %v4373 = vsub.f32 1.5, %v4372
        %v4374 = vmul.f32 %v4369, %v4373
        %vm4375 = vweird.f32 %v4348
        %vm4376 = vweird.f32 %v4369
        %vm4377 = vmor %vm4375, %vm4376
        %v4378 = vsel %vm4377, %v4369, %v4374
        %v4379 = vmul.f32 %v4328, %v4358
        %v4380 = vmul.f32 %v4329, %v4368
        %v4381 = vmul.f32 %v4330, %v4378
        %v4382 = vld [vmem:[#allocation6] sm:$0x1]
        %v4384 = vperm.slane %v4382, 0
        %v4386 = vmul.f32 %v4379, %v4384
        %v4387 = vmul.f32 %v4380, %v4384
        %v4388 = vmul.f32 %v4381, %v4384
        %v4389 = vld [vmem:[#allocation9] sm:$0x1]
        %v4391 = vperm.slane %v4389, 0
        %v4393 = vadd.f32 %v4386, %v4391
        %v4394 = vadd.f32 %v4387, %v4391
        %v4395 = vadd.f32 %v4388, %v4391
        %v4396 = vsel %vm2175, %v4393, 0.0
        %4397 = vadd.xlane.f32.xlu0 %v4396
        %v4398 = vpop.xlane.xlu0 %4397
        %v4399 = vsel %vm2175, %v4394, 0.0
        %4400 = vadd.xlane.f32.xlu0 %v4399
        %v4401 = vpop.xlane.xlu0 %4400
        %v4402 = vsel %vm2189, %v4395, 0.0
        %4403 = vadd.xlane.f32.xlu0 %v4402
        %v4404 = vpop.xlane.xlu0 %4403
        %v4405 = vmul.f32 %v4398, %v2199
        %v4406 = vmul.f32 %v4401, %v2199
        %v4407 = vmul.f32 %v4404, %v2199
        %v4408 = vsub.f32 %v4393, %v4405
        %v4409 = vsub.f32 %v4394, %v4406
        %v4410 = vsub.f32 %v4395, %v4407
        %v4411 = vmul.f32 %v4408, %v4408
        %v4412 = vmul.f32 %v4409, %v4409
        %v4413 = vmul.f32 %v4410, %v4410
        %v4414 = vsel %vm2175, %v4411, 0.0
        %4415 = vadd.xlane.f32.xlu0 %v4414
        %v4416 = vpop.xlane.xlu0 %4415
        %v4417 = vsel %vm2175, %v4412, 0.0
        %4418 = vadd.xlane.f32.xlu0 %v4417
        %v4419 = vpop.xlane.xlu0 %4418
        %v4420 = vsel %vm2189, %v4413, 0.0
        %4421 = vadd.xlane.f32.xlu0 %v4420
        %v4422 = vpop.xlane.xlu0 %4421
        %v4423 = vmul.f32 %v4416, %v2199
        %v4424 = vmul.f32 %v4419, %v2199
        %v4425 = vmul.f32 %v4422, %v2199
        %v4426 = vadd.f32 %v4423, 1e-05
        %v4427 = vadd.f32 %v4424, 1e-05
        %v4428 = vadd.f32 %v4425, 1e-05
        %v4429 = vrsqrt.pop %v4426
        %v4430 = vmul.f32 %v4429, %v4426
        %v4431 = vmul.f32 %v4430, %v4429
        %v4432 = vmul.f32 0.5, %v4431
        %v4433 = vsub.f32 1.5, %v4432
        %v4434 = vmul.f32 %v4429, %v4433
        %vm4435 = vweird.f32 %v4426
        %vm4436 = vweird.f32 %v4429
        %vm4437 = vmor %vm4435, %vm4436
        %v4438 = vsel %vm4437, %v4429, %v4434
        %v4439 = vrsqrt.pop %v4427
        %v4440 = vmul.f32 %v4439, %v4427
        %v4441 = vmul.f32 %v4440, %v4439
        %v4442 = vmul.f32 0.5, %v4441
        %v4443 = vsub.f32 1.5, %v4442
        %v4444 = vmul.f32 %v4439, %v4443
        %vm4445 = vweird.f32 %v4427
        %vm4446 = vweird.f32 %v4439
        %vm4447 = vmor %vm4445, %vm4446
        %v4448 = vsel %vm4447, %v4439, %v4444
        %v4449 = vrsqrt.pop %v4428
        %v4450 = vmul.f32 %v4449, %v4428
        %v4451 = vmul.f32 %v4450, %v4449
        %v4452 = vmul.f32 0.5, %v4451
        %v4453 = vsub.f32 1.5, %v4452
        %v4454 = vmul.f32 %v4449, %v4453
        %vm4455 = vweird.f32 %v4428
        %vm4456 = vweird.f32 %v4449
        %vm4457 = vmor %vm4455, %vm4456
        %v4458 = vsel %vm4457, %v4449, %v4454
        %v4459 = vmul.f32 %v4408, %v4438
        %v4460 = vmul.f32 %v4409, %v4448
        %v4461 = vmul.f32 %v4410, %v4458
        %s4462 = scalar_lea.vmem %s9, 1
        %v4463 = vld [vmem:[%s4462] sm:$0x1]
        %v4465 = vperm.slane %v4463, 0
        %v4467 = vmul.f32 %v4459, %v4465
        %v4468 = vmul.f32 %v4460, %v4465
        %v4469 = vmul.f32 %v4461, %v4465
        %s4470 = scalar_lea.vmem %s11, 1
        %v4471 = vld [vmem:[%s4470] sm:$0x1]
        %v4473 = vperm.slane %v4471, 0
        %v4475 = vadd.f32 %v4467, %v4473
        %v4476 = vadd.f32 %v4468, %v4473
        %v4477 = vadd.f32 %v4469, %v4473
        %s4478 = scalar_lea.vmem %s13, 32
        %v4479 = vld [vmem:[%s4478] sm:$0xff]
        %v4480 = vld [vmem:[%s4478 + $0x8] sm:$0xff]
        %v4481 = vld [vmem:[%s4478 + $0x10] sm:$0xff]
        %v4482 = vld [vmem:[%s4478 + $0x18] sm:$0xff]
        %s4483 = scalar_lea.vmem %s15, 1
        %v4484 = vld [vmem:[%s4483] sm:$0x1]
        %v4486 = vperm.slane %v4484, 0
        %v4489 = vsel %vm2175, %v4475, 0
        %v4492 = vsel %vm2175, %v4476, 0
        %v4495 = vsel %vm2175, %v4477, 0
        %4497 = vmatpush.msra.mxu0 0.0
        %4498 = vmatpush.msra.mxu0 0.0
        %4499 = vmatpush.msra.mxu0 0.0
        %4500 = vmatpush.msra.mxu0 0.0
        %4501 = vmatpush.msra.mxu0 0.0
        %4502 = vmatpush.msra.mxu0 0.0
        %4503 = vmatpush.msra.mxu0 0.0
        %4504 = vmatpush.msra.mxu0 0.0
        %4505 = vmatpush.msra.mxu0 0.0
        %4506 = vmatpush.msra.mxu0 0.0
        %4507 = vmatpush.msra.mxu0 0.0
        %4508 = vmatpush.msra.mxu0 0.0
        %4509 = vmatpush.msra.mxu0 %v4482
        %4510 = vmatpush.msra.mxu0 %v4481
        %4511 = vmatpush.msra.mxu0 %v4480
        %4512 = vmatpush.msra.mxu0 %v4479
        %4513 = vmatmul.f32.gmra.mxu0 %v4489
        %v4514 = vpop.f32.mrf.mxu0
        %v4515 = vadd.f32 %v4486, %v4514
        %4516 = vmatmul.f32.gmra.mxu0 %v4492
        %v4517 = vpop.f32.mrf.mxu0
        %v4518 = vadd.f32 %v4486, %v4517
        %4519 = vmatmul.f32.gmra.mxu0 %v4495
        %v4520 = vpop.f32.mrf.mxu0
        %v4521 = vadd.f32 %v4486, %v4520
        %4522 = vdwg.mxu0
        %v4523 = vsub.f32 0.0, %v4515
        %v4524 = vsub.f32 0.0, %v4518
        %v4525 = vsub.f32 0.0, %v4521
        %v4526 = vmul.f32 %v4523, 1.442695
        %v4527 = vpow.pop %v4526
        %v4528 = vmul.f32 %v4524, 1.442695
        %v4529 = vpow.pop %v4528
        %v4530 = vmul.f32 %v4525, 1.442695
        %v4531 = vpow.pop %v4530
        %v4532 = vadd.f32 %v4527, 1.0
        %v4533 = vadd.f32 %v4529, 1.0
        %v4534 = vadd.f32 %v4531, 1.0
        %v4535 = vrcp.pop %v4532
        %v4536 = vmul.f32 %v4532, %v4535
        %v4537 = vsub.f32 1.0, %v4536
        %v4538 = vmul.f32 %v4535, %v4537
        %v4539 = vadd.f32 %v4535, %v4538
        %vm4540 = vweird.f32 %v4532
        %vm4541 = vweird.f32 %v4535
        %vm4542 = vmor %vm4540, %vm4541
        %v4543 = vsel %vm4542, %v4535, %v4539
        %v4544 = vand.u32 2147483647, %v4532
        %vm4545 = vcmp.eq.f32.partialorder %v4544, 8.507059e+37
        %v4546 = vand.u32 %v4532, 2147483648
        %v4547 = vor.u32 1.1754944e-38, %v4546
        %v4548 = vsel %vm4545, %v4547, %v4543
        %v4549 = vmul.f32 1.0, %v4548
        %v4550 = vrcp.pop %v4533
        %v4551 = vmul.f32 %v4533, %v4550
        %v4552 = vsub.f32 1.0, %v4551
        %v4553 = vmul.f32 %v4550, %v4552
        %v4554 = vadd.f32 %v4550, %v4553
        %vm4555 = vweird.f32 %v4533
        %vm4556 = vweird.f32 %v4550
        %vm4557 = vmor %vm4555, %vm4556
        %v4558 = vsel %vm4557, %v4550, %v4554
        %v4559 = vand.u32 2147483647, %v4533
        %vm4560 = vcmp.eq.f32.partialorder %v4559, 8.507059e+37
        %v4561 = vand.u32 %v4533, 2147483648
        %v4562 = vor.u32 1.1754944e-38, %v4561
        %v4563 = vsel %vm4560, %v4562, %v4558
        %v4564 = vmul.f32 1.0, %v4563
        %v4565 = vrcp.pop %v4534
        %v4566 = vmul.f32 %v4534, %v4565
        %v4567 = vsub.f32 1.0, %v4566
        %v4568 = vmul.f32 %v4565, %v4567
        %v4569 = vadd.f32 %v4565, %v4568
        %vm4570 = vweird.f32 %v4534
        %vm4571 = vweird.f32 %v4565
        %vm4572 = vmor %vm4570, %vm4571
        %v4573 = vsel %vm4572, %v4565, %v4569
        %v4574 = vand.u32 2147483647, %v4534
        %vm4575 = vcmp.eq.f32.partialorder %v4574, 8.507059e+37
        %v4576 = vand.u32 %v4534, 2147483648
        %v4577 = vor.u32 1.1754944e-38, %v4576
        %v4578 = vsel %vm4575, %v4577, %v4573
        %v4579 = vmul.f32 1.0, %v4578
        %v4580 = vmul.f32 %v4515, %v4549
        %v4581 = vmul.f32 %v4518, %v4564
        %v4582 = vmul.f32 %v4521, %v4579
        %s4583 = scalar_lea.vmem %s17, 64
        %v4584 = vld [vmem:[%s4583] sm:$0xff]
        %v4585 = vld [vmem:[%s4583 + $0x8] sm:$0xff]
        %v4586 = vld [vmem:[%s4583 + $0x10] sm:$0xff]
        %v4587 = vld [vmem:[%s4583 + $0x18] sm:$0xff]
        %v4588 = vld [vmem:[%s4583 + $0x20] sm:$0xff]
        %v4589 = vld [vmem:[%s4583 + $0x28] sm:$0xff]
        %v4590 = vld [vmem:[%s4583 + $0x30] sm:$0xff]
        %v4591 = vld [vmem:[%s4583 + $0x38] sm:$0xff]
        %s4592 = scalar_lea.vmem %s19, 1
        %v4593 = vld [vmem:[%s4592] sm:$0x1]
        %v4595 = vperm.slane %v4593, 0
        %v4598 = vsel %vm2386, %v4580, 0
        %v4601 = vsel %vm2386, %v4581, 0
        %v4604 = vsel %vm2386, %v4582, 0
        %4606 = vmatpush.msra.mxu0 0.0
        %4607 = vmatpush.msra.mxu0 0.0
        %4608 = vmatpush.msra.mxu0 0.0
        %4609 = vmatpush.msra.mxu0 0.0
        %4610 = vmatpush.msra.mxu0 0.0
        %4611 = vmatpush.msra.mxu0 0.0
        %4612 = vmatpush.msra.mxu0 0.0
        %4613 = vmatpush.msra.mxu0 0.0
        %4614 = vmatpush.msra.mxu0 %v4591
        %4615 = vmatpush.msra.mxu0 %v4590
        %4616 = vmatpush.msra.mxu0 %v4589
        %4617 = vmatpush.msra.mxu0 %v4588
        %4618 = vmatpush.msra.mxu0 %v4587
        %4619 = vmatpush.msra.mxu0 %v4586
        %4620 = vmatpush.msra.mxu0 %v4585
        %4621 = vmatpush.msra.mxu0 %v4584
        %4622 = vmatmul.f32.gmra.mxu0 %v4598
        %v4623 = vpop.f32.mrf.mxu0
        %v4624 = vadd.f32 %v4595, %v4623
        %4625 = vmatmul.f32.gmra.mxu0 %v4601
        %v4626 = vpop.f32.mrf.mxu0
        %v4627 = vadd.f32 %v4595, %v4626
        %4628 = vmatmul.f32.gmra.mxu0 %v4604
        %v4629 = vpop.f32.mrf.mxu0
        %v4630 = vadd.f32 %v4595, %v4629
        %4631 = vdwg.mxu0
        %v4632 = vmul.f32 %v4624, 0.5
        %v4633 = vmul.f32 %v4627, 0.5
        %v4634 = vmul.f32 %v4630, 0.5
        %v4635 = vadd.f32 %v4393, %v4632
        %v4636 = vadd.f32 %v4394, %v4633
        %v4637 = vadd.f32 %v4395, %v4634
        %v4638 = vsel %vm2175, %v4635, 0.0
        %4639 = vadd.xlane.f32.xlu0 %v4638
        %v4640 = vpop.xlane.xlu0 %4639
        %v4641 = vsel %vm2175, %v4636, 0.0
        %4642 = vadd.xlane.f32.xlu0 %v4641
        %v4643 = vpop.xlane.xlu0 %4642
        %v4644 = vsel %vm2189, %v4637, 0.0
        %4645 = vadd.xlane.f32.xlu0 %v4644
        %v4646 = vpop.xlane.xlu0 %4645
        %v4647 = vmul.f32 %v4640, %v2199
        %v4648 = vmul.f32 %v4643, %v2199
        %v4649 = vmul.f32 %v4646, %v2199
        %v4650 = vsub.f32 %v4635, %v4647
        %v4651 = vsub.f32 %v4636, %v4648
        %v4652 = vsub.f32 %v4637, %v4649
        %v4653 = vmul.f32 %v4650, %v4650
        %v4654 = vmul.f32 %v4651, %v4651
        %v4655 = vmul.f32 %v4652, %v4652
        %v4656 = vsel %vm2175, %v4653, 0.0
        %4657 = vadd.xlane.f32.xlu0 %v4656
        %v4658 = vpop.xlane.xlu0 %4657
        %v4659 = vsel %vm2175, %v4654, 0.0
        %4660 = vadd.xlane.f32.xlu0 %v4659
        %v4661 = vpop.xlane.xlu0 %4660
        %v4662 = vsel %vm2189, %v4655, 0.0
        %4663 = vadd.xlane.f32.xlu0 %v4662
        %v4664 = vpop.xlane.xlu0 %4663
        %v4665 = vmul.f32 %v4658, %v2199
        %v4666 = vmul.f32 %v4661, %v2199
        %v4667 = vmul.f32 %v4664, %v2199
        %v4668 = vadd.f32 %v4665, 1e-05
        %v4669 = vadd.f32 %v4666, 1e-05
        %v4670 = vadd.f32 %v4667, 1e-05
        %v4671 = vrsqrt.pop %v4668
        %v4672 = vmul.f32 %v4671, %v4668
        %v4673 = vmul.f32 %v4672, %v4671
        %v4674 = vmul.f32 0.5, %v4673
        %v4675 = vsub.f32 1.5, %v4674
        %v4676 = vmul.f32 %v4671, %v4675
        %vm4677 = vweird.f32 %v4668
        %vm4678 = vweird.f32 %v4671
        %vm4679 = vmor %vm4677, %vm4678
        %v4680 = vsel %vm4679, %v4671, %v4676
        %v4681 = vrsqrt.pop %v4669
        %v4682 = vmul.f32 %v4681, %v4669
        %v4683 = vmul.f32 %v4682, %v4681
        %v4684 = vmul.f32 0.5, %v4683
        %v4685 = vsub.f32 1.5, %v4684
        %v4686 = vmul.f32 %v4681, %v4685
        %vm4687 = vweird.f32 %v4669
        %vm4688 = vweird.f32 %v4681
        %vm4689 = vmor %vm4687, %vm4688
        %v4690 = vsel %vm4689, %v4681, %v4686
        %v4691 = vrsqrt.pop %v4670
        %v4692 = vmul.f32 %v4691, %v4670
        %v4693 = vmul.f32 %v4692, %v4691
        %v4694 = vmul.f32 0.5, %v4693
        %v4695 = vsub.f32 1.5, %v4694
        %v4696 = vmul.f32 %v4691, %v4695
        %vm4697 = vweird.f32 %v4670
        %vm4698 = vweird.f32 %v4691
        %vm4699 = vmor %vm4697, %vm4698
        %v4700 = vsel %vm4699, %v4691, %v4696
        %v4701 = vmul.f32 %v4650, %v4680
        %v4702 = vmul.f32 %v4651, %v4690
        %v4703 = vmul.f32 %v4652, %v4700
        %s4704 = scalar_lea.vmem %s21, 1
        %v4705 = vld [vmem:[%s4704] sm:$0x1]
        %v4707 = vperm.slane %v4705, 0
        %v4709 = vmul.f32 %v4701, %v4707
        %v4710 = vmul.f32 %v4702, %v4707
        %v4711 = vmul.f32 %v4703, %v4707
        %s4712 = scalar_lea.vmem %s23, 1
        %v4713 = vld [vmem:[%s4712] sm:$0x1]
        %v4715 = vperm.slane %v4713, 0
        %v4717 = vadd.f32 %v4709, %v4715
        %v4718 = vadd.f32 %v4710, %v4715
        %v4719 = vadd.f32 %v4711, %v4715
        %s4720 = scalar_lea.vmem %s25, 32
        %v4721 = vld [vmem:[%s4720] sm:$0xff]
        %v4722 = vld [vmem:[%s4720 + $0x8] sm:$0xff]
        %v4723 = vld [vmem:[%s4720 + $0x10] sm:$0xff]
        %v4724 = vld [vmem:[%s4720 + $0x18] sm:$0xff]
        %s4725 = scalar_lea.vmem %s27, 1
        %v4726 = vld [vmem:[%s4725] sm:$0x1]
        %v4728 = vperm.slane %v4726, 0
        %v4731 = vsel %vm2175, %v4717, 0
        %v4734 = vsel %vm2175, %v4718, 0
        %v4737 = vsel %vm2175, %v4719, 0
        %4739 = vmatpush.msra.mxu0 0.0
        %4740 = vmatpush.msra.mxu0 0.0
        %4741 = vmatpush.msra.mxu0 0.0
        %4742 = vmatpush.msra.mxu0 0.0
        %4743 = vmatpush.msra.mxu0 0.0
        %4744 = vmatpush.msra.mxu0 0.0
        %4745 = vmatpush.msra.mxu0 0.0
        %4746 = vmatpush.msra.mxu0 0.0
        %4747 = vmatpush.msra.mxu0 0.0
        %4748 = vmatpush.msra.mxu0 0.0
        %4749 = vmatpush.msra.mxu0 0.0
        %4750 = vmatpush.msra.mxu0 0.0
        %4751 = vmatpush.msra.mxu0 %v4724
        %4752 = vmatpush.msra.mxu0 %v4723
        %4753 = vmatpush.msra.mxu0 %v4722
        %4754 = vmatpush.msra.mxu0 %v4721
        %4755 = vmatmul.f32.gmra.mxu0 %v4731
        %v4756 = vpop.f32.mrf.mxu0
        %v4757 = vadd.f32 %v4728, %v4756
        %4758 = vmatmul.f32.gmra.mxu0 %v4734
        %v4759 = vpop.f32.mrf.mxu0
        %v4760 = vadd.f32 %v4728, %v4759
        %4761 = vmatmul.f32.gmra.mxu0 %v4737
        %v4762 = vpop.f32.mrf.mxu0
        %v4763 = vadd.f32 %v4728, %v4762
        %4764 = vdwg.mxu0
        %s4765 = scalar_lea.vmem %s29, 32
        %v4766 = vld [vmem:[%s4765] sm:$0xff]
        %v4767 = vld [vmem:[%s4765 + $0x8] sm:$0xff]
        %v4768 = vld [vmem:[%s4765 + $0x10] sm:$0xff]
        %v4769 = vld [vmem:[%s4765 + $0x18] sm:$0xff]
        %s4770 = scalar_lea.vmem %s31, 1
        %v4771 = vld [vmem:[%s4770] sm:$0x1]
        %v4773 = vperm.slane %v4771, 0
        %4775 = vmatpush.msra.mxu0 0.0
        %4776 = vmatpush.msra.mxu0 0.0
        %4777 = vmatpush.msra.mxu0 0.0
        %4778 = vmatpush.msra.mxu0 0.0
        %4779 = vmatpush.msra.mxu0 0.0
        %4780 = vmatpush.msra.mxu0 0.0
        %4781 = vmatpush.msra.mxu0 0.0
        %4782 = vmatpush.msra.mxu0 0.0
        %4783 = vmatpush.msra.mxu0 0.0
        %4784 = vmatpush.msra.mxu0 0.0
        %4785 = vmatpush.msra.mxu0 0.0
        %4786 = vmatpush.msra.mxu0 0.0
        %4787 = vmatpush.msra.mxu0 %v4769
        %4788 = vmatpush.msra.mxu0 %v4768
        %4789 = vmatpush.msra.mxu0 %v4767
        %4790 = vmatpush.msra.mxu0 %v4766
        %4791 = vmatmul.f32.gmra.mxu0 %v4731
        %v4792 = vpop.f32.mrf.mxu0
        %v4793 = vadd.f32 %v4773, %v4792
        %4794 = vmatmul.f32.gmra.mxu0 %v4734
        %v4795 = vpop.f32.mrf.mxu0
        %v4796 = vadd.f32 %v4773, %v4795
        %4797 = vmatmul.f32.gmra.mxu0 %v4737
        %v4798 = vpop.f32.mrf.mxu0
        %v4799 = vadd.f32 %v4773, %v4798
        %4800 = vdwg.mxu0
        %s4801 = scalar_lea.vmem %s33, 32
        %v4802 = vld [vmem:[%s4801] sm:$0xff]
        %v4803 = vld [vmem:[%s4801 + $0x8] sm:$0xff]
        %v4804 = vld [vmem:[%s4801 + $0x10] sm:$0xff]
        %v4805 = vld [vmem:[%s4801 + $0x18] sm:$0xff]
        %s4806 = scalar_lea.vmem %s35, 1
        %v4807 = vld [vmem:[%s4806] sm:$0x1]
        %v4809 = vperm.slane %v4807, 0
        %4811 = vmatpush.msra.mxu0 0.0
        %4812 = vmatpush.msra.mxu0 0.0
        %4813 = vmatpush.msra.mxu0 0.0
        %4814 = vmatpush.msra.mxu0 0.0
        %4815 = vmatpush.msra.mxu0 0.0
        %4816 = vmatpush.msra.mxu0 0.0
        %4817 = vmatpush.msra.mxu0 0.0
        %4818 = vmatpush.msra.mxu0 0.0
        %4819 = vmatpush.msra.mxu0 0.0
        %4820 = vmatpush.msra.mxu0 0.0
        %4821 = vmatpush.msra.mxu0 0.0
        %4822 = vmatpush.msra.mxu0 0.0
        %4823 = vmatpush.msra.mxu0 %v4805
        %4824 = vmatpush.msra.mxu0 %v4804
        %4825 = vmatpush.msra.mxu0 %v4803
        %4826 = vmatpush.msra.mxu0 %v4802
        %4827 = vmatmul.f32.gmra.mxu0 %v4731
        %v4828 = vpop.f32.mrf.mxu0
        %v4829 = vadd.f32 %v4809, %v4828
        %4830 = vmatmul.f32.gmra.mxu0 %v4734
        %v4831 = vpop.f32.mrf.mxu0
        %v4832 = vadd.f32 %v4809, %v4831
        %4833 = vmatmul.f32.gmra.mxu0 %v4737
        %v4834 = vpop.f32.mrf.mxu0
        %v4835 = vadd.f32 %v4809, %v4834
        %4836 = vdwg.mxu0
        %s4837 = scalar_lea.vmem %s37, 32
        %v4838 = vld [vmem:[%s4837] sm:$0xff]
        %v4839 = vld [vmem:[%s4837 + $0x8] sm:$0xff]
        %v4840 = vld [vmem:[%s4837 + $0x10] sm:$0xff]
        %v4841 = vld [vmem:[%s4837 + $0x18] sm:$0xff]
        %s4842 = scalar_lea.vmem %s39, 1
        %v4843 = vld [vmem:[%s4842] sm:$0x1]
        %v4845 = vsel %vm2624, %v4757, 0
        %v4848 = vsel %vm2624, %v4760, 0
        %v4851 = vsel %vm2624, %v4763, 0
        %v4854 = vsel %vm2624, %v4793, 0
        %v4857 = vsel %vm2624, %v4796, 0
        %v4860 = vsel %vm2624, %v4799, 0
        %4862 = vmatpush.xpose.msra.mxu0 0.0
        %4863 = vmatpush.xpose.msra.mxu0 0.0
        %4864 = vmatpush.xpose.msra.mxu0 0.0
        %4865 = vmatpush.xpose.msra.mxu0 0.0
        %4866 = vmatpush.xpose.msra.mxu0 0.0
        %4867 = vmatpush.xpose.msra.mxu0 0.0
        %4868 = vmatpush.xpose.msra.mxu0 0.0
        %4869 = vmatpush.xpose.msra.mxu0 0.0
        %4870 = vmatpush.xpose.msra.mxu0 0.0
        %4871 = vmatpush.xpose.msra.mxu0 0.0
        %4872 = vmatpush.xpose.msra.mxu0 0.0
        %4873 = vmatpush.xpose.msra.mxu0 0.0
        %4874 = vmatpush.xpose.msra.mxu0 0.0
        %4875 = vmatpush.xpose.msra.mxu0 %v4860
        %4876 = vmatpush.xpose.msra.mxu0 %v4857
        %4877 = vmatpush.xpose.msra.mxu0 %v4854
        %4878 = vmatmul.f32.gmra.mxu0 %v4845
        %v4879 = vpop.f32.mrf.mxu0
        %v4880 = vadd.f32 0.0, %v4879
        %4881 = vmatmul.f32.gmra.mxu0 %v4848
        %v4882 = vpop.f32.mrf.mxu0
        %v4883 = vadd.f32 0.0, %v4882
        %4884 = vmatmul.f32.gmra.mxu0 %v4851
        %v4885 = vpop.f32.mrf.mxu0
        %v4886 = vadd.f32 0.0, %v4885
        %4887 = vdwg.mxu0
        %v4888 = vsel %vm2669, %v4880, -inf
        %4889 = vmax.xlane.f32.xlu0 %v4888
        %v4890 = vpop.xlane.xlu0 %4889
        %v4891 = vsel %vm2669, %v4883, -inf
        %4892 = vmax.xlane.f32.xlu0 %v4891
        %v4893 = vpop.xlane.xlu0 %4892
        %v4894 = vsel %vm2676, %v4886, -inf
        %4895 = vmax.xlane.f32.xlu0 %v4894
        %v4896 = vpop.xlane.xlu0 %4895
        %v4897 = vsub.f32 %v4880, %v4890
        %v4898 = vsub.f32 %v4883, %v4893
        %v4899 = vsub.f32 %v4886, %v4896
        %v4900 = vmul.f32 %v4897, 1.442695
        %v4901 = vpow.pop %v4900
        %v4902 = vmul.f32 %v4898, 1.442695
        %v4903 = vpow.pop %v4902
        %v4904 = vmul.f32 %v4899, 1.442695
        %v4905 = vpow.pop %v4904
        %v4906 = vsel %vm2669, %v4901, 0.0
        %4907 = vadd.xlane.f32.xlu0 %v4906
        %v4908 = vpop.xlane.xlu0 %4907
        %v4909 = vsel %vm2669, %v4903, 0.0
        %4910 = vadd.xlane.f32.xlu0 %v4909
        %v4911 = vpop.xlane.xlu0 %4910
        %v4912 = vsel %vm2676, %v4905, 0.0
        %4913 = vadd.xlane.f32.xlu0 %v4912
        %v4914 = vpop.xlane.xlu0 %4913
        %v4915 = vrcp.pop %v4908
        %v4916 = vmul.f32 %v4908, %v4915
        %v4917 = vsub.f32 1.0, %v4916
        %v4918 = vmul.f32 %v4915, %v4917
        %v4919 = vadd.f32 %v4915, %v4918
        %vm4920 = vweird.f32 %v4908
        %vm4921 = vweird.f32 %v4915
        %vm4922 = vmor %vm4920, %vm4921
        %v4923 = vsel %vm4922, %v4915, %v4919
        %v4924 = vand.u32 2147483647, %v4908
        %vm4925 = vcmp.eq.f32.partialorder %v4924, 8.507059e+37
        %v4926 = vand.u32 %v4908, 2147483648
        %v4927 = vor.u32 1.1754944e-38, %v4926
        %v4928 = vsel %vm4925, %v4927, %v4923
        %v4929 = vmul.f32 %v4901, %v4928
        %v4930 = vrcp.pop %v4911
        %v4931 = vmul.f32 %v4911, %v4930
        %v4932 = vsub.f32 1.0, %v4931
        %v4933 = vmul.f32 %v4930, %v4932
        %v4934 = vadd.f32 %v4930, %v4933
        %vm4935 = vweird.f32 %v4911
        %vm4936 = vweird.f32 %v4930
        %vm4937 = vmor %vm4935, %vm4936
        %v4938 = vsel %vm4937, %v4930, %v4934
        %v4939 = vand.u32 2147483647, %v4911
        %vm4940 = vcmp.eq.f32.partialorder %v4939, 8.507059e+37
        %v4941 = vand.u32 %v4911, 2147483648
        %v4942 = vor.u32 1.1754944e-38, %v4941
        %v4943 = vsel %vm4940, %v4942, %v4938
        %v4944 = vmul.f32 %v4903, %v4943
        %v4945 = vrcp.pop %v4914
        %v4946 = vmul.f32 %v4914, %v4945
        %v4947 = vsub.f32 1.0, %v4946
        %v4948 = vmul.f32 %v4945, %v4947
        %v4949 = vadd.f32 %v4945, %v4948
        %vm4950 = vweird.f32 %v4914
        %vm4951 = vweird.f32 %v4945
        %vm4952 = vmor %vm4950, %vm4951
        %v4953 = vsel %vm4952, %v4945, %v4949
        %v4954 = vand.u32 2147483647, %v4914
        %vm4955 = vcmp.eq.f32.partialorder %v4954, 8.507059e+37
        %v4956 = vand.u32 %v4914, 2147483648
        %v4957 = vor.u32 1.1754944e-38, %v4956
        %v4958 = vsel %vm4955, %v4957, %v4953
        %v4959 = vmul.f32 %v4905, %v4958
        %v4961 = vsel %vm2669, %v4929, 0
        %v4964 = vsel %vm2669, %v4944, 0
        %v4967 = vsel %vm2669, %v4959, 0
        %v4970 = vsel %vm2119, %v4835, 0
        %4972 = vmatpush.msra.mxu0 0.0
        %4973 = vmatpush.msra.mxu0 0.0
        %4974 = vmatpush.msra.mxu0 0.0
        %4975 = vmatpush.msra.mxu0 0.0
        %4976 = vmatpush.msra.mxu0 0.0
        %4977 = vmatpush.msra.mxu0 0.0
        %4978 = vmatpush.msra.mxu0 0.0
        %4979 = vmatpush.msra.mxu0 0.0
        %4980 = vmatpush.msra.mxu0 0.0
        %4981 = vmatpush.msra.mxu0 0.0
        %4982 = vmatpush.msra.mxu0 0.0
        %4983 = vmatpush.msra.mxu0 0.0
        %4984 = vmatpush.msra.mxu0 0.0
        %4985 = vmatpush.msra.mxu0 %v4970
        %4986 = vmatpush.msra.mxu0 %v4832
        %4987 = vmatpush.msra.mxu0 %v4829
        %4988 = vmatmul.f32.gmra.mxu0 %v4961
        %v4989 = vpop.f32.mrf.mxu0
        %v4990 = vadd.f32 0.0, %v4989
        %4991 = vmatmul.f32.gmra.mxu0 %v4964
        %v4992 = vpop.f32.mrf.mxu0
        %v4993 = vadd.f32 0.0, %v4992
        %4994 = vmatmul.f32.gmra.mxu0 %v4967
        %v4995 = vpop.f32.mrf.mxu0
        %v4996 = vadd.f32 0.0, %v4995
        %4997 = vdwg.mxu0
        %v4999 = vsel %vm2624, %v4990, 0
        %v5002 = vsel %vm2624, %v4993, 0
        %v5005 = vsel %vm2624, %v4996, 0
        %5007 = vmatpush.msra.mxu0 0.0
        %5008 = vmatpush.msra.mxu0 0.0
        %5009 = vmatpush.msra.mxu0 0.0
        %5010 = vmatpush.msra.mxu0 0.0
        %5011 = vmatpush.msra.mxu0 0.0
        %5012 = vmatpush.msra.mxu0 0.0
        %5013 = vmatpush.msra.mxu0 0.0
        %5014 = vmatpush.msra.mxu0 0.0
        %5015 = vmatpush.msra.mxu0 0.0
        %5016 = vmatpush.msra.mxu0 0.0
        %5017 = vmatpush.msra.mxu0 0.0
        %5018 = vmatpush.msra.mxu0 0.0
        %5019 = vmatpush.msra.mxu0 0.0
        %5020 = vmatpush.msra.mxu0 0.0
        %5021 = vmatpush.msra.mxu0 0.0
        %5022 = vmatpush.msra.mxu0 %v4838
        %5023 = vmatmul.f32.gmra.mxu0 %v4999
        %v5024 = vpop.f32.mrf.mxu0
        %v5025 = vadd.f32 0.0, %v5024
        %5026 = vmatmul.f32.gmra.mxu0 %v5002
        %v5027 = vpop.f32.mrf.mxu0
        %v5028 = vadd.f32 0.0, %v5027
        %5029 = vmatmul.f32.gmra.mxu0 %v5005
        %v5030 = vpop.f32.mrf.mxu0
        %v5031 = vadd.f32 0.0, %v5030
        %5032 = vdwg.mxu0
        %v5034 = vperm.slane %v4843, 0
        %v5036 = vadd.f32 %v5034, %v5025
        %v5037 = vadd.f32 %v5034, %v5028
        %v5038 = vadd.f32 %v5034, %v5031
        %5039 = vrot.lane.b32.xlu0 %v4757, 120
        %v5040 = vpop.permute.xlu0 %5039
        %5041 = vrot.lane.b32.xlu0 %v4760, 120
        %v5042 = vpop.permute.xlu0 %5041
        %5043 = vrot.lane.b32.xlu0 %v4763, 120
        %v5044 = vpop.permute.xlu0 %5043
        %5045 = vrot.lane.b32.xlu0 %v4793, 120
        %v5046 = vpop.permute.xlu0 %5045
        %5047 = vrot.lane.b32.xlu0 %v4796, 120
        %v5048 = vpop.permute.xlu0 %5047
        %5049 = vrot.lane.b32.xlu0 %v4799, 120
        %v5050 = vpop.permute.xlu0 %5049
        %v5051 = vsel %vm2624, %v5040, 0
        %v5053 = vsel %vm2624, %v5042, 0
        %v5055 = vsel %vm2624, %v5044, 0
        %v5057 = vsel %vm2624, %v5046, 0
        %v5059 = vsel %vm2624, %v5048, 0
        %v5061 = vsel %vm2624, %v5050, 0
        %5063 = vmatpush.xpose.msra.mxu0 0.0
        %5064 = vmatpush.xpose.msra.mxu0 0.0
        %5065 = vmatpush.xpose.msra.mxu0 0.0
        %5066 = vmatpush.xpose.msra.mxu0 0.0
        %5067 = vmatpush.xpose.msra.mxu0 0.0
        %5068 = vmatpush.xpose.msra.mxu0 0.0
        %5069 = vmatpush.xpose.msra.mxu0 0.0
        %5070 = vmatpush.xpose.msra.mxu0 0.0
        %5071 = vmatpush.xpose.msra.mxu0 0.0
        %5072 = vmatpush.xpose.msra.mxu0 0.0
        %5073 = vmatpush.xpose.msra.mxu0 0.0
        %5074 = vmatpush.xpose.msra.mxu0 0.0
        %5075 = vmatpush.xpose.msra.mxu0 0.0
        %5076 = vmatpush.xpose.msra.mxu0 %v5061
        %5077 = vmatpush.xpose.msra.mxu0 %v5059
        %5078 = vmatpush.xpose.msra.mxu0 %v5057
        %5079 = vmatmul.f32.gmra.mxu0 %v5051
        %v5080 = vpop.f32.mrf.mxu0
        %v5081 = vadd.f32 0.0, %v5080
        %5082 = vmatmul.f32.gmra.mxu0 %v5053
        %v5083 = vpop.f32.mrf.mxu0
        %v5084 = vadd.f32 0.0, %v5083
        %5085 = vmatmul.f32.gmra.mxu0 %v5055
        %v5086 = vpop.f32.mrf.mxu0
        %v5087 = vadd.f32 0.0, %v5086
        %5088 = vdwg.mxu0
        %v5089 = vsel %vm2669, %v5081, -inf
        %5090 = vmax.xlane.f32.xlu0 %v5089
        %v5091 = vpop.xlane.xlu0 %5090
        %v5092 = vsel %vm2669, %v5084, -inf
        %5093 = vmax.xlane.f32.xlu0 %v5092
        %v5094 = vpop.xlane.xlu0 %5093
        %v5095 = vsel %vm2676, %v5087, -inf
        %5096 = vmax.xlane.f32.xlu0 %v5095
        %v5097 = vpop.xlane.xlu0 %5096
        %v5098 = vsub.f32 %v5081, %v5091
        %v5099 = vsub.f32 %v5084, %v5094
        %v5100 = vsub.f32 %v5087, %v5097
        %v5101 = vmul.f32 %v5098, 1.442695
        %v5102 = vpow.pop %v5101
        %v5103 = vmul.f32 %v5099, 1.442695
        %v5104 = vpow.pop %v5103
        %v5105 = vmul.f32 %v5100, 1.442695
        %v5106 = vpow.pop %v5105
        %v5107 = vsel %vm2669, %v5102, 0.0
        %5108 = vadd.xlane.f32.xlu0 %v5107
        %v5109 = vpop.xlane.xlu0 %5108
        %v5110 = vsel %vm2669, %v5104, 0.0
        %5111 = vadd.xlane.f32.xlu0 %v5110
        %v5112 = vpop.xlane.xlu0 %5111
        %v5113 = vsel %vm2676, %v5106, 0.0
        %5114 = vadd.xlane.f32.xlu0 %v5113
        %v5115 = vpop.xlane.xlu0 %5114
        %v5116 = vrcp.pop %v5109
        %v5117 = vmul.f32 %v5109, %v5116
        %v5118 = vsub.f32 1.0, %v5117
        %v5119 = vmul.f32 %v5116, %v5118
        %v5120 = vadd.f32 %v5116, %v5119
        %vm5121 = vweird.f32 %v5109
        %vm5122 = vweird.f32 %v5116
        %vm5123 = vmor %vm5121, %vm5122
        %v5124 = vsel %vm5123, %v5116, %v5120
        %v5125 = vand.u32 2147483647, %v5109
        %vm5126 = vcmp.eq.f32.partialorder %v5125, 8.507059e+37
        %v5127 = vand.u32 %v5109, 2147483648
        %v5128 = vor.u32 1.1754944e-38, %v5127
        %v5129 = vsel %vm5126, %v5128, %v5124
        %v5130 = vmul.f32 %v5102, %v5129
        %v5131 = vrcp.pop %v5112
        %v5132 = vmul.f32 %v5112, %v5131
        %v5133 = vsub.f32 1.0, %v5132
        %v5134 = vmul.f32 %v5131, %v5133
        %v5135 = vadd.f32 %v5131, %v5134
        %vm5136 = vweird.f32 %v5112
        %vm5137 = vweird.f32 %v5131
        %vm5138 = vmor %vm5136, %vm5137
        %v5139 = vsel %vm5138, %v5131, %v5135
        %v5140 = vand.u32 2147483647, %v5112
        %vm5141 = vcmp.eq.f32.partialorder %v5140, 8.507059e+37
        %v5142 = vand.u32 %v5112, 2147483648
        %v5143 = vor.u32 1.1754944e-38, %v5142
        %v5144 = vsel %vm5141, %v5143, %v5139
        %v5145 = vmul.f32 %v5104, %v5144
        %v5146 = vrcp.pop %v5115
        %v5147 = vmul.f32 %v5115, %v5146
        %v5148 = vsub.f32 1.0, %v5147
        %v5149 = vmul.f32 %v5146, %v5148
        %v5150 = vadd.f32 %v5146, %v5149
        %vm5151 = vweird.f32 %v5115
        %vm5152 = vweird.f32 %v5146
        %vm5153 = vmor %vm5151, %vm5152
        %v5154 = vsel %vm5153, %v5146, %v5150
        %v5155 = vand.u32 2147483647, %v5115
        %vm5156 = vcmp.eq.f32.partialorder %v5155, 8.507059e+37
        %v5157 = vand.u32 %v5115, 2147483648
        %v5158 = vor.u32 1.1754944e-38, %v5157
        %v5159 = vsel %vm5156, %v5158, %v5154
        %v5160 = vmul.f32 %v5106, %v5159
        %5163 = vrot.lane.b32.xlu0 %v4829, 120
        %v5164 = vpop.permute.xlu0 %5163
        %5165 = vrot.lane.b32.xlu0 %v4832, 120
        %v5166 = vpop.permute.xlu0 %5165
        %5167 = vrot.lane.b32.xlu0 %v4835, 120
        %v5168 = vpop.permute.xlu0 %5167
        %v5172 = vsel %vm2669, %v5130, 0
        %v5175 = vsel %vm2669, %v5145, 0
        %v5178 = vsel %vm2669, %v5160, 0
        %v5180 = vsel %vm2119, %v5168, 0
        %5182 = vmatpush.msra.mxu0 0.0
        %5183 = vmatpush.msra.mxu0 0.0
        %5184 = vmatpush.msra.mxu0 0.0
        %5185 = vmatpush.msra.mxu0 0.0
        %5186 = vmatpush.msra.mxu0 0.0
        %5187 = vmatpush.msra.mxu0 0.0
        %5188 = vmatpush.msra.mxu0 0.0
        %5189 = vmatpush.msra.mxu0 0.0
        %5190 = vmatpush.msra.mxu0 0.0
        %5191 = vmatpush.msra.mxu0 0.0
        %5192 = vmatpush.msra.mxu0 0.0
        %5193 = vmatpush.msra.mxu0 0.0
        %5194 = vmatpush.msra.mxu0 0.0
        %5195 = vmatpush.msra.mxu0 %v5180
        %5196 = vmatpush.msra.mxu0 %v5166
        %5197 = vmatpush.msra.mxu0 %v5164
        %5198 = vmatmul.f32.gmra.mxu0 %v5172
        %v5199 = vpop.f32.mrf.mxu0
        %v5200 = vadd.f32 0.0, %v5199
        %5201 = vmatmul.f32.gmra.mxu0 %v5175
        %v5202 = vpop.f32.mrf.mxu0
        %v5203 = vadd.f32 0.0, %v5202
        %5204 = vmatmul.f32.gmra.mxu0 %v5178
        %v5205 = vpop.f32.mrf.mxu0
        %v5206 = vadd.f32 0.0, %v5205
        %5207 = vdwg.mxu0
        %v5209 = vsel %vm2624, %v5200, 0
        %v5212 = vsel %vm2624, %v5203, 0
        %v5215 = vsel %vm2624, %v5206, 0
        %5217 = vmatpush.msra.mxu0 0.0
        %5218 = vmatpush.msra.mxu0 0.0
        %5219 = vmatpush.msra.mxu0 0.0
        %5220 = vmatpush.msra.mxu0 0.0
        %5221 = vmatpush.msra.mxu0 0.0
        %5222 = vmatpush.msra.mxu0 0.0
        %5223 = vmatpush.msra.mxu0 0.0
        %5224 = vmatpush.msra.mxu0 0.0
        %5225 = vmatpush.msra.mxu0 0.0
        %5226 = vmatpush.msra.mxu0 0.0
        %5227 = vmatpush.msra.mxu0 0.0
        %5228 = vmatpush.msra.mxu0 0.0
        %5229 = vmatpush.msra.mxu0 0.0
        %5230 = vmatpush.msra.mxu0 0.0
        %5231 = vmatpush.msra.mxu0 0.0
        %5232 = vmatpush.msra.mxu0 %v4839
        %5233 = vmatmul.f32.gmra.mxu0 %v5209
        %v5234 = vpop.f32.mrf.mxu0
        %v5235 = vadd.f32 0.0, %v5234
        %5236 = vmatmul.f32.gmra.mxu0 %v5212
        %v5237 = vpop.f32.mrf.mxu0
        %v5238 = vadd.f32 0.0, %v5237
        %5239 = vmatmul.f32.gmra.mxu0 %v5215
        %v5240 = vpop.f32.mrf.mxu0
        %v5241 = vadd.f32 0.0, %v5240
        %5242 = vdwg.mxu0
        %v5243 = vadd.f32 %v5036, %v5235
        %v5244 = vadd.f32 %v5037, %v5238
        %v5245 = vadd.f32 %v5038, %v5241
        %5246 = vrot.lane.b32.xlu0 %v4757, 112
        %v5247 = vpop.permute.xlu0 %5246
        %5248 = vrot.lane.b32.xlu0 %v4760, 112
        %v5249 = vpop.permute.xlu0 %5248
        %5250 = vrot.lane.b32.xlu0 %v4763, 112
        %v5251 = vpop.permute.xlu0 %5250
        %5252 = vrot.lane.b32.xlu0 %v4793, 112
        %v5253 = vpop.permute.xlu0 %5252
        %5254 = vrot.lane.b32.xlu0 %v4796, 112
        %v5255 = vpop.permute.xlu0 %5254
        %5256 = vrot.lane.b32.xlu0 %v4799, 112
        %v5257 = vpop.permute.xlu0 %5256
        %v5258 = vsel %vm2624, %v5247, 0
        %v5260 = vsel %vm2624, %v5249, 0
        %v5262 = vsel %vm2624, %v5251, 0
        %v5264 = vsel %vm2624, %v5253, 0
        %v5266 = vsel %vm2624, %v5255, 0
        %v5268 = vsel %vm2624, %v5257, 0
        %5270 = vmatpush.xpose.msra.mxu0 0.0
        %5271 = vmatpush.xpose.msra.mxu0 0.0
        %5272 = vmatpush.xpose.msra.mxu0 0.0
        %5273 = vmatpush.xpose.msra.mxu0 0.0
        %5274 = vmatpush.xpose.msra.mxu0 0.0
        %5275 = vmatpush.xpose.msra.mxu0 0.0
        %5276 = vmatpush.xpose.msra.mxu0 0.0
        %5277 = vmatpush.xpose.msra.mxu0 0.0
        %5278 = vmatpush.xpose.msra.mxu0 0.0
        %5279 = vmatpush.xpose.msra.mxu0 0.0
        %5280 = vmatpush.xpose.msra.mxu0 0.0
        %5281 = vmatpush.xpose.msra.mxu0 0.0
        %5282 = vmatpush.xpose.msra.mxu0 0.0
        %5283 = vmatpush.xpose.msra.mxu0 %v5268
        %5284 = vmatpush.xpose.msra.mxu0 %v5266
        %5285 = vmatpush.xpose.msra.mxu0 %v5264
        %5286 = vmatmul.f32.gmra.mxu0 %v5258
        %v5287 = vpop.f32.mrf.mxu0
        %v5288 = vadd.f32 0.0, %v5287
        %5289 = vmatmul.f32.gmra.mxu0 %v5260
        %v5290 = vpop.f32.mrf.mxu0
        %v5291 = vadd.f32 0.0, %v5290
        %5292 = vmatmul.f32.gmra.mxu0 %v5262
        %v5293 = vpop.f32.mrf.mxu0
        %v5294 = vadd.f32 0.0, %v5293
        %5295 = vdwg.mxu0
        %v5296 = vsel %vm2669, %v5288, -inf
        %5297 = vmax.xlane.f32.xlu0 %v5296
        %v5298 = vpop.xlane.xlu0 %5297
        %v5299 = vsel %vm2669, %v5291, -inf
        %5300 = vmax.xlane.f32.xlu0 %v5299
        %v5301 = vpop.xlane.xlu0 %5300
        %v5302 = vsel %vm2676, %v5294, -inf
        %5303 = vmax.xlane.f32.xlu0 %v5302
        %v5304 = vpop.xlane.xlu0 %5303
        %v5305 = vsub.f32 %v5288, %v5298
        %v5306 = vsub.f32 %v5291, %v5301
        %v5307 = vsub.f32 %v5294, %v5304
        %v5308 = vmul.f32 %v5305, 1.442695
        %v5309 = vpow.pop %v5308
        %v5310 = vmul.f32 %v5306, 1.442695
        %v5311 = vpow.pop %v5310
        %v5312 = vmul.f32 %v5307, 1.442695
        %v5313 = vpow.pop %v5312
        %v5314 = vsel %vm2669, %v5309, 0.0
        %5315 = vadd.xlane.f32.xlu0 %v5314
        %v5316 = vpop.xlane.xlu0 %5315
        %v5317 = vsel %vm2669, %v5311, 0.0
        %5318 = vadd.xlane.f32.xlu0 %v5317
        %v5319 = vpop.xlane.xlu0 %5318
        %v5320 = vsel %vm2676, %v5313, 0.0
        %5321 = vadd.xlane.f32.xlu0 %v5320
        %v5322 = vpop.xlane.xlu0 %5321
        %v5323 = vrcp.pop %v5316
        %v5324 = vmul.f32 %v5316, %v5323
        %v5325 = vsub.f32 1.0, %v5324
        %v5326 = vmul.f32 %v5323, %v5325
        %v5327 = vadd.f32 %v5323, %v5326
        %vm5328 = vweird.f32 %v5316
        %vm5329 = vweird.f32 %v5323
        %vm5330 = vmor %vm5328, %vm5329
        %v5331 = vsel %vm5330, %v5323, %v5327
        %v5332 = vand.u32 2147483647, %v5316
        %vm5333 = vcmp.eq.f32.partialorder %v5332, 8.507059e+37
        %v5334 = vand.u32 %v5316, 2147483648
        %v5335 = vor.u32 1.1754944e-38, %v5334
        %v5336 = vsel %vm5333, %v5335, %v5331
        %v5337 = vmul.f32 %v5309, %v5336
        %v5338 = vrcp.pop %v5319
        %v5339 = vmul.f32 %v5319, %v5338
        %v5340 = vsub.f32 1.0, %v5339
        %v5341 = vmul.f32 %v5338, %v5340
        %v5342 = vadd.f32 %v5338, %v5341
        %vm5343 = vweird.f32 %v5319
        %vm5344 = vweird.f32 %v5338
        %vm5345 = vmor %vm5343, %vm5344
        %v5346 = vsel %vm5345, %v5338, %v5342
        %v5347 = vand.u32 2147483647, %v5319
        %vm5348 = vcmp.eq.f32.partialorder %v5347, 8.507059e+37
        %v5349 = vand.u32 %v5319, 2147483648
        %v5350 = vor.u32 1.1754944e-38, %v5349
        %v5351 = vsel %vm5348, %v5350, %v5346
        %v5352 = vmul.f32 %v5311, %v5351
        %v5353 = vrcp.pop %v5322
        %v5354 = vmul.f32 %v5322, %v5353
        %v5355 = vsub.f32 1.0, %v5354
        %v5356 = vmul.f32 %v5353, %v5355
        %v5357 = vadd.f32 %v5353, %v5356
        %vm5358 = vweird.f32 %v5322
        %vm5359 = vweird.f32 %v5353
        %vm5360 = vmor %vm5358, %vm5359
        %v5361 = vsel %vm5360, %v5353, %v5357
        %v5362 = vand.u32 2147483647, %v5322
        %vm5363 = vcmp.eq.f32.partialorder %v5362, 8.507059e+37
        %v5364 = vand.u32 %v5322, 2147483648
        %v5365 = vor.u32 1.1754944e-38, %v5364
        %v5366 = vsel %vm5363, %v5365, %v5361
        %v5367 = vmul.f32 %v5313, %v5366
        %5368 = vrot.lane.b32.xlu0 %v4829, 112
        %v5369 = vpop.permute.xlu0 %5368
        %5370 = vrot.lane.b32.xlu0 %v4832, 112
        %v5371 = vpop.permute.xlu0 %5370
        %5372 = vrot.lane.b32.xlu0 %v4835, 112
        %v5373 = vpop.permute.xlu0 %5372
        %v5377 = vsel %vm2669, %v5337, 0
        %v5380 = vsel %vm2669, %v5352, 0
        %v5383 = vsel %vm2669, %v5367, 0
        %v5385 = vsel %vm2119, %v5373, 0
        %5387 = vmatpush.msra.mxu0 0.0
        %5388 = vmatpush.msra.mxu0 0.0
        %5389 = vmatpush.msra.mxu0 0.0
        %5390 = vmatpush.msra.mxu0 0.0
        %5391 = vmatpush.msra.mxu0 0.0
        %5392 = vmatpush.msra.mxu0 0.0
        %5393 = vmatpush.msra.mxu0 0.0
        %5394 = vmatpush.msra.mxu0 0.0
        %5395 = vmatpush.msra.mxu0 0.0
        %5396 = vmatpush.msra.mxu0 0.0
        %5397 = vmatpush.msra.mxu0 0.0
        %5398 = vmatpush.msra.mxu0 0.0
        %5399 = vmatpush.msra.mxu0 0.0
        %5400 = vmatpush.msra.mxu0 %v5385
        %5401 = vmatpush.msra.mxu0 %v5371
        %5402 = vmatpush.msra.mxu0 %v5369
        %5403 = vmatmul.f32.gmra.mxu0 %v5377
        %v5404 = vpop.f32.mrf.mxu0
        %v5405 = vadd.f32 0.0, %v5404
        %5406 = vmatmul.f32.gmra.mxu0 %v5380
        %v5407 = vpop.f32.mrf.mxu0
        %v5408 = vadd.f32 0.0, %v5407
        %5409 = vmatmul.f32.gmra.mxu0 %v5383
        %v5410 = vpop.f32.mrf.mxu0
        %v5411 = vadd.f32 0.0, %v5410
        %5412 = vdwg.mxu0
        %v5414 = vsel %vm2624, %v5405, 0
        %v5417 = vsel %vm2624, %v5408, 0
        %v5420 = vsel %vm2624, %v5411, 0
        %5422 = vmatpush.msra.mxu0 0.0
        %5423 = vmatpush.msra.mxu0 0.0
        %5424 = vmatpush.msra.mxu0 0.0
        %5425 = vmatpush.msra.mxu0 0.0
        %5426 = vmatpush.msra.mxu0 0.0
        %5427 = vmatpush.msra.mxu0 0.0
        %5428 = vmatpush.msra.mxu0 0.0
        %5429 = vmatpush.msra.mxu0 0.0
        %5430 = vmatpush.msra.mxu0 0.0
        %5431 = vmatpush.msra.mxu0 0.0
        %5432 = vmatpush.msra.mxu0 0.0
        %5433 = vmatpush.msra.mxu0 0.0
        %5434 = vmatpush.msra.mxu0 0.0
        %5435 = vmatpush.msra.mxu0 0.0
        %5436 = vmatpush.msra.mxu0 0.0
        %5437 = vmatpush.msra.mxu0 %v4840
        %5438 = vmatmul.f32.gmra.mxu0 %v5414
        %v5439 = vpop.f32.mrf.mxu0
        %v5440 = vadd.f32 0.0, %v5439
        %5441 = vmatmul.f32.gmra.mxu0 %v5417
        %v5442 = vpop.f32.mrf.mxu0
        %v5443 = vadd.f32 0.0, %v5442
        %5444 = vmatmul.f32.gmra.mxu0 %v5420
        %v5445 = vpop.f32.mrf.mxu0
        %v5446 = vadd.f32 0.0, %v5445
        %5447 = vdwg.mxu0
        %v5448 = vadd.f32 %v5243, %v5440
        %v5449 = vadd.f32 %v5244, %v5443
        %v5450 = vadd.f32 %v5245, %v5446
        %5451 = vrot.lane.b32.xlu0 %v4757, 104
        %v5452 = vpop.permute.xlu0 %5451
        %5453 = vrot.lane.b32.xlu0 %v4760, 104
        %v5454 = vpop.permute.xlu0 %5453
        %5455 = vrot.lane.b32.xlu0 %v4763, 104
        %v5456 = vpop.permute.xlu0 %5455
        %5457 = vrot.lane.b32.xlu0 %v4793, 104
        %v5458 = vpop.permute.xlu0 %5457
        %5459 = vrot.lane.b32.xlu0 %v4796, 104
        %v5460 = vpop.permute.xlu0 %5459
        %5461 = vrot.lane.b32.xlu0 %v4799, 104
        %v5462 = vpop.permute.xlu0 %5461
        %v5463 = vsel %vm2624, %v5452, 0
        %v5465 = vsel %vm2624, %v5454, 0
        %v5467 = vsel %vm2624, %v5456, 0
        %v5469 = vsel %vm2624, %v5458, 0
        %v5471 = vsel %vm2624, %v5460, 0
        %v5473 = vsel %vm2624, %v5462, 0
        %5475 = vmatpush.xpose.msra.mxu0 0.0
        %5476 = vmatpush.xpose.msra.mxu0 0.0
        %5477 = vmatpush.xpose.msra.mxu0 0.0
        %5478 = vmatpush.xpose.msra.mxu0 0.0
        %5479 = vmatpush.xpose.msra.mxu0 0.0
        %5480 = vmatpush.xpose.msra.mxu0 0.0
        %5481 = vmatpush.xpose.msra.mxu0 0.0
        %5482 = vmatpush.xpose.msra.mxu0 0.0
        %5483 = vmatpush.xpose.msra.mxu0 0.0
        %5484 = vmatpush.xpose.msra.mxu0 0.0
        %5485 = vmatpush.xpose.msra.mxu0 0.0
        %5486 = vmatpush.xpose.msra.mxu0 0.0
        %5487 = vmatpush.xpose.msra.mxu0 0.0
        %5488 = vmatpush.xpose.msra.mxu0 %v5473
        %5489 = vmatpush.xpose.msra.mxu0 %v5471
        %5490 = vmatpush.xpose.msra.mxu0 %v5469
        %5491 = vmatmul.f32.gmra.mxu0 %v5463
        %v5492 = vpop.f32.mrf.mxu0
        %v5493 = vadd.f32 0.0, %v5492
        %5494 = vmatmul.f32.gmra.mxu0 %v5465
        %v5495 = vpop.f32.mrf.mxu0
        %v5496 = vadd.f32 0.0, %v5495
        %5497 = vmatmul.f32.gmra.mxu0 %v5467
        %v5498 = vpop.f32.mrf.mxu0
        %v5499 = vadd.f32 0.0, %v5498
        %5500 = vdwg.mxu0
        %v5501 = vsel %vm2669, %v5493, -inf
        %5502 = vmax.xlane.f32.xlu0 %v5501
        %v5503 = vpop.xlane.xlu0 %5502
        %v5504 = vsel %vm2669, %v5496, -inf
        %5505 = vmax.xlane.f32.xlu0 %v5504
        %v5506 = vpop.xlane.xlu0 %5505
        %v5507 = vsel %vm2676, %v5499, -inf
        %5508 = vmax.xlane.f32.xlu0 %v5507
        %v5509 = vpop.xlane.xlu0 %5508
        %v5510 = vsub.f32 %v5493, %v5503
        %v5511 = vsub.f32 %v5496, %v5506
        %v5512 = vsub.f32 %v5499, %v5509
        %v5513 = vmul.f32 %v5510, 1.442695
        %v5514 = vpow.pop %v5513
        %v5515 = vmul.f32 %v5511, 1.442695
        %v5516 = vpow.pop %v5515
        %v5517 = vmul.f32 %v5512, 1.442695
        %v5518 = vpow.pop %v5517
        %v5519 = vsel %vm2669, %v5514, 0.0
        %5520 = vadd.xlane.f32.xlu0 %v5519
        %v5521 = vpop.xlane.xlu0 %5520
        %v5522 = vsel %vm2669, %v5516, 0.0
        %5523 = vadd.xlane.f32.xlu0 %v5522
        %v5524 = vpop.xlane.xlu0 %5523
        %v5525 = vsel %vm2676, %v5518, 0.0
        %5526 = vadd.xlane.f32.xlu0 %v5525
        %v5527 = vpop.xlane.xlu0 %5526
        %v5528 = vrcp.pop %v5521
        %v5529 = vmul.f32 %v5521, %v5528
        %v5530 = vsub.f32 1.0, %v5529
        %v5531 = vmul.f32 %v5528, %v5530
        %v5532 = vadd.f32 %v5528, %v5531
        %vm5533 = vweird.f32 %v5521
        %vm5534 = vweird.f32 %v5528
        %vm5535 = vmor %vm5533, %vm5534
        %v5536 = vsel %vm5535, %v5528, %v5532
        %v5537 = vand.u32 2147483647, %v5521
        %vm5538 = vcmp.eq.f32.partialorder %v5537, 8.507059e+37
        %v5539 = vand.u32 %v5521, 2147483648
        %v5540 = vor.u32 1.1754944e-38, %v5539
        %v5541 = vsel %vm5538, %v5540, %v5536
        %v5542 = vmul.f32 %v5514, %v5541
        %v5543 = vrcp.pop %v5524
        %v5544 = vmul.f32 %v5524, %v5543
        %v5545 = vsub.f32 1.0, %v5544
        %v5546 = vmul.f32 %v5543, %v5545
        %v5547 = vadd.f32 %v5543, %v5546
        %vm5548 = vweird.f32 %v5524
        %vm5549 = vweird.f32 %v5543
        %vm5550 = vmor %vm5548, %vm5549
        %v5551 = vsel %vm5550, %v5543, %v5547
        %v5552 = vand.u32 2147483647, %v5524
        %vm5553 = vcmp.eq.f32.partialorder %v5552, 8.507059e+37
        %v5554 = vand.u32 %v5524, 2147483648
        %v5555 = vor.u32 1.1754944e-38, %v5554
        %v5556 = vsel %vm5553, %v5555, %v5551
        %v5557 = vmul.f32 %v5516, %v5556
        %v5558 = vrcp.pop %v5527
        %v5559 = vmul.f32 %v5527, %v5558
        %v5560 = vsub.f32 1.0, %v5559
        %v5561 = vmul.f32 %v5558, %v5560
        %v5562 = vadd.f32 %v5558, %v5561
        %vm5563 = vweird.f32 %v5527
        %vm5564 = vweird.f32 %v5558
        %vm5565 = vmor %vm5563, %vm5564
        %v5566 = vsel %vm5565, %v5558, %v5562
        %v5567 = vand.u32 2147483647, %v5527
        %vm5568 = vcmp.eq.f32.partialorder %v5567, 8.507059e+37
        %v5569 = vand.u32 %v5527, 2147483648
        %v5570 = vor.u32 1.1754944e-38, %v5569
        %v5571 = vsel %vm5568, %v5570, %v5566
        %v5572 = vmul.f32 %v5518, %v5571
        %5573 = vrot.lane.b32.xlu0 %v4829, 104
        %v5574 = vpop.permute.xlu0 %5573
        %5575 = vrot.lane.b32.xlu0 %v4832, 104
        %v5576 = vpop.permute.xlu0 %5575
        %5577 = vrot.lane.b32.xlu0 %v4835, 104
        %v5578 = vpop.permute.xlu0 %5577
        %v5582 = vsel %vm2669, %v5542, 0
        %v5585 = vsel %vm2669, %v5557, 0
        %v5588 = vsel %vm2669, %v5572, 0
        %v5590 = vsel %vm2119, %v5578, 0
        %5592 = vmatpush.msra.mxu0 0.0
        %5593 = vmatpush.msra.mxu0 0.0
        %5594 = vmatpush.msra.mxu0 0.0
        %5595 = vmatpush.msra.mxu0 0.0
        %5596 = vmatpush.msra.mxu0 0.0
        %5597 = vmatpush.msra.mxu0 0.0
        %5598 = vmatpush.msra.mxu0 0.0
        %5599 = vmatpush.msra.mxu0 0.0
        %5600 = vmatpush.msra.mxu0 0.0
        %5601 = vmatpush.msra.mxu0 0.0
        %5602 = vmatpush.msra.mxu0 0.0
        %5603 = vmatpush.msra.mxu0 0.0
        %5604 = vmatpush.msra.mxu0 0.0
        %5605 = vmatpush.msra.mxu0 %v5590
        %5606 = vmatpush.msra.mxu0 %v5576
        %5607 = vmatpush.msra.mxu0 %v5574
        %5608 = vmatmul.f32.gmra.mxu0 %v5582
        %v5609 = vpop.f32.mrf.mxu0
        %v5610 = vadd.f32 0.0, %v5609
        %5611 = vmatmul.f32.gmra.mxu0 %v5585
        %v5612 = vpop.f32.mrf.mxu0
        %v5613 = vadd.f32 0.0, %v5612
        %5614 = vmatmul.f32.gmra.mxu0 %v5588
        %v5615 = vpop.f32.mrf.mxu0
        %v5616 = vadd.f32 0.0, %v5615
        %5617 = vdwg.mxu0
        %v5619 = vsel %vm2624, %v5610, 0
        %v5622 = vsel %vm2624, %v5613, 0
        %v5625 = vsel %vm2624, %v5616, 0
        %5627 = vmatpush.msra.mxu0 0.0
        %5628 = vmatpush.msra.mxu0 0.0
        %5629 = vmatpush.msra.mxu0 0.0
        %5630 = vmatpush.msra.mxu0 0.0
        %5631 = vmatpush.msra.mxu0 0.0
        %5632 = vmatpush.msra.mxu0 0.0
        %5633 = vmatpush.msra.mxu0 0.0
        %5634 = vmatpush.msra.mxu0 0.0
        %5635 = vmatpush.msra.mxu0 0.0
        %5636 = vmatpush.msra.mxu0 0.0
        %5637 = vmatpush.msra.mxu0 0.0
        %5638 = vmatpush.msra.mxu0 0.0
        %5639 = vmatpush.msra.mxu0 0.0
        %5640 = vmatpush.msra.mxu0 0.0
        %5641 = vmatpush.msra.mxu0 0.0
        %5642 = vmatpush.msra.mxu0 %v4841
        %5643 = vmatmul.f32.gmra.mxu0 %v5619
        %v5644 = vpop.f32.mrf.mxu0
        %v5645 = vadd.f32 0.0, %v5644
        %5646 = vmatmul.f32.gmra.mxu0 %v5622
        %v5647 = vpop.f32.mrf.mxu0
        %v5648 = vadd.f32 0.0, %v5647
        %5649 = vmatmul.f32.gmra.mxu0 %v5625
        %v5650 = vpop.f32.mrf.mxu0
        %v5651 = vadd.f32 0.0, %v5650
        %5652 = vdwg.mxu0
        %v5653 = vadd.f32 %v5448, %v5645
        %v5654 = vadd.f32 %v5449, %v5648
        %v5655 = vadd.f32 %v5450, %v5651
        %v5656 = vadd.f32 %v4635, %v5653
        %v5657 = vadd.f32 %v4636, %v5654
        %v5658 = vadd.f32 %v4637, %v5655
        %v5659 = vsel %vm2175, %v5656, 0.0
        %5660 = vadd.xlane.f32.xlu0 %v5659
        %v5661 = vpop.xlane.xlu0 %5660
        %v5662 = vsel %vm2175, %v5657, 0.0
        %5663 = vadd.xlane.f32.xlu0 %v5662
        %v5664 = vpop.xlane.xlu0 %5663
        %v5665 = vsel %vm2189, %v5658, 0.0
        %5666 = vadd.xlane.f32.xlu0 %v5665
        %v5667 = vpop.xlane.xlu0 %5666
        %v5668 = vmul.f32 %v5661, %v2199
        %v5669 = vmul.f32 %v5664, %v2199
        %v5670 = vmul.f32 %v5667, %v2199
        %v5671 = vsub.f32 %v5656, %v5668
        %v5672 = vsub.f32 %v5657, %v5669
        %v5673 = vsub.f32 %v5658, %v5670
        %v5674 = vmul.f32 %v5671, %v5671
        %v5675 = vmul.f32 %v5672, %v5672
        %v5676 = vmul.f32 %v5673, %v5673
        %v5677 = vsel %vm2175, %v5674, 0.0
        %5678 = vadd.xlane.f32.xlu0 %v5677
        %v5679 = vpop.xlane.xlu0 %5678
        %v5680 = vsel %vm2175, %v5675, 0.0
        %5681 = vadd.xlane.f32.xlu0 %v5680
        %v5682 = vpop.xlane.xlu0 %5681
        %v5683 = vsel %vm2189, %v5676, 0.0
        %5684 = vadd.xlane.f32.xlu0 %v5683
        %v5685 = vpop.xlane.xlu0 %5684
        %v5686 = vmul.f32 %v5679, %v2199
        %v5687 = vmul.f32 %v5682, %v2199
        %v5688 = vmul.f32 %v5685, %v2199
        %v5689 = vadd.f32 %v5686, 1e-05
        %v5690 = vadd.f32 %v5687, 1e-05
        %v5691 = vadd.f32 %v5688, 1e-05
        %v5692 = vrsqrt.pop %v5689
        %v5693 = vmul.f32 %v5692, %v5689
        %v5694 = vmul.f32 %v5693, %v5692
        %v5695 = vmul.f32 0.5, %v5694
        %v5696 = vsub.f32 1.5, %v5695
        %v5697 = vmul.f32 %v5692, %v5696
        %vm5698 = vweird.f32 %v5689
        %vm5699 = vweird.f32 %v5692
        %vm5700 = vmor %vm5698, %vm5699
        %v5701 = vsel %vm5700, %v5692, %v5697
        %v5702 = vrsqrt.pop %v5690
        %v5703 = vmul.f32 %v5702, %v5690
        %v5704 = vmul.f32 %v5703, %v5702
        %v5705 = vmul.f32 0.5, %v5704
        %v5706 = vsub.f32 1.5, %v5705
        %v5707 = vmul.f32 %v5702, %v5706
        %vm5708 = vweird.f32 %v5690
        %vm5709 = vweird.f32 %v5702
        %vm5710 = vmor %vm5708, %vm5709
        %v5711 = vsel %vm5710, %v5702, %v5707
        %v5712 = vrsqrt.pop %v5691
        %v5713 = vmul.f32 %v5712, %v5691
        %v5714 = vmul.f32 %v5713, %v5712
        %v5715 = vmul.f32 0.5, %v5714
        %v5716 = vsub.f32 1.5, %v5715
        %v5717 = vmul.f32 %v5712, %v5716
        %vm5718 = vweird.f32 %v5691
        %vm5719 = vweird.f32 %v5712
        %vm5720 = vmor %vm5718, %vm5719
        %v5721 = vsel %vm5720, %v5712, %v5717
        %v5722 = vmul.f32 %v5671, %v5701
        %v5723 = vmul.f32 %v5672, %v5711
        %v5724 = vmul.f32 %v5673, %v5721
        %s5725 = scalar_lea.vmem %s41, 1
        %v5726 = vld [vmem:[%s5725] sm:$0x1]
        %v5728 = vperm.slane %v5726, 0
        %v5730 = vmul.f32 %v5722, %v5728
        %v5731 = vmul.f32 %v5723, %v5728
        %v5732 = vmul.f32 %v5724, %v5728
        %s5733 = scalar_lea.vmem %s43, 1
        %v5734 = vld [vmem:[%s5733] sm:$0x1]
        %v5736 = vperm.slane %v5734, 0
        %v5738 = vadd.f32 %v5730, %v5736
        %v5739 = vadd.f32 %v5731, %v5736
        %v5740 = vadd.f32 %v5732, %v5736
        %s5741 = scalar_lea.vmem %s45, 32
        %v5742 = vld [vmem:[%s5741] sm:$0xff]
        %v5743 = vld [vmem:[%s5741 + $0x8] sm:$0xff]
        %v5744 = vld [vmem:[%s5741 + $0x10] sm:$0xff]
        %v5745 = vld [vmem:[%s5741 + $0x18] sm:$0xff]
        %s5746 = scalar_lea.vmem %s47, 1
        %v5747 = vld [vmem:[%s5746] sm:$0x1]
        %v5749 = vperm.slane %v5747, 0
        %v5752 = vsel %vm2175, %v5738, 0
        %v5755 = vsel %vm2175, %v5739, 0
        %v5758 = vsel %vm2175, %v5740, 0
        %5760 = vmatpush.msra.mxu0 0.0
        %5761 = vmatpush.msra.mxu0 0.0
        %5762 = vmatpush.msra.mxu0 0.0
        %5763 = vmatpush.msra.mxu0 0.0
        %5764 = vmatpush.msra.mxu0 0.0
        %5765 = vmatpush.msra.mxu0 0.0
        %5766 = vmatpush.msra.mxu0 0.0
        %5767 = vmatpush.msra.mxu0 0.0
        %5768 = vmatpush.msra.mxu0 0.0
        %5769 = vmatpush.msra.mxu0 0.0
        %5770 = vmatpush.msra.mxu0 0.0
        %5771 = vmatpush.msra.mxu0 0.0
        %5772 = vmatpush.msra.mxu0 %v5745
        %5773 = vmatpush.msra.mxu0 %v5744
        %5774 = vmatpush.msra.mxu0 %v5743
        %5775 = vmatpush.msra.mxu0 %v5742
        %5776 = vmatmul.f32.gmra.mxu0 %v5752
        %v5777 = vpop.f32.mrf.mxu0
        %v5778 = vadd.f32 %v5749, %v5777
        %5779 = vmatmul.f32.gmra.mxu0 %v5755
        %v5780 = vpop.f32.mrf.mxu0
        %v5781 = vadd.f32 %v5749, %v5780
        %5782 = vmatmul.f32.gmra.mxu0 %v5758
        %v5783 = vpop.f32.mrf.mxu0
        %v5784 = vadd.f32 %v5749, %v5783
        %5785 = vdwg.mxu0
        %s5786 = scalar_lea.vmem %s49, 32
        %v5787 = vld [vmem:[%s5786] sm:$0xff]
        %v5788 = vld [vmem:[%s5786 + $0x8] sm:$0xff]
        %v5789 = vld [vmem:[%s5786 + $0x10] sm:$0xff]
        %v5790 = vld [vmem:[%s5786 + $0x18] sm:$0xff]
        %s5791 = scalar_lea.vmem %s51, 1
        %v5792 = vld [vmem:[%s5791] sm:$0x1]
        %v5794 = vperm.slane %v5792, 0
        %5796 = vmatpush.msra.mxu0 0.0
        %5797 = vmatpush.msra.mxu0 0.0
        %5798 = vmatpush.msra.mxu0 0.0
        %5799 = vmatpush.msra.mxu0 0.0
        %5800 = vmatpush.msra.mxu0 0.0
        %5801 = vmatpush.msra.mxu0 0.0
        %5802 = vmatpush.msra.mxu0 0.0
        %5803 = vmatpush.msra.mxu0 0.0
        %5804 = vmatpush.msra.mxu0 0.0
        %5805 = vmatpush.msra.mxu0 0.0
        %5806 = vmatpush.msra.mxu0 0.0
        %5807 = vmatpush.msra.mxu0 0.0
        %5808 = vmatpush.msra.mxu0 %v5790
        %5809 = vmatpush.msra.mxu0 %v5789
        %5810 = vmatpush.msra.mxu0 %v5788
        %5811 = vmatpush.msra.mxu0 %v5787
        %5812 = vmatmul.f32.gmra.mxu0 %v5752
        %v5813 = vpop.f32.mrf.mxu0
        %v5814 = vadd.f32 %v5794, %v5813
        %5815 = vmatmul.f32.gmra.mxu0 %v5755
        %v5816 = vpop.f32.mrf.mxu0
        %v5817 = vadd.f32 %v5794, %v5816
        %5818 = vmatmul.f32.gmra.mxu0 %v5758
        %v5819 = vpop.f32.mrf.mxu0
        %v5820 = vadd.f32 %v5794, %v5819
        %5821 = vdwg.mxu0
        %v5822 = vsub.f32 0.0, %v5814
        %v5823 = vsub.f32 0.0, %v5817
        %v5824 = vsub.f32 0.0, %v5820
        %v5825 = vmul.f32 %v5822, 1.442695
        %v5826 = vpow.pop %v5825
        %v5827 = vmul.f32 %v5823, 1.442695
        %v5828 = vpow.pop %v5827
        %v5829 = vmul.f32 %v5824, 1.442695
        %v5830 = vpow.pop %v5829
        %v5831 = vadd.f32 %v5826, 1.0
        %v5832 = vadd.f32 %v5828, 1.0
        %v5833 = vadd.f32 %v5830, 1.0
        %v5834 = vrcp.pop %v5831
        %v5835 = vmul.f32 %v5831, %v5834
        %v5836 = vsub.f32 1.0, %v5835
        %v5837 = vmul.f32 %v5834, %v5836
        %v5838 = vadd.f32 %v5834, %v5837
        %vm5839 = vweird.f32 %v5831
        %vm5840 = vweird.f32 %v5834
        %vm5841 = vmor %vm5839, %vm5840
        %v5842 = vsel %vm5841, %v5834, %v5838
        %v5843 = vand.u32 2147483647, %v5831
        %vm5844 = vcmp.eq.f32.partialorder %v5843, 8.507059e+37
        %v5845 = vand.u32 %v5831, 2147483648
        %v5846 = vor.u32 1.1754944e-38, %v5845
        %v5847 = vsel %vm5844, %v5846, %v5842
        %v5848 = vmul.f32 1.0, %v5847
        %v5849 = vrcp.pop %v5832
        %v5850 = vmul.f32 %v5832, %v5849
        %v5851 = vsub.f32 1.0, %v5850
        %v5852 = vmul.f32 %v5849, %v5851
        %v5853 = vadd.f32 %v5849, %v5852
        %vm5854 = vweird.f32 %v5832
        %vm5855 = vweird.f32 %v5849
        %vm5856 = vmor %vm5854, %vm5855
        %v5857 = vsel %vm5856, %v5849, %v5853
        %v5858 = vand.u32 2147483647, %v5832
        %vm5859 = vcmp.eq.f32.partialorder %v5858, 8.507059e+37
        %v5860 = vand.u32 %v5832, 2147483648
        %v5861 = vor.u32 1.1754944e-38, %v5860
        %v5862 = vsel %vm5859, %v5861, %v5857
        %v5863 = vmul.f32 1.0, %v5862
        %v5864 = vrcp.pop %v5833
        %v5865 = vmul.f32 %v5833, %v5864
        %v5866 = vsub.f32 1.0, %v5865
        %v5867 = vmul.f32 %v5864, %v5866
        %v5868 = vadd.f32 %v5864, %v5867
        %vm5869 = vweird.f32 %v5833
        %vm5870 = vweird.f32 %v5864
        %vm5871 = vmor %vm5869, %vm5870
        %v5872 = vsel %vm5871, %v5864, %v5868
        %v5873 = vand.u32 2147483647, %v5833
        %vm5874 = vcmp.eq.f32.partialorder %v5873, 8.507059e+37
        %v5875 = vand.u32 %v5833, 2147483648
        %v5876 = vor.u32 1.1754944e-38, %v5875
        %v5877 = vsel %vm5874, %v5876, %v5872
        %v5878 = vmul.f32 1.0, %v5877
        %v5879 = vmul.f32 %v5778, %v5848
        %v5880 = vmul.f32 %v5781, %v5863
        %v5881 = vmul.f32 %v5784, %v5878
        %5882 = vst.msk [vmem:[#allocation2 + $0xf] sm:$0xff] %vm2175, %v5879
        %5883 = vst.msk [vmem:[#allocation2 + $0x17] sm:$0xff] %vm2175, %v5880
        %5884 = vst.msk [vmem:[#allocation2 + $0x1f] sm:$0x1] %vm2189, %v5881
        %s5885 = scalar_lea.vmem %s53, 32
        %v5886 = vld [vmem:[%s5885] sm:$0xff]
        %v5887 = vld [vmem:[%s5885 + $0x8] sm:$0xff]
        %v5888 = vld [vmem:[%s5885 + $0x10] sm:$0xff]
        %v5889 = vld [vmem:[%s5885 + $0x18] sm:$0x7f]
        %v5890 = vld [vmem:[#allocation2] sm:$0xff]
        %v5891 = vld [vmem:[#allocation2 + $0x8] sm:$0xff]
        %v5892 = vld [vmem:[#allocation2 + $0x10] sm:$0x1]
        %v5893 = vperm.slane %v5886, 0
        %v5894 = vmul.f32 %v5890, %v5893
        %v5895 = vmul.f32 %v5891, %v5893
        %v5896 = vmul.f32 %v5892, %v5893
        %v5897 = vadd.f32 %v5894, 0.0
        %v5898 = vadd.f32 %v5895, 0.0
        %v5899 = vadd.f32 %v5896, 0.0
        %v5900 = vld [vmem:[#allocation2 + $0x1] sm:$0xff]
        %v5901 = vld [vmem:[#allocation2 + $0x9] sm:$0xff]
        %v5902 = vld [vmem:[#allocation2 + $0x11] sm:$0x1]
        %v5903 = vperm.slane %v5886, 1
        %v5904 = vmul.f32 %v5900, %v5903
        %v5905 = vmul.f32 %v5901, %v5903
        %v5906 = vmul.f32 %v5902, %v5903
        %v5907 = vadd.f32 %v5897, %v5904
        %v5908 = vadd.f32 %v5898, %v5905
        %v5909 = vadd.f32 %v5899, %v5906
        %v5910 = vld [vmem:[#allocation2 + $0x2] sm:$0xff]
        %v5911 = vld [vmem:[#allocation2 + $0xa] sm:$0xff]
        %v5912 = vld [vmem:[#allocation2 + $0x12] sm:$0x1]
        %v5913 = vperm.slane %v5886, 2
        %v5914 = vmul.f32 %v5910, %v5913
        %v5915 = vmul.f32 %v5911, %v5913
        %v5916 = vmul.f32 %v5912, %v5913
        %v5917 = vadd.f32 %v5907, %v5914
        %v5918 = vadd.f32 %v5908, %v5915
        %v5919 = vadd.f32 %v5909, %v5916
        %v5920 = vld [vmem:[#allocation2 + $0x3] sm:$0xff]
        %v5921 = vld [vmem:[#allocation2 + $0xb] sm:$0xff]
        %v5922 = vld [vmem:[#allocation2 + $0x13] sm:$0x1]
        %v5923 = vperm.slane %v5886, 3
        %v5924 = vmul.f32 %v5920, %v5923
        %v5925 = vmul.f32 %v5921, %v5923
        %v5926 = vmul.f32 %v5922, %v5923
        %v5927 = vadd.f32 %v5917, %v5924
        %v5928 = vadd.f32 %v5918, %v5925
        %v5929 = vadd.f32 %v5919, %v5926
        %v5930 = vld [vmem:[#allocation2 + $0x4] sm:$0xff]
        %v5931 = vld [vmem:[#allocation2 + $0xc] sm:$0xff]
        %v5932 = vld [vmem:[#allocation2 + $0x14] sm:$0x1]
        %v5933 = vperm.slane %v5886, 4
        %v5934 = vmul.f32 %v5930, %v5933
        %v5935 = vmul.f32 %v5931, %v5933
        %v5936 = vmul.f32 %v5932, %v5933
        %v5937 = vadd.f32 %v5927, %v5934
        %v5938 = vadd.f32 %v5928, %v5935
        %v5939 = vadd.f32 %v5929, %v5936
        %v5940 = vld [vmem:[#allocation2 + $0x5] sm:$0xff]
        %v5941 = vld [vmem:[#allocation2 + $0xd] sm:$0xff]
        %v5942 = vld [vmem:[#allocation2 + $0x15] sm:$0x1]
        %v5943 = vperm.slane %v5886, 5
        %v5944 = vmul.f32 %v5940, %v5943
        %v5945 = vmul.f32 %v5941, %v5943
        %v5946 = vmul.f32 %v5942, %v5943
        %v5947 = vadd.f32 %v5937, %v5944
        %v5948 = vadd.f32 %v5938, %v5945
        %v5949 = vadd.f32 %v5939, %v5946
        %v5950 = vld [vmem:[#allocation2 + $0x6] sm:$0xff]
        %v5951 = vld [vmem:[#allocation2 + $0xe] sm:$0xff]
        %v5952 = vld [vmem:[#allocation2 + $0x16] sm:$0x1]
        %v5953 = vperm.slane %v5886, 6
        %v5954 = vmul.f32 %v5950, %v5953
        %v5955 = vmul.f32 %v5951, %v5953
        %v5956 = vmul.f32 %v5952, %v5953
        %v5957 = vadd.f32 %v5947, %v5954
        %v5958 = vadd.f32 %v5948, %v5955
        %v5959 = vadd.f32 %v5949, %v5956
        %v5960 = vld [vmem:[#allocation2 + $0x7] sm:$0xff]
        %v5961 = vld [vmem:[#allocation2 + $0xf] sm:$0xff]
        %v5962 = vld [vmem:[#allocation2 + $0x17] sm:$0x1]
        %v5963 = vperm.slane %v5886, 7
        %v5964 = vmul.f32 %v5960, %v5963
        %v5965 = vmul.f32 %v5961, %v5963
        %v5966 = vmul.f32 %v5962, %v5963
        %v5967 = vadd.f32 %v5957, %v5964
        %v5968 = vadd.f32 %v5958, %v5965
        %v5969 = vadd.f32 %v5959, %v5966
        %v5970 = vld [vmem:[#allocation2 + $0x10] sm:$0xff]
        %v5971 = vld [vmem:[#allocation2 + $0x18] sm:$0x1]
        %v5972 = vperm.slane %v5887, 0
        %v5973 = vmul.f32 %v5891, %v5972
        %v5974 = vmul.f32 %v5970, %v5972
        %v5975 = vmul.f32 %v5971, %v5972
        %v5976 = vadd.f32 %v5967, %v5973
        %v5977 = vadd.f32 %v5968, %v5974
        %v5978 = vadd.f32 %v5969, %v5975
        %v5979 = vld [vmem:[#allocation2 + $0x11] sm:$0xff]
        %v5980 = vld [vmem:[#allocation2 + $0x19] sm:$0x1]
        %v5981 = vperm.slane %v5887, 1
        %v5982 = vmul.f32 %v5901, %v5981
        %v5983 = vmul.f32 %v5979, %v5981
        %v5984 = vmul.f32 %v5980, %v5981
        %v5985 = vadd.f32 %v5976, %v5982
        %v5986 = vadd.f32 %v5977, %v5983
        %v5987 = vadd.f32 %v5978, %v5984
        %v5988 = vld [vmem:[#allocation2 + $0x12] sm:$0xff]
        %v5989 = vld [vmem:[#allocation2 + $0x1a] sm:$0x1]
        %v5990 = vperm.slane %v5887, 2
        %v5991 = vmul.f32 %v5911, %v5990
        %v5992 = vmul.f32 %v5988, %v5990
        %v5993 = vmul.f32 %v5989, %v5990
        %v5994 = vadd.f32 %v5985, %v5991
        %v5995 = vadd.f32 %v5986, %v5992
        %v5996 = vadd.f32 %v5987, %v5993
        %v5997 = vld [vmem:[#allocation2 + $0x13] sm:$0xff]
        %v5998 = vld [vmem:[#allocation2 + $0x1b] sm:$0x1]
        %v5999 = vperm.slane %v5887, 3
        %v6000 = vmul.f32 %v5921, %v5999
        %v6001 = vmul.f32 %v5997, %v5999
        %v6002 = vmul.f32 %v5998, %v5999
        %v6003 = vadd.f32 %v5994, %v6000
        %v6004 = vadd.f32 %v5995, %v6001
        %v6005 = vadd.f32 %v5996, %v6002
        %v6006 = vld [vmem:[#allocation2 + $0x14] sm:$0xff]
        %v6007 = vld [vmem:[#allocation2 + $0x1c] sm:$0x1]
        %v6008 = vperm.slane %v5887, 4
        %v6009 = vmul.f32 %v5931, %v6008
        %v6010 = vmul.f32 %v6006, %v6008
        %v6011 = vmul.f32 %v6007, %v6008
        %v6012 = vadd.f32 %v6003, %v6009
        %v6013 = vadd.f32 %v6004, %v6010
        %v6014 = vadd.f32 %v6005, %v6011
        %v6015 = vld [vmem:[#allocation2 + $0x15] sm:$0xff]
        %v6016 = vld [vmem:[#allocation2 + $0x1d] sm:$0x1]
        %v6017 = vperm.slane %v5887, 5
        %v6018 = vmul.f32 %v5941, %v6017
        %v6019 = vmul.f32 %v6015, %v6017
        %v6020 = vmul.f32 %v6016, %v6017
        %v6021 = vadd.f32 %v6012, %v6018
        %v6022 = vadd.f32 %v6013, %v6019
        %v6023 = vadd.f32 %v6014, %v6020
        %v6024 = vld [vmem:[#allocation2 + $0x16] sm:$0xff]
        %v6025 = vld [vmem:[#allocation2 + $0x1e] sm:$0x1]
        %v6026 = vperm.slane %v5887, 6
        %v6027 = vmul.f32 %v5951, %v6026
        %v6028 = vmul.f32 %v6024, %v6026
        %v6029 = vmul.f32 %v6025, %v6026
        %v6030 = vadd.f32 %v6021, %v6027
        %v6031 = vadd.f32 %v6022, %v6028
        %v6032 = vadd.f32 %v6023, %v6029
        %v6033 = vld [vmem:[#allocation2 + $0x17] sm:$0xff]
        %v6034 = vld [vmem:[#allocation2 + $0x1f] sm:$0x1]
        %v6035 = vperm.slane %v5887, 7
        %v6036 = vmul.f32 %v5961, %v6035
        %v6037 = vmul.f32 %v6033, %v6035
        %v6038 = vmul.f32 %v6034, %v6035
        %v6039 = vadd.f32 %v6030, %v6036
        %v6040 = vadd.f32 %v6031, %v6037
        %v6041 = vadd.f32 %v6032, %v6038
        %v6042 = vld [vmem:[#allocation2 + $0x18] sm:$0xff]
        %v6043 = vld [vmem:[#allocation2 + $0x20] sm:$0x1]
        %v6044 = vperm.slane %v5888, 0
        %v6045 = vmul.f32 %v5970, %v6044
        %v6046 = vmul.f32 %v6042, %v6044
        %v6047 = vmul.f32 %v6043, %v6044
        %v6048 = vadd.f32 %v6039, %v6045
        %v6049 = vadd.f32 %v6040, %v6046
        %v6050 = vadd.f32 %v6041, %v6047
        %v6051 = vld [vmem:[#allocation2 + $0x19] sm:$0xff]
        %v6052 = vld [vmem:[#allocation2 + $0x21] sm:$0x1]
        %v6053 = vperm.slane %v5888, 1
        %v6054 = vmul.f32 %v5979, %v6053
        %v6055 = vmul.f32 %v6051, %v6053
        %v6056 = vmul.f32 %v6052, %v6053
        %v6057 = vadd.f32 %v6048, %v6054
        %v6058 = vadd.f32 %v6049, %v6055
        %v6059 = vadd.f32 %v6050, %v6056
        %v6060 = vld [vmem:[#allocation2 + $0x1a] sm:$0xff]
        %v6061 = vld [vmem:[#allocation2 + $0x22] sm:$0x1]
        %v6062 = vperm.slane %v5888, 2
        %v6063 = vmul.f32 %v5988, %v6062
        %v6064 = vmul.f32 %v6060, %v6062
        %v6065 = vmul.f32 %v6061, %v6062
        %v6066 = vadd.f32 %v6057, %v6063
        %v6067 = vadd.f32 %v6058, %v6064
        %v6068 = vadd.f32 %v6059, %v6065
        %v6069 = vld [vmem:[#allocation2 + $0x1b] sm:$0xff]
        %v6070 = vld [vmem:[#allocation2 + $0x23] sm:$0x1]
        %v6071 = vperm.slane %v5888, 3
        %v6072 = vmul.f32 %v5997, %v6071
        %v6073 = vmul.f32 %v6069, %v6071
        %v6074 = vmul.f32 %v6070, %v6071
        %v6075 = vadd.f32 %v6066, %v6072
        %v6076 = vadd.f32 %v6067, %v6073
        %v6077 = vadd.f32 %v6068, %v6074
        %v6078 = vld [vmem:[#allocation2 + $0x1c] sm:$0xff]
        %v6079 = vld [vmem:[#allocation2 + $0x24] sm:$0x1]
        %v6080 = vperm.slane %v5888, 4
        %v6081 = vmul.f32 %v6006, %v6080
        %v6082 = vmul.f32 %v6078, %v6080
        %v6083 = vmul.f32 %v6079, %v6080
        %v6084 = vadd.f32 %v6075, %v6081
        %v6085 = vadd.f32 %v6076, %v6082
        %v6086 = vadd.f32 %v6077, %v6083
        %v6087 = vld [vmem:[#allocation2 + $0x1d] sm:$0xff]
        %v6088 = vld [vmem:[#allocation2 + $0x25] sm:$0x1]
        %v6089 = vperm.slane %v5888, 5
        %v6090 = vmul.f32 %v6015, %v6089
        %v6091 = vmul.f32 %v6087, %v6089
        %v6092 = vmul.f32 %v6088, %v6089
        %v6093 = vadd.f32 %v6084, %v6090
        %v6094 = vadd.f32 %v6085, %v6091
        %v6095 = vadd.f32 %v6086, %v6092
        %v6096 = vld [vmem:[#allocation2 + $0x1e] sm:$0xff]
        %v6097 = vld [vmem:[#allocation2 + $0x26] sm:$0x1]
        %v6098 = vperm.slane %v5888, 6
        %v6099 = vmul.f32 %v6024, %v6098
        %v6100 = vmul.f32 %v6096, %v6098
        %v6101 = vmul.f32 %v6097, %v6098
        %v6102 = vadd.f32 %v6093, %v6099
        %v6103 = vadd.f32 %v6094, %v6100
        %v6104 = vadd.f32 %v6095, %v6101
        %v6105 = vld [vmem:[#allocation2 + $0x1f] sm:$0xff]
        %v6106 = vld [vmem:[#allocation2 + $0x27] sm:$0x1]
        %v6107 = vperm.slane %v5888, 7
        %v6108 = vmul.f32 %v6033, %v6107
        %v6109 = vmul.f32 %v6105, %v6107
        %v6110 = vmul.f32 %v6106, %v6107
        %v6111 = vadd.f32 %v6102, %v6108
        %v6112 = vadd.f32 %v6103, %v6109
        %v6113 = vadd.f32 %v6104, %v6110
        %v6114 = vld [vmem:[#allocation2 + $0x20] sm:$0xff]
        %v6115 = vld [vmem:[#allocation2 + $0x28] sm:$0x1]
        %v6116 = vperm.slane %v5889, 0
        %v6117 = vmul.f32 %v6042, %v6116
        %v6118 = vmul.f32 %v6114, %v6116
        %v6119 = vmul.f32 %v6115, %v6116
        %v6120 = vadd.f32 %v6111, %v6117
        %v6121 = vadd.f32 %v6112, %v6118
        %v6122 = vadd.f32 %v6113, %v6119
        %v6123 = vld [vmem:[#allocation2 + $0x21] sm:$0xff]
        %v6124 = vld [vmem:[#allocation2 + $0x29] sm:$0x1]
        %v6125 = vperm.slane %v5889, 1
        %v6126 = vmul.f32 %v6051, %v6125
        %v6127 = vmul.f32 %v6123, %v6125
        %v6128 = vmul.f32 %v6124, %v6125
        %v6129 = vadd.f32 %v6120, %v6126
        %v6130 = vadd.f32 %v6121, %v6127
        %v6131 = vadd.f32 %v6122, %v6128
        %v6132 = vld [vmem:[#allocation2 + $0x22] sm:$0xff]
        %v6133 = vld [vmem:[#allocation2 + $0x2a] sm:$0x1]
        %v6134 = vperm.slane %v5889, 2
        %v6135 = vmul.f32 %v6060, %v6134
        %v6136 = vmul.f32 %v6132, %v6134
        %v6137 = vmul.f32 %v6133, %v6134
        %v6138 = vadd.f32 %v6129, %v6135
        %v6139 = vadd.f32 %v6130, %v6136
        %v6140 = vadd.f32 %v6131, %v6137
        %v6141 = vld [vmem:[#allocation2 + $0x23] sm:$0xff]
        %v6142 = vld [vmem:[#allocation2 + $0x2b] sm:$0x1]
        %v6143 = vperm.slane %v5889, 3
        %v6144 = vmul.f32 %v6069, %v6143
        %v6145 = vmul.f32 %v6141, %v6143
        %v6146 = vmul.f32 %v6142, %v6143
        %v6147 = vadd.f32 %v6138, %v6144
        %v6148 = vadd.f32 %v6139, %v6145
        %v6149 = vadd.f32 %v6140, %v6146
        %v6150 = vld [vmem:[#allocation2 + $0x24] sm:$0xff]
        %v6151 = vld [vmem:[#allocation2 + $0x2c] sm:$0x1]
        %v6152 = vperm.slane %v5889, 4
        %v6153 = vmul.f32 %v6078, %v6152
        %v6154 = vmul.f32 %v6150, %v6152
        %v6155 = vmul.f32 %v6151, %v6152
        %v6156 = vadd.f32 %v6147, %v6153
        %v6157 = vadd.f32 %v6148, %v6154
        %v6158 = vadd.f32 %v6149, %v6155
        %v6159 = vld [vmem:[#allocation2 + $0x25] sm:$0xff]
        %v6160 = vld [vmem:[#allocation2 + $0x2d] sm:$0x1]
        %v6161 = vperm.slane %v5889, 5
        %v6162 = vmul.f32 %v6087, %v6161
        %v6163 = vmul.f32 %v6159, %v6161
        %v6164 = vmul.f32 %v6160, %v6161
        %v6165 = vadd.f32 %v6156, %v6162
        %v6166 = vadd.f32 %v6157, %v6163
        %v6167 = vadd.f32 %v6158, %v6164
        %v6168 = vld [vmem:[#allocation2 + $0x26] sm:$0xff]
        %v6169 = vld [vmem:[#allocation2 + $0x2e] sm:$0x1]
        %v6170 = vperm.slane %v5889, 6
        %v6171 = vmul.f32 %v6096, %v6170
        %v6172 = vmul.f32 %v6168, %v6170
        %v6173 = vmul.f32 %v6169, %v6170
        %v6174 = vadd.f32 %v6165, %v6171
        %v6175 = vadd.f32 %v6166, %v6172
        %v6176 = vadd.f32 %v6167, %v6173
        %s6177 = scalar_lea.vmem %s55, 1
        %v6178 = vld [vmem:[%s6177] sm:$0x1]
        %v6180 = vperm.slane %v6178, 0
        %v6182 = vadd.f32 %v6174, %v6180
        %v6183 = vadd.f32 %v6175, %v6180
        %v6184 = vadd.f32 %v6176, %v6180
        %s6185 = scalar_lea.vmem %s57, 1
        %v6186 = vld [vmem:[%s6185] sm:$0x1]
        %v6188 = vperm.slane %v6186, 0
        %v6190 = vmul.f32 %v6182, %v6188
        %v6191 = vmul.f32 %v6183, %v6188
        %v6192 = vmul.f32 %v6184, %v6188
        %s6193 = scalar_lea.vmem %s59, 1
        %v6194 = vld [vmem:[%s6193] sm:$0x1]
        %v6196 = vperm.slane %v6194, 0
        %v6198 = vadd.f32 %v6190, %v6196
        %v6199 = vadd.f32 %v6191, %v6196
        %v6200 = vadd.f32 %v6192, %v6196
        %v6201 = vsub.f32 0.0, %v6198
        %v6202 = vsub.f32 0.0, %v6199
        %v6203 = vsub.f32 0.0, %v6200
        %v6204 = vmul.f32 %v6201, 1.442695
        %v6205 = vpow.pop %v6204
        %v6206 = vmul.f32 %v6202, 1.442695
        %v6207 = vpow.pop %v6206
        %v6208 = vmul.f32 %v6203, 1.442695
        %v6209 = vpow.pop %v6208
        %v6210 = vadd.f32 %v6205, 1.0
        %v6211 = vadd.f32 %v6207, 1.0
        %v6212 = vadd.f32 %v6209, 1.0
        %v6213 = vrcp.pop %v6210
        %v6214 = vmul.f32 %v6210, %v6213
        %v6215 = vsub.f32 1.0, %v6214
        %v6216 = vmul.f32 %v6213, %v6215
        %v6217 = vadd.f32 %v6213, %v6216
        %vm6218 = vweird.f32 %v6210
        %vm6219 = vweird.f32 %v6213
        %vm6220 = vmor %vm6218, %vm6219
        %v6221 = vsel %vm6220, %v6213, %v6217
        %v6222 = vand.u32 2147483647, %v6210
        %vm6223 = vcmp.eq.f32.partialorder %v6222, 8.507059e+37
        %v6224 = vand.u32 %v6210, 2147483648
        %v6225 = vor.u32 1.1754944e-38, %v6224
        %v6226 = vsel %vm6223, %v6225, %v6221
        %v6227 = vmul.f32 1.0, %v6226
        %v6228 = vrcp.pop %v6211
        %v6229 = vmul.f32 %v6211, %v6228
        %v6230 = vsub.f32 1.0, %v6229
        %v6231 = vmul.f32 %v6228, %v6230
        %v6232 = vadd.f32 %v6228, %v6231
        %vm6233 = vweird.f32 %v6211
        %vm6234 = vweird.f32 %v6228
        %vm6235 = vmor %vm6233, %vm6234
        %v6236 = vsel %vm6235, %v6228, %v6232
        %v6237 = vand.u32 2147483647, %v6211
        %vm6238 = vcmp.eq.f32.partialorder %v6237, 8.507059e+37
        %v6239 = vand.u32 %v6211, 2147483648
        %v6240 = vor.u32 1.1754944e-38, %v6239
        %v6241 = vsel %vm6238, %v6240, %v6236
        %v6242 = vmul.f32 1.0, %v6241
        %v6243 = vrcp.pop %v6212
        %v6244 = vmul.f32 %v6212, %v6243
        %v6245 = vsub.f32 1.0, %v6244
        %v6246 = vmul.f32 %v6243, %v6245
        %v6247 = vadd.f32 %v6243, %v6246
        %vm6248 = vweird.f32 %v6212
        %vm6249 = vweird.f32 %v6243
        %vm6250 = vmor %vm6248, %vm6249
        %v6251 = vsel %vm6250, %v6243, %v6247
        %v6252 = vand.u32 2147483647, %v6212
        %vm6253 = vcmp.eq.f32.partialorder %v6252, 8.507059e+37
        %v6254 = vand.u32 %v6212, 2147483648
        %v6255 = vor.u32 1.1754944e-38, %v6254
        %v6256 = vsel %vm6253, %v6255, %v6251
        %v6257 = vmul.f32 1.0, %v6256
        %v6258 = vmul.f32 %v6198, %v6227
        %v6259 = vmul.f32 %v6199, %v6242
        %v6260 = vmul.f32 %v6200, %v6257
        %s6261 = scalar_lea.vmem %s61, 32
        %v6262 = vld [vmem:[%s6261] sm:$0xff]
        %v6263 = vld [vmem:[%s6261 + $0x8] sm:$0xff]
        %v6264 = vld [vmem:[%s6261 + $0x10] sm:$0xff]
        %v6265 = vld [vmem:[%s6261 + $0x18] sm:$0xff]
        %s6266 = scalar_lea.vmem %s63, 1
        %v6267 = vld [vmem:[%s6266] sm:$0x1]
        %v6269 = vperm.slane %v6267, 0
        %v6272 = vsel %vm2175, %v6258, 0
        %v6275 = vsel %vm2175, %v6259, 0
        %v6278 = vsel %vm2175, %v6260, 0
        %6280 = vmatpush.msra.mxu0 0.0
        %6281 = vmatpush.msra.mxu0 0.0
        %6282 = vmatpush.msra.mxu0 0.0
        %6283 = vmatpush.msra.mxu0 0.0
        %6284 = vmatpush.msra.mxu0 0.0
        %6285 = vmatpush.msra.mxu0 0.0
        %6286 = vmatpush.msra.mxu0 0.0
        %6287 = vmatpush.msra.mxu0 0.0
        %6288 = vmatpush.msra.mxu0 0.0
        %6289 = vmatpush.msra.mxu0 0.0
        %6290 = vmatpush.msra.mxu0 0.0
        %6291 = vmatpush.msra.mxu0 0.0
        %6292 = vmatpush.msra.mxu0 %v6265
        %6293 = vmatpush.msra.mxu0 %v6264
        %6294 = vmatpush.msra.mxu0 %v6263
        %6295 = vmatpush.msra.mxu0 %v6262
        %6296 = vmatmul.f32.gmra.mxu0 %v6272
        %v6297 = vpop.f32.mrf.mxu0
        %v6298 = vadd.f32 %v6269, %v6297
        %6299 = vmatmul.f32.gmra.mxu0 %v6275
        %v6300 = vpop.f32.mrf.mxu0
        %v6301 = vadd.f32 %v6269, %v6300
        %6302 = vmatmul.f32.gmra.mxu0 %v6278
        %v6303 = vpop.f32.mrf.mxu0
        %v6304 = vadd.f32 %v6269, %v6303
        %6305 = vdwg.mxu0
        %v6306 = vadd.f32 %v5656, %v6298
        %v6307 = vadd.f32 %v5657, %v6301
        %v6308 = vadd.f32 %v5658, %v6304
        %v6309 = vsel %vm2175, %v6306, 0.0
        %6310 = vadd.xlane.f32.xlu0 %v6309
        %v6311 = vpop.xlane.xlu0 %6310
        %v6312 = vsel %vm2175, %v6307, 0.0
        %6313 = vadd.xlane.f32.xlu0 %v6312
        %v6314 = vpop.xlane.xlu0 %6313
        %v6315 = vsel %vm2189, %v6308, 0.0
        %6316 = vadd.xlane.f32.xlu0 %v6315
        %v6317 = vpop.xlane.xlu0 %6316
        %v6318 = vmul.f32 %v6311, %v2199
        %v6319 = vmul.f32 %v6314, %v2199
        %v6320 = vmul.f32 %v6317, %v2199
        %v6321 = vsub.f32 %v6306, %v6318
        %v6322 = vsub.f32 %v6307, %v6319
        %v6323 = vsub.f32 %v6308, %v6320
        %v6324 = vmul.f32 %v6321, %v6321
        %v6325 = vmul.f32 %v6322, %v6322
        %v6326 = vmul.f32 %v6323, %v6323
        %v6327 = vsel %vm2175, %v6324, 0.0
        %6328 = vadd.xlane.f32.xlu0 %v6327
        %v6329 = vpop.xlane.xlu0 %6328
        %v6330 = vsel %vm2175, %v6325, 0.0
        %6331 = vadd.xlane.f32.xlu0 %v6330
        %v6332 = vpop.xlane.xlu0 %6331
        %v6333 = vsel %vm2189, %v6326, 0.0
        %6334 = vadd.xlane.f32.xlu0 %v6333
        %v6335 = vpop.xlane.xlu0 %6334
        %v6336 = vmul.f32 %v6329, %v2199
        %v6337 = vmul.f32 %v6332, %v2199
        %v6338 = vmul.f32 %v6335, %v2199
        %v6339 = vadd.f32 %v6336, 1e-05
        %v6340 = vadd.f32 %v6337, 1e-05
        %v6341 = vadd.f32 %v6338, 1e-05
        %v6342 = vrsqrt.pop %v6339
        %v6343 = vmul.f32 %v6342, %v6339
        %v6344 = vmul.f32 %v6343, %v6342
        %v6345 = vmul.f32 0.5, %v6344
        %v6346 = vsub.f32 1.5, %v6345
        %v6347 = vmul.f32 %v6342, %v6346
        %vm6348 = vweird.f32 %v6339
        %vm6349 = vweird.f32 %v6342
        %vm6350 = vmor %vm6348, %vm6349
        %v6351 = vsel %vm6350, %v6342, %v6347
        %v6352 = vrsqrt.pop %v6340
        %v6353 = vmul.f32 %v6352, %v6340
        %v6354 = vmul.f32 %v6353, %v6352
        %v6355 = vmul.f32 0.5, %v6354
        %v6356 = vsub.f32 1.5, %v6355
        %v6357 = vmul.f32 %v6352, %v6356
        %vm6358 = vweird.f32 %v6340
        %vm6359 = vweird.f32 %v6352
        %vm6360 = vmor %vm6358, %vm6359
        %v6361 = vsel %vm6360, %v6352, %v6357
        %v6362 = vrsqrt.pop %v6341
        %v6363 = vmul.f32 %v6362, %v6341
        %v6364 = vmul.f32 %v6363, %v6362
        %v6365 = vmul.f32 0.5, %v6364
        %v6366 = vsub.f32 1.5, %v6365
        %v6367 = vmul.f32 %v6362, %v6366
        %vm6368 = vweird.f32 %v6341
        %vm6369 = vweird.f32 %v6362
        %vm6370 = vmor %vm6368, %vm6369
        %v6371 = vsel %vm6370, %v6362, %v6367
        %v6372 = vmul.f32 %v6321, %v6351
        %v6373 = vmul.f32 %v6322, %v6361
        %v6374 = vmul.f32 %v6323, %v6371
        %s6375 = scalar_lea.vmem %s65, 1
        %v6376 = vld [vmem:[%s6375] sm:$0x1]
        %v6378 = vperm.slane %v6376, 0
        %v6380 = vmul.f32 %v6372, %v6378
        %v6381 = vmul.f32 %v6373, %v6378
        %v6382 = vmul.f32 %v6374, %v6378
        %s6383 = scalar_lea.vmem %s67, 1
        %v6384 = vld [vmem:[%s6383] sm:$0x1]
        %v6386 = vperm.slane %v6384, 0
        %v6388 = vadd.f32 %v6380, %v6386
        %v6389 = vadd.f32 %v6381, %v6386
        %v6390 = vadd.f32 %v6382, %v6386
        %s6391 = scalar_lea.vmem %s69, 32
        %v6392 = vld [vmem:[%s6391] sm:$0xff]
        %v6393 = vld [vmem:[%s6391 + $0x8] sm:$0xff]
        %v6394 = vld [vmem:[%s6391 + $0x10] sm:$0xff]
        %v6395 = vld [vmem:[%s6391 + $0x18] sm:$0xff]
        %s6396 = scalar_lea.vmem %s71, 1
        %v6397 = vld [vmem:[%s6396] sm:$0x1]
        %v6399 = vperm.slane %v6397, 0
        %v6402 = vsel %vm2175, %v6388, 0
        %v6405 = vsel %vm2175, %v6389, 0
        %v6408 = vsel %vm2175, %v6390, 0
        %6410 = vmatpush.msra.mxu0 0.0
        %6411 = vmatpush.msra.mxu0 0.0
        %6412 = vmatpush.msra.mxu0 0.0
        %6413 = vmatpush.msra.mxu0 0.0
        %6414 = vmatpush.msra.mxu0 0.0
        %6415 = vmatpush.msra.mxu0 0.0
        %6416 = vmatpush.msra.mxu0 0.0
        %6417 = vmatpush.msra.mxu0 0.0
        %6418 = vmatpush.msra.mxu0 0.0
        %6419 = vmatpush.msra.mxu0 0.0
        %6420 = vmatpush.msra.mxu0 0.0
        %6421 = vmatpush.msra.mxu0 0.0
        %6422 = vmatpush.msra.mxu0 %v6395
        %6423 = vmatpush.msra.mxu0 %v6394
        %6424 = vmatpush.msra.mxu0 %v6393
        %6425 = vmatpush.msra.mxu0 %v6392
        %6426 = vmatmul.f32.gmra.mxu0 %v6402
        %v6427 = vpop.f32.mrf.mxu0
        %v6428 = vadd.f32 %v6399, %v6427
        %6429 = vmatmul.f32.gmra.mxu0 %v6405
        %v6430 = vpop.f32.mrf.mxu0
        %v6431 = vadd.f32 %v6399, %v6430
        %6432 = vmatmul.f32.gmra.mxu0 %v6408
        %v6433 = vpop.f32.mrf.mxu0
        %v6434 = vadd.f32 %v6399, %v6433
        %6435 = vdwg.mxu0
        %v6436 = vsub.f32 0.0, %v6428
        %v6437 = vsub.f32 0.0, %v6431
        %v6438 = vsub.f32 0.0, %v6434
        %v6439 = vmul.f32 %v6436, 1.442695
        %v6440 = vpow.pop %v6439
        %v6441 = vmul.f32 %v6437, 1.442695
        %v6442 = vpow.pop %v6441
        %v6443 = vmul.f32 %v6438, 1.442695
        %v6444 = vpow.pop %v6443
        %v6445 = vadd.f32 %v6440, 1.0
        %v6446 = vadd.f32 %v6442, 1.0
        %v6447 = vadd.f32 %v6444, 1.0
        %v6448 = vrcp.pop %v6445
        %v6449 = vmul.f32 %v6445, %v6448
        %v6450 = vsub.f32 1.0, %v6449
        %v6451 = vmul.f32 %v6448, %v6450
        %v6452 = vadd.f32 %v6448, %v6451
        %vm6453 = vweird.f32 %v6445
        %vm6454 = vweird.f32 %v6448
        %vm6455 = vmor %vm6453, %vm6454
        %v6456 = vsel %vm6455, %v6448, %v6452
        %v6457 = vand.u32 2147483647, %v6445
        %vm6458 = vcmp.eq.f32.partialorder %v6457, 8.507059e+37
        %v6459 = vand.u32 %v6445, 2147483648
        %v6460 = vor.u32 1.1754944e-38, %v6459
        %v6461 = vsel %vm6458, %v6460, %v6456
        %v6462 = vmul.f32 1.0, %v6461
        %v6463 = vrcp.pop %v6446
        %v6464 = vmul.f32 %v6446, %v6463
        %v6465 = vsub.f32 1.0, %v6464
        %v6466 = vmul.f32 %v6463, %v6465
        %v6467 = vadd.f32 %v6463, %v6466
        %vm6468 = vweird.f32 %v6446
        %vm6469 = vweird.f32 %v6463
        %vm6470 = vmor %vm6468, %vm6469
        %v6471 = vsel %vm6470, %v6463, %v6467
        %v6472 = vand.u32 2147483647, %v6446
        %vm6473 = vcmp.eq.f32.partialorder %v6472, 8.507059e+37
        %v6474 = vand.u32 %v6446, 2147483648
        %v6475 = vor.u32 1.1754944e-38, %v6474
        %v6476 = vsel %vm6473, %v6475, %v6471
        %v6477 = vmul.f32 1.0, %v6476
        %v6478 = vrcp.pop %v6447
        %v6479 = vmul.f32 %v6447, %v6478
        %v6480 = vsub.f32 1.0, %v6479
        %v6481 = vmul.f32 %v6478, %v6480
        %v6482 = vadd.f32 %v6478, %v6481
        %vm6483 = vweird.f32 %v6447
        %vm6484 = vweird.f32 %v6478
        %vm6485 = vmor %vm6483, %vm6484
        %v6486 = vsel %vm6485, %v6478, %v6482
        %v6487 = vand.u32 2147483647, %v6447
        %vm6488 = vcmp.eq.f32.partialorder %v6487, 8.507059e+37
        %v6489 = vand.u32 %v6447, 2147483648
        %v6490 = vor.u32 1.1754944e-38, %v6489
        %v6491 = vsel %vm6488, %v6490, %v6486
        %v6492 = vmul.f32 1.0, %v6491
        %v6493 = vmul.f32 %v6428, %v6462
        %v6494 = vmul.f32 %v6431, %v6477
        %v6495 = vmul.f32 %v6434, %v6492
        %s6496 = scalar_lea.vmem %s73, 64
        %v6497 = vld [vmem:[%s6496] sm:$0xff]
        %v6498 = vld [vmem:[%s6496 + $0x8] sm:$0xff]
        %v6499 = vld [vmem:[%s6496 + $0x10] sm:$0xff]
        %v6500 = vld [vmem:[%s6496 + $0x18] sm:$0xff]
        %v6501 = vld [vmem:[%s6496 + $0x20] sm:$0xff]
        %v6502 = vld [vmem:[%s6496 + $0x28] sm:$0xff]
        %v6503 = vld [vmem:[%s6496 + $0x30] sm:$0xff]
        %v6504 = vld [vmem:[%s6496 + $0x38] sm:$0xff]
        %s6505 = scalar_lea.vmem %s75, 1
        %v6506 = vld [vmem:[%s6505] sm:$0x1]
        %v6508 = vperm.slane %v6506, 0
        %v6511 = vsel %vm2386, %v6493, 0
        %v6514 = vsel %vm2386, %v6494, 0
        %v6517 = vsel %vm2386, %v6495, 0
        %6519 = vmatpush.msra.mxu0 0.0
        %6520 = vmatpush.msra.mxu0 0.0
        %6521 = vmatpush.msra.mxu0 0.0
        %6522 = vmatpush.msra.mxu0 0.0
        %6523 = vmatpush.msra.mxu0 0.0
        %6524 = vmatpush.msra.mxu0 0.0
        %6525 = vmatpush.msra.mxu0 0.0
        %6526 = vmatpush.msra.mxu0 0.0
        %6527 = vmatpush.msra.mxu0 %v6504
        %6528 = vmatpush.msra.mxu0 %v6503
        %6529 = vmatpush.msra.mxu0 %v6502
        %6530 = vmatpush.msra.mxu0 %v6501
        %6531 = vmatpush.msra.mxu0 %v6500
        %6532 = vmatpush.msra.mxu0 %v6499
        %6533 = vmatpush.msra.mxu0 %v6498
        %6534 = vmatpush.msra.mxu0 %v6497
        %6535 = vmatmul.f32.gmra.mxu0 %v6511
        %v6536 = vpop.f32.mrf.mxu0
        %v6537 = vadd.f32 %v6508, %v6536
        %6538 = vmatmul.f32.gmra.mxu0 %v6514
        %v6539 = vpop.f32.mrf.mxu0
        %v6540 = vadd.f32 %v6508, %v6539
        %6541 = vmatmul.f32.gmra.mxu0 %v6517
        %v6542 = vpop.f32.mrf.mxu0
        %v6543 = vadd.f32 %v6508, %v6542
        %6544 = vdwg.mxu0
        %v6545 = vmul.f32 %v6537, 0.5
        %v6546 = vmul.f32 %v6540, 0.5
        %v6547 = vmul.f32 %v6543, 0.5
        %v6548 = vadd.f32 %v6306, %v6545
        %v6549 = vadd.f32 %v6307, %v6546
        %v6550 = vadd.f32 %v6308, %v6547
        %v6551 = vsel %vm2175, %v6548, 0.0
        %6552 = vadd.xlane.f32.xlu0 %v6551
        %v6553 = vpop.xlane.xlu0 %6552
        %v6554 = vsel %vm2175, %v6549, 0.0
        %6555 = vadd.xlane.f32.xlu0 %v6554
        %v6556 = vpop.xlane.xlu0 %6555
        %v6557 = vsel %vm2189, %v6550, 0.0
        %6558 = vadd.xlane.f32.xlu0 %v6557
        %v6559 = vpop.xlane.xlu0 %6558
        %v6560 = vmul.f32 %v6553, %v2199
        %v6561 = vmul.f32 %v6556, %v2199
        %v6562 = vmul.f32 %v6559, %v2199
        %v6563 = vsub.f32 %v6548, %v6560
        %v6564 = vsub.f32 %v6549, %v6561
        %v6565 = vsub.f32 %v6550, %v6562
        %v6566 = vmul.f32 %v6563, %v6563
        %v6567 = vmul.f32 %v6564, %v6564
        %v6568 = vmul.f32 %v6565, %v6565
        %v6569 = vsel %vm2175, %v6566, 0.0
        %6570 = vadd.xlane.f32.xlu0 %v6569
        %v6571 = vpop.xlane.xlu0 %6570
        %v6572 = vsel %vm2175, %v6567, 0.0
        %6573 = vadd.xlane.f32.xlu0 %v6572
        %v6574 = vpop.xlane.xlu0 %6573
        %v6575 = vsel %vm2189, %v6568, 0.0
        %6576 = vadd.xlane.f32.xlu0 %v6575
        %v6577 = vpop.xlane.xlu0 %6576
        %v6578 = vmul.f32 %v6571, %v2199
        %v6579 = vmul.f32 %v6574, %v2199
        %v6580 = vmul.f32 %v6577, %v2199
        %v6581 = vadd.f32 %v6578, 1e-05
        %v6582 = vadd.f32 %v6579, 1e-05
        %v6583 = vadd.f32 %v6580, 1e-05
        %v6584 = vrsqrt.pop %v6581
        %v6585 = vmul.f32 %v6584, %v6581
        %v6586 = vmul.f32 %v6585, %v6584
        %v6587 = vmul.f32 0.5, %v6586
        %v6588 = vsub.f32 1.5, %v6587
        %v6589 = vmul.f32 %v6584, %v6588
        %vm6590 = vweird.f32 %v6581
        %vm6591 = vweird.f32 %v6584
        %vm6592 = vmor %vm6590, %vm6591
        %v6593 = vsel %vm6592, %v6584, %v6589
        %v6594 = vrsqrt.pop %v6582
        %v6595 = vmul.f32 %v6594, %v6582
        %v6596 = vmul.f32 %v6595, %v6594
        %v6597 = vmul.f32 0.5, %v6596
        %v6598 = vsub.f32 1.5, %v6597
        %v6599 = vmul.f32 %v6594, %v6598
        %vm6600 = vweird.f32 %v6582
        %vm6601 = vweird.f32 %v6594
        %vm6602 = vmor %vm6600, %vm6601
        %v6603 = vsel %vm6602, %v6594, %v6599
        %v6604 = vrsqrt.pop %v6583
        %v6605 = vmul.f32 %v6604, %v6583
        %v6606 = vmul.f32 %v6605, %v6604
        %v6607 = vmul.f32 0.5, %v6606
        %v6608 = vsub.f32 1.5, %v6607
        %v6609 = vmul.f32 %v6604, %v6608
        %vm6610 = vweird.f32 %v6583
        %vm6611 = vweird.f32 %v6604
        %vm6612 = vmor %vm6610, %vm6611
        %v6613 = vsel %vm6612, %v6604, %v6609
        %v6614 = vmul.f32 %v6563, %v6593
        %v6615 = vmul.f32 %v6564, %v6603
        %v6616 = vmul.f32 %v6565, %v6613
        %s6617 = scalar_lea.vmem [#allocation6], 1
        %v6618 = vld [vmem:[%s6617] sm:$0x1]
        %v6620 = vperm.slane %v6618, 0
        %v6622 = vmul.f32 %v6614, %v6620
        %v6623 = vmul.f32 %v6615, %v6620
        %v6624 = vmul.f32 %v6616, %v6620
        %s6625 = scalar_lea.vmem [#allocation9], 1
        %v6626 = vld [vmem:[%s6625] sm:$0x1]
        %v6628 = vperm.slane %v6626, 0
        %v6630 = vadd.f32 %v6622, %v6628
        %v6631 = vadd.f32 %v6623, %v6628
        %v6632 = vadd.f32 %v6624, %v6628
        %v6633 = vsel %vm2175, %v6630, 0.0
        %v6634 = vsel %vm2175, %v6631, 0.0
        %v6635 = vadd.f32 %v6633, %v6634
        %v6636 = vsel %vm2189, %v6632, 0.0
        %v6637 = vadd.f32 %v6635, %v6636
        %v6638 = vrot.slane %v6637, 4
        %v6639 = vadd.f32 %v6637, %v6638
        %v6640 = vrot.slane %v6639, 2
        %v6641 = vadd.f32 %v6639, %v6640
        %v6642 = vrot.slane %v6641, 1
        %v6643 = vadd.f32 %v6641, %v6642
        %v6644 = vrcp.pop 17.0
        %v6645 = vmul.f32 17.0, %v6644
        %v6646 = vsub.f32 1.0, %v6645
        %v6647 = vmul.f32 %v6644, %v6646
        %v6648 = vadd.f32 %v6644, %v6647
        %vm6649 = vweird.f32 %v6644
        %v6650 = vsel %vm6649, %v6644, %v6648
        %v6651 = vmul.f32 %v6643, %v6650
        %v6652 = vsel %vm2175, %v6630, -inf
        %v6653 = vsel %vm2175, %v6631, -inf
        %v6654 = vsel %vm2189, %v6632, -inf
        %v6655 = vmax.f32 %v6652, %v6653
        %v6656 = vmax.f32 %v6655, %v6654
        %v6657 = vrot.slane %v6656, 4
        %v6658 = vmax.f32 %v6656, %v6657
        %v6659 = vrot.slane %v6658, 2
        %v6660 = vmax.f32 %v6658, %v6659
        %v6661 = vrot.slane %v6660, 1
        %v6662 = vmax.f32 %v6660, %v6661
        %v6663 = vadd.f32 %v6651, %v6662
        %v6664 = vld [vmem:[%s81] sm:$0xff]
        %v6665 = vld [vmem:[%s81 + $0x8] sm:$0xff]
        %v6666 = vld [vmem:[%s81 + $0x10] sm:$0xff]
        %v6667 = vld [vmem:[%s81 + $0x18] sm:$0xff]
        %v6668 = vld [vmem:[#allocation11] sm:$0x1]
        %v6670 = vsel %vm2175, %v6663, 0
        %6672 = vmatpush.msra.mxu0 0.0
        %6673 = vmatpush.msra.mxu0 0.0
        %6674 = vmatpush.msra.mxu0 0.0
        %6675 = vmatpush.msra.mxu0 0.0
        %6676 = vmatpush.msra.mxu0 0.0
        %6677 = vmatpush.msra.mxu0 0.0
        %6678 = vmatpush.msra.mxu0 0.0
        %6679 = vmatpush.msra.mxu0 0.0
        %6680 = vmatpush.msra.mxu0 0.0
        %6681 = vmatpush.msra.mxu0 0.0
        %6682 = vmatpush.msra.mxu0 0.0
        %6683 = vmatpush.msra.mxu0 0.0
        %6684 = vmatpush.msra.mxu0 %v6667
        %6685 = vmatpush.msra.mxu0 %v6666
        %6686 = vmatpush.msra.mxu0 %v6665
        %6687 = vmatpush.msra.mxu0 %v6664
        %6688 = vmatmul.f32.gmra.mxu0 %v6670
        %v6689 = vpop.f32.mrf.mxu0
        %v6690 = vadd.f32 %v6668, %v6689
        %6691 = vdwg.mxu0
        %v6692 = vld [vmem:[#allocation12] sm:$0x1]
        %v6693 = vmul.f32 %v6690, %v6692
        %v6694 = vld [vmem:[#allocation14] sm:$0x1]
        %v6695 = vadd.f32 %v6693, %v6694
        %vm6696 = vcmp.ge.f32.partialorder %v6695, 0.0
        %v6697 = vld [vmem:[#allocation3] sm:$0x1]
        %6699 = vset.pattern.permute.xlu0 0
        %6700 = vperm.xlu0 %6699, %v6697
        %v6701 = vpop.permute.xlu0 %6700
        %v6703 = vperm.slane %v6701, 0
        %v6704 = vmul.f32 %v6703, %v6695
        %v6705 = vsel %vm6696, %v6695, %v6704
        %v6706 = vld [vmem:[%s91] sm:$0xff]
        %v6707 = vld [vmem:[%s91 + $0x8] sm:$0xff]
        %v6708 = vld [vmem:[%s91 + $0x10] sm:$0xff]
        %v6709 = vld [vmem:[%s91 + $0x18] sm:$0xff]
        %v6710 = vld [vmem:[%s91 + $0x20] sm:$0xff]
        %v6711 = vld [vmem:[%s91 + $0x28] sm:$0xff]
        %v6712 = vld [vmem:[%s91 + $0x30] sm:$0xff]
        %v6713 = vld [vmem:[%s91 + $0x38] sm:$0xff]
        %v6714 = vld [vmem:[%s91 + $0x40] sm:$0xff]
        %v6715 = vld [vmem:[%s91 + $0x48] sm:$0xff]
        %v6716 = vld [vmem:[%s91 + $0x50] sm:$0xff]
        %v6717 = vld [vmem:[%s91 + $0x58] sm:$0xff]
        %v6718 = vld [vmem:[%s91 + $0x60] sm:$0xff]
        %v6719 = vld [vmem:[%s91 + $0x68] sm:$0xff]
        %v6720 = vld [vmem:[%s91 + $0x70] sm:$0xff]
        %v6721 = vld [vmem:[%s91 + $0x78] sm:$0xff]
        %v6722 = vld [vmem:[#allocation15] sm:$0x1]
        %6723 = vmatpush.msra.mxu0 %v6721
        %6724 = vmatpush.msra.mxu0 %v6720
        %6725 = vmatpush.msra.mxu0 %v6719
        %6726 = vmatpush.msra.mxu0 %v6718
        %6727 = vmatpush.msra.mxu0 %v6717
        %6728 = vmatpush.msra.mxu0 %v6716
        %6729 = vmatpush.msra.mxu0 %v6715
        %6730 = vmatpush.msra.mxu0 %v6714
        %6731 = vmatpush.msra.mxu0 %v6713
        %6732 = vmatpush.msra.mxu0 %v6712
        %6733 = vmatpush.msra.mxu0 %v6711
        %6734 = vmatpush.msra.mxu0 %v6710
        %6735 = vmatpush.msra.mxu0 %v6709
        %6736 = vmatpush.msra.mxu0 %v6708
        %6737 = vmatpush.msra.mxu0 %v6707
        %6738 = vmatpush.msra.mxu0 %v6706
        %6739 = vmatmul.f32.gmra.mxu0 %v6705
        %v6740 = vpop.f32.mrf.mxu0
        %v6741 = vadd.f32 %v6722, %v6740
        %6742 = vdwg.mxu0
        %6743 = vst [vmem:[%s1640] sm:$0x1] %v6741
        %v6744 = vmul.f32 %v6741, %v6741
        %v6745 = vsel %vm2119, %v6744, 0.0
        %6746 = vadd.xlane.f32.xlu0 %v6745
        %v6747 = vpop.xlane.xlu0 %6746
        %v6748 = vmul.f32 %v6747, 0.0078125
        %v6749 = vld [vmem:[#allocation4] sm:$0x1]
        %v6750 = vmul.f32 %v6748, %v6749
        %v6751 = vld [vmem:[#allocation5] sm:$0x1]
        %v6752 = vadd.f32 %v6750, %v6751
        %vm6753 = vcmask 0
        %6754 = vst.msk [vmem:[%s1659] sm:$0x1] %vm6753, %v6752
        %v6755 = vld [vmem:[%s99] sm:$0xff]
        %v6756 = vld [vmem:[%s99 + $0x8] sm:$0xff]
        %v6757 = vld [vmem:[%s99 + $0x10] sm:$0xff]
        %v6758 = vld [vmem:[%s99 + $0x18] sm:$0xff]
        %v6759 = vld [vmem:[%s99 + $0x20] sm:$0xff]
        %v6760 = vld [vmem:[%s99 + $0x28] sm:$0xff]
        %v6761 = vld [vmem:[%s99 + $0x30] sm:$0xff]
        %v6762 = vld [vmem:[%s99 + $0x38] sm:$0xff]
        %v6763 = vld [vmem:[%s99 + $0x40] sm:$0xff]
        %v6764 = vld [vmem:[%s99 + $0x48] sm:$0xff]
        %v6765 = vld [vmem:[%s99 + $0x50] sm:$0xff]
        %v6766 = vld [vmem:[%s99 + $0x58] sm:$0xff]
        %v6767 = vld [vmem:[%s99 + $0x60] sm:$0xff]
        %v6768 = vld [vmem:[%s99 + $0x68] sm:$0xff]
        %v6769 = vld [vmem:[%s99 + $0x70] sm:$0xff]
        %v6770 = vld [vmem:[%s99 + $0x78] sm:$0xff]
        %6771 = vmatpush.msra.mxu0 %v6770
        %6772 = vmatpush.msra.mxu0 %v6769
        %6773 = vmatpush.msra.mxu0 %v6768
        %6774 = vmatpush.msra.mxu0 %v6767
        %6775 = vmatpush.msra.mxu0 %v6766
        %6776 = vmatpush.msra.mxu0 %v6765
        %6777 = vmatpush.msra.mxu0 %v6764
        %6778 = vmatpush.msra.mxu0 %v6763
        %6779 = vmatpush.msra.mxu0 %v6762
        %6780 = vmatpush.msra.mxu0 %v6761
        %6781 = vmatpush.msra.mxu0 %v6760
        %6782 = vmatpush.msra.mxu0 %v6759
        %6783 = vmatpush.msra.mxu0 %v6758
        %6784 = vmatpush.msra.mxu0 %v6757
        %6785 = vmatpush.msra.mxu0 %v6756
        %6786 = vmatpush.msra.mxu0 %v6755
        %6787 = vmatmul.f32.gmra.mxu0 %v6741
        %v6788 = vpop.f32.mrf.mxu0
        %v6789 = vadd.f32 0.0, %v6788
        %6790 = vdwg.mxu0
        %vm6791 = vcmask 40960
        %6792 = vst.msk [vmem:[%s1651] sm:$0x1] %vm6791, %v6789
        %s6793 = sand.u32 %s1196, 1
        %s6794 = scalar_lea.sflag [#allocation8], %s6793
        %s6795 = sand.u32 %s1196, 1
        %s6796 = scalar_lea.vmem [#allocation17], %s6795
        %p6797 = scmp.lt.s32.totalorder %s133, 1
        %s6798 = scalar_select %p6797, %s133, 1
        %s6799 = scalar_lea.vmem %s103, %s6798
        %s6800 = sand.u32 %s1248, 1
        %s6801 = scalar_lea.sflag [#allocation19], %s6800
        %s6802 = sand.u32 %s1248, 1
        %s6803 = scalar_lea.vmem [#allocation18], %s6802
        // Predicated region
        $region245: #{asd_conformer_forward.1} parent=219 // pred_check
          %p6804 = pneg %p1206
        $region246: #{asd_conformer_forward.1} parent=219 // pred_check_branch
          %6806 = sbr.rel (%p6804) target = $region248
        $region247: #{asd_conformer_forward.1} parent=219 // pred_region
          %6808 = vsyncadd %s6794, 0
          %s6809 = scalar_lea.hbm %s101, %s133
          %s6811 = sshll.u32 %s6796, 4
          %s6812 = int_to_ptr.vmem [resolvable:$true] %s6811
          %s6813 = sshll.u32 %s6809, 4
          %s6814 = int_to_ptr.hbm [resolvable:$true] %s6813
          %6816 = dma.vmem_to_hbm [thread:$0]  %s6812, 16, %s6814, %s6794
        $region248: #{asd_conformer_forward.1} parent=219 // pred_fallthru
          _
        // Predicated region
        $region249: #{asd_conformer_forward.1} parent=219 // pred_check
          %p6817 = pneg %p1232
        $region250: #{asd_conformer_forward.1} parent=219 // pred_check_branch
          %6819 = sbr.rel (%p6817) target = $region252
        $region251: #{asd_conformer_forward.1} parent=219 // pred_region
          _
        $region252: #{asd_conformer_forward.1} parent=219 // pred_fallthru
          _
        // Predicated region
        $region253: #{asd_conformer_forward.1} parent=219 // pred_check
          %p6820 = pneg %p1258
        $region254: #{asd_conformer_forward.1} parent=219 // pred_check_branch
          %6822 = sbr.rel (%p6820) target = $region256
        $region255: #{asd_conformer_forward.1} parent=219 // pred_region
          %6824 = vsyncadd %s6801, 0
          %s6825 = scalar_lea.hbm %s105, %s133
          %s6827 = sshll.u32 %s6803, 4
          %s6828 = int_to_ptr.vmem [resolvable:$true] %s6827
          %s6829 = sshll.u32 %s6825, 4
          %s6830 = int_to_ptr.hbm [resolvable:$true] %s6829
          %6832 = dma.vmem_to_hbm [thread:$0]  %s6828, 16, %s6830, %s6801
        $region256: #{asd_conformer_forward.1} parent=219 // pred_fallthru
          _
      $region220: #{asd_conformer_forward.1} parent=5 // pred_fallthru
        _
      %p6833 = scmp.le.s32.totalorder 2, %s128
      // Predicated region
      $region257: #{asd_conformer_forward.1} parent=5 // pred_check
        %p6834 = pneg %p6833
      $region258: #{asd_conformer_forward.1} parent=5 // pred_check_branch
        %6836 = sbr.rel (%p6834) target = $region260
      $region259: #{asd_conformer_forward.1} parent=5 // pred_region
        %s6837 = ssub.s32 %s128, 2
        // Predicated region
        $region261: #{asd_conformer_forward.1} parent=259 // pred_check
          %p6838 = pneg %p1212
        $region262: #{asd_conformer_forward.1} parent=259 // pred_check_branch
          %6840 = sbr.rel (%p6838) target = $region264
        $region263: #{asd_conformer_forward.1} parent=259 // pred_region
          %s6841 = sand.u32 %s1197, 1
          %s6842 = scalar_lea.sflag [#allocation8], %s6841
          %s6843 = sand.u32 %s1197, 1
          %s6844 = scalar_lea.vmem [#allocation17], %s6843
          %6846 = dma.done %s6842, 16
        $region264: #{asd_conformer_forward.1} parent=259 // pred_fallthru
          _
        // Predicated region
        $region265: #{asd_conformer_forward.1} parent=259 // pred_check
          %p6847 = pneg %p1238
        $region266: #{asd_conformer_forward.1} parent=259 // pred_check_branch
          %6849 = sbr.rel (%p6847) target = $region268
        $region267: #{asd_conformer_forward.1} parent=259 // pred_region
          %p6850 = scmp.lt.s32.totalorder %s134, 1
          %s6851 = scalar_select %p6850, %s134, 1
          %s6852 = scalar_lea.vmem %s103, %s6851
        $region268: #{asd_conformer_forward.1} parent=259 // pred_fallthru
          _
        // Predicated region
        $region269: #{asd_conformer_forward.1} parent=259 // pred_check
          %p6853 = pneg %p1264
        $region270: #{asd_conformer_forward.1} parent=259 // pred_check_branch
          %6855 = sbr.rel (%p6853) target = $region272
        $region271: #{asd_conformer_forward.1} parent=259 // pred_region
          %s6856 = sand.u32 %s1249, 1
          %s6857 = scalar_lea.sflag [#allocation19], %s6856
          %s6858 = sand.u32 %s1249, 1
          %s6859 = scalar_lea.vmem [#allocation18], %s6858
          %6861 = dma.done %s6857, 16
        $region272: #{asd_conformer_forward.1} parent=259 // pred_fallthru
          _
      $region260: #{asd_conformer_forward.1} parent=5 // pred_fallthru
        _
    $region6: #{asd_conformer_forward.1} parent=1 // loop_footer
      %s132 = sadd.s32 1, %s128
    $region7: #{asd_conformer_forward.1} parent=1 // loop_footer_branch
      %127 = sbr.rel target = $region3
    $region8: #{asd_conformer_forward.1} parent=1 // loop_exit
      _
    %6862 = vsyncpa [#allocation7], 1
    %s6863 = scalar_lea.sflag [#allocation7], 1
    %6864 = vsyncpa %s6863, 1
    %6865 = vsyncpa [#allocation10], 1
    %6866 = vsyncpa [#allocation13], 1
    %6867 = vsyncpa [#allocation16], 1
    %6868 = vsyncpa [#allocation8], 1
    %s6869 = scalar_lea.sflag [#allocation8], 1
    %6870 = vsyncpa %s6869, 1
    %6871 = vsyncpa [#allocation19], 1
    %s6872 = scalar_lea.sflag [#allocation19], 1
    %6873 = vsyncpa %s6872, 1

</llo_original>
